<compile_context>
chip_gen: v5e
topology: v5e:2x2
jax: 0.10.0
libtpu: 0.0.40
codegen_flags: <defaults>
</compile_context>

<pallas_src>
import math
import jax
import jax.numpy as jnp
from jax import lax
from jax.experimental import pallas as pl
from jax.experimental.pallas import tpu as pltpu

B_TILE = 32                       # images per conv grid step (shrunk for small batches)
FC_TILE = 256                     # rows per FC grid step
VMEM_LIMIT = 32 * 1024 * 1024     # fits v5e/v6e and leaves >=50% headroom on v7x (64 MiB)


def _ceil_div(a, b):
    return -(-a // b)


def _round_up(a, b):
    return _ceil_div(a, b) * b


# ----------------------------------------------------------------------------
# Pallas kernels
# ----------------------------------------------------------------------------
def _conv_block_kernel(r_ref, w_ref, b_ref, o_ref):
    """3x3 conv (channels-major matmul) + folded-BN bias + ReLU + 2x2 maxpool.

    r_ref: (1, 4, K, QR) bf16  pool-quartered im2col, K = 9*Cin, QR = b_tile*Q lanes
    w_ref: (Cout, K)     bf16  conv weight with the BN scale folded into each row
    b_ref: (Cout, 1)     f32   folded BN bias
    o_ref: (1, Cout, QR) bf16  pooled activations, lanes ordered [image][pooled pixel]
    """
    w = w_ref[...]
    h = jnp.dot(w, r_ref[0, 0], preferred_element_type=jnp.float32)
    for j in range(1, 4):                       # 2x2 maxpool == max over the 4 quarters
        h = jnp.maximum(h, jnp.dot(w, r_ref[0, j], preferred_element_type=jnp.float32))
    # relu(max_j(z_j) + b) == maxpool(relu(z + b)): per-channel bias, monotone relu.
    o_ref[0] = jnp.maximum(h + b_ref[...], 0.0).astype(o_ref.dtype)


def conv_block(cols, w, b):
    """cols: (G, 4, K, QR) channels-major pool-quartered im2col -> (G, Cout, QR)."""
    G, _, K, QR = cols.shape
    Cout = w.shape[0]
    return pl.pallas_call(
        _conv_block_kernel,
        out_shape=jax.ShapeDtypeStruct((G, Cout, QR), jnp.bfloat16),
        grid=(G,),
        in_specs=[
            pl.BlockSpec((1, 4, K, QR), lambda i: (i, 0, 0, 0)),
            pl.BlockSpec((Cout, K), lambda i: (0, 0)),   # constant index_map ->
            pl.BlockSpec((Cout, 1), lambda i: (0, 0)),   #   VMEM-resident across steps
        ],
        out_specs=pl.BlockSpec((1, Cout, QR), lambda i: (i, 0, 0)),
        compiler_params=pltpu.CompilerParams(
            dimension_semantics=("parallel",),
            vmem_limit_bytes=VMEM_LIMIT),
    )(cols, w, b)


def _fc_kernel(x_ref, w1_ref, b1_ref, w2_ref, b2_ref, w3_ref, b3_ref, o_ref):
    h = jnp.dot(x_ref[...], w1_ref[...],
                preferred_element_type=jnp.float32) + b1_ref[...]
    # TODO(synk): Dropout2d(0.3) is identity at inference (eval mode); training-mode
    # channel dropout is not implemented.
    h = jnp.dot(h.astype(jnp.bfloat16), w2_ref[...],
                preferred_element_type=jnp.float32) + b2_ref[...]
    h = jnp.dot(h.astype(jnp.bfloat16), w3_ref[...],
                preferred_element_type=jnp.float32) + b3_ref[...]
    o_ref[...] = h


def fc_stack(flat, kp, *, fc_tile):
    Nf, Din = flat.shape
    G = Nf // fc_tile
    D1 = kp["fc1_wt"].shape[1]
    D2 = kp["fc2_wt"].shape[1]
    D3 = kp["fc3_wt"].shape[1]
    return pl.pallas_call(
        _fc_kernel,
        out_shape=jax.ShapeDtypeStruct((Nf, D3), jnp.float32),
        grid=(G,),
        in_specs=[
            pl.BlockSpec((fc_tile, Din), lambda i: (i, 0)),
            pl.BlockSpec((Din, D1), lambda i: (0, 0)),   # weights: constant index_maps
            pl.BlockSpec((1, D1), lambda i: (0, 0)),     #   -> stay VMEM-resident
            pl.BlockSpec((D1, D2), lambda i: (0, 0)),
            pl.BlockSpec((1, D2), lambda i: (0, 0)),
            pl.BlockSpec((D2, D3), lambda i: (0, 0)),
            pl.BlockSpec((1, D3), lambda i: (0, 0)),
        ],
        out_specs=pl.BlockSpec((fc_tile, D3), lambda i: (i, 0)),
        compiler_params=pltpu.CompilerParams(
            dimension_semantics=("parallel",),
            vmem_limit_bytes=VMEM_LIMIT),
    )(flat, kp["fc1_wt"], kp["fc1_b"], kp["fc2_wt"], kp["fc2_b"],
      kp["fc3_wt"], kp["fc3_b"])


# ----------------------------------------------------------------------------
# Glue (pure data movement in plain JAX; kernels stay relayout-free)
# ----------------------------------------------------------------------------
def _quartered_cols(a_nhwc, b_tile):
    """(Np, H, W, C) -> (G, 4, 9*C, b_tile*Q) channels-major pool-quartered im2col.

    dim1 = pool quarter (sh*2+sw), dim2 rows ordered (tap dy*3+dx, channel), lanes
    ordered [image in tile][pooled pixel oh*Wp+ow].  Valid 3x3 conv (caller pre-pads).
    """
    Np, H, W, C = a_nhwc.shape
    Ho, Wo = H - 2, W - 2            # conv output size
    Hp, Wp = Ho // 2, Wo // 2        # pooled output size
    G = Np // b_tile
    taps = jnp.stack([a_nhwc[:, dy:dy + Ho, dx:dx + Wo, :]
                      for dy in range(3) for dx in range(3)], axis=1)  # (Np,9,Ho,Wo,C)
    t = taps.reshape(G, b_tile, 9, Hp, 2, Wp, 2, C)
    t = t.transpose(0, 4, 6, 2, 7, 1, 3, 5)          # (G, sh, sw, tap, C, b, oh, ow)
    return t.reshape(G, 4, 9 * C, b_tile * Hp * Wp)


def prepare_params(p, eps=1e-5):
    """One-time parameter folding (hoisted out of the per-forward path)."""
    bf16 = jnp.bfloat16

    def fold_conv(conv_w2d, conv_b, gamma, beta, mean, var):
        s = gamma / jnp.sqrt(var + eps)                        # (Cout,)
        w = (conv_w2d * s[:, None]).astype(bf16)               # BN scale folded into rows
        b = (beta + s * (conv_b - mean)).reshape(-1, 1)        # (Cout, 1) f32
        return w, b

    # conv weights -> (Cout, 9*Cin), column = (dy*3+dx)*Cin + ci (matches _quartered_cols)
    w1, b1 = fold_conv(p["conv1_w"].reshape(32, 9), p["conv1_b"],
                       p["bn1_g"], p["bn1_b"], p["bn1_m"], p["bn1_v"])
    w2, b2 = fold_conv(p["conv2_w"].transpose(0, 2, 3, 1).reshape(64, 288), p["conv2_b"],
                       p["bn2_g"], p["bn2_b"], p["bn2_m"], p["bn2_v"])

    # fc3 zero-padded to 128 output lanes -> lane-dense final store; sliced back later.
    fc3_wt = jnp.pad(p["fc3_w"].T, ((0, 0), (0, 128 - 10)))
    fc3_b = jnp.pad(p["fc3_b"], (0, 128 - 10)).reshape(1, -1)

    return {
        "w1": w1, "b1": b1, "w2": w2, "b2": b2,
        "fc1_wt": p["fc1_w"].T.astype(bf16), "fc1_b": p["fc1_b"].reshape(1, -1),
        "fc2_wt": p["fc2_w"].T.astype(bf16), "fc2_b": p["fc2_b"].reshape(1, -1),
        "fc3_wt": fc3_wt.astype(bf16), "fc3_b": fc3_b,
    }


def fashion_cnn_forward(x_nchw, kp):
    N = x_nchw.shape[0]
    # Conv batch tile: big enough for lane-dense stores / a wide matmul N-dim, but always
    # >= 2 grid steps when N >= 2 so both v7x TensorCores get work ("parallel" axis).
    b_tile = min(B_TILE, max(1, _ceil_div(N, 2)))
    Np = _round_up(N, b_tile)
    G = Np // b_tile

    # ---- layer1: Conv2d(1->32, k3, pad=1) + BN + ReLU + MaxPool2 --------------------
    a = jnp.pad(x_nchw[:, 0], ((0, Np - N), (1, 1), (1, 1)))             # (Np, 30, 30)
    cols1 = _quartered_cols(a[..., None].astype(jnp.bfloat16), b_tile)   # (G, 4, 9, b*196)
    y1 = conv_block(cols1, kp["w1"], kp["b1"])                           # (G, 32, b*196)

    # ---- layer2: Conv2d(32->64, k3) + BN + ReLU + MaxPool2 --------------------------
    # TODO(synk): cols2 still round-trips through HBM (~83 KB/img bf16 vs ~25 KB of real
    # activation); building the 9 taps in-kernel / fusing conv1->conv2->FC would remove it.
    y1n = (y1.reshape(G, 32, b_tile, 14, 14)
             .transpose(0, 2, 3, 4, 1).reshape(Np, 14, 14, 32))          # NHWC, bf16
    cols2 = _quartered_cols(y1n, b_tile)                                 # (G, 4, 288, b*36)
    y2 = conv_block(cols2, kp["w2"], kp["b2"])                           # (G, 64, b*36)

    # ---- flatten in torch NCHW order (c*36 + oh*6 + ow) + fc1 -> fc2 -> fc3 ---------
    flat = (y2.reshape(G, 64, b_tile, 36)
              .transpose(0, 2, 1, 3).reshape(Np, 64 * 36))[:N]           # (N, 2304) bf16
    fc_tile = min(FC_TILE, _round_up(N, 8))
    Nf = _round_up(N, fc_tile)
    flat = jnp.pad(flat, ((0, Nf - N), (0, 0)))
    logits = fc_stack(flat, kp, fc_tile=fc_tile)                         # (Nf, 128) f32
    return logits[:N, :10]


# ----------------------------------------------------------------------------
# Pure-JAX reference (mirrors PyTorch eval-mode forward) for validation
# ----------------------------------------------------------------------------
def torch_reference(x, p):
    hi = lax.Precision.HIGHEST

    def bn(z, g, b, m, v):
        s = g / jnp.sqrt(v + 1e-5)
        return z * s[None, :, None, None] + (b - m * s)[None, :, None, None]

    z = lax.conv_general_dilated(x, p["conv1_w"], (1, 1), [(1, 1), (1, 1)],
                                 dimension_numbers=("NCHW", "OIHW", "NCHW"),
                                 precision=hi)
    z = z + p["conv1_b"][None, :, None, None]
    z = jnp.maximum(bn(z, p["bn1_g"], p["bn1_b"], p["bn1_m"], p["bn1_v"]), 0.0)
    z = lax.reduce_window(z, -jnp.inf, lax.max, (1, 1, 2, 2), (1, 1, 2, 2), "VALID")

    z = lax.conv_general_dilated(z, p["conv2_w"], (1, 1), [(0, 0), (0, 0)],
                                 dimension_numbers=("NCHW", "OIHW", "NCHW"),
                                 precision=hi)
    z = z + p["conv2_b"][None, :, None, None]
    z = jnp.maximum(bn(z, p["bn2_g"], p["bn2_b"], p["bn2_m"], p["bn2_v"]), 0.0)
    z = lax.reduce_window(z, -jnp.inf, lax.max, (1, 1, 2, 2), (1, 1, 2, 2), "VALID")

    z = z.reshape(z.shape[0], -1)
    z = jnp.matmul(z, p["fc1_w"].T, precision=hi) + p["fc1_b"]
    z = jnp.matmul(z, p["fc2_w"].T, precision=hi) + p["fc2_b"]
    z = jnp.matmul(z, p["fc3_w"].T, precision=hi) + p["fc3_b"]
    return z


# ----------------------------------------------------------------------------
# Deterministic parameter init (shapes from FashionCNN.__init__)
# ----------------------------------------------------------------------------
def init_params(key):
    ks = jax.random.split(key, 20)
    f32 = jnp.float32
    return {
        "conv1_w": jax.random.normal(ks[0], (32, 1, 3, 3), f32) * (1.0 / math.sqrt(9)),
        "conv1_b": jax.random.normal(ks[1], (32,), f32) * 0.05,
        "bn1_g": jax.random.uniform(ks[2], (32,), f32, 0.5, 1.5),
        "bn1_b": jax.random.normal(ks[3], (32,), f32) * 0.1,
        "bn1_m": jax.random.normal(ks[4], (32,), f32) * 0.1,
        "bn1_v": jax.random.uniform(ks[5], (32,), f32, 0.5, 1.5),
        "conv2_w": jax.random.normal(ks[6], (64, 32, 3, 3), f32) * (1.0 / math.sqrt(32 * 9)),
        "conv2_b": jax.random.normal(ks[7], (64,), f32) * 0.05,
        "bn2_g": jax.random.uniform(ks[8], (64,), f32, 0.5, 1.5),
        "bn2_b": jax.random.normal(ks[9], (64,), f32) * 0.1,
        "bn2_m": jax.random.normal(ks[10], (64,), f32) * 0.1,
        "bn2_v": jax.random.uniform(ks[11], (64,), f32, 0.5, 1.5),
        "fc1_w": jax.random.normal(ks[12], (600, 2304), f32) * (1.0 / math.sqrt(2304)),
        "fc1_b": jax.random.normal(ks[13], (600,), f32) * 0.05,
        "fc2_w": jax.random.normal(ks[14], (120, 600), f32) * (1.0 / math.sqrt(600)),
        "fc2_b": jax.random.normal(ks[15], (120,), f32) * 0.05,
        "fc3_w": jax.random.normal(ks[16], (10, 120), f32) * (1.0 / math.sqrt(120)),
        "fc3_b": jax.random.normal(ks[17], (10,), f32) * 0.05,
    }


if __name__ == "__main__":
    params = init_params(jax.random.PRNGKey(0))
    kparams = prepare_params(params)  # one-time folding, outside the per-forward path
    # FashionMNIST-shaped input: batch=2, 1 channel, 28x28 (fc1 fixes the spatial size).
    x = jax.random.normal(jax.random.PRNGKey(0), (2, 1, 28, 28), jnp.float32)

    fwd = jax.jit(fashion_cnn_forward)
    out = jax.block_until_ready(fwd(x, kparams))
    assert out.shape == (2, 10), out.shape

    ref = torch_reference(x, params)
    err = float(jnp.max(jnp.abs(out - ref)))
    # bf16 weights/activations with f32 accumulation -> small drift vs the f32 HIGHEST
    # reference (logit scale ~1.5); 1e-1 leaves margin while still catching layout bugs.
    assert err < 1e-1, f"Pallas vs reference mismatch: max abs err {err}"

    print("KERNEL_OK")
</pallas_src>

<mosaic_0001>
module attributes {stable_mosaic.version = 11 : i64} {
  func.func @_conv_block_kernel(%arg0: i32, %arg1: memref<1x4x9x196xbf16, #tpu.memory_space<vmem>>, %arg2: memref<32x9xbf16, #tpu.memory_space<vmem>>, %arg3: memref<32x1xf32, #tpu.memory_space<vmem>>, %arg4: memref<1x32x196xbf16, #tpu.memory_space<vmem>>) attributes {dimension_semantics = [#tpu.dimension_semantics<parallel>], iteration_bounds = array<i64: 2>, scalar_prefetch = 0 : i64, scratch_operands = 0 : i64, tpu.core_type = #tpu.core_type<tc>, window_params = [{transform_indices = @transform_0, window_bounds = array<i64: 1, 4, 9, 196>}, {pipeline_mode = #tpu.pipeline_mode<synchronous>, transform_indices = @transform_1, window_bounds = array<i64: 32, 9>}, {pipeline_mode = #tpu.pipeline_mode<synchronous>, transform_indices = @transform_2, window_bounds = array<i64: 32, 1>}, {transform_indices = @transform_3, window_bounds = array<i64: 1, 32, 196>}]} {
    %c0 = arith.constant 0 : index
    %c0_0 = arith.constant 0 : index
    %0 = vector.load %arg2[%c0, %c0_0] : memref<32x9xbf16, #tpu.memory_space<vmem>>, vector<32x9xbf16>
    %c0_1 = arith.constant 0 : index
    %c0_2 = arith.constant 0 : index
    %c0_3 = arith.constant 0 : index
    %c0_4 = arith.constant 0 : index
    %1 = vector.load %arg1[%c0_1, %c0_2, %c0_3, %c0_4] : memref<1x4x9x196xbf16, #tpu.memory_space<vmem>>, vector<1x1x9x196xbf16>
    %2 = vector.shape_cast %1 : vector<1x1x9x196xbf16> to vector<9x196xbf16>
    %cst = arith.constant dense<0.000000e+00> : vector<32x196xf32>
    %3 = tpu.matmul %0, %2, %cst {dimension_numbers = #tpu.dot_dimension_numbers<[1], [0], [0], [1], [0, 0, 1, 1], [], []>} : vector<32x9xbf16>, vector<9x196xbf16>, vector<32x196xf32> -> vector<32x196xf32>
    %c0_5 = arith.constant 0 : index
    %c1 = arith.constant 1 : index
    %c0_6 = arith.constant 0 : index
    %c0_7 = arith.constant 0 : index
    %4 = vector.load %arg1[%c0_5, %c1, %c0_6, %c0_7] : memref<1x4x9x196xbf16, #tpu.memory_space<vmem>>, vector<1x1x9x196xbf16>
    %5 = vector.shape_cast %4 : vector<1x1x9x196xbf16> to vector<9x196xbf16>
    %cst_8 = arith.constant dense<0.000000e+00> : vector<32x196xf32>
    %6 = tpu.matmul %0, %5, %cst_8 {dimension_numbers = #tpu.dot_dimension_numbers<[1], [0], [0], [1], [0, 0, 1, 1], [], []>} : vector<32x9xbf16>, vector<9x196xbf16>, vector<32x196xf32> -> vector<32x196xf32>
    %7 = arith.maximumf %3, %6 : vector<32x196xf32>
    %c0_9 = arith.constant 0 : index
    %c2 = arith.constant 2 : index
    %c0_10 = arith.constant 0 : index
    %c0_11 = arith.constant 0 : index
    %8 = vector.load %arg1[%c0_9, %c2, %c0_10, %c0_11] : memref<1x4x9x196xbf16, #tpu.memory_space<vmem>>, vector<1x1x9x196xbf16>
    %9 = vector.shape_cast %8 : vector<1x1x9x196xbf16> to vector<9x196xbf16>
    %cst_12 = arith.constant dense<0.000000e+00> : vector<32x196xf32>
    %10 = tpu.matmul %0, %9, %cst_12 {dimension_numbers = #tpu.dot_dimension_numbers<[1], [0], [0], [1], [0, 0, 1, 1], [], []>} : vector<32x9xbf16>, vector<9x196xbf16>, vector<32x196xf32> -> vector<32x196xf32>
    %11 = arith.maximumf %7, %10 : vector<32x196xf32>
    %c0_13 = arith.constant 0 : index
    %c3 = arith.constant 3 : index
    %c0_14 = arith.constant 0 : index
    %c0_15 = arith.constant 0 : index
    %12 = vector.load %arg1[%c0_13, %c3, %c0_14, %c0_15] : memref<1x4x9x196xbf16, #tpu.memory_space<vmem>>, vector<1x1x9x196xbf16>
    %13 = vector.shape_cast %12 : vector<1x1x9x196xbf16> to vector<9x196xbf16>
    %cst_16 = arith.constant dense<0.000000e+00> : vector<32x196xf32>
    %14 = tpu.matmul %0, %13, %cst_16 {dimension_numbers = #tpu.dot_dimension_numbers<[1], [0], [0], [1], [0, 0, 1, 1], [], []>} : vector<32x9xbf16>, vector<9x196xbf16>, vector<32x196xf32> -> vector<32x196xf32>
    %15 = arith.maximumf %11, %14 : vector<32x196xf32>
    %c0_17 = arith.constant 0 : index
    %c0_18 = arith.constant 0 : index
    %16 = vector.load %arg3[%c0_17, %c0_18] : memref<32x1xf32, #tpu.memory_space<vmem>>, vector<32x1xf32>
    %17 = vector.broadcast %16 : vector<32x1xf32> to vector<32x196xf32>
    %18 = arith.addf %15, %17 : vector<32x196xf32>
    %cst_19 = arith.constant 0.000000e+00 : f32
    %19 = vector.broadcast %cst_19 : f32 to vector<32x196xf32>
    %20 = arith.maximumf %18, %19 : vector<32x196xf32>
    %21 = arith.truncf %20 : vector<32x196xf32> to vector<32x196xbf16>
    %c0_20 = arith.constant 0 : index
    %c0_21 = arith.constant 0 : index
    %c0_22 = arith.constant 0 : index
    %22 = vector.load %arg4[%c0_20, %c0_21, %c0_22] : memref<1x32x196xbf16, #tpu.memory_space<vmem>>, vector<1x32x196xbf16>
    %23 = vector.shape_cast %22 : vector<1x32x196xbf16> to vector<32x196xbf16>
    %24 = vector.shape_cast %21 : vector<32x196xbf16> to vector<1x32x196xbf16>
    tpu.vector_store %arg4[%c0_20, %c0_21, %c0_22], %24 {strides = array<i32>} : memref<1x32x196xbf16, #tpu.memory_space<vmem>>, vector<1x32x196xbf16>,
    return
  }
  func.func @transform_0(%arg0: i32) -> (i32, i32, i32, i32) {
    %c0_i32 = arith.constant 0 : i32
    %c0_i32_0 = arith.constant 0 : i32
    %c0_i32_1 = arith.constant 0 : i32
    %c0_i32_2 = arith.constant 0 : i32
    return %arg0, %c0_i32, %c0_i32_0, %c0_i32_1 : i32, i32, i32, i32
  }
  func.func @transform_1(%arg0: i32) -> (i32, i32) {
    %c0_i32 = arith.constant 0 : i32
    %c0_i32_0 = arith.constant 0 : i32
    %c0_i32_1 = arith.constant 0 : i32
    return %c0_i32, %c0_i32_0 : i32, i32
  }
  func.func @transform_2(%arg0: i32) -> (i32, i32) {
    %c0_i32 = arith.constant 0 : i32
    %c0_i32_0 = arith.constant 0 : i32
    %c0_i32_1 = arith.constant 0 : i32
    return %c0_i32, %c0_i32_0 : i32, i32
  }
  func.func @transform_3(%arg0: i32) -> (i32, i32, i32) {
    %c0_i32 = arith.constant 0 : i32
    %c0_i32_0 = arith.constant 0 : i32
    %c0_i32_1 = arith.constant 0 : i32
    return %arg0, %c0_i32, %c0_i32_0 : i32, i32, i32
  }
}

module attributes {stable_mosaic.version = 11 : i64} {
  func.func @_conv_block_kernel(%arg0: i32, %arg1: memref<1x4x288x36xbf16, #tpu.memory_space<vmem>>, %arg2: memref<64x288xbf16, #tpu.memory_space<vmem>>, %arg3: memref<64x1xf32, #tpu.memory_space<vmem>>, %arg4: memref<1x64x36xbf16, #tpu.memory_space<vmem>>) attributes {dimension_semantics = [#tpu.dimension_semantics<parallel>], iteration_bounds = array<i64: 2>, scalar_prefetch = 0 : i64, scratch_operands = 0 : i64, tpu.core_type = #tpu.core_type<tc>, window_params = [{transform_indices = @transform_0, window_bounds = array<i64: 1, 4, 288, 36>}, {pipeline_mode = #tpu.pipeline_mode<synchronous>, transform_indices = @transform_1, window_bounds = array<i64: 64, 288>}, {pipeline_mode = #tpu.pipeline_mode<synchronous>, transform_indices = @transform_2, window_bounds = array<i64: 64, 1>}, {transform_indices = @transform_3, window_bounds = array<i64: 1, 64, 36>}]} {
    %c0 = arith.constant 0 : index
    %c0_0 = arith.constant 0 : index
    %0 = vector.load %arg2[%c0, %c0_0] : memref<64x288xbf16, #tpu.memory_space<vmem>>, vector<64x288xbf16>
    %c0_1 = arith.constant 0 : index
    %c0_2 = arith.constant 0 : index
    %c0_3 = arith.constant 0 : index
    %c0_4 = arith.constant 0 : index
    %1 = vector.load %arg1[%c0_1, %c0_2, %c0_3, %c0_4] : memref<1x4x288x36xbf16, #tpu.memory_space<vmem>>, vector<1x1x288x36xbf16>
    %2 = vector.shape_cast %1 : vector<1x1x288x36xbf16> to vector<288x36xbf16>
    %cst = arith.constant dense<0.000000e+00> : vector<64x36xf32>
    %3 = tpu.matmul %0, %2, %cst {dimension_numbers = #tpu.dot_dimension_numbers<[1], [0], [0], [1], [0, 0, 1, 1], [], []>} : vector<64x288xbf16>, vector<288x36xbf16>, vector<64x36xf32> -> vector<64x36xf32>
    %c0_5 = arith.constant 0 : index
    %c1 = arith.constant 1 : index
    %c0_6 = arith.constant 0 : index
    %c0_7 = arith.constant 0 : index
    %4 = vector.load %arg1[%c0_5, %c1, %c0_6, %c0_7] : memref<1x4x288x36xbf16, #tpu.memory_space<vmem>>, vector<1x1x288x36xbf16>
    %5 = vector.shape_cast %4 : vector<1x1x288x36xbf16> to vector<288x36xbf16>
    %cst_8 = arith.constant dense<0.000000e+00> : vector<64x36xf32>
    %6 = tpu.matmul %0, %5, %cst_8 {dimension_numbers = #tpu.dot_dimension_numbers<[1], [0], [0], [1], [0, 0, 1, 1], [], []>} : vector<64x288xbf16>, vector<288x36xbf16>, vector<64x36xf32> -> vector<64x36xf32>
    %7 = arith.maximumf %3, %6 : vector<64x36xf32>
    %c0_9 = arith.constant 0 : index
    %c2 = arith.constant 2 : index
    %c0_10 = arith.constant 0 : index
    %c0_11 = arith.constant 0 : index
    %8 = vector.load %arg1[%c0_9, %c2, %c0_10, %c0_11] : memref<1x4x288x36xbf16, #tpu.memory_space<vmem>>, vector<1x1x288x36xbf16>
    %9 = vector.shape_cast %8 : vector<1x1x288x36xbf16> to vector<288x36xbf16>
    %cst_12 = arith.constant dense<0.000000e+00> : vector<64x36xf32>
    %10 = tpu.matmul %0, %9, %cst_12 {dimension_numbers = #tpu.dot_dimension_numbers<[1], [0], [0], [1], [0, 0, 1, 1], [], []>} : vector<64x288xbf16>, vector<288x36xbf16>, vector<64x36xf32> -> vector<64x36xf32>
    %11 = arith.maximumf %7, %10 : vector<64x36xf32>
    %c0_13 = arith.constant 0 : index
    %c3 = arith.constant 3 : index
    %c0_14 = arith.constant 0 : index
    %c0_15 = arith.constant 0 : index
    %12 = vector.load %arg1[%c0_13, %c3, %c0_14, %c0_15] : memref<1x4x288x36xbf16, #tpu.memory_space<vmem>>, vector<1x1x288x36xbf16>
    %13 = vector.shape_cast %12 : vector<1x1x288x36xbf16> to vector<288x36xbf16>
    %cst_16 = arith.constant dense<0.000000e+00> : vector<64x36xf32>
    %14 = tpu.matmul %0, %13, %cst_16 {dimension_numbers = #tpu.dot_dimension_numbers<[1], [0], [0], [1], [0, 0, 1, 1], [], []>} : vector<64x288xbf16>, vector<288x36xbf16>, vector<64x36xf32> -> vector<64x36xf32>
    %15 = arith.maximumf %11, %14 : vector<64x36xf32>
    %c0_17 = arith.constant 0 : index
    %c0_18 = arith.constant 0 : index
    %16 = vector.load %arg3[%c0_17, %c0_18] : memref<64x1xf32, #tpu.memory_space<vmem>>, vector<64x1xf32>
    %17 = vector.broadcast %16 : vector<64x1xf32> to vector<64x36xf32>
    %18 = arith.addf %15, %17 : vector<64x36xf32>
    %cst_19 = arith.constant 0.000000e+00 : f32
    %19 = vector.broadcast %cst_19 : f32 to vector<64x36xf32>
    %20 = arith.maximumf %18, %19 : vector<64x36xf32>
    %21 = arith.truncf %20 : vector<64x36xf32> to vector<64x36xbf16>
    %c0_20 = arith.constant 0 : index
    %c0_21 = arith.constant 0 : index
    %c0_22 = arith.constant 0 : index
    %22 = vector.load %arg4[%c0_20, %c0_21, %c0_22] : memref<1x64x36xbf16, #tpu.memory_space<vmem>>, vector<1x64x36xbf16>
    %23 = vector.shape_cast %22 : vector<1x64x36xbf16> to vector<64x36xbf16>
    %24 = vector.shape_cast %21 : vector<64x36xbf16> to vector<1x64x36xbf16>
    tpu.vector_store %arg4[%c0_20, %c0_21, %c0_22], %24 {strides = array<i32>} : memref<1x64x36xbf16, #tpu.memory_space<vmem>>, vector<1x64x36xbf16>,
    return
  }
  func.func @transform_0(%arg0: i32) -> (i32, i32, i32, i32) {
    %c0_i32 = arith.constant 0 : i32
    %c0_i32_0 = arith.constant 0 : i32
    %c0_i32_1 = arith.constant 0 : i32
    %c0_i32_2 = arith.constant 0 : i32
    return %arg0, %c0_i32, %c0_i32_0, %c0_i32_1 : i32, i32, i32, i32
  }
  func.func @transform_1(%arg0: i32) -> (i32, i32) {
    %c0_i32 = arith.constant 0 : i32
    %c0_i32_0 = arith.constant 0 : i32
    %c0_i32_1 = arith.constant 0 : i32
    return %c0_i32, %c0_i32_0 : i32, i32
  }
  func.func @transform_2(%arg0: i32) -> (i32, i32) {
    %c0_i32 = arith.constant 0 : i32
    %c0_i32_0 = arith.constant 0 : i32
    %c0_i32_1 = arith.constant 0 : i32
    return %c0_i32, %c0_i32_0 : i32, i32
  }
  func.func @transform_3(%arg0: i32) -> (i32, i32, i32) {
    %c0_i32 = arith.constant 0 : i32
    %c0_i32_0 = arith.constant 0 : i32
    %c0_i32_1 = arith.constant 0 : i32
    return %arg0, %c0_i32, %c0_i32_0 : i32, i32, i32
  }
}

module attributes {stable_mosaic.version = 11 : i64} {
  func.func @_fc_kernel(%arg0: i32, %arg1: memref<8x2304xbf16, #tpu.memory_space<vmem>>, %arg2: memref<2304x600xbf16, #tpu.memory_space<vmem>>, %arg3: memref<1x600xf32, #tpu.memory_space<vmem>>, %arg4: memref<600x120xbf16, #tpu.memory_space<vmem>>, %arg5: memref<1x120xf32, #tpu.memory_space<vmem>>, %arg6: memref<120x128xbf16, #tpu.memory_space<vmem>>, %arg7: memref<1x128xf32, #tpu.memory_space<vmem>>, %arg8: memref<8x128xf32, #tpu.memory_space<vmem>>) attributes {dimension_semantics = [#tpu.dimension_semantics<parallel>], iteration_bounds = array<i64: 1>, scalar_prefetch = 0 : i64, scratch_operands = 0 : i64, tpu.core_type = #tpu.core_type<tc>, window_params = [{transform_indices = @transform_0, window_bounds = array<i64: 8, 2304>}, {pipeline_mode = #tpu.pipeline_mode<synchronous>, transform_indices = @transform_1, window_bounds = array<i64: 2304, 600>}, {pipeline_mode = #tpu.pipeline_mode<synchronous>, transform_indices = @transform_2, window_bounds = array<i64: 1, 600>}, {pipeline_mode = #tpu.pipeline_mode<synchronous>, transform_indices = @transform_3, window_bounds = array<i64: 600, 120>}, {pipeline_mode = #tpu.pipeline_mode<synchronous>, transform_indices = @transform_4, window_bounds = array<i64: 1, 120>}, {pipeline_mode = #tpu.pipeline_mode<synchronous>, transform_indices = @transform_5, window_bounds = array<i64: 120, 128>}, {pipeline_mode = #tpu.pipeline_mode<synchronous>, transform_indices = @transform_6, window_bounds = array<i64: 1, 128>}, {transform_indices = @transform_7, window_bounds = array<i64: 8, 128>}]} {
    %c0 = arith.constant 0 : index
    %c0_0 = arith.constant 0 : index
    %0 = vector.load %arg1[%c0, %c0_0] : memref<8x2304xbf16, #tpu.memory_space<vmem>>, vector<8x2304xbf16>
    %c0_1 = arith.constant 0 : index
    %c0_2 = arith.constant 0 : index
    %1 = vector.load %arg2[%c0_1, %c0_2] : memref<2304x600xbf16, #tpu.memory_space<vmem>>, vector<2304x600xbf16>
    %cst = arith.constant dense<0.000000e+00> : vector<8x600xf32>
    %2 = tpu.matmul %0, %1, %cst {dimension_numbers = #tpu.dot_dimension_numbers<[1], [0], [0], [1], [0, 0, 1, 1], [], []>} : vector<8x2304xbf16>, vector<2304x600xbf16>, vector<8x600xf32> -> vector<8x600xf32>
    %c0_3 = arith.constant 0 : index
    %c0_4 = arith.constant 0 : index
    %3 = vector.load %arg3[%c0_3, %c0_4] : memref<1x600xf32, #tpu.memory_space<vmem>>, vector<1x600xf32>
    %4 = vector.broadcast %3 : vector<1x600xf32> to vector<8x600xf32>
    %5 = arith.addf %2, %4 : vector<8x600xf32>
    %6 = arith.truncf %5 : vector<8x600xf32> to vector<8x600xbf16>
    %c0_5 = arith.constant 0 : index
    %c0_6 = arith.constant 0 : index
    %7 = vector.load %arg4[%c0_5, %c0_6] : memref<600x120xbf16, #tpu.memory_space<vmem>>, vector<600x120xbf16>
    %cst_7 = arith.constant dense<0.000000e+00> : vector<8x120xf32>
    %8 = tpu.matmul %6, %7, %cst_7 {dimension_numbers = #tpu.dot_dimension_numbers<[1], [0], [0], [1], [0, 0, 1, 1], [], []>} : vector<8x600xbf16>, vector<600x120xbf16>, vector<8x120xf32> -> vector<8x120xf32>
    %c0_8 = arith.constant 0 : index
    %c0_9 = arith.constant 0 : index
    %9 = vector.load %arg5[%c0_8, %c0_9] : memref<1x120xf32, #tpu.memory_space<vmem>>, vector<1x120xf32>
    %10 = vector.broadcast %9 : vector<1x120xf32> to vector<8x120xf32>
    %11 = arith.addf %8, %10 : vector<8x120xf32>
    %12 = arith.truncf %11 : vector<8x120xf32> to vector<8x120xbf16>
    %c0_10 = arith.constant 0 : index
    %c0_11 = arith.constant 0 : index
    %13 = vector.load %arg6[%c0_10, %c0_11] : memref<120x128xbf16, #tpu.memory_space<vmem>>, vector<120x128xbf16>
    %cst_12 = arith.constant dense<0.000000e+00> : vector<8x128xf32>
    %14 = tpu.matmul %12, %13, %cst_12 {dimension_numbers = #tpu.dot_dimension_numbers<[1], [0], [0], [1], [0, 0, 1, 1], [], []>} : vector<8x120xbf16>, vector<120x128xbf16>, vector<8x128xf32> -> vector<8x128xf32>
    %c0_13 = arith.constant 0 : index
    %c0_14 = arith.constant 0 : index
    %15 = vector.load %arg7[%c0_13, %c0_14] : memref<1x128xf32, #tpu.memory_space<vmem>>, vector<1x128xf32>
    %16 = vector.broadcast %15 : vector<1x128xf32> to vector<8x128xf32>
    %17 = arith.addf %14, %16 : vector<8x128xf32>
    %c0_15 = arith.constant 0 : index
    %c0_16 = arith.constant 0 : index
    %18 = vector.load %arg8[%c0_15, %c0_16] : memref<8x128xf32, #tpu.memory_space<vmem>>, vector<8x128xf32>
    tpu.vector_store %arg8[%c0_15, %c0_16], %17 {strides = array<i32>} : memref<8x128xf32, #tpu.memory_space<vmem>>, vector<8x128xf32>,
    return
  }
  func.func @transform_0(%arg0: i32) -> (i32, i32) {
    %c0_i32 = arith.constant 0 : i32
    %c0_i32_0 = arith.constant 0 : i32
    return %arg0, %c0_i32 : i32, i32
  }
  func.func @transform_1(%arg0: i32) -> (i32, i32) {
    %c0_i32 = arith.constant 0 : i32
    %c0_i32_0 = arith.constant 0 : i32
    %c0_i32_1 = arith.constant 0 : i32
    return %c0_i32, %c0_i32_0 : i32, i32
  }
  func.func @transform_2(%arg0: i32) -> (i32, i32) {
    %c0_i32 = arith.constant 0 : i32
    %c0_i32_0 = arith.constant 0 : i32
    %c0_i32_1 = arith.constant 0 : i32
    return %c0_i32, %c0_i32_0 : i32, i32
  }
  func.func @transform_3(%arg0: i32) -> (i32, i32) {
    %c0_i32 = arith.constant 0 : i32
    %c0_i32_0 = arith.constant 0 : i32
    %c0_i32_1 = arith.constant 0 : i32
    return %c0_i32, %c0_i32_0 : i32, i32
  }
  func.func @transform_4(%arg0: i32) -> (i32, i32) {
    %c0_i32 = arith.constant 0 : i32
    %c0_i32_0 = arith.constant 0 : i32
    %c0_i32_1 = arith.constant 0 : i32
    return %c0_i32, %c0_i32_0 : i32, i32
  }
  func.func @transform_5(%arg0: i32) -> (i32, i32) {
    %c0_i32 = arith.constant 0 : i32
    %c0_i32_0 = arith.constant 0 : i32
    %c0_i32_1 = arith.constant 0 : i32
    return %c0_i32, %c0_i32_0 : i32, i32
  }
  func.func @transform_6(%arg0: i32) -> (i32, i32) {
    %c0_i32 = arith.constant 0 : i32
    %c0_i32_0 = arith.constant 0 : i32
    %c0_i32_1 = arith.constant 0 : i32
    return %c0_i32, %c0_i32_0 : i32, i32
  }
  func.func @transform_7(%arg0: i32) -> (i32, i32) {
    %c0_i32 = arith.constant 0 : i32
    %c0_i32_0 = arith.constant 0 : i32
    return %arg0, %c0_i32 : i32, i32
  }
}

</mosaic_0001>

<llo_original>
// kernel: fashion_cnn_forward.3
$region0: #{fashion_cnn_forward.3}
  #allocation0 [shape = 'u32[]', space=smem, size = 0x4, offset = 0x4, fixed_abs, tag = 'smem constant byte address 0x4 - core index']
  #allocation1 [shape = 'u32[72,128]{1,0:T(1,128)}', space=vmem, size = 0x9000, scoped, tag = 'internal scratch']
  %s0 = inlined_call_operand.vmem [shape: bf16[2,4,9,196], index: 0, kind: input, shape index: {}]
  %s1 = inlined_call_operand.vmem [shape: bf16[32,9], index: 1, kind: input, shape index: {}]
  %s2 = inlined_call_operand.vmem [shape: f32[32,1], index: 2, kind: input, shape index: {}]
  %s3 = inlined_call_operand.vmem [shape: bf16[2,32,196], index: 3, kind: output, shape index: {}]
  %s4 = sld [smem:[#allocation0]]
  $region45: #{fashion_cnn_forward.3} parent=0
    _
  %s6 = ssub.s32 1, %s4
  %s7 = scalar_select 0, %s6, %s4
  loop: start=0, step=1, limit=4
  $region2: #{fashion_cnn_forward.3} parent=0 // loop_pre_header
    _
  $region3: #{fashion_cnn_forward.3} parent=0 // loop_header
    %s9 = sphi 0, %s13
    %p10 = scmp.ge.s32.totalorder %s9, 4
    %s19 = sphi 0, %s21
    %s22 = sphi 0, %s19
    %s23 = sphi 0, %s22
    %s39 = sphi 0, %s23
    %s43 = sphi 0, %s43
    %s45 = sphi 0, %s43
    %s46 = sphi 0, %s45
    %s60 = sphi 0, %s46
    %s64 = sphi 0, %s64
    %s66 = sphi 0, %s64
    %s67 = sphi 0, %s66
    %s81 = sphi 0, %s67
    %s87 = sphi 0, %s89
    %s90 = sphi 0, %s87
    %s91 = sphi 0, %s90
    %s107 = sphi 0, %s91
  $region4: #{fashion_cnn_forward.3} parent=0 // loop_header_branch
    %12 = sbr.rel (%p10) target = $region8
  $region5: #{fashion_cnn_forward.3} parent=0 // loop_body
    %s14 = ssub.s32 %s9, 1
    %s15 = ssub.s32 %s9, 2
    %s16 = sadd.s32 %s9, 1
    %s17 = ssub.s32 %s9, %s16
    %p18 = scmp.eq.s32.totalorder %s17, 0
    %s20 = sadd.s32 %s19, 1
    %s21 = scalar_select %p18, %s19, %s20
    %p24 = pneg %p18
    %p25 = scmp.eq.s32.totalorder %s9, 1
    %p26 = por %p24, %p25
    %p27 = scmp.ne.s32.totalorder %s19, %s22
    %p28 = scmp.eq.s32.totalorder %s9, 0
    %p29 = por %p27, %p28
    %p30 = scmp.ne.s32.totalorder %s19, %s22
    %p31 = scmp.eq.s32.totalorder %s14, 1
    %p32 = por %p30, %p31
    %p33 = scmp.ne.s32.totalorder %s22, %s23
    %p34 = scmp.eq.s32.totalorder %s14, 0
    %p35 = por %p33, %p34
    %p36 = scmp.ne.s32.totalorder %s22, %s23
    %p37 = scmp.eq.s32.totalorder %s15, 1
    %p38 = por %p36, %p37
    %p40 = scmp.ne.s32.totalorder %s23, %s39
    %p41 = scmp.eq.s32.totalorder %s15, 0
    %p42 = por %p40, %p41
    %s44 = sadd.s32 %s43, 1
    %p47 = scmp.eq.s32.totalorder %s9, 1
    %p48 = scmp.ne.s32.totalorder %s43, %s45
    %p49 = scmp.eq.s32.totalorder %s9, 0
    %p50 = por %p48, %p49
    %p51 = scmp.ne.s32.totalorder %s43, %s45
    %p52 = scmp.eq.s32.totalorder %s14, 1
    %p53 = por %p51, %p52
    %p54 = scmp.ne.s32.totalorder %s45, %s46
    %p55 = scmp.eq.s32.totalorder %s14, 0
    %p56 = por %p54, %p55
    %p57 = scmp.ne.s32.totalorder %s45, %s46
    %p58 = scmp.eq.s32.totalorder %s15, 1
    %p59 = por %p57, %p58
    %p61 = scmp.ne.s32.totalorder %s46, %s60
    %p62 = scmp.eq.s32.totalorder %s15, 0
    %p63 = por %p61, %p62
    %s65 = sadd.s32 %s64, 1
    %p68 = scmp.eq.s32.totalorder %s9, 1
    %p69 = scmp.ne.s32.totalorder %s64, %s66
    %p70 = scmp.eq.s32.totalorder %s9, 0
    %p71 = por %p69, %p70
    %p72 = scmp.ne.s32.totalorder %s64, %s66
    %p73 = scmp.eq.s32.totalorder %s14, 1
    %p74 = por %p72, %p73
    %p75 = scmp.ne.s32.totalorder %s66, %s67
    %p76 = scmp.eq.s32.totalorder %s14, 0
    %p77 = por %p75, %p76
    %p78 = scmp.ne.s32.totalorder %s66, %s67
    %p79 = scmp.eq.s32.totalorder %s15, 1
    %p80 = por %p78, %p79
    %p82 = scmp.ne.s32.totalorder %s67, %s81
    %p83 = scmp.eq.s32.totalorder %s15, 0
    %p84 = por %p82, %p83
    %s85 = ssub.s32 %s9, %s16
    %p86 = scmp.eq.s32.totalorder %s85, 0
    %s88 = sadd.s32 %s87, 1
    %s89 = scalar_select %p86, %s87, %s88
    %p92 = pneg %p86
    %p93 = scmp.eq.s32.totalorder %s9, 1
    %p94 = por %p92, %p93
    %p95 = scmp.ne.s32.totalorder %s87, %s90
    %p96 = scmp.eq.s32.totalorder %s9, 0
    %p97 = por %p95, %p96
    %p98 = scmp.ne.s32.totalorder %s87, %s90
    %p99 = scmp.eq.s32.totalorder %s14, 1
    %p100 = por %p98, %p99
    %p101 = scmp.ne.s32.totalorder %s90, %s91
    %p102 = scmp.eq.s32.totalorder %s14, 0
    %p103 = por %p101, %p102
    %p104 = scmp.ne.s32.totalorder %s90, %s91
    %p105 = scmp.eq.s32.totalorder %s15, 1
    %p106 = por %p104, %p105
    %p108 = scmp.ne.s32.totalorder %s91, %s107
    %p109 = scmp.eq.s32.totalorder %s15, 0
    %p110 = por %p108, %p109
    %p111 = scmp.le.s32.totalorder 1, %s9
    %p112 = scmp.lt.s32.totalorder %s9, 3
    %p113 = pnand %p111, %p112
    %p114 = pneg %p113
    // Predicated region
    $region9: #{fashion_cnn_forward.3} parent=5 // pred_check
      _
    $region10: #{fashion_cnn_forward.3} parent=5 // pred_check_branch
      %116 = sbr.rel (%p113) target = $region12
    $region11: #{fashion_cnn_forward.3} parent=5 // pred_region
      %s117 = ssub.s32 %s9, 1
      // Predicated region
      $region13: #{fashion_cnn_forward.3} parent=11 // pred_check
        %p118 = pneg %p56
      $region14: #{fashion_cnn_forward.3} parent=11 // pred_check_branch
        %120 = sbr.rel (%p118) target = $region16
      $region15: #{fashion_cnn_forward.3} parent=11 // pred_region
        _
      $region16: #{fashion_cnn_forward.3} parent=11 // pred_fallthru
        _
      // Predicated region
      $region17: #{fashion_cnn_forward.3} parent=11 // pred_check
        %p121 = pneg %p77
      $region18: #{fashion_cnn_forward.3} parent=11 // pred_check_branch
        %123 = sbr.rel (%p121) target = $region20
      $region19: #{fashion_cnn_forward.3} parent=11 // pred_region
        _
      $region20: #{fashion_cnn_forward.3} parent=11 // pred_fallthru
        _
    $region12: #{fashion_cnn_forward.3} parent=5 // pred_fallthru
      _
    %p124 = scmp.lt.s32.totalorder %s9, 2
    // Predicated region
    $region21: #{fashion_cnn_forward.3} parent=5 // pred_check
      %p125 = pneg %p124
    $region22: #{fashion_cnn_forward.3} parent=5 // pred_check_branch
      %127 = sbr.rel (%p125) target = $region24
    $region23: #{fashion_cnn_forward.3} parent=5 // pred_region
      // Predicated region
      $region25: #{fashion_cnn_forward.3} parent=23 // pred_check
        %p128 = pneg %p29
      $region26: #{fashion_cnn_forward.3} parent=23 // pred_check_branch
        %130 = sbr.rel (%p128) target = $region28
      $region27: #{fashion_cnn_forward.3} parent=23 // pred_region
        %p131 = scmp.lt.s32.totalorder %s9, 1
        %s132 = scalar_select %p131, %s9, 1
        %s133 = smul.addr %s132, 16
        %s134 = smul.addr %s133, 4
        %s135 = scalar_lea.vmem %s0, %s134
      $region28: #{fashion_cnn_forward.3} parent=23 // pred_fallthru
        _
    $region24: #{fashion_cnn_forward.3} parent=5 // pred_fallthru
      _
    %p136 = scmp.le.s32.totalorder 1, %s9
    %p137 = scmp.lt.s32.totalorder %s9, 3
    %p138 = pnand %p136, %p137
    %p139 = pneg %p138
    // Predicated region
    $region29: #{fashion_cnn_forward.3} parent=5 // pred_check
      _
    $region30: #{fashion_cnn_forward.3} parent=5 // pred_check_branch
      %141 = sbr.rel (%p138) target = $region32
    $region31: #{fashion_cnn_forward.3} parent=5 // pred_region
      %s142 = ssub.s32 %s9, 1
      %p143 = scmp.lt.s32.totalorder %s14, 1
      %s144 = scalar_select %p143, %s14, 1
      %s145 = smul.addr %s144, 16
      %s146 = smul.addr %s145, 4
      %s147 = scalar_lea.vmem %s0, %s146
      %p148 = pneg %p35
      %p149 = pneg %p32
      %p150 = pneg %p56
      %p151 = pneg %p53
      %p152 = pneg %p77
      %p153 = pneg %p74
      %p154 = pneg %p103
      %p155 = pneg %p100
      %p156 = scmp.lt.s32.totalorder %s14, 1
      %s157 = scalar_select %p156, %s14, 1
      %s158 = smul.addr %s157, 8
      %s159 = smul.addr %s158, 4
      %s160 = scalar_lea.vmem %s3, %s159
      %p161 = scmp.lt.s32.totalorder %s14, 1
      %s162 = scalar_select %p161, %s14, 1
      %s163 = smul.addr %s162, 16
      %s164 = smul.addr %s163, 4
      %s165 = scalar_lea.vmem %s0, %s164
      %p166 = scmp.lt.s32.totalorder %s14, 1
      %s167 = scalar_select %p166, %s14, 1
      %s168 = smul.addr %s167, 8
      %s169 = smul.addr %s168, 4
      %s170 = scalar_lea.vmem %s3, %s169
      %v172 = vld [vmem:[%s1] sm:$0xf]
      %v173 = vld [vmem:[%s1 + $0x4] sm:$0xf]
      %v174 = vld [vmem:[%s1 + $0x8] sm:$0xf]
      %v175 = vld [vmem:[%s1 + $0xc] sm:$0xf]
      %v176 = vld [vmem:[%s165] sm:$0xff]
      %v177 = vld [vmem:[%s165 + $0x8] sm:$0x11]
      %v182 = vunpack.c.l.b16 %v172
      %v183 = vunpack.c.l.b16 %v173
      %v184 = vunpack.c.l.b16 %v174
      %v185 = vunpack.c.l.b16 %v175
      %v186 = vpack.c.b16 %v183, %v182
      %v187 = vpack.c.b16 %v185, %v184
      %v190 = vunpack.c.l.b16 %v176
      %v191 = vunpack.c.h.b16 %v176
      %v192 = vunpack.c.l.b16 %v177
      %v193 = vunpack.c.h.b16 %v177
      %v194 = vpack.c.b16 %v192, %v190
      %v195 = vpack.c.b16 %v193, %v191
      %vm196 = vcmask 72704
      %v198 = vsel %vm196, %v186, 0
      %v201 = vsel %vm196, %v187, 0
      %vm203 = vcmask 1043456
      %vm204 = vcmask 1044480
      %v205 = vsel %vm203, 4294967295, 65535
      %v206 = vsel %vm204, %v205, 0
      %v208 = vand.u32 %v194, %v206
      %v211 = vand.u32 %v195, %v206
      %213 = vmatpush.bf16.msra.mxu0 0
      %214 = vmatpush.bf16.msra.mxu0 0
      %215 = vmatpush.bf16.msra.mxu0 0
      %216 = vmatpush.bf16.msra.mxu0 0
      %217 = vmatpush.bf16.msra.mxu0 0
      %218 = vmatpush.bf16.msra.mxu0 0
      %219 = vmatpush.bf16.msra.mxu0 0
      %220 = vmatpush.bf16.msra.mxu0 %v208
      %221 = vmatmul.bf16.gmra.mxu0 %v198
      %v222 = vpop.f32.mrf.mxu0
      %v223 = vadd.f32 0.0, %v222
      %v224 = vpop.f32.mrf.mxu0
      %v225 = vadd.f32 0.0, %v224
      %226 = vmatmul.bf16.gmra.mxu0 %v201
      %v227 = vpop.f32.mrf.mxu0
      %v228 = vadd.f32 0.0, %v227
      %v229 = vpop.f32.mrf.mxu0
      %v230 = vadd.f32 0.0, %v229
      %231 = vdwg.mxu0
      %232 = vmatpush.bf16.msra.mxu0 0
      %233 = vmatpush.bf16.msra.mxu0 0
      %234 = vmatpush.bf16.msra.mxu0 0
      %235 = vmatpush.bf16.msra.mxu0 0
      %236 = vmatpush.bf16.msra.mxu0 0
      %237 = vmatpush.bf16.msra.mxu0 0
      %238 = vmatpush.bf16.msra.mxu0 0
      %239 = vmatpush.bf16.msra.mxu0 %v211
      %240 = vmatmul.bf16.gmra.mxu0 %v198
      %v241 = vpop.f32.mrf.mxu0
      %v242 = vadd.f32 0.0, %v241
      %v243 = vpop.f32.mrf.mxu0
      %v244 = vadd.f32 0.0, %v243
      %245 = vmatmul.bf16.gmra.mxu0 %v201
      %v246 = vpop.f32.mrf.mxu0
      %v247 = vadd.f32 0.0, %v246
      %v248 = vpop.f32.mrf.mxu0
      %v249 = vadd.f32 0.0, %v248
      %250 = vdwg.mxu0
      %s251 = scalar_lea.vmem %s165, 16
      %v252 = vld [vmem:[%s251] sm:$0xff]
      %v253 = vld [vmem:[%s251 + $0x8] sm:$0x11]
      %v256 = vunpack.c.l.b16 %v252
      %v257 = vunpack.c.h.b16 %v252
      %v258 = vunpack.c.l.b16 %v253
      %v259 = vunpack.c.h.b16 %v253
      %v260 = vpack.c.b16 %v258, %v256
      %v261 = vpack.c.b16 %v259, %v257
      %v263 = vand.u32 %v260, %v206
      %v266 = vand.u32 %v261, %v206
      %268 = vmatpush.bf16.msra.mxu0 0
      %269 = vmatpush.bf16.msra.mxu0 0
      %270 = vmatpush.bf16.msra.mxu0 0
      %271 = vmatpush.bf16.msra.mxu0 0
      %272 = vmatpush.bf16.msra.mxu0 0
      %273 = vmatpush.bf16.msra.mxu0 0
      %274 = vmatpush.bf16.msra.mxu0 0
      %275 = vmatpush.bf16.msra.mxu0 %v263
      %276 = vmatmul.bf16.gmra.mxu0 %v198
      %v277 = vpop.f32.mrf.mxu0
      %v278 = vadd.f32 0.0, %v277
      %v279 = vpop.f32.mrf.mxu0
      %v280 = vadd.f32 0.0, %v279
      %281 = vmatmul.bf16.gmra.mxu0 %v201
      %v282 = vpop.f32.mrf.mxu0
      %v283 = vadd.f32 0.0, %v282
      %v284 = vpop.f32.mrf.mxu0
      %v285 = vadd.f32 0.0, %v284
      %286 = vdwg.mxu0
      %287 = vmatpush.bf16.msra.mxu0 0
      %288 = vmatpush.bf16.msra.mxu0 0
      %289 = vmatpush.bf16.msra.mxu0 0
      %290 = vmatpush.bf16.msra.mxu0 0
      %291 = vmatpush.bf16.msra.mxu0 0
      %292 = vmatpush.bf16.msra.mxu0 0
      %293 = vmatpush.bf16.msra.mxu0 0
      %294 = vmatpush.bf16.msra.mxu0 %v266
      %295 = vmatmul.bf16.gmra.mxu0 %v198
      %v296 = vpop.f32.mrf.mxu0
      %v297 = vadd.f32 0.0, %v296
      %v298 = vpop.f32.mrf.mxu0
      %v299 = vadd.f32 0.0, %v298
      %300 = vmatmul.bf16.gmra.mxu0 %v201
      %v301 = vpop.f32.mrf.mxu0
      %v302 = vadd.f32 0.0, %v301
      %v303 = vpop.f32.mrf.mxu0
      %v304 = vadd.f32 0.0, %v303
      %305 = vdwg.mxu0
      %v306 = vmax.f32 %v223, %v278
      %v307 = vmax.f32 %v242, %v297
      %v308 = vmax.f32 %v225, %v280
      %v309 = vmax.f32 %v244, %v299
      %v310 = vmax.f32 %v228, %v283
      %v311 = vmax.f32 %v247, %v302
      %v312 = vmax.f32 %v230, %v285
      %v313 = vmax.f32 %v249, %v304
      %s314 = scalar_lea.vmem %s165, 32
      %v315 = vld [vmem:[%s314] sm:$0xff]
      %v316 = vld [vmem:[%s314 + $0x8] sm:$0x11]
      %v319 = vunpack.c.l.b16 %v315
      %v320 = vunpack.c.h.b16 %v315
      %v321 = vunpack.c.l.b16 %v316
      %v322 = vunpack.c.h.b16 %v316
      %v323 = vpack.c.b16 %v321, %v319
      %v324 = vpack.c.b16 %v322, %v320
      %v326 = vand.u32 %v323, %v206
      %v329 = vand.u32 %v324, %v206
      %331 = vmatpush.bf16.msra.mxu0 0
      %332 = vmatpush.bf16.msra.mxu0 0
      %333 = vmatpush.bf16.msra.mxu0 0
      %334 = vmatpush.bf16.msra.mxu0 0
      %335 = vmatpush.bf16.msra.mxu0 0
      %336 = vmatpush.bf16.msra.mxu0 0
      %337 = vmatpush.bf16.msra.mxu0 0
      %338 = vmatpush.bf16.msra.mxu0 %v326
      %339 = vmatmul.bf16.gmra.mxu0 %v198
      %v340 = vpop.f32.mrf.mxu0
      %v341 = vadd.f32 0.0, %v340
      %v342 = vpop.f32.mrf.mxu0
      %v343 = vadd.f32 0.0, %v342
      %344 = vmatmul.bf16.gmra.mxu0 %v201
      %v345 = vpop.f32.mrf.mxu0
      %v346 = vadd.f32 0.0, %v345
      %v347 = vpop.f32.mrf.mxu0
      %v348 = vadd.f32 0.0, %v347
      %349 = vdwg.mxu0
      %350 = vmatpush.bf16.msra.mxu0 0
      %351 = vmatpush.bf16.msra.mxu0 0
      %352 = vmatpush.bf16.msra.mxu0 0
      %353 = vmatpush.bf16.msra.mxu0 0
      %354 = vmatpush.bf16.msra.mxu0 0
      %355 = vmatpush.bf16.msra.mxu0 0
      %356 = vmatpush.bf16.msra.mxu0 0
      %357 = vmatpush.bf16.msra.mxu0 %v329
      %358 = vmatmul.bf16.gmra.mxu0 %v198
      %v359 = vpop.f32.mrf.mxu0
      %v360 = vadd.f32 0.0, %v359
      %v361 = vpop.f32.mrf.mxu0
      %v362 = vadd.f32 0.0, %v361
      %363 = vmatmul.bf16.gmra.mxu0 %v201
      %v364 = vpop.f32.mrf.mxu0
      %v365 = vadd.f32 0.0, %v364
      %v366 = vpop.f32.mrf.mxu0
      %v367 = vadd.f32 0.0, %v366
      %368 = vdwg.mxu0
      %v369 = vmax.f32 %v306, %v341
      %v370 = vmax.f32 %v307, %v360
      %v371 = vmax.f32 %v308, %v343
      %v372 = vmax.f32 %v309, %v362
      %v373 = vmax.f32 %v310, %v346
      %v374 = vmax.f32 %v311, %v365
      %v375 = vmax.f32 %v312, %v348
      %v376 = vmax.f32 %v313, %v367
      %s377 = scalar_lea.vmem %s165, 48
      %v378 = vld [vmem:[%s377] sm:$0xff]
      %v379 = vld [vmem:[%s377 + $0x8] sm:$0x11]
      %v382 = vunpack.c.l.b16 %v378
      %v383 = vunpack.c.h.b16 %v378
      %v384 = vunpack.c.l.b16 %v379
      %v385 = vunpack.c.h.b16 %v379
      %v386 = vpack.c.b16 %v384, %v382
      %v387 = vpack.c.b16 %v385, %v383
      %v389 = vand.u32 %v386, %v206
      %v392 = vand.u32 %v387, %v206
      %394 = vmatpush.bf16.msra.mxu0 0
      %395 = vmatpush.bf16.msra.mxu0 0
      %396 = vmatpush.bf16.msra.mxu0 0
      %397 = vmatpush.bf16.msra.mxu0 0
      %398 = vmatpush.bf16.msra.mxu0 0
      %399 = vmatpush.bf16.msra.mxu0 0
      %400 = vmatpush.bf16.msra.mxu0 0
      %401 = vmatpush.bf16.msra.mxu0 %v389
      %402 = vmatmul.bf16.gmra.mxu0 %v198
      %v403 = vpop.f32.mrf.mxu0
      %v404 = vadd.f32 0.0, %v403
      %v405 = vpop.f32.mrf.mxu0
      %v406 = vadd.f32 0.0, %v405
      %407 = vmatmul.bf16.gmra.mxu0 %v201
      %v408 = vpop.f32.mrf.mxu0
      %v409 = vadd.f32 0.0, %v408
      %v410 = vpop.f32.mrf.mxu0
      %v411 = vadd.f32 0.0, %v410
      %412 = vdwg.mxu0
      %413 = vmatpush.bf16.msra.mxu0 0
      %414 = vmatpush.bf16.msra.mxu0 0
      %415 = vmatpush.bf16.msra.mxu0 0
      %416 = vmatpush.bf16.msra.mxu0 0
      %417 = vmatpush.bf16.msra.mxu0 0
      %418 = vmatpush.bf16.msra.mxu0 0
      %419 = vmatpush.bf16.msra.mxu0 0
      %420 = vmatpush.bf16.msra.mxu0 %v392
      %421 = vmatmul.bf16.gmra.mxu0 %v198
      %v422 = vpop.f32.mrf.mxu0
      %v423 = vadd.f32 0.0, %v422
      %v424 = vpop.f32.mrf.mxu0
      %v425 = vadd.f32 0.0, %v424
      %426 = vmatmul.bf16.gmra.mxu0 %v201
      %v427 = vpop.f32.mrf.mxu0
      %v428 = vadd.f32 0.0, %v427
      %v429 = vpop.f32.mrf.mxu0
      %v430 = vadd.f32 0.0, %v429
      %431 = vdwg.mxu0
      %v432 = vmax.f32 %v369, %v404
      %v433 = vmax.f32 %v370, %v423
      %v434 = vmax.f32 %v371, %v406
      %v435 = vmax.f32 %v372, %v425
      %v436 = vmax.f32 %v373, %v409
      %v437 = vmax.f32 %v374, %v428
      %v438 = vmax.f32 %v375, %v411
      %v439 = vmax.f32 %v376, %v430
      %v440 = vld [vmem:[%s2] sm:$0xff]
      %v441 = vld [vmem:[%s2 + $0x8] sm:$0xff]
      %v442 = vld [vmem:[%s2 + $0x10] sm:$0xff]
      %v443 = vld [vmem:[%s2 + $0x18] sm:$0xff]
      %445 = vset.pattern.permute.xlu0 0
      %446 = vperm.xlu0 %445, %v440
      %v447 = vpop.permute.xlu0 %446
      %450 = vset.pattern.permute.xlu0 0
      %451 = vperm.xlu0 %450, %v441
      %v452 = vpop.permute.xlu0 %451
      %455 = vset.pattern.permute.xlu0 0
      %456 = vperm.xlu0 %455, %v442
      %v457 = vpop.permute.xlu0 %456
      %460 = vset.pattern.permute.xlu0 0
      %461 = vperm.xlu0 %460, %v443
      %v462 = vpop.permute.xlu0 %461
      %v464 = vadd.f32 %v432, %v447
      %v465 = vadd.f32 %v433, %v447
      %v466 = vadd.f32 %v434, %v452
      %v467 = vadd.f32 %v435, %v452
      %v468 = vadd.f32 %v436, %v457
      %v469 = vadd.f32 %v437, %v457
      %v470 = vadd.f32 %v438, %v462
      %v471 = vadd.f32 %v439, %v462
      %v472 = vmax.f32 %v464, 0.0
      %v473 = vmax.f32 %v465, 0.0
      %v474 = vmax.f32 %v466, 0.0
      %v475 = vmax.f32 %v467, 0.0
      %v476 = vmax.f32 %v468, 0.0
      %v477 = vmax.f32 %v469, 0.0
      %v478 = vmax.f32 %v470, 0.0
      %v479 = vmax.f32 %v471, 0.0
      %v480 = vpack.c.bf16 %v473, %v472
      %v481 = vpack.c.bf16 %v475, %v474
      %v482 = vpack.c.bf16 %v477, %v476
      %v483 = vpack.c.bf16 %v479, %v478
      %vm484 = vcmask 556036
      %vm485 = vmor %vm484, %vm203
      %486 = vst.msk [vmem:[%s170] sm:$0xff] %vm485, %v480
      %487 = vst.msk [vmem:[%s170 + $0x8] sm:$0xff] %vm485, %v481
      %488 = vst.msk [vmem:[%s170 + $0x10] sm:$0xff] %vm485, %v482
      %489 = vst.msk [vmem:[%s170 + $0x18] sm:$0xff] %vm485, %v483
      %p490 = scmp.lt.s32.totalorder %s14, 1
      %s491 = scalar_select %p490, %s14, 1
      %s492 = smul.addr %s491, 8
      %s493 = smul.addr %s492, 4
      %s494 = scalar_lea.vmem %s3, %s493
      // Predicated region
      $region33: #{fashion_cnn_forward.3} parent=31 // pred_check
        %p495 = pneg %p100
      $region34: #{fashion_cnn_forward.3} parent=31 // pred_check_branch
        %497 = sbr.rel (%p495) target = $region36
      $region35: #{fashion_cnn_forward.3} parent=31 // pred_region
        _
      $region36: #{fashion_cnn_forward.3} parent=31 // pred_fallthru
        _
    $region32: #{fashion_cnn_forward.3} parent=5 // pred_fallthru
      _
    %p498 = scmp.le.s32.totalorder 2, %s9
    // Predicated region
    $region37: #{fashion_cnn_forward.3} parent=5 // pred_check
      %p499 = pneg %p498
    $region38: #{fashion_cnn_forward.3} parent=5 // pred_check_branch
      %501 = sbr.rel (%p499) target = $region40
    $region39: #{fashion_cnn_forward.3} parent=5 // pred_region
      %s502 = ssub.s32 %s9, 2
      // Predicated region
      $region41: #{fashion_cnn_forward.3} parent=39 // pred_check
        %p503 = pneg %p106
      $region42: #{fashion_cnn_forward.3} parent=39 // pred_check_branch
        %505 = sbr.rel (%p503) target = $region44
      $region43: #{fashion_cnn_forward.3} parent=39 // pred_region
        %p506 = scmp.lt.s32.totalorder %s15, 1
        %s507 = scalar_select %p506, %s15, 1
        %s508 = smul.addr %s507, 8
        %s509 = smul.addr %s508, 4
        %s510 = scalar_lea.vmem %s3, %s509
      $region44: #{fashion_cnn_forward.3} parent=39 // pred_fallthru
        _
    $region40: #{fashion_cnn_forward.3} parent=5 // pred_fallthru
      _
  $region6: #{fashion_cnn_forward.3} parent=0 // loop_footer
    %s13 = sadd.s32 1, %s9
  $region7: #{fashion_cnn_forward.3} parent=0 // loop_footer_branch
    %8 = sbr.rel target = $region3
  $region8: #{fashion_cnn_forward.3} parent=0 // loop_exit
    _

// kernel: fashion_cnn_forward.4
$region0: #{fashion_cnn_forward.4}
  #allocation0 [shape = 'u32[]', space=smem, size = 0x4, offset = 0x4, fixed_abs, tag = 'smem constant byte address 0x4 - core index']
  #allocation1 [shape = 'u32[72,128]{1,0:T(1,128)}', space=vmem, size = 0x9000, scoped, tag = 'internal scratch']
  %s0 = inlined_call_operand.vmem [shape: bf16[2,4,288,36], index: 0, kind: input, shape index: {}]
  %s1 = inlined_call_operand.vmem [shape: bf16[64,288], index: 1, kind: input, shape index: {}]
  %s2 = inlined_call_operand.vmem [shape: f32[64,1], index: 2, kind: input, shape index: {}]
  %s3 = inlined_call_operand.vmem [shape: bf16[2,64,36], index: 3, kind: output, shape index: {}]
  %s4 = sld [smem:[#allocation0]]
  $region45: #{fashion_cnn_forward.4} parent=0
    _
  %s6 = ssub.s32 1, %s4
  %s7 = scalar_select 0, %s6, %s4
  loop: start=0, step=1, limit=4
  $region2: #{fashion_cnn_forward.4} parent=0 // loop_pre_header
    _
  $region3: #{fashion_cnn_forward.4} parent=0 // loop_header
    %s9 = sphi 0, %s13
    %p10 = scmp.ge.s32.totalorder %s9, 4
    %s19 = sphi 0, %s21
    %s22 = sphi 0, %s19
    %s23 = sphi 0, %s22
    %s39 = sphi 0, %s23
    %s43 = sphi 0, %s43
    %s45 = sphi 0, %s43
    %s46 = sphi 0, %s45
    %s60 = sphi 0, %s46
    %s64 = sphi 0, %s64
    %s66 = sphi 0, %s64
    %s67 = sphi 0, %s66
    %s81 = sphi 0, %s67
    %s87 = sphi 0, %s89
    %s90 = sphi 0, %s87
    %s91 = sphi 0, %s90
    %s107 = sphi 0, %s91
  $region4: #{fashion_cnn_forward.4} parent=0 // loop_header_branch
    %12 = sbr.rel (%p10) target = $region8
  $region5: #{fashion_cnn_forward.4} parent=0 // loop_body
    %s14 = ssub.s32 %s9, 1
    %s15 = ssub.s32 %s9, 2
    %s16 = sadd.s32 %s9, 1
    %s17 = ssub.s32 %s9, %s16
    %p18 = scmp.eq.s32.totalorder %s17, 0
    %s20 = sadd.s32 %s19, 1
    %s21 = scalar_select %p18, %s19, %s20
    %p24 = pneg %p18
    %p25 = scmp.eq.s32.totalorder %s9, 1
    %p26 = por %p24, %p25
    %p27 = scmp.ne.s32.totalorder %s19, %s22
    %p28 = scmp.eq.s32.totalorder %s9, 0
    %p29 = por %p27, %p28
    %p30 = scmp.ne.s32.totalorder %s19, %s22
    %p31 = scmp.eq.s32.totalorder %s14, 1
    %p32 = por %p30, %p31
    %p33 = scmp.ne.s32.totalorder %s22, %s23
    %p34 = scmp.eq.s32.totalorder %s14, 0
    %p35 = por %p33, %p34
    %p36 = scmp.ne.s32.totalorder %s22, %s23
    %p37 = scmp.eq.s32.totalorder %s15, 1
    %p38 = por %p36, %p37
    %p40 = scmp.ne.s32.totalorder %s23, %s39
    %p41 = scmp.eq.s32.totalorder %s15, 0
    %p42 = por %p40, %p41
    %s44 = sadd.s32 %s43, 1
    %p47 = scmp.eq.s32.totalorder %s9, 1
    %p48 = scmp.ne.s32.totalorder %s43, %s45
    %p49 = scmp.eq.s32.totalorder %s9, 0
    %p50 = por %p48, %p49
    %p51 = scmp.ne.s32.totalorder %s43, %s45
    %p52 = scmp.eq.s32.totalorder %s14, 1
    %p53 = por %p51, %p52
    %p54 = scmp.ne.s32.totalorder %s45, %s46
    %p55 = scmp.eq.s32.totalorder %s14, 0
    %p56 = por %p54, %p55
    %p57 = scmp.ne.s32.totalorder %s45, %s46
    %p58 = scmp.eq.s32.totalorder %s15, 1
    %p59 = por %p57, %p58
    %p61 = scmp.ne.s32.totalorder %s46, %s60
    %p62 = scmp.eq.s32.totalorder %s15, 0
    %p63 = por %p61, %p62
    %s65 = sadd.s32 %s64, 1
    %p68 = scmp.eq.s32.totalorder %s9, 1
    %p69 = scmp.ne.s32.totalorder %s64, %s66
    %p70 = scmp.eq.s32.totalorder %s9, 0
    %p71 = por %p69, %p70
    %p72 = scmp.ne.s32.totalorder %s64, %s66
    %p73 = scmp.eq.s32.totalorder %s14, 1
    %p74 = por %p72, %p73
    %p75 = scmp.ne.s32.totalorder %s66, %s67
    %p76 = scmp.eq.s32.totalorder %s14, 0
    %p77 = por %p75, %p76
    %p78 = scmp.ne.s32.totalorder %s66, %s67
    %p79 = scmp.eq.s32.totalorder %s15, 1
    %p80 = por %p78, %p79
    %p82 = scmp.ne.s32.totalorder %s67, %s81
    %p83 = scmp.eq.s32.totalorder %s15, 0
    %p84 = por %p82, %p83
    %s85 = ssub.s32 %s9, %s16
    %p86 = scmp.eq.s32.totalorder %s85, 0
    %s88 = sadd.s32 %s87, 1
    %s89 = scalar_select %p86, %s87, %s88
    %p92 = pneg %p86
    %p93 = scmp.eq.s32.totalorder %s9, 1
    %p94 = por %p92, %p93
    %p95 = scmp.ne.s32.totalorder %s87, %s90
    %p96 = scmp.eq.s32.totalorder %s9, 0
    %p97 = por %p95, %p96
    %p98 = scmp.ne.s32.totalorder %s87, %s90
    %p99 = scmp.eq.s32.totalorder %s14, 1
    %p100 = por %p98, %p99
    %p101 = scmp.ne.s32.totalorder %s90, %s91
    %p102 = scmp.eq.s32.totalorder %s14, 0
    %p103 = por %p101, %p102
    %p104 = scmp.ne.s32.totalorder %s90, %s91
    %p105 = scmp.eq.s32.totalorder %s15, 1
    %p106 = por %p104, %p105
    %p108 = scmp.ne.s32.totalorder %s91, %s107
    %p109 = scmp.eq.s32.totalorder %s15, 0
    %p110 = por %p108, %p109
    %p111 = scmp.le.s32.totalorder 1, %s9
    %p112 = scmp.lt.s32.totalorder %s9, 3
    %p113 = pnand %p111, %p112
    %p114 = pneg %p113
    // Predicated region
    $region9: #{fashion_cnn_forward.4} parent=5 // pred_check
      _
    $region10: #{fashion_cnn_forward.4} parent=5 // pred_check_branch
      %116 = sbr.rel (%p113) target = $region12
    $region11: #{fashion_cnn_forward.4} parent=5 // pred_region
      %s117 = ssub.s32 %s9, 1
      // Predicated region
      $region13: #{fashion_cnn_forward.4} parent=11 // pred_check
        %p118 = pneg %p56
      $region14: #{fashion_cnn_forward.4} parent=11 // pred_check_branch
        %120 = sbr.rel (%p118) target = $region16
      $region15: #{fashion_cnn_forward.4} parent=11 // pred_region
        _
      $region16: #{fashion_cnn_forward.4} parent=11 // pred_fallthru
        _
      // Predicated region
      $region17: #{fashion_cnn_forward.4} parent=11 // pred_check
        %p121 = pneg %p77
      $region18: #{fashion_cnn_forward.4} parent=11 // pred_check_branch
        %123 = sbr.rel (%p121) target = $region20
      $region19: #{fashion_cnn_forward.4} parent=11 // pred_region
        _
      $region20: #{fashion_cnn_forward.4} parent=11 // pred_fallthru
        _
    $region12: #{fashion_cnn_forward.4} parent=5 // pred_fallthru
      _
    %p124 = scmp.lt.s32.totalorder %s9, 2
    // Predicated region
    $region21: #{fashion_cnn_forward.4} parent=5 // pred_check
      %p125 = pneg %p124
    $region22: #{fashion_cnn_forward.4} parent=5 // pred_check_branch
      %127 = sbr.rel (%p125) target = $region24
    $region23: #{fashion_cnn_forward.4} parent=5 // pred_region
      // Predicated region
      $region25: #{fashion_cnn_forward.4} parent=23 // pred_check
        %p128 = pneg %p29
      $region26: #{fashion_cnn_forward.4} parent=23 // pred_check_branch
        %130 = sbr.rel (%p128) target = $region28
      $region27: #{fashion_cnn_forward.4} parent=23 // pred_region
        %p131 = scmp.lt.s32.totalorder %s9, 1
        %s132 = scalar_select %p131, %s9, 1
        %s133 = smul.addr %s132, 144
        %s134 = smul.addr %s133, 4
        %s135 = scalar_lea.vmem %s0, %s134
      $region28: #{fashion_cnn_forward.4} parent=23 // pred_fallthru
        _
    $region24: #{fashion_cnn_forward.4} parent=5 // pred_fallthru
      _
    %p136 = scmp.le.s32.totalorder 1, %s9
    %p137 = scmp.lt.s32.totalorder %s9, 3
    %p138 = pnand %p136, %p137
    %p139 = pneg %p138
    // Predicated region
    $region29: #{fashion_cnn_forward.4} parent=5 // pred_check
      _
    $region30: #{fashion_cnn_forward.4} parent=5 // pred_check_branch
      %141 = sbr.rel (%p138) target = $region32
    $region31: #{fashion_cnn_forward.4} parent=5 // pred_region
      %s142 = ssub.s32 %s9, 1
      %p143 = scmp.lt.s32.totalorder %s14, 1
      %s144 = scalar_select %p143, %s14, 1
      %s145 = smul.addr %s144, 144
      %s146 = smul.addr %s145, 4
      %s147 = scalar_lea.vmem %s0, %s146
      %p148 = pneg %p35
      %p149 = pneg %p32
      %p150 = pneg %p56
      %p151 = pneg %p53
      %p152 = pneg %p77
      %p153 = pneg %p74
      %p154 = pneg %p103
      %p155 = pneg %p100
      %p156 = scmp.lt.s32.totalorder %s14, 1
      %s157 = scalar_select %p156, %s14, 1
      %s158 = smul.addr %s157, 8
      %s159 = smul.addr %s158, 4
      %s160 = scalar_lea.vmem %s3, %s159
      %p161 = scmp.lt.s32.totalorder %s14, 1
      %s162 = scalar_select %p161, %s14, 1
      %s163 = smul.addr %s162, 144
      %s164 = smul.addr %s163, 4
      %s165 = scalar_lea.vmem %s0, %s164
      %p166 = scmp.lt.s32.totalorder %s14, 1
      %s167 = scalar_select %p166, %s14, 1
      %s168 = smul.addr %s167, 8
      %s169 = smul.addr %s168, 4
      %s170 = scalar_lea.vmem %s3, %s169
      %v172 = vld [vmem:[%s1] sm:$0xff]
      %v173 = vld [vmem:[%s1 + $0x8] sm:$0xf]
      %v174 = vld [vmem:[%s1 + $0xc] sm:$0xff]
      %v175 = vld [vmem:[%s1 + $0x14] sm:$0xf]
      %v176 = vld [vmem:[%s1 + $0x18] sm:$0xff]
      %v177 = vld [vmem:[%s1 + $0x20] sm:$0xf]
      %v178 = vld [vmem:[%s1 + $0x24] sm:$0xff]
      %v179 = vld [vmem:[%s1 + $0x2c] sm:$0xf]
      %v180 = vld [vmem:[%s1 + $0x30] sm:$0xff]
      %v181 = vld [vmem:[%s1 + $0x38] sm:$0xf]
      %v182 = vld [vmem:[%s1 + $0x3c] sm:$0xff]
      %v183 = vld [vmem:[%s1 + $0x44] sm:$0xf]
      %v184 = vld [vmem:[%s1 + $0x48] sm:$0xff]
      %v185 = vld [vmem:[%s1 + $0x50] sm:$0xf]
      %v186 = vld [vmem:[%s1 + $0x54] sm:$0xff]
      %v187 = vld [vmem:[%s1 + $0x5c] sm:$0xf]
      %v188 = vld [vmem:[%s165] sm:$0xf]
      %v189 = vld [vmem:[%s165 + $0x4] sm:$0xf]
      %v190 = vld [vmem:[%s165 + $0x8] sm:$0xf]
      %v191 = vld [vmem:[%s165 + $0xc] sm:$0xf]
      %v192 = vld [vmem:[%s165 + $0x10] sm:$0xf]
      %v193 = vld [vmem:[%s165 + $0x14] sm:$0xf]
      %v194 = vld [vmem:[%s165 + $0x18] sm:$0xf]
      %v195 = vld [vmem:[%s165 + $0x1c] sm:$0xf]
      %v196 = vld [vmem:[%s165 + $0x20] sm:$0xf]
      %v197 = vld [vmem:[%s165 + $0x24] sm:$0xf]
      %v198 = vld [vmem:[%s165 + $0x28] sm:$0xf]
      %v199 = vld [vmem:[%s165 + $0x2c] sm:$0xf]
      %v200 = vld [vmem:[%s165 + $0x30] sm:$0xf]
      %v201 = vld [vmem:[%s165 + $0x34] sm:$0xf]
      %v202 = vld [vmem:[%s165 + $0x38] sm:$0xf]
      %v203 = vld [vmem:[%s165 + $0x3c] sm:$0xf]
      %v204 = vld [vmem:[%s165 + $0x40] sm:$0xf]
      %v205 = vld [vmem:[%s165 + $0x44] sm:$0xf]
      %v206 = vld [vmem:[%s165 + $0x48] sm:$0xf]
      %v207 = vld [vmem:[%s165 + $0x4c] sm:$0xf]
      %v208 = vld [vmem:[%s165 + $0x50] sm:$0xf]
      %v209 = vld [vmem:[%s165 + $0x54] sm:$0xf]
      %v210 = vld [vmem:[%s165 + $0x58] sm:$0xf]
      %v211 = vld [vmem:[%s165 + $0x5c] sm:$0xf]
      %v212 = vld [vmem:[%s165 + $0x60] sm:$0xf]
      %v213 = vld [vmem:[%s165 + $0x64] sm:$0xf]
      %v214 = vld [vmem:[%s165 + $0x68] sm:$0xf]
      %v215 = vld [vmem:[%s165 + $0x6c] sm:$0xf]
      %v216 = vld [vmem:[%s165 + $0x70] sm:$0xf]
      %v217 = vld [vmem:[%s165 + $0x74] sm:$0xf]
      %v218 = vld [vmem:[%s165 + $0x78] sm:$0xf]
      %v219 = vld [vmem:[%s165 + $0x7c] sm:$0xf]
      %v220 = vld [vmem:[%s165 + $0x80] sm:$0xf]
      %v221 = vld [vmem:[%s165 + $0x84] sm:$0xf]
      %v222 = vld [vmem:[%s165 + $0x88] sm:$0xf]
      %v223 = vld [vmem:[%s165 + $0x8c] sm:$0xf]
      %v240 = vunpack.c.l.b16 %v172
      %v241 = vunpack.c.h.b16 %v172
      %v242 = vunpack.c.l.b16 %v173
      %v243 = vunpack.c.l.b16 %v174
      %v244 = vunpack.c.h.b16 %v174
      %v245 = vunpack.c.l.b16 %v175
      %v246 = vunpack.c.l.b16 %v176
      %v247 = vunpack.c.h.b16 %v176
      %v248 = vunpack.c.l.b16 %v177
      %v249 = vunpack.c.l.b16 %v178
      %v250 = vunpack.c.h.b16 %v178
      %v251 = vunpack.c.l.b16 %v179
      %v252 = vunpack.c.l.b16 %v180
      %v253 = vunpack.c.h.b16 %v180
      %v254 = vunpack.c.l.b16 %v181
      %v255 = vunpack.c.l.b16 %v182
      %v256 = vunpack.c.h.b16 %v182
      %v257 = vunpack.c.l.b16 %v183
      %v258 = vunpack.c.l.b16 %v184
      %v259 = vunpack.c.h.b16 %v184
      %v260 = vunpack.c.l.b16 %v185
      %v261 = vunpack.c.l.b16 %v186
      %v262 = vunpack.c.h.b16 %v186
      %v263 = vunpack.c.l.b16 %v187
      %v264 = vpack.c.b16 %v243, %v240
      %v265 = vpack.c.b16 %v244, %v241
      %v266 = vpack.c.b16 %v245, %v242
      %v267 = vpack.c.b16 %v249, %v246
      %v268 = vpack.c.b16 %v250, %v247
      %v269 = vpack.c.b16 %v251, %v248
      %v270 = vpack.c.b16 %v255, %v252
      %v271 = vpack.c.b16 %v256, %v253
      %v272 = vpack.c.b16 %v257, %v254
      %v273 = vpack.c.b16 %v261, %v258
      %v274 = vpack.c.b16 %v262, %v259
      %v275 = vpack.c.b16 %v263, %v260
      %v320 = vunpack.c.l.b16 %v188
      %v321 = vunpack.c.l.b16 %v189
      %v322 = vunpack.c.l.b16 %v190
      %v323 = vunpack.c.l.b16 %v191
      %v324 = vunpack.c.l.b16 %v192
      %v325 = vunpack.c.l.b16 %v193
      %v326 = vunpack.c.l.b16 %v194
      %v327 = vunpack.c.l.b16 %v195
      %v328 = vunpack.c.l.b16 %v196
      %v329 = vunpack.c.l.b16 %v197
      %v330 = vunpack.c.l.b16 %v198
      %v331 = vunpack.c.l.b16 %v199
      %v332 = vunpack.c.l.b16 %v200
      %v333 = vunpack.c.l.b16 %v201
      %v334 = vunpack.c.l.b16 %v202
      %v335 = vunpack.c.l.b16 %v203
      %v336 = vunpack.c.l.b16 %v204
      %v337 = vunpack.c.l.b16 %v205
      %v338 = vunpack.c.l.b16 %v206
      %v339 = vunpack.c.l.b16 %v207
      %v340 = vunpack.c.l.b16 %v208
      %v341 = vunpack.c.l.b16 %v209
      %v342 = vunpack.c.l.b16 %v210
      %v343 = vunpack.c.l.b16 %v211
      %v344 = vunpack.c.l.b16 %v212
      %v345 = vunpack.c.l.b16 %v213
      %v346 = vunpack.c.l.b16 %v214
      %v347 = vunpack.c.l.b16 %v215
      %v348 = vunpack.c.l.b16 %v216
      %v349 = vunpack.c.l.b16 %v217
      %v350 = vunpack.c.l.b16 %v218
      %v351 = vunpack.c.l.b16 %v219
      %v352 = vunpack.c.l.b16 %v220
      %v353 = vunpack.c.l.b16 %v221
      %v354 = vunpack.c.l.b16 %v222
      %v355 = vunpack.c.l.b16 %v223
      %v356 = vpack.c.b16 %v321, %v320
      %v357 = vpack.c.b16 %v323, %v322
      %v358 = vpack.c.b16 %v325, %v324
      %v359 = vpack.c.b16 %v327, %v326
      %v360 = vpack.c.b16 %v329, %v328
      %v361 = vpack.c.b16 %v331, %v330
      %v362 = vpack.c.b16 %v333, %v332
      %v363 = vpack.c.b16 %v335, %v334
      %v364 = vpack.c.b16 %v337, %v336
      %v365 = vpack.c.b16 %v339, %v338
      %v366 = vpack.c.b16 %v341, %v340
      %v367 = vpack.c.b16 %v343, %v342
      %v368 = vpack.c.b16 %v345, %v344
      %v369 = vpack.c.b16 %v347, %v346
      %v370 = vpack.c.b16 %v349, %v348
      %v371 = vpack.c.b16 %v351, %v350
      %v372 = vpack.c.b16 %v353, %v352
      %v373 = vpack.c.b16 %v355, %v354
      %vm392 = vcmask 261120
      %v394 = vsel %vm392, %v266, 0
      %v397 = vsel %vm392, %v269, 0
      %v400 = vsel %vm392, %v272, 0
      %v403 = vsel %vm392, %v275, 0
      %405 = vmatpush.bf16.msra.mxu0 %v363
      %406 = vmatpush.bf16.msra.mxu0 %v362
      %407 = vmatpush.bf16.msra.mxu0 %v361
      %408 = vmatpush.bf16.msra.mxu0 %v360
      %409 = vmatpush.bf16.msra.mxu0 %v359
      %410 = vmatpush.bf16.msra.mxu0 %v358
      %411 = vmatpush.bf16.msra.mxu0 %v357
      %412 = vmatpush.bf16.msra.mxu0 %v356
      %413 = vmatmul.bf16.gmra.mxu0 %v264
      %v414 = vpop.f32.mrf.mxu0
      %v415 = vadd.f32 0.0, %v414
      %v416 = vpop.f32.mrf.mxu0
      %v417 = vadd.f32 0.0, %v416
      %418 = vmatmul.bf16.gmra.mxu0 %v267
      %v419 = vpop.f32.mrf.mxu0
      %v420 = vadd.f32 0.0, %v419
      %v421 = vpop.f32.mrf.mxu0
      %v422 = vadd.f32 0.0, %v421
      %423 = vmatmul.bf16.gmra.mxu0 %v270
      %v424 = vpop.f32.mrf.mxu0
      %v425 = vadd.f32 0.0, %v424
      %v426 = vpop.f32.mrf.mxu0
      %v427 = vadd.f32 0.0, %v426
      %428 = vmatmul.bf16.gmra.mxu0 %v273
      %v429 = vpop.f32.mrf.mxu0
      %v430 = vadd.f32 0.0, %v429
      %v431 = vpop.f32.mrf.mxu0
      %v432 = vadd.f32 0.0, %v431
      %433 = vdwg.mxu0
      %434 = vmatpush.bf16.msra.mxu0 %v371
      %435 = vmatpush.bf16.msra.mxu0 %v370
      %436 = vmatpush.bf16.msra.mxu0 %v369
      %437 = vmatpush.bf16.msra.mxu0 %v368
      %438 = vmatpush.bf16.msra.mxu0 %v367
      %439 = vmatpush.bf16.msra.mxu0 %v366
      %440 = vmatpush.bf16.msra.mxu0 %v365
      %441 = vmatpush.bf16.msra.mxu0 %v364
      %442 = vmatmul.bf16.gmra.mxu0 %v265
      %v443 = vpop.f32.mrf.mxu0
      %v444 = vadd.f32 %v415, %v443
      %v445 = vpop.f32.mrf.mxu0
      %v446 = vadd.f32 %v417, %v445
      %447 = vmatmul.bf16.gmra.mxu0 %v268
      %v448 = vpop.f32.mrf.mxu0
      %v449 = vadd.f32 %v420, %v448
      %v450 = vpop.f32.mrf.mxu0
      %v451 = vadd.f32 %v422, %v450
      %452 = vmatmul.bf16.gmra.mxu0 %v271
      %v453 = vpop.f32.mrf.mxu0
      %v454 = vadd.f32 %v425, %v453
      %v455 = vpop.f32.mrf.mxu0
      %v456 = vadd.f32 %v427, %v455
      %457 = vmatmul.bf16.gmra.mxu0 %v274
      %v458 = vpop.f32.mrf.mxu0
      %v459 = vadd.f32 %v430, %v458
      %v460 = vpop.f32.mrf.mxu0
      %v461 = vadd.f32 %v432, %v460
      %462 = vdwg.mxu0
      %463 = vmatpush.bf16.msra.mxu0 0
      %464 = vmatpush.bf16.msra.mxu0 0
      %465 = vmatpush.bf16.msra.mxu0 0
      %466 = vmatpush.bf16.msra.mxu0 0
      %467 = vmatpush.bf16.msra.mxu0 0
      %468 = vmatpush.bf16.msra.mxu0 0
      %469 = vmatpush.bf16.msra.mxu0 %v373
      %470 = vmatpush.bf16.msra.mxu0 %v372
      %471 = vmatmul.bf16.gmra.mxu0 %v394
      %v472 = vpop.f32.mrf.mxu0
      %v473 = vadd.f32 %v444, %v472
      %v474 = vpop.f32.mrf.mxu0
      %v475 = vadd.f32 %v446, %v474
      %476 = vmatmul.bf16.gmra.mxu0 %v397
      %v477 = vpop.f32.mrf.mxu0
      %v478 = vadd.f32 %v449, %v477
      %v479 = vpop.f32.mrf.mxu0
      %v480 = vadd.f32 %v451, %v479
      %481 = vmatmul.bf16.gmra.mxu0 %v400
      %v482 = vpop.f32.mrf.mxu0
      %v483 = vadd.f32 %v454, %v482
      %v484 = vpop.f32.mrf.mxu0
      %v485 = vadd.f32 %v456, %v484
      %486 = vmatmul.bf16.gmra.mxu0 %v403
      %v487 = vpop.f32.mrf.mxu0
      %v488 = vadd.f32 %v459, %v487
      %v489 = vpop.f32.mrf.mxu0
      %v490 = vadd.f32 %v461, %v489
      %491 = vdwg.mxu0
      %s492 = scalar_lea.vmem %s165, 144
      %v493 = vld [vmem:[%s492] sm:$0xf]
      %v494 = vld [vmem:[%s492 + $0x4] sm:$0xf]
      %v495 = vld [vmem:[%s492 + $0x8] sm:$0xf]
      %v496 = vld [vmem:[%s492 + $0xc] sm:$0xf]
      %v497 = vld [vmem:[%s492 + $0x10] sm:$0xf]
      %v498 = vld [vmem:[%s492 + $0x14] sm:$0xf]
      %v499 = vld [vmem:[%s492 + $0x18] sm:$0xf]
      %v500 = vld [vmem:[%s492 + $0x1c] sm:$0xf]
      %v501 = vld [vmem:[%s492 + $0x20] sm:$0xf]
      %v502 = vld [vmem:[%s492 + $0x24] sm:$0xf]
      %v503 = vld [vmem:[%s492 + $0x28] sm:$0xf]
      %v504 = vld [vmem:[%s492 + $0x2c] sm:$0xf]
      %v505 = vld [vmem:[%s492 + $0x30] sm:$0xf]
      %v506 = vld [vmem:[%s492 + $0x34] sm:$0xf]
      %v507 = vld [vmem:[%s492 + $0x38] sm:$0xf]
      %v508 = vld [vmem:[%s492 + $0x3c] sm:$0xf]
      %v509 = vld [vmem:[%s492 + $0x40] sm:$0xf]
      %v510 = vld [vmem:[%s492 + $0x44] sm:$0xf]
      %v511 = vld [vmem:[%s492 + $0x48] sm:$0xf]
      %v512 = vld [vmem:[%s492 + $0x4c] sm:$0xf]
      %v513 = vld [vmem:[%s492 + $0x50] sm:$0xf]
      %v514 = vld [vmem:[%s492 + $0x54] sm:$0xf]
      %v515 = vld [vmem:[%s492 + $0x58] sm:$0xf]
      %v516 = vld [vmem:[%s492 + $0x5c] sm:$0xf]
      %v517 = vld [vmem:[%s492 + $0x60] sm:$0xf]
      %v518 = vld [vmem:[%s492 + $0x64] sm:$0xf]
      %v519 = vld [vmem:[%s492 + $0x68] sm:$0xf]
      %v520 = vld [vmem:[%s492 + $0x6c] sm:$0xf]
      %v521 = vld [vmem:[%s492 + $0x70] sm:$0xf]
      %v522 = vld [vmem:[%s492 + $0x74] sm:$0xf]
      %v523 = vld [vmem:[%s492 + $0x78] sm:$0xf]
      %v524 = vld [vmem:[%s492 + $0x7c] sm:$0xf]
      %v525 = vld [vmem:[%s492 + $0x80] sm:$0xf]
      %v526 = vld [vmem:[%s492 + $0x84] sm:$0xf]
      %v527 = vld [vmem:[%s492 + $0x88] sm:$0xf]
      %v528 = vld [vmem:[%s492 + $0x8c] sm:$0xf]
      %v565 = vunpack.c.l.b16 %v493
      %v566 = vunpack.c.l.b16 %v494
      %v567 = vunpack.c.l.b16 %v495
      %v568 = vunpack.c.l.b16 %v496
      %v569 = vunpack.c.l.b16 %v497
      %v570 = vunpack.c.l.b16 %v498
      %v571 = vunpack.c.l.b16 %v499
      %v572 = vunpack.c.l.b16 %v500
      %v573 = vunpack.c.l.b16 %v501
      %v574 = vunpack.c.l.b16 %v502
      %v575 = vunpack.c.l.b16 %v503
      %v576 = vunpack.c.l.b16 %v504
      %v577 = vunpack.c.l.b16 %v505
      %v578 = vunpack.c.l.b16 %v506
      %v579 = vunpack.c.l.b16 %v507
      %v580 = vunpack.c.l.b16 %v508
      %v581 = vunpack.c.l.b16 %v509
      %v582 = vunpack.c.l.b16 %v510
      %v583 = vunpack.c.l.b16 %v511
      %v584 = vunpack.c.l.b16 %v512
      %v585 = vunpack.c.l.b16 %v513
      %v586 = vunpack.c.l.b16 %v514
      %v587 = vunpack.c.l.b16 %v515
      %v588 = vunpack.c.l.b16 %v516
      %v589 = vunpack.c.l.b16 %v517
      %v590 = vunpack.c.l.b16 %v518
      %v591 = vunpack.c.l.b16 %v519
      %v592 = vunpack.c.l.b16 %v520
      %v593 = vunpack.c.l.b16 %v521
      %v594 = vunpack.c.l.b16 %v522
      %v595 = vunpack.c.l.b16 %v523
      %v596 = vunpack.c.l.b16 %v524
      %v597 = vunpack.c.l.b16 %v525
      %v598 = vunpack.c.l.b16 %v526
      %v599 = vunpack.c.l.b16 %v527
      %v600 = vunpack.c.l.b16 %v528
      %v601 = vpack.c.b16 %v566, %v565
      %v602 = vpack.c.b16 %v568, %v567
      %v603 = vpack.c.b16 %v570, %v569
      %v604 = vpack.c.b16 %v572, %v571
      %v605 = vpack.c.b16 %v574, %v573
      %v606 = vpack.c.b16 %v576, %v575
      %v607 = vpack.c.b16 %v578, %v577
      %v608 = vpack.c.b16 %v580, %v579
      %v609 = vpack.c.b16 %v582, %v581
      %v610 = vpack.c.b16 %v584, %v583
      %v611 = vpack.c.b16 %v586, %v585
      %v612 = vpack.c.b16 %v588, %v587
      %v613 = vpack.c.b16 %v590, %v589
      %v614 = vpack.c.b16 %v592, %v591
      %v615 = vpack.c.b16 %v594, %v593
      %v616 = vpack.c.b16 %v596, %v595
      %v617 = vpack.c.b16 %v598, %v597
      %v618 = vpack.c.b16 %v600, %v599
      %637 = vmatpush.bf16.msra.mxu0 %v608
      %638 = vmatpush.bf16.msra.mxu0 %v607
      %639 = vmatpush.bf16.msra.mxu0 %v606
      %640 = vmatpush.bf16.msra.mxu0 %v605
      %641 = vmatpush.bf16.msra.mxu0 %v604
      %642 = vmatpush.bf16.msra.mxu0 %v603
      %643 = vmatpush.bf16.msra.mxu0 %v602
      %644 = vmatpush.bf16.msra.mxu0 %v601
      %645 = vmatmul.bf16.gmra.mxu0 %v264
      %v646 = vpop.f32.mrf.mxu0
      %v647 = vadd.f32 0.0, %v646
      %v648 = vpop.f32.mrf.mxu0
      %v649 = vadd.f32 0.0, %v648
      %650 = vmatmul.bf16.gmra.mxu0 %v267
      %v651 = vpop.f32.mrf.mxu0
      %v652 = vadd.f32 0.0, %v651
      %v653 = vpop.f32.mrf.mxu0
      %v654 = vadd.f32 0.0, %v653
      %655 = vmatmul.bf16.gmra.mxu0 %v270
      %v656 = vpop.f32.mrf.mxu0
      %v657 = vadd.f32 0.0, %v656
      %v658 = vpop.f32.mrf.mxu0
      %v659 = vadd.f32 0.0, %v658
      %660 = vmatmul.bf16.gmra.mxu0 %v273
      %v661 = vpop.f32.mrf.mxu0
      %v662 = vadd.f32 0.0, %v661
      %v663 = vpop.f32.mrf.mxu0
      %v664 = vadd.f32 0.0, %v663
      %665 = vdwg.mxu0
      %666 = vmatpush.bf16.msra.mxu0 %v616
      %667 = vmatpush.bf16.msra.mxu0 %v615
      %668 = vmatpush.bf16.msra.mxu0 %v614
      %669 = vmatpush.bf16.msra.mxu0 %v613
      %670 = vmatpush.bf16.msra.mxu0 %v612
      %671 = vmatpush.bf16.msra.mxu0 %v611
      %672 = vmatpush.bf16.msra.mxu0 %v610
      %673 = vmatpush.bf16.msra.mxu0 %v609
      %674 = vmatmul.bf16.gmra.mxu0 %v265
      %v675 = vpop.f32.mrf.mxu0
      %v676 = vadd.f32 %v647, %v675
      %v677 = vpop.f32.mrf.mxu0
      %v678 = vadd.f32 %v649, %v677
      %679 = vmatmul.bf16.gmra.mxu0 %v268
      %v680 = vpop.f32.mrf.mxu0
      %v681 = vadd.f32 %v652, %v680
      %v682 = vpop.f32.mrf.mxu0
      %v683 = vadd.f32 %v654, %v682
      %684 = vmatmul.bf16.gmra.mxu0 %v271
      %v685 = vpop.f32.mrf.mxu0
      %v686 = vadd.f32 %v657, %v685
      %v687 = vpop.f32.mrf.mxu0
      %v688 = vadd.f32 %v659, %v687
      %689 = vmatmul.bf16.gmra.mxu0 %v274
      %v690 = vpop.f32.mrf.mxu0
      %v691 = vadd.f32 %v662, %v690
      %v692 = vpop.f32.mrf.mxu0
      %v693 = vadd.f32 %v664, %v692
      %694 = vdwg.mxu0
      %695 = vmatpush.bf16.msra.mxu0 0
      %696 = vmatpush.bf16.msra.mxu0 0
      %697 = vmatpush.bf16.msra.mxu0 0
      %698 = vmatpush.bf16.msra.mxu0 0
      %699 = vmatpush.bf16.msra.mxu0 0
      %700 = vmatpush.bf16.msra.mxu0 0
      %701 = vmatpush.bf16.msra.mxu0 %v618
      %702 = vmatpush.bf16.msra.mxu0 %v617
      %703 = vmatmul.bf16.gmra.mxu0 %v394
      %v704 = vpop.f32.mrf.mxu0
      %v705 = vadd.f32 %v676, %v704
      %v706 = vpop.f32.mrf.mxu0
      %v707 = vadd.f32 %v678, %v706
      %708 = vmatmul.bf16.gmra.mxu0 %v397
      %v709 = vpop.f32.mrf.mxu0
      %v710 = vadd.f32 %v681, %v709
      %v711 = vpop.f32.mrf.mxu0
      %v712 = vadd.f32 %v683, %v711
      %713 = vmatmul.bf16.gmra.mxu0 %v400
      %v714 = vpop.f32.mrf.mxu0
      %v715 = vadd.f32 %v686, %v714
      %v716 = vpop.f32.mrf.mxu0
      %v717 = vadd.f32 %v688, %v716
      %718 = vmatmul.bf16.gmra.mxu0 %v403
      %v719 = vpop.f32.mrf.mxu0
      %v720 = vadd.f32 %v691, %v719
      %v721 = vpop.f32.mrf.mxu0
      %v722 = vadd.f32 %v693, %v721
      %723 = vdwg.mxu0
      %v724 = vmax.f32 %v473, %v705
      %v725 = vmax.f32 %v475, %v707
      %v726 = vmax.f32 %v478, %v710
      %v727 = vmax.f32 %v480, %v712
      %v728 = vmax.f32 %v483, %v715
      %v729 = vmax.f32 %v485, %v717
      %v730 = vmax.f32 %v488, %v720
      %v731 = vmax.f32 %v490, %v722
      %s732 = scalar_lea.vmem %s165, 288
      %v733 = vld [vmem:[%s732] sm:$0xf]
      %v734 = vld [vmem:[%s732 + $0x4] sm:$0xf]
      %v735 = vld [vmem:[%s732 + $0x8] sm:$0xf]
      %v736 = vld [vmem:[%s732 + $0xc] sm:$0xf]
      %v737 = vld [vmem:[%s732 + $0x10] sm:$0xf]
      %v738 = vld [vmem:[%s732 + $0x14] sm:$0xf]
      %v739 = vld [vmem:[%s732 + $0x18] sm:$0xf]
      %v740 = vld [vmem:[%s732 + $0x1c] sm:$0xf]
      %v741 = vld [vmem:[%s732 + $0x20] sm:$0xf]
      %v742 = vld [vmem:[%s732 + $0x24] sm:$0xf]
      %v743 = vld [vmem:[%s732 + $0x28] sm:$0xf]
      %v744 = vld [vmem:[%s732 + $0x2c] sm:$0xf]
      %v745 = vld [vmem:[%s732 + $0x30] sm:$0xf]
      %v746 = vld [vmem:[%s732 + $0x34] sm:$0xf]
      %v747 = vld [vmem:[%s732 + $0x38] sm:$0xf]
      %v748 = vld [vmem:[%s732 + $0x3c] sm:$0xf]
      %v749 = vld [vmem:[%s732 + $0x40] sm:$0xf]
      %v750 = vld [vmem:[%s732 + $0x44] sm:$0xf]
      %v751 = vld [vmem:[%s732 + $0x48] sm:$0xf]
      %v752 = vld [vmem:[%s732 + $0x4c] sm:$0xf]
      %v753 = vld [vmem:[%s732 + $0x50] sm:$0xf]
      %v754 = vld [vmem:[%s732 + $0x54] sm:$0xf]
      %v755 = vld [vmem:[%s732 + $0x58] sm:$0xf]
      %v756 = vld [vmem:[%s732 + $0x5c] sm:$0xf]
      %v757 = vld [vmem:[%s732 + $0x60] sm:$0xf]
      %v758 = vld [vmem:[%s732 + $0x64] sm:$0xf]
      %v759 = vld [vmem:[%s732 + $0x68] sm:$0xf]
      %v760 = vld [vmem:[%s732 + $0x6c] sm:$0xf]
      %v761 = vld [vmem:[%s732 + $0x70] sm:$0xf]
      %v762 = vld [vmem:[%s732 + $0x74] sm:$0xf]
      %v763 = vld [vmem:[%s732 + $0x78] sm:$0xf]
      %v764 = vld [vmem:[%s732 + $0x7c] sm:$0xf]
      %v765 = vld [vmem:[%s732 + $0x80] sm:$0xf]
      %v766 = vld [vmem:[%s732 + $0x84] sm:$0xf]
      %v767 = vld [vmem:[%s732 + $0x88] sm:$0xf]
      %v768 = vld [vmem:[%s732 + $0x8c] sm:$0xf]
      %v805 = vunpack.c.l.b16 %v733
      %v806 = vunpack.c.l.b16 %v734
      %v807 = vunpack.c.l.b16 %v735
      %v808 = vunpack.c.l.b16 %v736
      %v809 = vunpack.c.l.b16 %v737
      %v810 = vunpack.c.l.b16 %v738
      %v811 = vunpack.c.l.b16 %v739
      %v812 = vunpack.c.l.b16 %v740
      %v813 = vunpack.c.l.b16 %v741
      %v814 = vunpack.c.l.b16 %v742
      %v815 = vunpack.c.l.b16 %v743
      %v816 = vunpack.c.l.b16 %v744
      %v817 = vunpack.c.l.b16 %v745
      %v818 = vunpack.c.l.b16 %v746
      %v819 = vunpack.c.l.b16 %v747
      %v820 = vunpack.c.l.b16 %v748
      %v821 = vunpack.c.l.b16 %v749
      %v822 = vunpack.c.l.b16 %v750
      %v823 = vunpack.c.l.b16 %v751
      %v824 = vunpack.c.l.b16 %v752
      %v825 = vunpack.c.l.b16 %v753
      %v826 = vunpack.c.l.b16 %v754
      %v827 = vunpack.c.l.b16 %v755
      %v828 = vunpack.c.l.b16 %v756
      %v829 = vunpack.c.l.b16 %v757
      %v830 = vunpack.c.l.b16 %v758
      %v831 = vunpack.c.l.b16 %v759
      %v832 = vunpack.c.l.b16 %v760
      %v833 = vunpack.c.l.b16 %v761
      %v834 = vunpack.c.l.b16 %v762
      %v835 = vunpack.c.l.b16 %v763
      %v836 = vunpack.c.l.b16 %v764
      %v837 = vunpack.c.l.b16 %v765
      %v838 = vunpack.c.l.b16 %v766
      %v839 = vunpack.c.l.b16 %v767
      %v840 = vunpack.c.l.b16 %v768
      %v841 = vpack.c.b16 %v806, %v805
      %v842 = vpack.c.b16 %v808, %v807
      %v843 = vpack.c.b16 %v810, %v809
      %v844 = vpack.c.b16 %v812, %v811
      %v845 = vpack.c.b16 %v814, %v813
      %v846 = vpack.c.b16 %v816, %v815
      %v847 = vpack.c.b16 %v818, %v817
      %v848 = vpack.c.b16 %v820, %v819
      %v849 = vpack.c.b16 %v822, %v821
      %v850 = vpack.c.b16 %v824, %v823
      %v851 = vpack.c.b16 %v826, %v825
      %v852 = vpack.c.b16 %v828, %v827
      %v853 = vpack.c.b16 %v830, %v829
      %v854 = vpack.c.b16 %v832, %v831
      %v855 = vpack.c.b16 %v834, %v833
      %v856 = vpack.c.b16 %v836, %v835
      %v857 = vpack.c.b16 %v838, %v837
      %v858 = vpack.c.b16 %v840, %v839
      %877 = vmatpush.bf16.msra.mxu0 %v848
      %878 = vmatpush.bf16.msra.mxu0 %v847
      %879 = vmatpush.bf16.msra.mxu0 %v846
      %880 = vmatpush.bf16.msra.mxu0 %v845
      %881 = vmatpush.bf16.msra.mxu0 %v844
      %882 = vmatpush.bf16.msra.mxu0 %v843
      %883 = vmatpush.bf16.msra.mxu0 %v842
      %884 = vmatpush.bf16.msra.mxu0 %v841
      %885 = vmatmul.bf16.gmra.mxu0 %v264
      %v886 = vpop.f32.mrf.mxu0
      %v887 = vadd.f32 0.0, %v886
      %v888 = vpop.f32.mrf.mxu0
      %v889 = vadd.f32 0.0, %v888
      %890 = vmatmul.bf16.gmra.mxu0 %v267
      %v891 = vpop.f32.mrf.mxu0
      %v892 = vadd.f32 0.0, %v891
      %v893 = vpop.f32.mrf.mxu0
      %v894 = vadd.f32 0.0, %v893
      %895 = vmatmul.bf16.gmra.mxu0 %v270
      %v896 = vpop.f32.mrf.mxu0
      %v897 = vadd.f32 0.0, %v896
      %v898 = vpop.f32.mrf.mxu0
      %v899 = vadd.f32 0.0, %v898
      %900 = vmatmul.bf16.gmra.mxu0 %v273
      %v901 = vpop.f32.mrf.mxu0
      %v902 = vadd.f32 0.0, %v901
      %v903 = vpop.f32.mrf.mxu0
      %v904 = vadd.f32 0.0, %v903
      %905 = vdwg.mxu0
      %906 = vmatpush.bf16.msra.mxu0 %v856
      %907 = vmatpush.bf16.msra.mxu0 %v855
      %908 = vmatpush.bf16.msra.mxu0 %v854
      %909 = vmatpush.bf16.msra.mxu0 %v853
      %910 = vmatpush.bf16.msra.mxu0 %v852
      %911 = vmatpush.bf16.msra.mxu0 %v851
      %912 = vmatpush.bf16.msra.mxu0 %v850
      %913 = vmatpush.bf16.msra.mxu0 %v849
      %914 = vmatmul.bf16.gmra.mxu0 %v265
      %v915 = vpop.f32.mrf.mxu0
      %v916 = vadd.f32 %v887, %v915
      %v917 = vpop.f32.mrf.mxu0
      %v918 = vadd.f32 %v889, %v917
      %919 = vmatmul.bf16.gmra.mxu0 %v268
      %v920 = vpop.f32.mrf.mxu0
      %v921 = vadd.f32 %v892, %v920
      %v922 = vpop.f32.mrf.mxu0
      %v923 = vadd.f32 %v894, %v922
      %924 = vmatmul.bf16.gmra.mxu0 %v271
      %v925 = vpop.f32.mrf.mxu0
      %v926 = vadd.f32 %v897, %v925
      %v927 = vpop.f32.mrf.mxu0
      %v928 = vadd.f32 %v899, %v927
      %929 = vmatmul.bf16.gmra.mxu0 %v274
      %v930 = vpop.f32.mrf.mxu0
      %v931 = vadd.f32 %v902, %v930
      %v932 = vpop.f32.mrf.mxu0
      %v933 = vadd.f32 %v904, %v932
      %934 = vdwg.mxu0
      %935 = vmatpush.bf16.msra.mxu0 0
      %936 = vmatpush.bf16.msra.mxu0 0
      %937 = vmatpush.bf16.msra.mxu0 0
      %938 = vmatpush.bf16.msra.mxu0 0
      %939 = vmatpush.bf16.msra.mxu0 0
      %940 = vmatpush.bf16.msra.mxu0 0
      %941 = vmatpush.bf16.msra.mxu0 %v858
      %942 = vmatpush.bf16.msra.mxu0 %v857
      %943 = vmatmul.bf16.gmra.mxu0 %v394
      %v944 = vpop.f32.mrf.mxu0
      %v945 = vadd.f32 %v916, %v944
      %v946 = vpop.f32.mrf.mxu0
      %v947 = vadd.f32 %v918, %v946
      %948 = vmatmul.bf16.gmra.mxu0 %v397
      %v949 = vpop.f32.mrf.mxu0
      %v950 = vadd.f32 %v921, %v949
      %v951 = vpop.f32.mrf.mxu0
      %v952 = vadd.f32 %v923, %v951
      %953 = vmatmul.bf16.gmra.mxu0 %v400
      %v954 = vpop.f32.mrf.mxu0
      %v955 = vadd.f32 %v926, %v954
      %v956 = vpop.f32.mrf.mxu0
      %v957 = vadd.f32 %v928, %v956
      %958 = vmatmul.bf16.gmra.mxu0 %v403
      %v959 = vpop.f32.mrf.mxu0
      %v960 = vadd.f32 %v931, %v959
      %v961 = vpop.f32.mrf.mxu0
      %v962 = vadd.f32 %v933, %v961
      %963 = vdwg.mxu0
      %v964 = vmax.f32 %v724, %v945
      %v965 = vmax.f32 %v725, %v947
      %v966 = vmax.f32 %v726, %v950
      %v967 = vmax.f32 %v727, %v952
      %v968 = vmax.f32 %v728, %v955
      %v969 = vmax.f32 %v729, %v957
      %v970 = vmax.f32 %v730, %v960
      %v971 = vmax.f32 %v731, %v962
      %s972 = scalar_lea.vmem %s165, 432
      %v973 = vld [vmem:[%s972] sm:$0xf]
      %v974 = vld [vmem:[%s972 + $0x4] sm:$0xf]
      %v975 = vld [vmem:[%s972 + $0x8] sm:$0xf]
      %v976 = vld [vmem:[%s972 + $0xc] sm:$0xf]
      %v977 = vld [vmem:[%s972 + $0x10] sm:$0xf]
      %v978 = vld [vmem:[%s972 + $0x14] sm:$0xf]
      %v979 = vld [vmem:[%s972 + $0x18] sm:$0xf]
      %v980 = vld [vmem:[%s972 + $0x1c] sm:$0xf]
      %v981 = vld [vmem:[%s972 + $0x20] sm:$0xf]
      %v982 = vld [vmem:[%s972 + $0x24] sm:$0xf]
      %v983 = vld [vmem:[%s972 + $0x28] sm:$0xf]
      %v984 = vld [vmem:[%s972 + $0x2c] sm:$0xf]
      %v985 = vld [vmem:[%s972 + $0x30] sm:$0xf]
      %v986 = vld [vmem:[%s972 + $0x34] sm:$0xf]
      %v987 = vld [vmem:[%s972 + $0x38] sm:$0xf]
      %v988 = vld [vmem:[%s972 + $0x3c] sm:$0xf]
      %v989 = vld [vmem:[%s972 + $0x40] sm:$0xf]
      %v990 = vld [vmem:[%s972 + $0x44] sm:$0xf]
      %v991 = vld [vmem:[%s972 + $0x48] sm:$0xf]
      %v992 = vld [vmem:[%s972 + $0x4c] sm:$0xf]
      %v993 = vld [vmem:[%s972 + $0x50] sm:$0xf]
      %v994 = vld [vmem:[%s972 + $0x54] sm:$0xf]
      %v995 = vld [vmem:[%s972 + $0x58] sm:$0xf]
      %v996 = vld [vmem:[%s972 + $0x5c] sm:$0xf]
      %v997 = vld [vmem:[%s972 + $0x60] sm:$0xf]
      %v998 = vld [vmem:[%s972 + $0x64] sm:$0xf]
      %v999 = vld [vmem:[%s972 + $0x68] sm:$0xf]
      %v1000 = vld [vmem:[%s972 + $0x6c] sm:$0xf]
      %v1001 = vld [vmem:[%s972 + $0x70] sm:$0xf]
      %v1002 = vld [vmem:[%s972 + $0x74] sm:$0xf]
      %v1003 = vld [vmem:[%s972 + $0x78] sm:$0xf]
      %v1004 = vld [vmem:[%s972 + $0x7c] sm:$0xf]
      %v1005 = vld [vmem:[%s972 + $0x80] sm:$0xf]
      %v1006 = vld [vmem:[%s972 + $0x84] sm:$0xf]
      %v1007 = vld [vmem:[%s972 + $0x88] sm:$0xf]
      %v1008 = vld [vmem:[%s972 + $0x8c] sm:$0xf]
      %v1045 = vunpack.c.l.b16 %v973
      %v1046 = vunpack.c.l.b16 %v974
      %v1047 = vunpack.c.l.b16 %v975
      %v1048 = vunpack.c.l.b16 %v976
      %v1049 = vunpack.c.l.b16 %v977
      %v1050 = vunpack.c.l.b16 %v978
      %v1051 = vunpack.c.l.b16 %v979
      %v1052 = vunpack.c.l.b16 %v980
      %v1053 = vunpack.c.l.b16 %v981
      %v1054 = vunpack.c.l.b16 %v982
      %v1055 = vunpack.c.l.b16 %v983
      %v1056 = vunpack.c.l.b16 %v984
      %v1057 = vunpack.c.l.b16 %v985
      %v1058 = vunpack.c.l.b16 %v986
      %v1059 = vunpack.c.l.b16 %v987
      %v1060 = vunpack.c.l.b16 %v988
      %v1061 = vunpack.c.l.b16 %v989
      %v1062 = vunpack.c.l.b16 %v990
      %v1063 = vunpack.c.l.b16 %v991
      %v1064 = vunpack.c.l.b16 %v992
      %v1065 = vunpack.c.l.b16 %v993
      %v1066 = vunpack.c.l.b16 %v994
      %v1067 = vunpack.c.l.b16 %v995
      %v1068 = vunpack.c.l.b16 %v996
      %v1069 = vunpack.c.l.b16 %v997
      %v1070 = vunpack.c.l.b16 %v998
      %v1071 = vunpack.c.l.b16 %v999
      %v1072 = vunpack.c.l.b16 %v1000
      %v1073 = vunpack.c.l.b16 %v1001
      %v1074 = vunpack.c.l.b16 %v1002
      %v1075 = vunpack.c.l.b16 %v1003
      %v1076 = vunpack.c.l.b16 %v1004
      %v1077 = vunpack.c.l.b16 %v1005
      %v1078 = vunpack.c.l.b16 %v1006
      %v1079 = vunpack.c.l.b16 %v1007
      %v1080 = vunpack.c.l.b16 %v1008
      %v1081 = vpack.c.b16 %v1046, %v1045
      %v1082 = vpack.c.b16 %v1048, %v1047
      %v1083 = vpack.c.b16 %v1050, %v1049
      %v1084 = vpack.c.b16 %v1052, %v1051
      %v1085 = vpack.c.b16 %v1054, %v1053
      %v1086 = vpack.c.b16 %v1056, %v1055
      %v1087 = vpack.c.b16 %v1058, %v1057
      %v1088 = vpack.c.b16 %v1060, %v1059
      %v1089 = vpack.c.b16 %v1062, %v1061
      %v1090 = vpack.c.b16 %v1064, %v1063
      %v1091 = vpack.c.b16 %v1066, %v1065
      %v1092 = vpack.c.b16 %v1068, %v1067
      %v1093 = vpack.c.b16 %v1070, %v1069
      %v1094 = vpack.c.b16 %v1072, %v1071
      %v1095 = vpack.c.b16 %v1074, %v1073
      %v1096 = vpack.c.b16 %v1076, %v1075
      %v1097 = vpack.c.b16 %v1078, %v1077
      %v1098 = vpack.c.b16 %v1080, %v1079
      %1117 = vmatpush.bf16.msra.mxu0 %v1088
      %1118 = vmatpush.bf16.msra.mxu0 %v1087
      %1119 = vmatpush.bf16.msra.mxu0 %v1086
      %1120 = vmatpush.bf16.msra.mxu0 %v1085
      %1121 = vmatpush.bf16.msra.mxu0 %v1084
      %1122 = vmatpush.bf16.msra.mxu0 %v1083
      %1123 = vmatpush.bf16.msra.mxu0 %v1082
      %1124 = vmatpush.bf16.msra.mxu0 %v1081
      %1125 = vmatmul.bf16.gmra.mxu0 %v264
      %v1126 = vpop.f32.mrf.mxu0
      %v1127 = vadd.f32 0.0, %v1126
      %v1128 = vpop.f32.mrf.mxu0
      %v1129 = vadd.f32 0.0, %v1128
      %1130 = vmatmul.bf16.gmra.mxu0 %v267
      %v1131 = vpop.f32.mrf.mxu0
      %v1132 = vadd.f32 0.0, %v1131
      %v1133 = vpop.f32.mrf.mxu0
      %v1134 = vadd.f32 0.0, %v1133
      %1135 = vmatmul.bf16.gmra.mxu0 %v270
      %v1136 = vpop.f32.mrf.mxu0
      %v1137 = vadd.f32 0.0, %v1136
      %v1138 = vpop.f32.mrf.mxu0
      %v1139 = vadd.f32 0.0, %v1138
      %1140 = vmatmul.bf16.gmra.mxu0 %v273
      %v1141 = vpop.f32.mrf.mxu0
      %v1142 = vadd.f32 0.0, %v1141
      %v1143 = vpop.f32.mrf.mxu0
      %v1144 = vadd.f32 0.0, %v1143
      %1145 = vdwg.mxu0
      %1146 = vmatpush.bf16.msra.mxu0 %v1096
      %1147 = vmatpush.bf16.msra.mxu0 %v1095
      %1148 = vmatpush.bf16.msra.mxu0 %v1094
      %1149 = vmatpush.bf16.msra.mxu0 %v1093
      %1150 = vmatpush.bf16.msra.mxu0 %v1092
      %1151 = vmatpush.bf16.msra.mxu0 %v1091
      %1152 = vmatpush.bf16.msra.mxu0 %v1090
      %1153 = vmatpush.bf16.msra.mxu0 %v1089
      %1154 = vmatmul.bf16.gmra.mxu0 %v265
      %v1155 = vpop.f32.mrf.mxu0
      %v1156 = vadd.f32 %v1127, %v1155
      %v1157 = vpop.f32.mrf.mxu0
      %v1158 = vadd.f32 %v1129, %v1157
      %1159 = vmatmul.bf16.gmra.mxu0 %v268
      %v1160 = vpop.f32.mrf.mxu0
      %v1161 = vadd.f32 %v1132, %v1160
      %v1162 = vpop.f32.mrf.mxu0
      %v1163 = vadd.f32 %v1134, %v1162
      %1164 = vmatmul.bf16.gmra.mxu0 %v271
      %v1165 = vpop.f32.mrf.mxu0
      %v1166 = vadd.f32 %v1137, %v1165
      %v1167 = vpop.f32.mrf.mxu0
      %v1168 = vadd.f32 %v1139, %v1167
      %1169 = vmatmul.bf16.gmra.mxu0 %v274
      %v1170 = vpop.f32.mrf.mxu0
      %v1171 = vadd.f32 %v1142, %v1170
      %v1172 = vpop.f32.mrf.mxu0
      %v1173 = vadd.f32 %v1144, %v1172
      %1174 = vdwg.mxu0
      %1175 = vmatpush.bf16.msra.mxu0 0
      %1176 = vmatpush.bf16.msra.mxu0 0
      %1177 = vmatpush.bf16.msra.mxu0 0
      %1178 = vmatpush.bf16.msra.mxu0 0
      %1179 = vmatpush.bf16.msra.mxu0 0
      %1180 = vmatpush.bf16.msra.mxu0 0
      %1181 = vmatpush.bf16.msra.mxu0 %v1098
      %1182 = vmatpush.bf16.msra.mxu0 %v1097
      %1183 = vmatmul.bf16.gmra.mxu0 %v394
      %v1184 = vpop.f32.mrf.mxu0
      %v1185 = vadd.f32 %v1156, %v1184
      %v1186 = vpop.f32.mrf.mxu0
      %v1187 = vadd.f32 %v1158, %v1186
      %1188 = vmatmul.bf16.gmra.mxu0 %v397
      %v1189 = vpop.f32.mrf.mxu0
      %v1190 = vadd.f32 %v1161, %v1189
      %v1191 = vpop.f32.mrf.mxu0
      %v1192 = vadd.f32 %v1163, %v1191
      %1193 = vmatmul.bf16.gmra.mxu0 %v400
      %v1194 = vpop.f32.mrf.mxu0
      %v1195 = vadd.f32 %v1166, %v1194
      %v1196 = vpop.f32.mrf.mxu0
      %v1197 = vadd.f32 %v1168, %v1196
      %1198 = vmatmul.bf16.gmra.mxu0 %v403
      %v1199 = vpop.f32.mrf.mxu0
      %v1200 = vadd.f32 %v1171, %v1199
      %v1201 = vpop.f32.mrf.mxu0
      %v1202 = vadd.f32 %v1173, %v1201
      %1203 = vdwg.mxu0
      %v1204 = vmax.f32 %v964, %v1185
      %v1205 = vmax.f32 %v965, %v1187
      %v1206 = vmax.f32 %v966, %v1190
      %v1207 = vmax.f32 %v967, %v1192
      %v1208 = vmax.f32 %v968, %v1195
      %v1209 = vmax.f32 %v969, %v1197
      %v1210 = vmax.f32 %v970, %v1200
      %v1211 = vmax.f32 %v971, %v1202
      %v1212 = vld [vmem:[%s2] sm:$0xff]
      %v1213 = vld [vmem:[%s2 + $0x8] sm:$0xff]
      %v1214 = vld [vmem:[%s2 + $0x10] sm:$0xff]
      %v1215 = vld [vmem:[%s2 + $0x18] sm:$0xff]
      %v1216 = vld [vmem:[%s2 + $0x20] sm:$0xff]
      %v1217 = vld [vmem:[%s2 + $0x28] sm:$0xff]
      %v1218 = vld [vmem:[%s2 + $0x30] sm:$0xff]
      %v1219 = vld [vmem:[%s2 + $0x38] sm:$0xff]
      %1221 = vset.pattern.permute.xlu0 0
      %1222 = vperm.xlu0 %1221, %v1212
      %v1223 = vpop.permute.xlu0 %1222
      %1226 = vset.pattern.permute.xlu0 0
      %1227 = vperm.xlu0 %1226, %v1213
      %v1228 = vpop.permute.xlu0 %1227
      %1231 = vset.pattern.permute.xlu0 0
      %1232 = vperm.xlu0 %1231, %v1214
      %v1233 = vpop.permute.xlu0 %1232
      %1236 = vset.pattern.permute.xlu0 0
      %1237 = vperm.xlu0 %1236, %v1215
      %v1238 = vpop.permute.xlu0 %1237
      %1241 = vset.pattern.permute.xlu0 0
      %1242 = vperm.xlu0 %1241, %v1216
      %v1243 = vpop.permute.xlu0 %1242
      %1246 = vset.pattern.permute.xlu0 0
      %1247 = vperm.xlu0 %1246, %v1217
      %v1248 = vpop.permute.xlu0 %1247
      %1251 = vset.pattern.permute.xlu0 0
      %1252 = vperm.xlu0 %1251, %v1218
      %v1253 = vpop.permute.xlu0 %1252
      %1256 = vset.pattern.permute.xlu0 0
      %1257 = vperm.xlu0 %1256, %v1219
      %v1258 = vpop.permute.xlu0 %1257
      %v1260 = vadd.f32 %v1204, %v1223
      %v1261 = vadd.f32 %v1205, %v1228
      %v1262 = vadd.f32 %v1206, %v1233
      %v1263 = vadd.f32 %v1207, %v1238
      %v1264 = vadd.f32 %v1208, %v1243
      %v1265 = vadd.f32 %v1209, %v1248
      %v1266 = vadd.f32 %v1210, %v1253
      %v1267 = vadd.f32 %v1211, %v1258
      %v1268 = vmax.f32 %v1260, 0.0
      %v1269 = vmax.f32 %v1261, 0.0
      %v1270 = vmax.f32 %v1262, 0.0
      %v1271 = vmax.f32 %v1263, 0.0
      %v1272 = vmax.f32 %v1264, 0.0
      %v1273 = vmax.f32 %v1265, 0.0
      %v1274 = vmax.f32 %v1266, 0.0
      %v1275 = vmax.f32 %v1267, 0.0
      %v1276 = vpack.c.bf16 %v1268, %v1268
      %v1277 = vpack.c.bf16 %v1269, %v1269
      %v1278 = vpack.c.bf16 %v1270, %v1270
      %v1279 = vpack.c.bf16 %v1271, %v1271
      %v1280 = vpack.c.bf16 %v1272, %v1272
      %v1281 = vpack.c.bf16 %v1273, %v1273
      %v1282 = vpack.c.bf16 %v1274, %v1274
      %v1283 = vpack.c.bf16 %v1275, %v1275
      %vm1284 = vcmask 289792
      %1285 = vst.msk [vmem:[%s170] sm:$0xf] %vm1284, %v1276
      %1286 = vst.msk [vmem:[%s170 + $0x4] sm:$0xf] %vm1284, %v1277
      %1287 = vst.msk [vmem:[%s170 + $0x8] sm:$0xf] %vm1284, %v1278
      %1288 = vst.msk [vmem:[%s170 + $0xc] sm:$0xf] %vm1284, %v1279
      %1289 = vst.msk [vmem:[%s170 + $0x10] sm:$0xf] %vm1284, %v1280
      %1290 = vst.msk [vmem:[%s170 + $0x14] sm:$0xf] %vm1284, %v1281
      %1291 = vst.msk [vmem:[%s170 + $0x18] sm:$0xf] %vm1284, %v1282
      %1292 = vst.msk [vmem:[%s170 + $0x1c] sm:$0xf] %vm1284, %v1283
      %p1293 = scmp.lt.s32.totalorder %s14, 1
      %s1294 = scalar_select %p1293, %s14, 1
      %s1295 = smul.addr %s1294, 8
      %s1296 = smul.addr %s1295, 4
      %s1297 = scalar_lea.vmem %s3, %s1296
      // Predicated region
      $region33: #{fashion_cnn_forward.4} parent=31 // pred_check
        %p1298 = pneg %p100
      $region34: #{fashion_cnn_forward.4} parent=31 // pred_check_branch
        %1300 = sbr.rel (%p1298) target = $region36
      $region35: #{fashion_cnn_forward.4} parent=31 // pred_region
        _
      $region36: #{fashion_cnn_forward.4} parent=31 // pred_fallthru
        _
    $region32: #{fashion_cnn_forward.4} parent=5 // pred_fallthru
      _
    %p1301 = scmp.le.s32.totalorder 2, %s9
    // Predicated region
    $region37: #{fashion_cnn_forward.4} parent=5 // pred_check
      %p1302 = pneg %p1301
    $region38: #{fashion_cnn_forward.4} parent=5 // pred_check_branch
      %1304 = sbr.rel (%p1302) target = $region40
    $region39: #{fashion_cnn_forward.4} parent=5 // pred_region
      %s1305 = ssub.s32 %s9, 2
      // Predicated region
      $region41: #{fashion_cnn_forward.4} parent=39 // pred_check
        %p1306 = pneg %p106
      $region42: #{fashion_cnn_forward.4} parent=39 // pred_check_branch
        %1308 = sbr.rel (%p1306) target = $region44
      $region43: #{fashion_cnn_forward.4} parent=39 // pred_region
        %p1309 = scmp.lt.s32.totalorder %s15, 1
        %s1310 = scalar_select %p1309, %s15, 1
        %s1311 = smul.addr %s1310, 8
        %s1312 = smul.addr %s1311, 4
        %s1313 = scalar_lea.vmem %s3, %s1312
      $region44: #{fashion_cnn_forward.4} parent=39 // pred_fallthru
        _
    $region40: #{fashion_cnn_forward.4} parent=5 // pred_fallthru
      _
  $region6: #{fashion_cnn_forward.4} parent=0 // loop_footer
    %s13 = sadd.s32 1, %s9
  $region7: #{fashion_cnn_forward.4} parent=0 // loop_footer_branch
    %8 = sbr.rel target = $region3
  $region8: #{fashion_cnn_forward.4} parent=0 // loop_exit
    _

// kernel: fashion_cnn_forward.5
$region0: #{fashion_cnn_forward.5}
  #allocation0 [shape = 'u32[]', space=smem, size = 0x4, offset = 0x4, fixed_abs, tag = 'smem constant byte address 0x4 - core index']
  #allocation1 [shape = 'u32[72,128]{1,0:T(1,128)}', space=vmem, size = 0x9000, scoped, tag = 'internal scratch']
  %s0 = inlined_call_operand.vmem [shape: bf16[8,2304], index: 0, kind: input, shape index: {}]
  %s1 = inlined_call_operand.vmem [shape: bf16[2304,600], index: 1, kind: input, shape index: {}]
  %s2 = inlined_call_operand.vmem [shape: f32[1,600], index: 2, kind: input, shape index: {}]
  %s3 = inlined_call_operand.vmem [shape: bf16[600,120], index: 3, kind: input, shape index: {}]
  %s4 = inlined_call_operand.vmem [shape: f32[1,120], index: 4, kind: input, shape index: {}]
  %s5 = inlined_call_operand.vmem [shape: bf16[120,128], index: 5, kind: input, shape index: {}]
  %s6 = inlined_call_operand.vmem [shape: f32[1,128], index: 6, kind: input, shape index: {}]
  %s7 = inlined_call_operand.vmem [shape: f32[8,128], index: 7, kind: output, shape index: {}]
  %s8 = sld [smem:[#allocation0]]
  $region38: #{fashion_cnn_forward.5} parent=0
    _
  %s10 = ssub.s32 1, %s8
  %s11 = scalar_select 0, %s10, %s8
  // Predicated region
  $region2: #{fashion_cnn_forward.5} parent=0 // pred_check
    _
  $region3: #{fashion_cnn_forward.5} parent=0 // pred_check_branch
    %13 = sbr.rel (0) target = $region5
  $region4: #{fashion_cnn_forward.5} parent=0 // pred_region
    _
  $region5: #{fashion_cnn_forward.5} parent=0 // pred_fallthru
    _
  // Predicated region
  $region6: #{fashion_cnn_forward.5} parent=0 // pred_check
    _
  $region7: #{fashion_cnn_forward.5} parent=0 // pred_check_branch
    %15 = sbr.rel (0) target = $region9
  $region8: #{fashion_cnn_forward.5} parent=0 // pred_region
    _
  $region9: #{fashion_cnn_forward.5} parent=0 // pred_fallthru
    _
  // Predicated region
  $region10: #{fashion_cnn_forward.5} parent=0 // pred_check
    _
  $region11: #{fashion_cnn_forward.5} parent=0 // pred_check_branch
    %17 = sbr.rel (0) target = $region13
  $region12: #{fashion_cnn_forward.5} parent=0 // pred_region
    _
  $region13: #{fashion_cnn_forward.5} parent=0 // pred_fallthru
    _
  // Predicated region
  $region14: #{fashion_cnn_forward.5} parent=0 // pred_check
    _
  $region15: #{fashion_cnn_forward.5} parent=0 // pred_check_branch
    %19 = sbr.rel (0) target = $region17
  $region16: #{fashion_cnn_forward.5} parent=0 // pred_region
    _
  $region17: #{fashion_cnn_forward.5} parent=0 // pred_fallthru
    _
  // Predicated region
  $region18: #{fashion_cnn_forward.5} parent=0 // pred_check
    _
  $region19: #{fashion_cnn_forward.5} parent=0 // pred_check_branch
    %21 = sbr.rel (0) target = $region21
  $region20: #{fashion_cnn_forward.5} parent=0 // pred_region
    _
  $region21: #{fashion_cnn_forward.5} parent=0 // pred_fallthru
    _
  // Predicated region
  $region22: #{fashion_cnn_forward.5} parent=0 // pred_check
    _
  $region23: #{fashion_cnn_forward.5} parent=0 // pred_check_branch
    %23 = sbr.rel (0) target = $region25
  $region24: #{fashion_cnn_forward.5} parent=0 // pred_region
    _
  $region25: #{fashion_cnn_forward.5} parent=0 // pred_fallthru
    _
  // Predicated region
  $region26: #{fashion_cnn_forward.5} parent=0 // pred_check
    _
  $region27: #{fashion_cnn_forward.5} parent=0 // pred_check_branch
    %25 = sbr.rel (0) target = $region29
  $region28: #{fashion_cnn_forward.5} parent=0 // pred_region
    _
  $region29: #{fashion_cnn_forward.5} parent=0 // pred_fallthru
    _
  %v27 = vld [vmem:[%s0] sm:$0xff]
  %v28 = vld [vmem:[%s0 + $0x8] sm:$0xff]
  %v29 = vld [vmem:[%s0 + $0x10] sm:$0xff]
  %v30 = vld [vmem:[%s0 + $0x18] sm:$0xff]
  %v31 = vld [vmem:[%s0 + $0x20] sm:$0xff]
  %v32 = vld [vmem:[%s0 + $0x28] sm:$0xff]
  %v33 = vld [vmem:[%s0 + $0x30] sm:$0xff]
  %v34 = vld [vmem:[%s0 + $0x38] sm:$0xff]
  %v35 = vld [vmem:[%s0 + $0x40] sm:$0xff]
  %v36 = vld [vmem:[%s1] sm:$0xff]
  %v37 = vld [vmem:[%s1 + $0x8] sm:$0xff]
  %v38 = vld [vmem:[%s1 + $0x10] sm:$0xf]
  %v39 = vld [vmem:[%s1 + $0x14] sm:$0xff]
  %v40 = vld [vmem:[%s1 + $0x1c] sm:$0xff]
  %v41 = vld [vmem:[%s1 + $0x24] sm:$0xf]
  %v42 = vld [vmem:[%s1 + $0x28] sm:$0xff]
  %v43 = vld [vmem:[%s1 + $0x30] sm:$0xff]
  %v44 = vld [vmem:[%s1 + $0x38] sm:$0xf]
  %v45 = vld [vmem:[%s1 + $0x3c] sm:$0xff]
  %v46 = vld [vmem:[%s1 + $0x44] sm:$0xff]
  %v47 = vld [vmem:[%s1 + $0x4c] sm:$0xf]
  %v48 = vld [vmem:[%s1 + $0x50] sm:$0xff]
  %v49 = vld [vmem:[%s1 + $0x58] sm:$0xff]
  %v50 = vld [vmem:[%s1 + $0x60] sm:$0xf]
  %v51 = vld [vmem:[%s1 + $0x64] sm:$0xff]
  %v52 = vld [vmem:[%s1 + $0x6c] sm:$0xff]
  %v53 = vld [vmem:[%s1 + $0x74] sm:$0xf]
  %v54 = vld [vmem:[%s1 + $0x78] sm:$0xff]
  %v55 = vld [vmem:[%s1 + $0x80] sm:$0xff]
  %v56 = vld [vmem:[%s1 + $0x88] sm:$0xf]
  %v57 = vld [vmem:[%s1 + $0x8c] sm:$0xff]
  %v58 = vld [vmem:[%s1 + $0x94] sm:$0xff]
  %v59 = vld [vmem:[%s1 + $0x9c] sm:$0xf]
  %v60 = vld [vmem:[%s1 + $0xa0] sm:$0xff]
  %v61 = vld [vmem:[%s1 + $0xa8] sm:$0xff]
  %v62 = vld [vmem:[%s1 + $0xb0] sm:$0xf]
  %v63 = vld [vmem:[%s1 + $0xb4] sm:$0xff]
  %v64 = vld [vmem:[%s1 + $0xbc] sm:$0xff]
  %v65 = vld [vmem:[%s1 + $0xc4] sm:$0xf]
  %v66 = vld [vmem:[%s1 + $0xc8] sm:$0xff]
  %v67 = vld [vmem:[%s1 + $0xd0] sm:$0xff]
  %v68 = vld [vmem:[%s1 + $0xd8] sm:$0xf]
  %v69 = vld [vmem:[%s1 + $0xdc] sm:$0xff]
  %v70 = vld [vmem:[%s1 + $0xe4] sm:$0xff]
  %v71 = vld [vmem:[%s1 + $0xec] sm:$0xf]
  %v72 = vld [vmem:[%s1 + $0xf0] sm:$0xff]
  %v73 = vld [vmem:[%s1 + $0xf8] sm:$0xff]
  %v74 = vld [vmem:[%s1 + $0x100] sm:$0xf]
  %v75 = vld [vmem:[%s1 + $0x104] sm:$0xff]
  %v76 = vld [vmem:[%s1 + $0x10c] sm:$0xff]
  %v77 = vld [vmem:[%s1 + $0x114] sm:$0xf]
  %v78 = vld [vmem:[%s1 + $0x118] sm:$0xff]
  %v79 = vld [vmem:[%s1 + $0x120] sm:$0xff]
  %v80 = vld [vmem:[%s1 + $0x128] sm:$0xf]
  %v81 = vld [vmem:[%s1 + $0x12c] sm:$0xff]
  %v82 = vld [vmem:[%s1 + $0x134] sm:$0xff]
  %v83 = vld [vmem:[%s1 + $0x13c] sm:$0xf]
  %v84 = vld [vmem:[%s1 + $0x140] sm:$0xff]
  %v85 = vld [vmem:[%s1 + $0x148] sm:$0xff]
  %v86 = vld [vmem:[%s1 + $0x150] sm:$0xf]
  %v87 = vld [vmem:[%s1 + $0x154] sm:$0xff]
  %v88 = vld [vmem:[%s1 + $0x15c] sm:$0xff]
  %v89 = vld [vmem:[%s1 + $0x164] sm:$0xf]
  %v90 = vld [vmem:[%s1 + $0x168] sm:$0xff]
  %v91 = vld [vmem:[%s1 + $0x170] sm:$0xff]
  %v92 = vld [vmem:[%s1 + $0x178] sm:$0xf]
  %v93 = vld [vmem:[%s1 + $0x17c] sm:$0xff]
  %v94 = vld [vmem:[%s1 + $0x184] sm:$0xff]
  %v95 = vld [vmem:[%s1 + $0x18c] sm:$0xf]
  %v96 = vld [vmem:[%s1 + $0x190] sm:$0xff]
  %v97 = vld [vmem:[%s1 + $0x198] sm:$0xff]
  %v98 = vld [vmem:[%s1 + $0x1a0] sm:$0xf]
  %v99 = vld [vmem:[%s1 + $0x1a4] sm:$0xff]
  %v100 = vld [vmem:[%s1 + $0x1ac] sm:$0xff]
  %v101 = vld [vmem:[%s1 + $0x1b4] sm:$0xf]
  %v102 = vld [vmem:[%s1 + $0x1b8] sm:$0xff]
  %v103 = vld [vmem:[%s1 + $0x1c0] sm:$0xff]
  %v104 = vld [vmem:[%s1 + $0x1c8] sm:$0xf]
  %v105 = vld [vmem:[%s1 + $0x1cc] sm:$0xff]
  %v106 = vld [vmem:[%s1 + $0x1d4] sm:$0xff]
  %v107 = vld [vmem:[%s1 + $0x1dc] sm:$0xf]
  %v108 = vld [vmem:[%s1 + $0x1e0] sm:$0xff]
  %v109 = vld [vmem:[%s1 + $0x1e8] sm:$0xff]
  %v110 = vld [vmem:[%s1 + $0x1f0] sm:$0xf]
  %v111 = vld [vmem:[%s1 + $0x1f4] sm:$0xff]
  %v112 = vld [vmem:[%s1 + $0x1fc] sm:$0xff]
  %v113 = vld [vmem:[%s1 + $0x204] sm:$0xf]
  %v114 = vld [vmem:[%s1 + $0x208] sm:$0xff]
  %v115 = vld [vmem:[%s1 + $0x210] sm:$0xff]
  %v116 = vld [vmem:[%s1 + $0x218] sm:$0xf]
  %v117 = vld [vmem:[%s1 + $0x21c] sm:$0xff]
  %v118 = vld [vmem:[%s1 + $0x224] sm:$0xff]
  %v119 = vld [vmem:[%s1 + $0x22c] sm:$0xf]
  %v120 = vld [vmem:[%s1 + $0x230] sm:$0xff]
  %v121 = vld [vmem:[%s1 + $0x238] sm:$0xff]
  %v122 = vld [vmem:[%s1 + $0x240] sm:$0xf]
  %v123 = vld [vmem:[%s1 + $0x244] sm:$0xff]
  %v124 = vld [vmem:[%s1 + $0x24c] sm:$0xff]
  %v125 = vld [vmem:[%s1 + $0x254] sm:$0xf]
  %v126 = vld [vmem:[%s1 + $0x258] sm:$0xff]
  %v127 = vld [vmem:[%s1 + $0x260] sm:$0xff]
  %v128 = vld [vmem:[%s1 + $0x268] sm:$0xf]
  %v129 = vld [vmem:[%s1 + $0x26c] sm:$0xff]
  %v130 = vld [vmem:[%s1 + $0x274] sm:$0xff]
  %v131 = vld [vmem:[%s1 + $0x27c] sm:$0xf]
  %v132 = vld [vmem:[%s1 + $0x280] sm:$0xff]
  %v133 = vld [vmem:[%s1 + $0x288] sm:$0xff]
  %v134 = vld [vmem:[%s1 + $0x290] sm:$0xf]
  %v135 = vld [vmem:[%s1 + $0x294] sm:$0xff]
  %v136 = vld [vmem:[%s1 + $0x29c] sm:$0xff]
  %v137 = vld [vmem:[%s1 + $0x2a4] sm:$0xf]
  %v138 = vld [vmem:[%s1 + $0x2a8] sm:$0xff]
  %v139 = vld [vmem:[%s1 + $0x2b0] sm:$0xff]
  %v140 = vld [vmem:[%s1 + $0x2b8] sm:$0xf]
  %v141 = vld [vmem:[%s1 + $0x2bc] sm:$0xff]
  %v142 = vld [vmem:[%s1 + $0x2c4] sm:$0xff]
  %v143 = vld [vmem:[%s1 + $0x2cc] sm:$0xf]
  %v144 = vld [vmem:[%s1 + $0x2d0] sm:$0xff]
  %v145 = vld [vmem:[%s1 + $0x2d8] sm:$0xff]
  %v146 = vld [vmem:[%s1 + $0x2e0] sm:$0xf]
  %v147 = vld [vmem:[%s1 + $0x2e4] sm:$0xff]
  %v148 = vld [vmem:[%s1 + $0x2ec] sm:$0xff]
  %v149 = vld [vmem:[%s1 + $0x2f4] sm:$0xf]
  %v150 = vld [vmem:[%s1 + $0x2f8] sm:$0xff]
  %v151 = vld [vmem:[%s1 + $0x300] sm:$0xff]
  %v152 = vld [vmem:[%s1 + $0x308] sm:$0xf]
  %v153 = vld [vmem:[%s1 + $0x30c] sm:$0xff]
  %v154 = vld [vmem:[%s1 + $0x314] sm:$0xff]
  %v155 = vld [vmem:[%s1 + $0x31c] sm:$0xf]
  %v156 = vld [vmem:[%s1 + $0x320] sm:$0xff]
  %v157 = vld [vmem:[%s1 + $0x328] sm:$0xff]
  %v158 = vld [vmem:[%s1 + $0x330] sm:$0xf]
  %v159 = vld [vmem:[%s1 + $0x334] sm:$0xff]
  %v160 = vld [vmem:[%s1 + $0x33c] sm:$0xff]
  %v161 = vld [vmem:[%s1 + $0x344] sm:$0xf]
  %v162 = vld [vmem:[%s1 + $0x348] sm:$0xff]
  %v163 = vld [vmem:[%s1 + $0x350] sm:$0xff]
  %v164 = vld [vmem:[%s1 + $0x358] sm:$0xf]
  %v165 = vld [vmem:[%s1 + $0x35c] sm:$0xff]
  %v166 = vld [vmem:[%s1 + $0x364] sm:$0xff]
  %v167 = vld [vmem:[%s1 + $0x36c] sm:$0xf]
  %v168 = vld [vmem:[%s1 + $0x370] sm:$0xff]
  %v169 = vld [vmem:[%s1 + $0x378] sm:$0xff]
  %v170 = vld [vmem:[%s1 + $0x380] sm:$0xf]
  %v171 = vld [vmem:[%s1 + $0x384] sm:$0xff]
  %v172 = vld [vmem:[%s1 + $0x38c] sm:$0xff]
  %v173 = vld [vmem:[%s1 + $0x394] sm:$0xf]
  %v174 = vld [vmem:[%s1 + $0x398] sm:$0xff]
  %v175 = vld [vmem:[%s1 + $0x3a0] sm:$0xff]
  %v176 = vld [vmem:[%s1 + $0x3a8] sm:$0xf]
  %v177 = vld [vmem:[%s1 + $0x3ac] sm:$0xff]
  %v178 = vld [vmem:[%s1 + $0x3b4] sm:$0xff]
  %v179 = vld [vmem:[%s1 + $0x3bc] sm:$0xf]
  %v180 = vld [vmem:[%s1 + $0x3c0] sm:$0xff]
  %v181 = vld [vmem:[%s1 + $0x3c8] sm:$0xff]
  %v182 = vld [vmem:[%s1 + $0x3d0] sm:$0xf]
  %v183 = vld [vmem:[%s1 + $0x3d4] sm:$0xff]
  %v184 = vld [vmem:[%s1 + $0x3dc] sm:$0xff]
  %v185 = vld [vmem:[%s1 + $0x3e4] sm:$0xf]
  %v186 = vld [vmem:[%s1 + $0x3e8] sm:$0xff]
  %v187 = vld [vmem:[%s1 + $0x3f0] sm:$0xff]
  %v188 = vld [vmem:[%s1 + $0x3f8] sm:$0xf]
  %v189 = vld [vmem:[%s1 + $0x3fc] sm:$0xff]
  %v190 = vld [vmem:[%s1 + $0x404] sm:$0xff]
  %v191 = vld [vmem:[%s1 + $0x40c] sm:$0xf]
  %v192 = vld [vmem:[%s1 + $0x410] sm:$0xff]
  %v193 = vld [vmem:[%s1 + $0x418] sm:$0xff]
  %v194 = vld [vmem:[%s1 + $0x420] sm:$0xf]
  %v195 = vld [vmem:[%s1 + $0x424] sm:$0xff]
  %v196 = vld [vmem:[%s1 + $0x42c] sm:$0xff]
  %v197 = vld [vmem:[%s1 + $0x434] sm:$0xf]
  %v198 = vld [vmem:[%s1 + $0x438] sm:$0xff]
  %v199 = vld [vmem:[%s1 + $0x440] sm:$0xff]
  %v200 = vld [vmem:[%s1 + $0x448] sm:$0xf]
  %v201 = vld [vmem:[%s1 + $0x44c] sm:$0xff]
  %v202 = vld [vmem:[%s1 + $0x454] sm:$0xff]
  %v203 = vld [vmem:[%s1 + $0x45c] sm:$0xf]
  %v204 = vld [vmem:[%s1 + $0x460] sm:$0xff]
  %v205 = vld [vmem:[%s1 + $0x468] sm:$0xff]
  %v206 = vld [vmem:[%s1 + $0x470] sm:$0xf]
  %v207 = vld [vmem:[%s1 + $0x474] sm:$0xff]
  %v208 = vld [vmem:[%s1 + $0x47c] sm:$0xff]
  %v209 = vld [vmem:[%s1 + $0x484] sm:$0xf]
  %v210 = vld [vmem:[%s1 + $0x488] sm:$0xff]
  %v211 = vld [vmem:[%s1 + $0x490] sm:$0xff]
  %v212 = vld [vmem:[%s1 + $0x498] sm:$0xf]
  %v213 = vld [vmem:[%s1 + $0x49c] sm:$0xff]
  %v214 = vld [vmem:[%s1 + $0x4a4] sm:$0xff]
  %v215 = vld [vmem:[%s1 + $0x4ac] sm:$0xf]
  %v216 = vld [vmem:[%s1 + $0x4b0] sm:$0xff]
  %v217 = vld [vmem:[%s1 + $0x4b8] sm:$0xff]
  %v218 = vld [vmem:[%s1 + $0x4c0] sm:$0xf]
  %v219 = vld [vmem:[%s1 + $0x4c4] sm:$0xff]
  %v220 = vld [vmem:[%s1 + $0x4cc] sm:$0xff]
  %v221 = vld [vmem:[%s1 + $0x4d4] sm:$0xf]
  %v222 = vld [vmem:[%s1 + $0x4d8] sm:$0xff]
  %v223 = vld [vmem:[%s1 + $0x4e0] sm:$0xff]
  %v224 = vld [vmem:[%s1 + $0x4e8] sm:$0xf]
  %v225 = vld [vmem:[%s1 + $0x4ec] sm:$0xff]
  %v226 = vld [vmem:[%s1 + $0x4f4] sm:$0xff]
  %v227 = vld [vmem:[%s1 + $0x4fc] sm:$0xf]
  %v228 = vld [vmem:[%s1 + $0x500] sm:$0xff]
  %v229 = vld [vmem:[%s1 + $0x508] sm:$0xff]
  %v230 = vld [vmem:[%s1 + $0x510] sm:$0xf]
  %v231 = vld [vmem:[%s1 + $0x514] sm:$0xff]
  %v232 = vld [vmem:[%s1 + $0x51c] sm:$0xff]
  %v233 = vld [vmem:[%s1 + $0x524] sm:$0xf]
  %v234 = vld [vmem:[%s1 + $0x528] sm:$0xff]
  %v235 = vld [vmem:[%s1 + $0x530] sm:$0xff]
  %v236 = vld [vmem:[%s1 + $0x538] sm:$0xf]
  %v237 = vld [vmem:[%s1 + $0x53c] sm:$0xff]
  %v238 = vld [vmem:[%s1 + $0x544] sm:$0xff]
  %v239 = vld [vmem:[%s1 + $0x54c] sm:$0xf]
  %v240 = vld [vmem:[%s1 + $0x550] sm:$0xff]
  %v241 = vld [vmem:[%s1 + $0x558] sm:$0xff]
  %v242 = vld [vmem:[%s1 + $0x560] sm:$0xf]
  %v243 = vld [vmem:[%s1 + $0x564] sm:$0xff]
  %v244 = vld [vmem:[%s1 + $0x56c] sm:$0xff]
  %v245 = vld [vmem:[%s1 + $0x574] sm:$0xf]
  %v246 = vld [vmem:[%s1 + $0x578] sm:$0xff]
  %v247 = vld [vmem:[%s1 + $0x580] sm:$0xff]
  %v248 = vld [vmem:[%s1 + $0x588] sm:$0xf]
  %v249 = vld [vmem:[%s1 + $0x58c] sm:$0xff]
  %v250 = vld [vmem:[%s1 + $0x594] sm:$0xff]
  %v251 = vld [vmem:[%s1 + $0x59c] sm:$0xf]
  %v252 = vld [vmem:[%s1 + $0x5a0] sm:$0xff]
  %v253 = vld [vmem:[%s1 + $0x5a8] sm:$0xff]
  %v254 = vld [vmem:[%s1 + $0x5b0] sm:$0xf]
  %v255 = vld [vmem:[%s1 + $0x5b4] sm:$0xff]
  %v256 = vld [vmem:[%s1 + $0x5bc] sm:$0xff]
  %v257 = vld [vmem:[%s1 + $0x5c4] sm:$0xf]
  %v258 = vld [vmem:[%s1 + $0x5c8] sm:$0xff]
  %v259 = vld [vmem:[%s1 + $0x5d0] sm:$0xff]
  %v260 = vld [vmem:[%s1 + $0x5d8] sm:$0xf]
  %v261 = vld [vmem:[%s1 + $0x5dc] sm:$0xff]
  %v262 = vld [vmem:[%s1 + $0x5e4] sm:$0xff]
  %v263 = vld [vmem:[%s1 + $0x5ec] sm:$0xf]
  %v264 = vld [vmem:[%s1 + $0x5f0] sm:$0xff]
  %v265 = vld [vmem:[%s1 + $0x5f8] sm:$0xff]
  %v266 = vld [vmem:[%s1 + $0x600] sm:$0xf]
  %v267 = vld [vmem:[%s1 + $0x604] sm:$0xff]
  %v268 = vld [vmem:[%s1 + $0x60c] sm:$0xff]
  %v269 = vld [vmem:[%s1 + $0x614] sm:$0xf]
  %v270 = vld [vmem:[%s1 + $0x618] sm:$0xff]
  %v271 = vld [vmem:[%s1 + $0x620] sm:$0xff]
  %v272 = vld [vmem:[%s1 + $0x628] sm:$0xf]
  %v273 = vld [vmem:[%s1 + $0x62c] sm:$0xff]
  %v274 = vld [vmem:[%s1 + $0x634] sm:$0xff]
  %v275 = vld [vmem:[%s1 + $0x63c] sm:$0xf]
  %v276 = vld [vmem:[%s1 + $0x640] sm:$0xff]
  %v277 = vld [vmem:[%s1 + $0x648] sm:$0xff]
  %v278 = vld [vmem:[%s1 + $0x650] sm:$0xf]
  %v279 = vld [vmem:[%s1 + $0x654] sm:$0xff]
  %v280 = vld [vmem:[%s1 + $0x65c] sm:$0xff]
  %v281 = vld [vmem:[%s1 + $0x664] sm:$0xf]
  %v282 = vld [vmem:[%s1 + $0x668] sm:$0xff]
  %v283 = vld [vmem:[%s1 + $0x670] sm:$0xff]
  %v284 = vld [vmem:[%s1 + $0x678] sm:$0xf]
  %v285 = vld [vmem:[%s1 + $0x67c] sm:$0xff]
  %v286 = vld [vmem:[%s1 + $0x684] sm:$0xff]
  %v287 = vld [vmem:[%s1 + $0x68c] sm:$0xf]
  %v288 = vld [vmem:[%s1 + $0x690] sm:$0xff]
  %v289 = vld [vmem:[%s1 + $0x698] sm:$0xff]
  %v290 = vld [vmem:[%s1 + $0x6a0] sm:$0xf]
  %v291 = vld [vmem:[%s1 + $0x6a4] sm:$0xff]
  %v292 = vld [vmem:[%s1 + $0x6ac] sm:$0xff]
  %v293 = vld [vmem:[%s1 + $0x6b4] sm:$0xf]
  %v294 = vld [vmem:[%s1 + $0x6b8] sm:$0xff]
  %v295 = vld [vmem:[%s1 + $0x6c0] sm:$0xff]
  %v296 = vld [vmem:[%s1 + $0x6c8] sm:$0xf]
  %v297 = vld [vmem:[%s1 + $0x6cc] sm:$0xff]
  %v298 = vld [vmem:[%s1 + $0x6d4] sm:$0xff]
  %v299 = vld [vmem:[%s1 + $0x6dc] sm:$0xf]
  %v300 = vld [vmem:[%s1 + $0x6e0] sm:$0xff]
  %v301 = vld [vmem:[%s1 + $0x6e8] sm:$0xff]
  %v302 = vld [vmem:[%s1 + $0x6f0] sm:$0xf]
  %v303 = vld [vmem:[%s1 + $0x6f4] sm:$0xff]
  %v304 = vld [vmem:[%s1 + $0x6fc] sm:$0xff]
  %v305 = vld [vmem:[%s1 + $0x704] sm:$0xf]
  %v306 = vld [vmem:[%s1 + $0x708] sm:$0xff]
  %v307 = vld [vmem:[%s1 + $0x710] sm:$0xff]
  %v308 = vld [vmem:[%s1 + $0x718] sm:$0xf]
  %v309 = vld [vmem:[%s1 + $0x71c] sm:$0xff]
  %v310 = vld [vmem:[%s1 + $0x724] sm:$0xff]
  %v311 = vld [vmem:[%s1 + $0x72c] sm:$0xf]
  %v312 = vld [vmem:[%s1 + $0x730] sm:$0xff]
  %v313 = vld [vmem:[%s1 + $0x738] sm:$0xff]
  %v314 = vld [vmem:[%s1 + $0x740] sm:$0xf]
  %v315 = vld [vmem:[%s1 + $0x744] sm:$0xff]
  %v316 = vld [vmem:[%s1 + $0x74c] sm:$0xff]
  %v317 = vld [vmem:[%s1 + $0x754] sm:$0xf]
  %v318 = vld [vmem:[%s1 + $0x758] sm:$0xff]
  %v319 = vld [vmem:[%s1 + $0x760] sm:$0xff]
  %v320 = vld [vmem:[%s1 + $0x768] sm:$0xf]
  %v321 = vld [vmem:[%s1 + $0x76c] sm:$0xff]
  %v322 = vld [vmem:[%s1 + $0x774] sm:$0xff]
  %v323 = vld [vmem:[%s1 + $0x77c] sm:$0xf]
  %v324 = vld [vmem:[%s1 + $0x780] sm:$0xff]
  %v325 = vld [vmem:[%s1 + $0x788] sm:$0xff]
  %v326 = vld [vmem:[%s1 + $0x790] sm:$0xf]
  %v327 = vld [vmem:[%s1 + $0x794] sm:$0xff]
  %v328 = vld [vmem:[%s1 + $0x79c] sm:$0xff]
  %v329 = vld [vmem:[%s1 + $0x7a4] sm:$0xf]
  %v330 = vld [vmem:[%s1 + $0x7a8] sm:$0xff]
  %v331 = vld [vmem:[%s1 + $0x7b0] sm:$0xff]
  %v332 = vld [vmem:[%s1 + $0x7b8] sm:$0xf]
  %v333 = vld [vmem:[%s1 + $0x7bc] sm:$0xff]
  %v334 = vld [vmem:[%s1 + $0x7c4] sm:$0xff]
  %v335 = vld [vmem:[%s1 + $0x7cc] sm:$0xf]
  %v336 = vld [vmem:[%s1 + $0x7d0] sm:$0xff]
  %v337 = vld [vmem:[%s1 + $0x7d8] sm:$0xff]
  %v338 = vld [vmem:[%s1 + $0x7e0] sm:$0xf]
  %v339 = vld [vmem:[%s1 + $0x7e4] sm:$0xff]
  %v340 = vld [vmem:[%s1 + $0x7ec] sm:$0xff]
  %v341 = vld [vmem:[%s1 + $0x7f4] sm:$0xf]
  %v342 = vld [vmem:[%s1 + $0x7f8] sm:$0xff]
  %v343 = vld [vmem:[%s1 + $0x800] sm:$0xff]
  %v344 = vld [vmem:[%s1 + $0x808] sm:$0xf]
  %v345 = vld [vmem:[%s1 + $0x80c] sm:$0xff]
  %v346 = vld [vmem:[%s1 + $0x814] sm:$0xff]
  %v347 = vld [vmem:[%s1 + $0x81c] sm:$0xf]
  %v348 = vld [vmem:[%s1 + $0x820] sm:$0xff]
  %v349 = vld [vmem:[%s1 + $0x828] sm:$0xff]
  %v350 = vld [vmem:[%s1 + $0x830] sm:$0xf]
  %v351 = vld [vmem:[%s1 + $0x834] sm:$0xff]
  %v352 = vld [vmem:[%s1 + $0x83c] sm:$0xff]
  %v353 = vld [vmem:[%s1 + $0x844] sm:$0xf]
  %v354 = vld [vmem:[%s1 + $0x848] sm:$0xff]
  %v355 = vld [vmem:[%s1 + $0x850] sm:$0xff]
  %v356 = vld [vmem:[%s1 + $0x858] sm:$0xf]
  %v357 = vld [vmem:[%s1 + $0x85c] sm:$0xff]
  %v358 = vld [vmem:[%s1 + $0x864] sm:$0xff]
  %v359 = vld [vmem:[%s1 + $0x86c] sm:$0xf]
  %v360 = vld [vmem:[%s1 + $0x870] sm:$0xff]
  %v361 = vld [vmem:[%s1 + $0x878] sm:$0xff]
  %v362 = vld [vmem:[%s1 + $0x880] sm:$0xf]
  %v363 = vld [vmem:[%s1 + $0x884] sm:$0xff]
  %v364 = vld [vmem:[%s1 + $0x88c] sm:$0xff]
  %v365 = vld [vmem:[%s1 + $0x894] sm:$0xf]
  %v366 = vld [vmem:[%s1 + $0x898] sm:$0xff]
  %v367 = vld [vmem:[%s1 + $0x8a0] sm:$0xff]
  %v368 = vld [vmem:[%s1 + $0x8a8] sm:$0xf]
  %v369 = vld [vmem:[%s1 + $0x8ac] sm:$0xff]
  %v370 = vld [vmem:[%s1 + $0x8b4] sm:$0xff]
  %v371 = vld [vmem:[%s1 + $0x8bc] sm:$0xf]
  %v372 = vld [vmem:[%s1 + $0x8c0] sm:$0xff]
  %v373 = vld [vmem:[%s1 + $0x8c8] sm:$0xff]
  %v374 = vld [vmem:[%s1 + $0x8d0] sm:$0xf]
  %v375 = vld [vmem:[%s1 + $0x8d4] sm:$0xff]
  %v376 = vld [vmem:[%s1 + $0x8dc] sm:$0xff]
  %v377 = vld [vmem:[%s1 + $0x8e4] sm:$0xf]
  %v378 = vld [vmem:[%s1 + $0x8e8] sm:$0xff]
  %v379 = vld [vmem:[%s1 + $0x8f0] sm:$0xff]
  %v380 = vld [vmem:[%s1 + $0x8f8] sm:$0xf]
  %v381 = vld [vmem:[%s1 + $0x8fc] sm:$0xff]
  %v382 = vld [vmem:[%s1 + $0x904] sm:$0xff]
  %v383 = vld [vmem:[%s1 + $0x90c] sm:$0xf]
  %v384 = vld [vmem:[%s1 + $0x910] sm:$0xff]
  %v385 = vld [vmem:[%s1 + $0x918] sm:$0xff]
  %v386 = vld [vmem:[%s1 + $0x920] sm:$0xf]
  %v387 = vld [vmem:[%s1 + $0x924] sm:$0xff]
  %v388 = vld [vmem:[%s1 + $0x92c] sm:$0xff]
  %v389 = vld [vmem:[%s1 + $0x934] sm:$0xf]
  %v390 = vld [vmem:[%s1 + $0x938] sm:$0xff]
  %v391 = vld [vmem:[%s1 + $0x940] sm:$0xff]
  %v392 = vld [vmem:[%s1 + $0x948] sm:$0xf]
  %v393 = vld [vmem:[%s1 + $0x94c] sm:$0xff]
  %v394 = vld [vmem:[%s1 + $0x954] sm:$0xff]
  %v395 = vld [vmem:[%s1 + $0x95c] sm:$0xf]
  %v396 = vld [vmem:[%s1 + $0x960] sm:$0xff]
  %v397 = vld [vmem:[%s1 + $0x968] sm:$0xff]
  %v398 = vld [vmem:[%s1 + $0x970] sm:$0xf]
  %v399 = vld [vmem:[%s1 + $0x974] sm:$0xff]
  %v400 = vld [vmem:[%s1 + $0x97c] sm:$0xff]
  %v401 = vld [vmem:[%s1 + $0x984] sm:$0xf]
  %v402 = vld [vmem:[%s1 + $0x988] sm:$0xff]
  %v403 = vld [vmem:[%s1 + $0x990] sm:$0xff]
  %v404 = vld [vmem:[%s1 + $0x998] sm:$0xf]
  %v405 = vld [vmem:[%s1 + $0x99c] sm:$0xff]
  %v406 = vld [vmem:[%s1 + $0x9a4] sm:$0xff]
  %v407 = vld [vmem:[%s1 + $0x9ac] sm:$0xf]
  %v408 = vld [vmem:[%s1 + $0x9b0] sm:$0xff]
  %v409 = vld [vmem:[%s1 + $0x9b8] sm:$0xff]
  %v410 = vld [vmem:[%s1 + $0x9c0] sm:$0xf]
  %v411 = vld [vmem:[%s1 + $0x9c4] sm:$0xff]
  %v412 = vld [vmem:[%s1 + $0x9cc] sm:$0xff]
  %v413 = vld [vmem:[%s1 + $0x9d4] sm:$0xf]
  %v414 = vld [vmem:[%s1 + $0x9d8] sm:$0xff]
  %v415 = vld [vmem:[%s1 + $0x9e0] sm:$0xff]
  %v416 = vld [vmem:[%s1 + $0x9e8] sm:$0xf]
  %v417 = vld [vmem:[%s1 + $0x9ec] sm:$0xff]
  %v418 = vld [vmem:[%s1 + $0x9f4] sm:$0xff]
  %v419 = vld [vmem:[%s1 + $0x9fc] sm:$0xf]
  %v420 = vld [vmem:[%s1 + $0xa00] sm:$0xff]
  %v421 = vld [vmem:[%s1 + $0xa08] sm:$0xff]
  %v422 = vld [vmem:[%s1 + $0xa10] sm:$0xf]
  %v423 = vld [vmem:[%s1 + $0xa14] sm:$0xff]
  %v424 = vld [vmem:[%s1 + $0xa1c] sm:$0xff]
  %v425 = vld [vmem:[%s1 + $0xa24] sm:$0xf]
  %v426 = vld [vmem:[%s1 + $0xa28] sm:$0xff]
  %v427 = vld [vmem:[%s1 + $0xa30] sm:$0xff]
  %v428 = vld [vmem:[%s1 + $0xa38] sm:$0xf]
  %v429 = vld [vmem:[%s1 + $0xa3c] sm:$0xff]
  %v430 = vld [vmem:[%s1 + $0xa44] sm:$0xff]
  %v431 = vld [vmem:[%s1 + $0xa4c] sm:$0xf]
  %v432 = vld [vmem:[%s1 + $0xa50] sm:$0xff]
  %v433 = vld [vmem:[%s1 + $0xa58] sm:$0xff]
  %v434 = vld [vmem:[%s1 + $0xa60] sm:$0xf]
  %v435 = vld [vmem:[%s1 + $0xa64] sm:$0xff]
  %v436 = vld [vmem:[%s1 + $0xa6c] sm:$0xff]
  %v437 = vld [vmem:[%s1 + $0xa74] sm:$0xf]
  %v438 = vld [vmem:[%s1 + $0xa78] sm:$0xff]
  %v439 = vld [vmem:[%s1 + $0xa80] sm:$0xff]
  %v440 = vld [vmem:[%s1 + $0xa88] sm:$0xf]
  %v441 = vld [vmem:[%s1 + $0xa8c] sm:$0xff]
  %v442 = vld [vmem:[%s1 + $0xa94] sm:$0xff]
  %v443 = vld [vmem:[%s1 + $0xa9c] sm:$0xf]
  %v444 = vld [vmem:[%s1 + $0xaa0] sm:$0xff]
  %v445 = vld [vmem:[%s1 + $0xaa8] sm:$0xff]
  %v446 = vld [vmem:[%s1 + $0xab0] sm:$0xf]
  %v447 = vld [vmem:[%s1 + $0xab4] sm:$0xff]
  %v448 = vld [vmem:[%s1 + $0xabc] sm:$0xff]
  %v449 = vld [vmem:[%s1 + $0xac4] sm:$0xf]
  %v450 = vld [vmem:[%s1 + $0xac8] sm:$0xff]
  %v451 = vld [vmem:[%s1 + $0xad0] sm:$0xff]
  %v452 = vld [vmem:[%s1 + $0xad8] sm:$0xf]
  %v453 = vld [vmem:[%s1 + $0xadc] sm:$0xff]
  %v454 = vld [vmem:[%s1 + $0xae4] sm:$0xff]
  %v455 = vld [vmem:[%s1 + $0xaec] sm:$0xf]
  %v456 = vld [vmem:[%s1 + $0xaf0] sm:$0xff]
  %v457 = vld [vmem:[%s1 + $0xaf8] sm:$0xff]
  %v458 = vld [vmem:[%s1 + $0xb00] sm:$0xf]
  %v459 = vld [vmem:[%s1 + $0xb04] sm:$0xff]
  %v460 = vld [vmem:[%s1 + $0xb0c] sm:$0xff]
  %v461 = vld [vmem:[%s1 + $0xb14] sm:$0xf]
  %v462 = vld [vmem:[%s1 + $0xb18] sm:$0xff]
  %v463 = vld [vmem:[%s1 + $0xb20] sm:$0xff]
  %v464 = vld [vmem:[%s1 + $0xb28] sm:$0xf]
  %v465 = vld [vmem:[%s1 + $0xb2c] sm:$0xff]
  %v466 = vld [vmem:[%s1 + $0xb34] sm:$0xff]
  %v467 = vld [vmem:[%s1 + $0xb3c] sm:$0xf]
  %v468 = vld [vmem:[%s1 + $0xb40] sm:$0xff]
  %v469 = vld [vmem:[%s1 + $0xb48] sm:$0xff]
  %v470 = vld [vmem:[%s1 + $0xb50] sm:$0xf]
  %v471 = vld [vmem:[%s1 + $0xb54] sm:$0xff]
  %v472 = vld [vmem:[%s1 + $0xb5c] sm:$0xff]
  %v473 = vld [vmem:[%s1 + $0xb64] sm:$0xf]
  %v474 = vld [vmem:[%s1 + $0xb68] sm:$0xff]
  %v475 = vld [vmem:[%s1 + $0xb70] sm:$0xff]
  %v476 = vld [vmem:[%s1 + $0xb78] sm:$0xf]
  %v477 = vld [vmem:[%s1 + $0xb7c] sm:$0xff]
  %v478 = vld [vmem:[%s1 + $0xb84] sm:$0xff]
  %v479 = vld [vmem:[%s1 + $0xb8c] sm:$0xf]
  %v480 = vld [vmem:[%s1 + $0xb90] sm:$0xff]
  %v481 = vld [vmem:[%s1 + $0xb98] sm:$0xff]
  %v482 = vld [vmem:[%s1 + $0xba0] sm:$0xf]
  %v483 = vld [vmem:[%s1 + $0xba4] sm:$0xff]
  %v484 = vld [vmem:[%s1 + $0xbac] sm:$0xff]
  %v485 = vld [vmem:[%s1 + $0xbb4] sm:$0xf]
  %v486 = vld [vmem:[%s1 + $0xbb8] sm:$0xff]
  %v487 = vld [vmem:[%s1 + $0xbc0] sm:$0xff]
  %v488 = vld [vmem:[%s1 + $0xbc8] sm:$0xf]
  %v489 = vld [vmem:[%s1 + $0xbcc] sm:$0xff]
  %v490 = vld [vmem:[%s1 + $0xbd4] sm:$0xff]
  %v491 = vld [vmem:[%s1 + $0xbdc] sm:$0xf]
  %v492 = vld [vmem:[%s1 + $0xbe0] sm:$0xff]
  %v493 = vld [vmem:[%s1 + $0xbe8] sm:$0xff]
  %v494 = vld [vmem:[%s1 + $0xbf0] sm:$0xf]
  %v495 = vld [vmem:[%s1 + $0xbf4] sm:$0xff]
  %v496 = vld [vmem:[%s1 + $0xbfc] sm:$0xff]
  %v497 = vld [vmem:[%s1 + $0xc04] sm:$0xf]
  %v498 = vld [vmem:[%s1 + $0xc08] sm:$0xff]
  %v499 = vld [vmem:[%s1 + $0xc10] sm:$0xff]
  %v500 = vld [vmem:[%s1 + $0xc18] sm:$0xf]
  %v501 = vld [vmem:[%s1 + $0xc1c] sm:$0xff]
  %v502 = vld [vmem:[%s1 + $0xc24] sm:$0xff]
  %v503 = vld [vmem:[%s1 + $0xc2c] sm:$0xf]
  %v504 = vld [vmem:[%s1 + $0xc30] sm:$0xff]
  %v505 = vld [vmem:[%s1 + $0xc38] sm:$0xff]
  %v506 = vld [vmem:[%s1 + $0xc40] sm:$0xf]
  %v507 = vld [vmem:[%s1 + $0xc44] sm:$0xff]
  %v508 = vld [vmem:[%s1 + $0xc4c] sm:$0xff]
  %v509 = vld [vmem:[%s1 + $0xc54] sm:$0xf]
  %v510 = vld [vmem:[%s1 + $0xc58] sm:$0xff]
  %v511 = vld [vmem:[%s1 + $0xc60] sm:$0xff]
  %v512 = vld [vmem:[%s1 + $0xc68] sm:$0xf]
  %v513 = vld [vmem:[%s1 + $0xc6c] sm:$0xff]
  %v514 = vld [vmem:[%s1 + $0xc74] sm:$0xff]
  %v515 = vld [vmem:[%s1 + $0xc7c] sm:$0xf]
  %v516 = vld [vmem:[%s1 + $0xc80] sm:$0xff]
  %v517 = vld [vmem:[%s1 + $0xc88] sm:$0xff]
  %v518 = vld [vmem:[%s1 + $0xc90] sm:$0xf]
  %v519 = vld [vmem:[%s1 + $0xc94] sm:$0xff]
  %v520 = vld [vmem:[%s1 + $0xc9c] sm:$0xff]
  %v521 = vld [vmem:[%s1 + $0xca4] sm:$0xf]
  %v522 = vld [vmem:[%s1 + $0xca8] sm:$0xff]
  %v523 = vld [vmem:[%s1 + $0xcb0] sm:$0xff]
  %v524 = vld [vmem:[%s1 + $0xcb8] sm:$0xf]
  %v525 = vld [vmem:[%s1 + $0xcbc] sm:$0xff]
  %v526 = vld [vmem:[%s1 + $0xcc4] sm:$0xff]
  %v527 = vld [vmem:[%s1 + $0xccc] sm:$0xf]
  %v528 = vld [vmem:[%s1 + $0xcd0] sm:$0xff]
  %v529 = vld [vmem:[%s1 + $0xcd8] sm:$0xff]
  %v530 = vld [vmem:[%s1 + $0xce0] sm:$0xf]
  %v531 = vld [vmem:[%s1 + $0xce4] sm:$0xff]
  %v532 = vld [vmem:[%s1 + $0xcec] sm:$0xff]
  %v533 = vld [vmem:[%s1 + $0xcf4] sm:$0xf]
  %v534 = vld [vmem:[%s1 + $0xcf8] sm:$0xff]
  %v535 = vld [vmem:[%s1 + $0xd00] sm:$0xff]
  %v536 = vld [vmem:[%s1 + $0xd08] sm:$0xf]
  %v537 = vld [vmem:[%s1 + $0xd0c] sm:$0xff]
  %v538 = vld [vmem:[%s1 + $0xd14] sm:$0xff]
  %v539 = vld [vmem:[%s1 + $0xd1c] sm:$0xf]
  %v540 = vld [vmem:[%s1 + $0xd20] sm:$0xff]
  %v541 = vld [vmem:[%s1 + $0xd28] sm:$0xff]
  %v542 = vld [vmem:[%s1 + $0xd30] sm:$0xf]
  %v543 = vld [vmem:[%s1 + $0xd34] sm:$0xff]
  %v544 = vld [vmem:[%s1 + $0xd3c] sm:$0xff]
  %v545 = vld [vmem:[%s1 + $0xd44] sm:$0xf]
  %v546 = vld [vmem:[%s1 + $0xd48] sm:$0xff]
  %v547 = vld [vmem:[%s1 + $0xd50] sm:$0xff]
  %v548 = vld [vmem:[%s1 + $0xd58] sm:$0xf]
  %v549 = vld [vmem:[%s1 + $0xd5c] sm:$0xff]
  %v550 = vld [vmem:[%s1 + $0xd64] sm:$0xff]
  %v551 = vld [vmem:[%s1 + $0xd6c] sm:$0xf]
  %v552 = vld [vmem:[%s1 + $0xd70] sm:$0xff]
  %v553 = vld [vmem:[%s1 + $0xd78] sm:$0xff]
  %v554 = vld [vmem:[%s1 + $0xd80] sm:$0xf]
  %v555 = vld [vmem:[%s1 + $0xd84] sm:$0xff]
  %v556 = vld [vmem:[%s1 + $0xd8c] sm:$0xff]
  %v557 = vld [vmem:[%s1 + $0xd94] sm:$0xf]
  %v558 = vld [vmem:[%s1 + $0xd98] sm:$0xff]
  %v559 = vld [vmem:[%s1 + $0xda0] sm:$0xff]
  %v560 = vld [vmem:[%s1 + $0xda8] sm:$0xf]
  %v561 = vld [vmem:[%s1 + $0xdac] sm:$0xff]
  %v562 = vld [vmem:[%s1 + $0xdb4] sm:$0xff]
  %v563 = vld [vmem:[%s1 + $0xdbc] sm:$0xf]
  %v564 = vld [vmem:[%s1 + $0xdc0] sm:$0xff]
  %v565 = vld [vmem:[%s1 + $0xdc8] sm:$0xff]
  %v566 = vld [vmem:[%s1 + $0xdd0] sm:$0xf]
  %v567 = vld [vmem:[%s1 + $0xdd4] sm:$0xff]
  %v568 = vld [vmem:[%s1 + $0xddc] sm:$0xff]
  %v569 = vld [vmem:[%s1 + $0xde4] sm:$0xf]
  %v570 = vld [vmem:[%s1 + $0xde8] sm:$0xff]
  %v571 = vld [vmem:[%s1 + $0xdf0] sm:$0xff]
  %v572 = vld [vmem:[%s1 + $0xdf8] sm:$0xf]
  %v573 = vld [vmem:[%s1 + $0xdfc] sm:$0xff]
  %v574 = vld [vmem:[%s1 + $0xe04] sm:$0xff]
  %v575 = vld [vmem:[%s1 + $0xe0c] sm:$0xf]
  %v576 = vld [vmem:[%s1 + $0xe10] sm:$0xff]
  %v577 = vld [vmem:[%s1 + $0xe18] sm:$0xff]
  %v578 = vld [vmem:[%s1 + $0xe20] sm:$0xf]
  %v579 = vld [vmem:[%s1 + $0xe24] sm:$0xff]
  %v580 = vld [vmem:[%s1 + $0xe2c] sm:$0xff]
  %v581 = vld [vmem:[%s1 + $0xe34] sm:$0xf]
  %v582 = vld [vmem:[%s1 + $0xe38] sm:$0xff]
  %v583 = vld [vmem:[%s1 + $0xe40] sm:$0xff]
  %v584 = vld [vmem:[%s1 + $0xe48] sm:$0xf]
  %v585 = vld [vmem:[%s1 + $0xe4c] sm:$0xff]
  %v586 = vld [vmem:[%s1 + $0xe54] sm:$0xff]
  %v587 = vld [vmem:[%s1 + $0xe5c] sm:$0xf]
  %v588 = vld [vmem:[%s1 + $0xe60] sm:$0xff]
  %v589 = vld [vmem:[%s1 + $0xe68] sm:$0xff]
  %v590 = vld [vmem:[%s1 + $0xe70] sm:$0xf]
  %v591 = vld [vmem:[%s1 + $0xe74] sm:$0xff]
  %v592 = vld [vmem:[%s1 + $0xe7c] sm:$0xff]
  %v593 = vld [vmem:[%s1 + $0xe84] sm:$0xf]
  %v594 = vld [vmem:[%s1 + $0xe88] sm:$0xff]
  %v595 = vld [vmem:[%s1 + $0xe90] sm:$0xff]
  %v596 = vld [vmem:[%s1 + $0xe98] sm:$0xf]
  %v597 = vld [vmem:[%s1 + $0xe9c] sm:$0xff]
  %v598 = vld [vmem:[%s1 + $0xea4] sm:$0xff]
  %v599 = vld [vmem:[%s1 + $0xeac] sm:$0xf]
  %v600 = vld [vmem:[%s1 + $0xeb0] sm:$0xff]
  %v601 = vld [vmem:[%s1 + $0xeb8] sm:$0xff]
  %v602 = vld [vmem:[%s1 + $0xec0] sm:$0xf]
  %v603 = vld [vmem:[%s1 + $0xec4] sm:$0xff]
  %v604 = vld [vmem:[%s1 + $0xecc] sm:$0xff]
  %v605 = vld [vmem:[%s1 + $0xed4] sm:$0xf]
  %v606 = vld [vmem:[%s1 + $0xed8] sm:$0xff]
  %v607 = vld [vmem:[%s1 + $0xee0] sm:$0xff]
  %v608 = vld [vmem:[%s1 + $0xee8] sm:$0xf]
  %v609 = vld [vmem:[%s1 + $0xeec] sm:$0xff]
  %v610 = vld [vmem:[%s1 + $0xef4] sm:$0xff]
  %v611 = vld [vmem:[%s1 + $0xefc] sm:$0xf]
  %v612 = vld [vmem:[%s1 + $0xf00] sm:$0xff]
  %v613 = vld [vmem:[%s1 + $0xf08] sm:$0xff]
  %v614 = vld [vmem:[%s1 + $0xf10] sm:$0xf]
  %v615 = vld [vmem:[%s1 + $0xf14] sm:$0xff]
  %v616 = vld [vmem:[%s1 + $0xf1c] sm:$0xff]
  %v617 = vld [vmem:[%s1 + $0xf24] sm:$0xf]
  %v618 = vld [vmem:[%s1 + $0xf28] sm:$0xff]
  %v619 = vld [vmem:[%s1 + $0xf30] sm:$0xff]
  %v620 = vld [vmem:[%s1 + $0xf38] sm:$0xf]
  %v621 = vld [vmem:[%s1 + $0xf3c] sm:$0xff]
  %v622 = vld [vmem:[%s1 + $0xf44] sm:$0xff]
  %v623 = vld [vmem:[%s1 + $0xf4c] sm:$0xf]
  %v624 = vld [vmem:[%s1 + $0xf50] sm:$0xff]
  %v625 = vld [vmem:[%s1 + $0xf58] sm:$0xff]
  %v626 = vld [vmem:[%s1 + $0xf60] sm:$0xf]
  %v627 = vld [vmem:[%s1 + $0xf64] sm:$0xff]
  %v628 = vld [vmem:[%s1 + $0xf6c] sm:$0xff]
  %v629 = vld [vmem:[%s1 + $0xf74] sm:$0xf]
  %v630 = vld [vmem:[%s1 + $0xf78] sm:$0xff]
  %v631 = vld [vmem:[%s1 + $0xf80] sm:$0xff]
  %v632 = vld [vmem:[%s1 + $0xf88] sm:$0xf]
  %v633 = vld [vmem:[%s1 + $0xf8c] sm:$0xff]
  %v634 = vld [vmem:[%s1 + $0xf94] sm:$0xff]
  %v635 = vld [vmem:[%s1 + $0xf9c] sm:$0xf]
  %v636 = vld [vmem:[%s1 + $0xfa0] sm:$0xff]
  %v637 = vld [vmem:[%s1 + $0xfa8] sm:$0xff]
  %v638 = vld [vmem:[%s1 + $0xfb0] sm:$0xf]
  %v639 = vld [vmem:[%s1 + $0xfb4] sm:$0xff]
  %v640 = vld [vmem:[%s1 + $0xfbc] sm:$0xff]
  %v641 = vld [vmem:[%s1 + $0xfc4] sm:$0xf]
  %v642 = vld [vmem:[%s1 + $0xfc8] sm:$0xff]
  %v643 = vld [vmem:[%s1 + $0xfd0] sm:$0xff]
  %v644 = vld [vmem:[%s1 + $0xfd8] sm:$0xf]
  %v645 = vld [vmem:[%s1 + $0xfdc] sm:$0xff]
  %v646 = vld [vmem:[%s1 + $0xfe4] sm:$0xff]
  %v647 = vld [vmem:[%s1 + $0xfec] sm:$0xf]
  %v648 = vld [vmem:[%s1 + $0xff0] sm:$0xff]
  %v649 = vld [vmem:[%s1 + $0xff8] sm:$0xff]
  %v650 = vld [vmem:[%s1 + $0x1000] sm:$0xf]
  %v651 = vld [vmem:[%s1 + $0x1004] sm:$0xff]
  %v652 = vld [vmem:[%s1 + $0x100c] sm:$0xff]
  %v653 = vld [vmem:[%s1 + $0x1014] sm:$0xf]
  %v654 = vld [vmem:[%s1 + $0x1018] sm:$0xff]
  %v655 = vld [vmem:[%s1 + $0x1020] sm:$0xff]
  %v656 = vld [vmem:[%s1 + $0x1028] sm:$0xf]
  %v657 = vld [vmem:[%s1 + $0x102c] sm:$0xff]
  %v658 = vld [vmem:[%s1 + $0x1034] sm:$0xff]
  %v659 = vld [vmem:[%s1 + $0x103c] sm:$0xf]
  %v660 = vld [vmem:[%s1 + $0x1040] sm:$0xff]
  %v661 = vld [vmem:[%s1 + $0x1048] sm:$0xff]
  %v662 = vld [vmem:[%s1 + $0x1050] sm:$0xf]
  %v663 = vld [vmem:[%s1 + $0x1054] sm:$0xff]
  %v664 = vld [vmem:[%s1 + $0x105c] sm:$0xff]
  %v665 = vld [vmem:[%s1 + $0x1064] sm:$0xf]
  %v666 = vld [vmem:[%s1 + $0x1068] sm:$0xff]
  %v667 = vld [vmem:[%s1 + $0x1070] sm:$0xff]
  %v668 = vld [vmem:[%s1 + $0x1078] sm:$0xf]
  %v669 = vld [vmem:[%s1 + $0x107c] sm:$0xff]
  %v670 = vld [vmem:[%s1 + $0x1084] sm:$0xff]
  %v671 = vld [vmem:[%s1 + $0x108c] sm:$0xf]
  %v672 = vld [vmem:[%s1 + $0x1090] sm:$0xff]
  %v673 = vld [vmem:[%s1 + $0x1098] sm:$0xff]
  %v674 = vld [vmem:[%s1 + $0x10a0] sm:$0xf]
  %v675 = vld [vmem:[%s1 + $0x10a4] sm:$0xff]
  %v676 = vld [vmem:[%s1 + $0x10ac] sm:$0xff]
  %v677 = vld [vmem:[%s1 + $0x10b4] sm:$0xf]
  %v678 = vld [vmem:[%s1 + $0x10b8] sm:$0xff]
  %v679 = vld [vmem:[%s1 + $0x10c0] sm:$0xff]
  %v680 = vld [vmem:[%s1 + $0x10c8] sm:$0xf]
  %v681 = vld [vmem:[%s1 + $0x10cc] sm:$0xff]
  %v682 = vld [vmem:[%s1 + $0x10d4] sm:$0xff]
  %v683 = vld [vmem:[%s1 + $0x10dc] sm:$0xf]
  %v684 = vld [vmem:[%s1 + $0x10e0] sm:$0xff]
  %v685 = vld [vmem:[%s1 + $0x10e8] sm:$0xff]
  %v686 = vld [vmem:[%s1 + $0x10f0] sm:$0xf]
  %v687 = vld [vmem:[%s1 + $0x10f4] sm:$0xff]
  %v688 = vld [vmem:[%s1 + $0x10fc] sm:$0xff]
  %v689 = vld [vmem:[%s1 + $0x1104] sm:$0xf]
  %v690 = vld [vmem:[%s1 + $0x1108] sm:$0xff]
  %v691 = vld [vmem:[%s1 + $0x1110] sm:$0xff]
  %v692 = vld [vmem:[%s1 + $0x1118] sm:$0xf]
  %v693 = vld [vmem:[%s1 + $0x111c] sm:$0xff]
  %v694 = vld [vmem:[%s1 + $0x1124] sm:$0xff]
  %v695 = vld [vmem:[%s1 + $0x112c] sm:$0xf]
  %v696 = vld [vmem:[%s1 + $0x1130] sm:$0xff]
  %v697 = vld [vmem:[%s1 + $0x1138] sm:$0xff]
  %v698 = vld [vmem:[%s1 + $0x1140] sm:$0xf]
  %v699 = vld [vmem:[%s1 + $0x1144] sm:$0xff]
  %v700 = vld [vmem:[%s1 + $0x114c] sm:$0xff]
  %v701 = vld [vmem:[%s1 + $0x1154] sm:$0xf]
  %v702 = vld [vmem:[%s1 + $0x1158] sm:$0xff]
  %v703 = vld [vmem:[%s1 + $0x1160] sm:$0xff]
  %v704 = vld [vmem:[%s1 + $0x1168] sm:$0xf]
  %v705 = vld [vmem:[%s1 + $0x116c] sm:$0xff]
  %v706 = vld [vmem:[%s1 + $0x1174] sm:$0xff]
  %v707 = vld [vmem:[%s1 + $0x117c] sm:$0xf]
  %v708 = vld [vmem:[%s1 + $0x1180] sm:$0xff]
  %v709 = vld [vmem:[%s1 + $0x1188] sm:$0xff]
  %v710 = vld [vmem:[%s1 + $0x1190] sm:$0xf]
  %v711 = vld [vmem:[%s1 + $0x1194] sm:$0xff]
  %v712 = vld [vmem:[%s1 + $0x119c] sm:$0xff]
  %v713 = vld [vmem:[%s1 + $0x11a4] sm:$0xf]
  %v714 = vld [vmem:[%s1 + $0x11a8] sm:$0xff]
  %v715 = vld [vmem:[%s1 + $0x11b0] sm:$0xff]
  %v716 = vld [vmem:[%s1 + $0x11b8] sm:$0xf]
  %v717 = vld [vmem:[%s1 + $0x11bc] sm:$0xff]
  %v718 = vld [vmem:[%s1 + $0x11c4] sm:$0xff]
  %v719 = vld [vmem:[%s1 + $0x11cc] sm:$0xf]
  %v720 = vld [vmem:[%s1 + $0x11d0] sm:$0xff]
  %v721 = vld [vmem:[%s1 + $0x11d8] sm:$0xff]
  %v722 = vld [vmem:[%s1 + $0x11e0] sm:$0xf]
  %v723 = vld [vmem:[%s1 + $0x11e4] sm:$0xff]
  %v724 = vld [vmem:[%s1 + $0x11ec] sm:$0xff]
  %v725 = vld [vmem:[%s1 + $0x11f4] sm:$0xf]
  %v726 = vld [vmem:[%s1 + $0x11f8] sm:$0xff]
  %v727 = vld [vmem:[%s1 + $0x1200] sm:$0xff]
  %v728 = vld [vmem:[%s1 + $0x1208] sm:$0xf]
  %v729 = vld [vmem:[%s1 + $0x120c] sm:$0xff]
  %v730 = vld [vmem:[%s1 + $0x1214] sm:$0xff]
  %v731 = vld [vmem:[%s1 + $0x121c] sm:$0xf]
  %v732 = vld [vmem:[%s1 + $0x1220] sm:$0xff]
  %v733 = vld [vmem:[%s1 + $0x1228] sm:$0xff]
  %v734 = vld [vmem:[%s1 + $0x1230] sm:$0xf]
  %v735 = vld [vmem:[%s1 + $0x1234] sm:$0xff]
  %v736 = vld [vmem:[%s1 + $0x123c] sm:$0xff]
  %v737 = vld [vmem:[%s1 + $0x1244] sm:$0xf]
  %v738 = vld [vmem:[%s1 + $0x1248] sm:$0xff]
  %v739 = vld [vmem:[%s1 + $0x1250] sm:$0xff]
  %v740 = vld [vmem:[%s1 + $0x1258] sm:$0xf]
  %v741 = vld [vmem:[%s1 + $0x125c] sm:$0xff]
  %v742 = vld [vmem:[%s1 + $0x1264] sm:$0xff]
  %v743 = vld [vmem:[%s1 + $0x126c] sm:$0xf]
  %v744 = vld [vmem:[%s1 + $0x1270] sm:$0xff]
  %v745 = vld [vmem:[%s1 + $0x1278] sm:$0xff]
  %v746 = vld [vmem:[%s1 + $0x1280] sm:$0xf]
  %v747 = vld [vmem:[%s1 + $0x1284] sm:$0xff]
  %v748 = vld [vmem:[%s1 + $0x128c] sm:$0xff]
  %v749 = vld [vmem:[%s1 + $0x1294] sm:$0xf]
  %v750 = vld [vmem:[%s1 + $0x1298] sm:$0xff]
  %v751 = vld [vmem:[%s1 + $0x12a0] sm:$0xff]
  %v752 = vld [vmem:[%s1 + $0x12a8] sm:$0xf]
  %v753 = vld [vmem:[%s1 + $0x12ac] sm:$0xff]
  %v754 = vld [vmem:[%s1 + $0x12b4] sm:$0xff]
  %v755 = vld [vmem:[%s1 + $0x12bc] sm:$0xf]
  %v756 = vld [vmem:[%s1 + $0x12c0] sm:$0xff]
  %v757 = vld [vmem:[%s1 + $0x12c8] sm:$0xff]
  %v758 = vld [vmem:[%s1 + $0x12d0] sm:$0xf]
  %v759 = vld [vmem:[%s1 + $0x12d4] sm:$0xff]
  %v760 = vld [vmem:[%s1 + $0x12dc] sm:$0xff]
  %v761 = vld [vmem:[%s1 + $0x12e4] sm:$0xf]
  %v762 = vld [vmem:[%s1 + $0x12e8] sm:$0xff]
  %v763 = vld [vmem:[%s1 + $0x12f0] sm:$0xff]
  %v764 = vld [vmem:[%s1 + $0x12f8] sm:$0xf]
  %v765 = vld [vmem:[%s1 + $0x12fc] sm:$0xff]
  %v766 = vld [vmem:[%s1 + $0x1304] sm:$0xff]
  %v767 = vld [vmem:[%s1 + $0x130c] sm:$0xf]
  %v768 = vld [vmem:[%s1 + $0x1310] sm:$0xff]
  %v769 = vld [vmem:[%s1 + $0x1318] sm:$0xff]
  %v770 = vld [vmem:[%s1 + $0x1320] sm:$0xf]
  %v771 = vld [vmem:[%s1 + $0x1324] sm:$0xff]
  %v772 = vld [vmem:[%s1 + $0x132c] sm:$0xff]
  %v773 = vld [vmem:[%s1 + $0x1334] sm:$0xf]
  %v774 = vld [vmem:[%s1 + $0x1338] sm:$0xff]
  %v775 = vld [vmem:[%s1 + $0x1340] sm:$0xff]
  %v776 = vld [vmem:[%s1 + $0x1348] sm:$0xf]
  %v777 = vld [vmem:[%s1 + $0x134c] sm:$0xff]
  %v778 = vld [vmem:[%s1 + $0x1354] sm:$0xff]
  %v779 = vld [vmem:[%s1 + $0x135c] sm:$0xf]
  %v780 = vld [vmem:[%s1 + $0x1360] sm:$0xff]
  %v781 = vld [vmem:[%s1 + $0x1368] sm:$0xff]
  %v782 = vld [vmem:[%s1 + $0x1370] sm:$0xf]
  %v783 = vld [vmem:[%s1 + $0x1374] sm:$0xff]
  %v784 = vld [vmem:[%s1 + $0x137c] sm:$0xff]
  %v785 = vld [vmem:[%s1 + $0x1384] sm:$0xf]
  %v786 = vld [vmem:[%s1 + $0x1388] sm:$0xff]
  %v787 = vld [vmem:[%s1 + $0x1390] sm:$0xff]
  %v788 = vld [vmem:[%s1 + $0x1398] sm:$0xf]
  %v789 = vld [vmem:[%s1 + $0x139c] sm:$0xff]
  %v790 = vld [vmem:[%s1 + $0x13a4] sm:$0xff]
  %v791 = vld [vmem:[%s1 + $0x13ac] sm:$0xf]
  %v792 = vld [vmem:[%s1 + $0x13b0] sm:$0xff]
  %v793 = vld [vmem:[%s1 + $0x13b8] sm:$0xff]
  %v794 = vld [vmem:[%s1 + $0x13c0] sm:$0xf]
  %v795 = vld [vmem:[%s1 + $0x13c4] sm:$0xff]
  %v796 = vld [vmem:[%s1 + $0x13cc] sm:$0xff]
  %v797 = vld [vmem:[%s1 + $0x13d4] sm:$0xf]
  %v798 = vld [vmem:[%s1 + $0x13d8] sm:$0xff]
  %v799 = vld [vmem:[%s1 + $0x13e0] sm:$0xff]
  %v800 = vld [vmem:[%s1 + $0x13e8] sm:$0xf]
  %v801 = vld [vmem:[%s1 + $0x13ec] sm:$0xff]
  %v802 = vld [vmem:[%s1 + $0x13f4] sm:$0xff]
  %v803 = vld [vmem:[%s1 + $0x13fc] sm:$0xf]
  %v804 = vld [vmem:[%s1 + $0x1400] sm:$0xff]
  %v805 = vld [vmem:[%s1 + $0x1408] sm:$0xff]
  %v806 = vld [vmem:[%s1 + $0x1410] sm:$0xf]
  %v807 = vld [vmem:[%s1 + $0x1414] sm:$0xff]
  %v808 = vld [vmem:[%s1 + $0x141c] sm:$0xff]
  %v809 = vld [vmem:[%s1 + $0x1424] sm:$0xf]
  %v810 = vld [vmem:[%s1 + $0x1428] sm:$0xff]
  %v811 = vld [vmem:[%s1 + $0x1430] sm:$0xff]
  %v812 = vld [vmem:[%s1 + $0x1438] sm:$0xf]
  %v813 = vld [vmem:[%s1 + $0x143c] sm:$0xff]
  %v814 = vld [vmem:[%s1 + $0x1444] sm:$0xff]
  %v815 = vld [vmem:[%s1 + $0x144c] sm:$0xf]
  %v816 = vld [vmem:[%s1 + $0x1450] sm:$0xff]
  %v817 = vld [vmem:[%s1 + $0x1458] sm:$0xff]
  %v818 = vld [vmem:[%s1 + $0x1460] sm:$0xf]
  %v819 = vld [vmem:[%s1 + $0x1464] sm:$0xff]
  %v820 = vld [vmem:[%s1 + $0x146c] sm:$0xff]
  %v821 = vld [vmem:[%s1 + $0x1474] sm:$0xf]
  %v822 = vld [vmem:[%s1 + $0x1478] sm:$0xff]
  %v823 = vld [vmem:[%s1 + $0x1480] sm:$0xff]
  %v824 = vld [vmem:[%s1 + $0x1488] sm:$0xf]
  %v825 = vld [vmem:[%s1 + $0x148c] sm:$0xff]
  %v826 = vld [vmem:[%s1 + $0x1494] sm:$0xff]
  %v827 = vld [vmem:[%s1 + $0x149c] sm:$0xf]
  %v828 = vld [vmem:[%s1 + $0x14a0] sm:$0xff]
  %v829 = vld [vmem:[%s1 + $0x14a8] sm:$0xff]
  %v830 = vld [vmem:[%s1 + $0x14b0] sm:$0xf]
  %v831 = vld [vmem:[%s1 + $0x14b4] sm:$0xff]
  %v832 = vld [vmem:[%s1 + $0x14bc] sm:$0xff]
  %v833 = vld [vmem:[%s1 + $0x14c4] sm:$0xf]
  %v834 = vld [vmem:[%s1 + $0x14c8] sm:$0xff]
  %v835 = vld [vmem:[%s1 + $0x14d0] sm:$0xff]
  %v836 = vld [vmem:[%s1 + $0x14d8] sm:$0xf]
  %v837 = vld [vmem:[%s1 + $0x14dc] sm:$0xff]
  %v838 = vld [vmem:[%s1 + $0x14e4] sm:$0xff]
  %v839 = vld [vmem:[%s1 + $0x14ec] sm:$0xf]
  %v840 = vld [vmem:[%s1 + $0x14f0] sm:$0xff]
  %v841 = vld [vmem:[%s1 + $0x14f8] sm:$0xff]
  %v842 = vld [vmem:[%s1 + $0x1500] sm:$0xf]
  %v843 = vld [vmem:[%s1 + $0x1504] sm:$0xff]
  %v844 = vld [vmem:[%s1 + $0x150c] sm:$0xff]
  %v845 = vld [vmem:[%s1 + $0x1514] sm:$0xf]
  %v846 = vld [vmem:[%s1 + $0x1518] sm:$0xff]
  %v847 = vld [vmem:[%s1 + $0x1520] sm:$0xff]
  %v848 = vld [vmem:[%s1 + $0x1528] sm:$0xf]
  %v849 = vld [vmem:[%s1 + $0x152c] sm:$0xff]
  %v850 = vld [vmem:[%s1 + $0x1534] sm:$0xff]
  %v851 = vld [vmem:[%s1 + $0x153c] sm:$0xf]
  %v852 = vld [vmem:[%s1 + $0x1540] sm:$0xff]
  %v853 = vld [vmem:[%s1 + $0x1548] sm:$0xff]
  %v854 = vld [vmem:[%s1 + $0x1550] sm:$0xf]
  %v855 = vld [vmem:[%s1 + $0x1554] sm:$0xff]
  %v856 = vld [vmem:[%s1 + $0x155c] sm:$0xff]
  %v857 = vld [vmem:[%s1 + $0x1564] sm:$0xf]
  %v858 = vld [vmem:[%s1 + $0x1568] sm:$0xff]
  %v859 = vld [vmem:[%s1 + $0x1570] sm:$0xff]
  %v860 = vld [vmem:[%s1 + $0x1578] sm:$0xf]
  %v861 = vld [vmem:[%s1 + $0x157c] sm:$0xff]
  %v862 = vld [vmem:[%s1 + $0x1584] sm:$0xff]
  %v863 = vld [vmem:[%s1 + $0x158c] sm:$0xf]
  %v864 = vld [vmem:[%s1 + $0x1590] sm:$0xff]
  %v865 = vld [vmem:[%s1 + $0x1598] sm:$0xff]
  %v866 = vld [vmem:[%s1 + $0x15a0] sm:$0xf]
  %v867 = vld [vmem:[%s1 + $0x15a4] sm:$0xff]
  %v868 = vld [vmem:[%s1 + $0x15ac] sm:$0xff]
  %v869 = vld [vmem:[%s1 + $0x15b4] sm:$0xf]
  %v870 = vld [vmem:[%s1 + $0x15b8] sm:$0xff]
  %v871 = vld [vmem:[%s1 + $0x15c0] sm:$0xff]
  %v872 = vld [vmem:[%s1 + $0x15c8] sm:$0xf]
  %v873 = vld [vmem:[%s1 + $0x15cc] sm:$0xff]
  %v874 = vld [vmem:[%s1 + $0x15d4] sm:$0xff]
  %v875 = vld [vmem:[%s1 + $0x15dc] sm:$0xf]
  %v876 = vld [vmem:[%s1 + $0x15e0] sm:$0xff]
  %v877 = vld [vmem:[%s1 + $0x15e8] sm:$0xff]
  %v878 = vld [vmem:[%s1 + $0x15f0] sm:$0xf]
  %v879 = vld [vmem:[%s1 + $0x15f4] sm:$0xff]
  %v880 = vld [vmem:[%s1 + $0x15fc] sm:$0xff]
  %v881 = vld [vmem:[%s1 + $0x1604] sm:$0xf]
  %v882 = vld [vmem:[%s1 + $0x1608] sm:$0xff]
  %v883 = vld [vmem:[%s1 + $0x1610] sm:$0xff]
  %v884 = vld [vmem:[%s1 + $0x1618] sm:$0xf]
  %v885 = vld [vmem:[%s1 + $0x161c] sm:$0xff]
  %v886 = vld [vmem:[%s1 + $0x1624] sm:$0xff]
  %v887 = vld [vmem:[%s1 + $0x162c] sm:$0xf]
  %v888 = vld [vmem:[%s1 + $0x1630] sm:$0xff]
  %v889 = vld [vmem:[%s1 + $0x1638] sm:$0xff]
  %v890 = vld [vmem:[%s1 + $0x1640] sm:$0xf]
  %v891 = vld [vmem:[%s1 + $0x1644] sm:$0xff]
  %v892 = vld [vmem:[%s1 + $0x164c] sm:$0xff]
  %v893 = vld [vmem:[%s1 + $0x1654] sm:$0xf]
  %v894 = vld [vmem:[%s1 + $0x1658] sm:$0xff]
  %v895 = vld [vmem:[%s1 + $0x1660] sm:$0xff]
  %v896 = vld [vmem:[%s1 + $0x1668] sm:$0xf]
  %v897 = vld [vmem:[%s1 + $0x166c] sm:$0xff]
  %v898 = vld [vmem:[%s1 + $0x1674] sm:$0xff]
  %v899 = vld [vmem:[%s1 + $0x167c] sm:$0xf]
  %v900 = vld [vmem:[%s2] sm:$0x1f]
  %v902 = vperm.slane %v900, 0
  %v903 = vperm.slane %v900, 1
  %v904 = vperm.slane %v900, 2
  %v905 = vperm.slane %v900, 3
  %v906 = vperm.slane %v900, 4
  %v921 = vunpack.c.l.b16 %v27
  %v922 = vunpack.c.h.b16 %v27
  %v923 = vunpack.c.l.b16 %v28
  %v924 = vunpack.c.h.b16 %v28
  %v925 = vunpack.c.l.b16 %v29
  %v926 = vunpack.c.h.b16 %v29
  %v927 = vunpack.c.l.b16 %v30
  %v928 = vunpack.c.h.b16 %v30
  %v929 = vunpack.c.l.b16 %v31
  %v930 = vunpack.c.h.b16 %v31
  %v931 = vunpack.c.l.b16 %v32
  %v932 = vunpack.c.h.b16 %v32
  %v933 = vunpack.c.l.b16 %v33
  %v934 = vunpack.c.h.b16 %v33
  %v935 = vunpack.c.l.b16 %v34
  %v936 = vunpack.c.h.b16 %v34
  %v937 = vunpack.c.l.b16 %v35
  %v938 = vunpack.c.h.b16 %v35
  %v939 = vpack.c.b16 %v921, %v921
  %v940 = vpack.c.b16 %v922, %v922
  %v941 = vpack.c.b16 %v923, %v923
  %v942 = vpack.c.b16 %v924, %v924
  %v943 = vpack.c.b16 %v925, %v925
  %v944 = vpack.c.b16 %v926, %v926
  %v945 = vpack.c.b16 %v927, %v927
  %v946 = vpack.c.b16 %v928, %v928
  %v947 = vpack.c.b16 %v929, %v929
  %v948 = vpack.c.b16 %v930, %v930
  %v949 = vpack.c.b16 %v931, %v931
  %v950 = vpack.c.b16 %v932, %v932
  %v951 = vpack.c.b16 %v933, %v933
  %v952 = vpack.c.b16 %v934, %v934
  %v953 = vpack.c.b16 %v935, %v935
  %v954 = vpack.c.b16 %v936, %v936
  %v955 = vpack.c.b16 %v937, %v937
  %v956 = vpack.c.b16 %v938, %v938
  %v1839 = vunpack.c.l.b16 %v36
  %v1840 = vunpack.c.h.b16 %v36
  %v1841 = vunpack.c.l.b16 %v37
  %v1842 = vunpack.c.h.b16 %v37
  %v1843 = vunpack.c.l.b16 %v38
  %v1844 = vunpack.c.l.b16 %v39
  %v1845 = vunpack.c.h.b16 %v39
  %v1846 = vunpack.c.l.b16 %v40
  %v1847 = vunpack.c.h.b16 %v40
  %v1848 = vunpack.c.l.b16 %v41
  %v1849 = vunpack.c.l.b16 %v42
  %v1850 = vunpack.c.h.b16 %v42
  %v1851 = vunpack.c.l.b16 %v43
  %v1852 = vunpack.c.h.b16 %v43
  %v1853 = vunpack.c.l.b16 %v44
  %v1854 = vunpack.c.l.b16 %v45
  %v1855 = vunpack.c.h.b16 %v45
  %v1856 = vunpack.c.l.b16 %v46
  %v1857 = vunpack.c.h.b16 %v46
  %v1858 = vunpack.c.l.b16 %v47
  %v1859 = vunpack.c.l.b16 %v48
  %v1860 = vunpack.c.h.b16 %v48
  %v1861 = vunpack.c.l.b16 %v49
  %v1862 = vunpack.c.h.b16 %v49
  %v1863 = vunpack.c.l.b16 %v50
  %v1864 = vunpack.c.l.b16 %v51
  %v1865 = vunpack.c.h.b16 %v51
  %v1866 = vunpack.c.l.b16 %v52
  %v1867 = vunpack.c.h.b16 %v52
  %v1868 = vunpack.c.l.b16 %v53
  %v1869 = vunpack.c.l.b16 %v54
  %v1870 = vunpack.c.h.b16 %v54
  %v1871 = vunpack.c.l.b16 %v55
  %v1872 = vunpack.c.h.b16 %v55
  %v1873 = vunpack.c.l.b16 %v56
  %v1874 = vunpack.c.l.b16 %v57
  %v1875 = vunpack.c.h.b16 %v57
  %v1876 = vunpack.c.l.b16 %v58
  %v1877 = vunpack.c.h.b16 %v58
  %v1878 = vunpack.c.l.b16 %v59
  %v1879 = vunpack.c.l.b16 %v60
  %v1880 = vunpack.c.h.b16 %v60
  %v1881 = vunpack.c.l.b16 %v61
  %v1882 = vunpack.c.h.b16 %v61
  %v1883 = vunpack.c.l.b16 %v62
  %v1884 = vunpack.c.l.b16 %v63
  %v1885 = vunpack.c.h.b16 %v63
  %v1886 = vunpack.c.l.b16 %v64
  %v1887 = vunpack.c.h.b16 %v64
  %v1888 = vunpack.c.l.b16 %v65
  %v1889 = vunpack.c.l.b16 %v66
  %v1890 = vunpack.c.h.b16 %v66
  %v1891 = vunpack.c.l.b16 %v67
  %v1892 = vunpack.c.h.b16 %v67
  %v1893 = vunpack.c.l.b16 %v68
  %v1894 = vunpack.c.l.b16 %v69
  %v1895 = vunpack.c.h.b16 %v69
  %v1896 = vunpack.c.l.b16 %v70
  %v1897 = vunpack.c.h.b16 %v70
  %v1898 = vunpack.c.l.b16 %v71
  %v1899 = vunpack.c.l.b16 %v72
  %v1900 = vunpack.c.h.b16 %v72
  %v1901 = vunpack.c.l.b16 %v73
  %v1902 = vunpack.c.h.b16 %v73
  %v1903 = vunpack.c.l.b16 %v74
  %v1904 = vunpack.c.l.b16 %v75
  %v1905 = vunpack.c.h.b16 %v75
  %v1906 = vunpack.c.l.b16 %v76
  %v1907 = vunpack.c.h.b16 %v76
  %v1908 = vunpack.c.l.b16 %v77
  %v1909 = vunpack.c.l.b16 %v78
  %v1910 = vunpack.c.h.b16 %v78
  %v1911 = vunpack.c.l.b16 %v79
  %v1912 = vunpack.c.h.b16 %v79
  %v1913 = vunpack.c.l.b16 %v80
  %v1914 = vunpack.c.l.b16 %v81
  %v1915 = vunpack.c.h.b16 %v81
  %v1916 = vunpack.c.l.b16 %v82
  %v1917 = vunpack.c.h.b16 %v82
  %v1918 = vunpack.c.l.b16 %v83
  %v1919 = vunpack.c.l.b16 %v84
  %v1920 = vunpack.c.h.b16 %v84
  %v1921 = vunpack.c.l.b16 %v85
  %v1922 = vunpack.c.h.b16 %v85
  %v1923 = vunpack.c.l.b16 %v86
  %v1924 = vunpack.c.l.b16 %v87
  %v1925 = vunpack.c.h.b16 %v87
  %v1926 = vunpack.c.l.b16 %v88
  %v1927 = vunpack.c.h.b16 %v88
  %v1928 = vunpack.c.l.b16 %v89
  %v1929 = vunpack.c.l.b16 %v90
  %v1930 = vunpack.c.h.b16 %v90
  %v1931 = vunpack.c.l.b16 %v91
  %v1932 = vunpack.c.h.b16 %v91
  %v1933 = vunpack.c.l.b16 %v92
  %v1934 = vunpack.c.l.b16 %v93
  %v1935 = vunpack.c.h.b16 %v93
  %v1936 = vunpack.c.l.b16 %v94
  %v1937 = vunpack.c.h.b16 %v94
  %v1938 = vunpack.c.l.b16 %v95
  %v1939 = vunpack.c.l.b16 %v96
  %v1940 = vunpack.c.h.b16 %v96
  %v1941 = vunpack.c.l.b16 %v97
  %v1942 = vunpack.c.h.b16 %v97
  %v1943 = vunpack.c.l.b16 %v98
  %v1944 = vunpack.c.l.b16 %v99
  %v1945 = vunpack.c.h.b16 %v99
  %v1946 = vunpack.c.l.b16 %v100
  %v1947 = vunpack.c.h.b16 %v100
  %v1948 = vunpack.c.l.b16 %v101
  %v1949 = vunpack.c.l.b16 %v102
  %v1950 = vunpack.c.h.b16 %v102
  %v1951 = vunpack.c.l.b16 %v103
  %v1952 = vunpack.c.h.b16 %v103
  %v1953 = vunpack.c.l.b16 %v104
  %v1954 = vunpack.c.l.b16 %v105
  %v1955 = vunpack.c.h.b16 %v105
  %v1956 = vunpack.c.l.b16 %v106
  %v1957 = vunpack.c.h.b16 %v106
  %v1958 = vunpack.c.l.b16 %v107
  %v1959 = vunpack.c.l.b16 %v108
  %v1960 = vunpack.c.h.b16 %v108
  %v1961 = vunpack.c.l.b16 %v109
  %v1962 = vunpack.c.h.b16 %v109
  %v1963 = vunpack.c.l.b16 %v110
  %v1964 = vunpack.c.l.b16 %v111
  %v1965 = vunpack.c.h.b16 %v111
  %v1966 = vunpack.c.l.b16 %v112
  %v1967 = vunpack.c.h.b16 %v112
  %v1968 = vunpack.c.l.b16 %v113
  %v1969 = vunpack.c.l.b16 %v114
  %v1970 = vunpack.c.h.b16 %v114
  %v1971 = vunpack.c.l.b16 %v115
  %v1972 = vunpack.c.h.b16 %v115
  %v1973 = vunpack.c.l.b16 %v116
  %v1974 = vunpack.c.l.b16 %v117
  %v1975 = vunpack.c.h.b16 %v117
  %v1976 = vunpack.c.l.b16 %v118
  %v1977 = vunpack.c.h.b16 %v118
  %v1978 = vunpack.c.l.b16 %v119
  %v1979 = vunpack.c.l.b16 %v120
  %v1980 = vunpack.c.h.b16 %v120
  %v1981 = vunpack.c.l.b16 %v121
  %v1982 = vunpack.c.h.b16 %v121
  %v1983 = vunpack.c.l.b16 %v122
  %v1984 = vunpack.c.l.b16 %v123
  %v1985 = vunpack.c.h.b16 %v123
  %v1986 = vunpack.c.l.b16 %v124
  %v1987 = vunpack.c.h.b16 %v124
  %v1988 = vunpack.c.l.b16 %v125
  %v1989 = vunpack.c.l.b16 %v126
  %v1990 = vunpack.c.h.b16 %v126
  %v1991 = vunpack.c.l.b16 %v127
  %v1992 = vunpack.c.h.b16 %v127
  %v1993 = vunpack.c.l.b16 %v128
  %v1994 = vunpack.c.l.b16 %v129
  %v1995 = vunpack.c.h.b16 %v129
  %v1996 = vunpack.c.l.b16 %v130
  %v1997 = vunpack.c.h.b16 %v130
  %v1998 = vunpack.c.l.b16 %v131
  %v1999 = vunpack.c.l.b16 %v132
  %v2000 = vunpack.c.h.b16 %v132
  %v2001 = vunpack.c.l.b16 %v133
  %v2002 = vunpack.c.h.b16 %v133
  %v2003 = vunpack.c.l.b16 %v134
  %v2004 = vunpack.c.l.b16 %v135
  %v2005 = vunpack.c.h.b16 %v135
  %v2006 = vunpack.c.l.b16 %v136
  %v2007 = vunpack.c.h.b16 %v136
  %v2008 = vunpack.c.l.b16 %v137
  %v2009 = vunpack.c.l.b16 %v138
  %v2010 = vunpack.c.h.b16 %v138
  %v2011 = vunpack.c.l.b16 %v139
  %v2012 = vunpack.c.h.b16 %v139
  %v2013 = vunpack.c.l.b16 %v140
  %v2014 = vunpack.c.l.b16 %v141
  %v2015 = vunpack.c.h.b16 %v141
  %v2016 = vunpack.c.l.b16 %v142
  %v2017 = vunpack.c.h.b16 %v142
  %v2018 = vunpack.c.l.b16 %v143
  %v2019 = vunpack.c.l.b16 %v144
  %v2020 = vunpack.c.h.b16 %v144
  %v2021 = vunpack.c.l.b16 %v145
  %v2022 = vunpack.c.h.b16 %v145
  %v2023 = vunpack.c.l.b16 %v146
  %v2024 = vunpack.c.l.b16 %v147
  %v2025 = vunpack.c.h.b16 %v147
  %v2026 = vunpack.c.l.b16 %v148
  %v2027 = vunpack.c.h.b16 %v148
  %v2028 = vunpack.c.l.b16 %v149
  %v2029 = vunpack.c.l.b16 %v150
  %v2030 = vunpack.c.h.b16 %v150
  %v2031 = vunpack.c.l.b16 %v151
  %v2032 = vunpack.c.h.b16 %v151
  %v2033 = vunpack.c.l.b16 %v152
  %v2034 = vunpack.c.l.b16 %v153
  %v2035 = vunpack.c.h.b16 %v153
  %v2036 = vunpack.c.l.b16 %v154
  %v2037 = vunpack.c.h.b16 %v154
  %v2038 = vunpack.c.l.b16 %v155
  %v2039 = vunpack.c.l.b16 %v156
  %v2040 = vunpack.c.h.b16 %v156
  %v2041 = vunpack.c.l.b16 %v157
  %v2042 = vunpack.c.h.b16 %v157
  %v2043 = vunpack.c.l.b16 %v158
  %v2044 = vunpack.c.l.b16 %v159
  %v2045 = vunpack.c.h.b16 %v159
  %v2046 = vunpack.c.l.b16 %v160
  %v2047 = vunpack.c.h.b16 %v160
  %v2048 = vunpack.c.l.b16 %v161
  %v2049 = vunpack.c.l.b16 %v162
  %v2050 = vunpack.c.h.b16 %v162
  %v2051 = vunpack.c.l.b16 %v163
  %v2052 = vunpack.c.h.b16 %v163
  %v2053 = vunpack.c.l.b16 %v164
  %v2054 = vunpack.c.l.b16 %v165
  %v2055 = vunpack.c.h.b16 %v165
  %v2056 = vunpack.c.l.b16 %v166
  %v2057 = vunpack.c.h.b16 %v166
  %v2058 = vunpack.c.l.b16 %v167
  %v2059 = vunpack.c.l.b16 %v168
  %v2060 = vunpack.c.h.b16 %v168
  %v2061 = vunpack.c.l.b16 %v169
  %v2062 = vunpack.c.h.b16 %v169
  %v2063 = vunpack.c.l.b16 %v170
  %v2064 = vunpack.c.l.b16 %v171
  %v2065 = vunpack.c.h.b16 %v171
  %v2066 = vunpack.c.l.b16 %v172
  %v2067 = vunpack.c.h.b16 %v172
  %v2068 = vunpack.c.l.b16 %v173
  %v2069 = vunpack.c.l.b16 %v174
  %v2070 = vunpack.c.h.b16 %v174
  %v2071 = vunpack.c.l.b16 %v175
  %v2072 = vunpack.c.h.b16 %v175
  %v2073 = vunpack.c.l.b16 %v176
  %v2074 = vunpack.c.l.b16 %v177
  %v2075 = vunpack.c.h.b16 %v177
  %v2076 = vunpack.c.l.b16 %v178
  %v2077 = vunpack.c.h.b16 %v178
  %v2078 = vunpack.c.l.b16 %v179
  %v2079 = vunpack.c.l.b16 %v180
  %v2080 = vunpack.c.h.b16 %v180
  %v2081 = vunpack.c.l.b16 %v181
  %v2082 = vunpack.c.h.b16 %v181
  %v2083 = vunpack.c.l.b16 %v182
  %v2084 = vunpack.c.l.b16 %v183
  %v2085 = vunpack.c.h.b16 %v183
  %v2086 = vunpack.c.l.b16 %v184
  %v2087 = vunpack.c.h.b16 %v184
  %v2088 = vunpack.c.l.b16 %v185
  %v2089 = vunpack.c.l.b16 %v186
  %v2090 = vunpack.c.h.b16 %v186
  %v2091 = vunpack.c.l.b16 %v187
  %v2092 = vunpack.c.h.b16 %v187
  %v2093 = vunpack.c.l.b16 %v188
  %v2094 = vunpack.c.l.b16 %v189
  %v2095 = vunpack.c.h.b16 %v189
  %v2096 = vunpack.c.l.b16 %v190
  %v2097 = vunpack.c.h.b16 %v190
  %v2098 = vunpack.c.l.b16 %v191
  %v2099 = vunpack.c.l.b16 %v192
  %v2100 = vunpack.c.h.b16 %v192
  %v2101 = vunpack.c.l.b16 %v193
  %v2102 = vunpack.c.h.b16 %v193
  %v2103 = vunpack.c.l.b16 %v194
  %v2104 = vunpack.c.l.b16 %v195
  %v2105 = vunpack.c.h.b16 %v195
  %v2106 = vunpack.c.l.b16 %v196
  %v2107 = vunpack.c.h.b16 %v196
  %v2108 = vunpack.c.l.b16 %v197
  %v2109 = vunpack.c.l.b16 %v198
  %v2110 = vunpack.c.h.b16 %v198
  %v2111 = vunpack.c.l.b16 %v199
  %v2112 = vunpack.c.h.b16 %v199
  %v2113 = vunpack.c.l.b16 %v200
  %v2114 = vunpack.c.l.b16 %v201
  %v2115 = vunpack.c.h.b16 %v201
  %v2116 = vunpack.c.l.b16 %v202
  %v2117 = vunpack.c.h.b16 %v202
  %v2118 = vunpack.c.l.b16 %v203
  %v2119 = vunpack.c.l.b16 %v204
  %v2120 = vunpack.c.h.b16 %v204
  %v2121 = vunpack.c.l.b16 %v205
  %v2122 = vunpack.c.h.b16 %v205
  %v2123 = vunpack.c.l.b16 %v206
  %v2124 = vunpack.c.l.b16 %v207
  %v2125 = vunpack.c.h.b16 %v207
  %v2126 = vunpack.c.l.b16 %v208
  %v2127 = vunpack.c.h.b16 %v208
  %v2128 = vunpack.c.l.b16 %v209
  %v2129 = vunpack.c.l.b16 %v210
  %v2130 = vunpack.c.h.b16 %v210
  %v2131 = vunpack.c.l.b16 %v211
  %v2132 = vunpack.c.h.b16 %v211
  %v2133 = vunpack.c.l.b16 %v212
  %v2134 = vunpack.c.l.b16 %v213
  %v2135 = vunpack.c.h.b16 %v213
  %v2136 = vunpack.c.l.b16 %v214
  %v2137 = vunpack.c.h.b16 %v214
  %v2138 = vunpack.c.l.b16 %v215
  %v2139 = vunpack.c.l.b16 %v216
  %v2140 = vunpack.c.h.b16 %v216
  %v2141 = vunpack.c.l.b16 %v217
  %v2142 = vunpack.c.h.b16 %v217
  %v2143 = vunpack.c.l.b16 %v218
  %v2144 = vunpack.c.l.b16 %v219
  %v2145 = vunpack.c.h.b16 %v219
  %v2146 = vunpack.c.l.b16 %v220
  %v2147 = vunpack.c.h.b16 %v220
  %v2148 = vunpack.c.l.b16 %v221
  %v2149 = vunpack.c.l.b16 %v222
  %v2150 = vunpack.c.h.b16 %v222
  %v2151 = vunpack.c.l.b16 %v223
  %v2152 = vunpack.c.h.b16 %v223
  %v2153 = vunpack.c.l.b16 %v224
  %v2154 = vunpack.c.l.b16 %v225
  %v2155 = vunpack.c.h.b16 %v225
  %v2156 = vunpack.c.l.b16 %v226
  %v2157 = vunpack.c.h.b16 %v226
  %v2158 = vunpack.c.l.b16 %v227
  %v2159 = vunpack.c.l.b16 %v228
  %v2160 = vunpack.c.h.b16 %v228
  %v2161 = vunpack.c.l.b16 %v229
  %v2162 = vunpack.c.h.b16 %v229
  %v2163 = vunpack.c.l.b16 %v230
  %v2164 = vunpack.c.l.b16 %v231
  %v2165 = vunpack.c.h.b16 %v231
  %v2166 = vunpack.c.l.b16 %v232
  %v2167 = vunpack.c.h.b16 %v232
  %v2168 = vunpack.c.l.b16 %v233
  %v2169 = vunpack.c.l.b16 %v234
  %v2170 = vunpack.c.h.b16 %v234
  %v2171 = vunpack.c.l.b16 %v235
  %v2172 = vunpack.c.h.b16 %v235
  %v2173 = vunpack.c.l.b16 %v236
  %v2174 = vunpack.c.l.b16 %v237
  %v2175 = vunpack.c.h.b16 %v237
  %v2176 = vunpack.c.l.b16 %v238
  %v2177 = vunpack.c.h.b16 %v238
  %v2178 = vunpack.c.l.b16 %v239
  %v2179 = vunpack.c.l.b16 %v240
  %v2180 = vunpack.c.h.b16 %v240
  %v2181 = vunpack.c.l.b16 %v241
  %v2182 = vunpack.c.h.b16 %v241
  %v2183 = vunpack.c.l.b16 %v242
  %v2184 = vunpack.c.l.b16 %v243
  %v2185 = vunpack.c.h.b16 %v243
  %v2186 = vunpack.c.l.b16 %v244
  %v2187 = vunpack.c.h.b16 %v244
  %v2188 = vunpack.c.l.b16 %v245
  %v2189 = vunpack.c.l.b16 %v246
  %v2190 = vunpack.c.h.b16 %v246
  %v2191 = vunpack.c.l.b16 %v247
  %v2192 = vunpack.c.h.b16 %v247
  %v2193 = vunpack.c.l.b16 %v248
  %v2194 = vunpack.c.l.b16 %v249
  %v2195 = vunpack.c.h.b16 %v249
  %v2196 = vunpack.c.l.b16 %v250
  %v2197 = vunpack.c.h.b16 %v250
  %v2198 = vunpack.c.l.b16 %v251
  %v2199 = vunpack.c.l.b16 %v252
  %v2200 = vunpack.c.h.b16 %v252
  %v2201 = vunpack.c.l.b16 %v253
  %v2202 = vunpack.c.h.b16 %v253
  %v2203 = vunpack.c.l.b16 %v254
  %v2204 = vunpack.c.l.b16 %v255
  %v2205 = vunpack.c.h.b16 %v255
  %v2206 = vunpack.c.l.b16 %v256
  %v2207 = vunpack.c.h.b16 %v256
  %v2208 = vunpack.c.l.b16 %v257
  %v2209 = vunpack.c.l.b16 %v258
  %v2210 = vunpack.c.h.b16 %v258
  %v2211 = vunpack.c.l.b16 %v259
  %v2212 = vunpack.c.h.b16 %v259
  %v2213 = vunpack.c.l.b16 %v260
  %v2214 = vunpack.c.l.b16 %v261
  %v2215 = vunpack.c.h.b16 %v261
  %v2216 = vunpack.c.l.b16 %v262
  %v2217 = vunpack.c.h.b16 %v262
  %v2218 = vunpack.c.l.b16 %v263
  %v2219 = vunpack.c.l.b16 %v264
  %v2220 = vunpack.c.h.b16 %v264
  %v2221 = vunpack.c.l.b16 %v265
  %v2222 = vunpack.c.h.b16 %v265
  %v2223 = vunpack.c.l.b16 %v266
  %v2224 = vunpack.c.l.b16 %v267
  %v2225 = vunpack.c.h.b16 %v267
  %v2226 = vunpack.c.l.b16 %v268
  %v2227 = vunpack.c.h.b16 %v268
  %v2228 = vunpack.c.l.b16 %v269
  %v2229 = vunpack.c.l.b16 %v270
  %v2230 = vunpack.c.h.b16 %v270
  %v2231 = vunpack.c.l.b16 %v271
  %v2232 = vunpack.c.h.b16 %v271
  %v2233 = vunpack.c.l.b16 %v272
  %v2234 = vunpack.c.l.b16 %v273
  %v2235 = vunpack.c.h.b16 %v273
  %v2236 = vunpack.c.l.b16 %v274
  %v2237 = vunpack.c.h.b16 %v274
  %v2238 = vunpack.c.l.b16 %v275
  %v2239 = vunpack.c.l.b16 %v276
  %v2240 = vunpack.c.h.b16 %v276
  %v2241 = vunpack.c.l.b16 %v277
  %v2242 = vunpack.c.h.b16 %v277
  %v2243 = vunpack.c.l.b16 %v278
  %v2244 = vunpack.c.l.b16 %v279
  %v2245 = vunpack.c.h.b16 %v279
  %v2246 = vunpack.c.l.b16 %v280
  %v2247 = vunpack.c.h.b16 %v280
  %v2248 = vunpack.c.l.b16 %v281
  %v2249 = vunpack.c.l.b16 %v282
  %v2250 = vunpack.c.h.b16 %v282
  %v2251 = vunpack.c.l.b16 %v283
  %v2252 = vunpack.c.h.b16 %v283
  %v2253 = vunpack.c.l.b16 %v284
  %v2254 = vunpack.c.l.b16 %v285
  %v2255 = vunpack.c.h.b16 %v285
  %v2256 = vunpack.c.l.b16 %v286
  %v2257 = vunpack.c.h.b16 %v286
  %v2258 = vunpack.c.l.b16 %v287
  %v2259 = vunpack.c.l.b16 %v288
  %v2260 = vunpack.c.h.b16 %v288
  %v2261 = vunpack.c.l.b16 %v289
  %v2262 = vunpack.c.h.b16 %v289
  %v2263 = vunpack.c.l.b16 %v290
  %v2264 = vunpack.c.l.b16 %v291
  %v2265 = vunpack.c.h.b16 %v291
  %v2266 = vunpack.c.l.b16 %v292
  %v2267 = vunpack.c.h.b16 %v292
  %v2268 = vunpack.c.l.b16 %v293
  %v2269 = vunpack.c.l.b16 %v294
  %v2270 = vunpack.c.h.b16 %v294
  %v2271 = vunpack.c.l.b16 %v295
  %v2272 = vunpack.c.h.b16 %v295
  %v2273 = vunpack.c.l.b16 %v296
  %v2274 = vunpack.c.l.b16 %v297
  %v2275 = vunpack.c.h.b16 %v297
  %v2276 = vunpack.c.l.b16 %v298
  %v2277 = vunpack.c.h.b16 %v298
  %v2278 = vunpack.c.l.b16 %v299
  %v2279 = vunpack.c.l.b16 %v300
  %v2280 = vunpack.c.h.b16 %v300
  %v2281 = vunpack.c.l.b16 %v301
  %v2282 = vunpack.c.h.b16 %v301
  %v2283 = vunpack.c.l.b16 %v302
  %v2284 = vunpack.c.l.b16 %v303
  %v2285 = vunpack.c.h.b16 %v303
  %v2286 = vunpack.c.l.b16 %v304
  %v2287 = vunpack.c.h.b16 %v304
  %v2288 = vunpack.c.l.b16 %v305
  %v2289 = vunpack.c.l.b16 %v306
  %v2290 = vunpack.c.h.b16 %v306
  %v2291 = vunpack.c.l.b16 %v307
  %v2292 = vunpack.c.h.b16 %v307
  %v2293 = vunpack.c.l.b16 %v308
  %v2294 = vunpack.c.l.b16 %v309
  %v2295 = vunpack.c.h.b16 %v309
  %v2296 = vunpack.c.l.b16 %v310
  %v2297 = vunpack.c.h.b16 %v310
  %v2298 = vunpack.c.l.b16 %v311
  %v2299 = vunpack.c.l.b16 %v312
  %v2300 = vunpack.c.h.b16 %v312
  %v2301 = vunpack.c.l.b16 %v313
  %v2302 = vunpack.c.h.b16 %v313
  %v2303 = vunpack.c.l.b16 %v314
  %v2304 = vunpack.c.l.b16 %v315
  %v2305 = vunpack.c.h.b16 %v315
  %v2306 = vunpack.c.l.b16 %v316
  %v2307 = vunpack.c.h.b16 %v316
  %v2308 = vunpack.c.l.b16 %v317
  %v2309 = vunpack.c.l.b16 %v318
  %v2310 = vunpack.c.h.b16 %v318
  %v2311 = vunpack.c.l.b16 %v319
  %v2312 = vunpack.c.h.b16 %v319
  %v2313 = vunpack.c.l.b16 %v320
  %v2314 = vunpack.c.l.b16 %v321
  %v2315 = vunpack.c.h.b16 %v321
  %v2316 = vunpack.c.l.b16 %v322
  %v2317 = vunpack.c.h.b16 %v322
  %v2318 = vunpack.c.l.b16 %v323
  %v2319 = vunpack.c.l.b16 %v324
  %v2320 = vunpack.c.h.b16 %v324
  %v2321 = vunpack.c.l.b16 %v325
  %v2322 = vunpack.c.h.b16 %v325
  %v2323 = vunpack.c.l.b16 %v326
  %v2324 = vunpack.c.l.b16 %v327
  %v2325 = vunpack.c.h.b16 %v327
  %v2326 = vunpack.c.l.b16 %v328
  %v2327 = vunpack.c.h.b16 %v328
  %v2328 = vunpack.c.l.b16 %v329
  %v2329 = vunpack.c.l.b16 %v330
  %v2330 = vunpack.c.h.b16 %v330
  %v2331 = vunpack.c.l.b16 %v331
  %v2332 = vunpack.c.h.b16 %v331
  %v2333 = vunpack.c.l.b16 %v332
  %v2334 = vunpack.c.l.b16 %v333
  %v2335 = vunpack.c.h.b16 %v333
  %v2336 = vunpack.c.l.b16 %v334
  %v2337 = vunpack.c.h.b16 %v334
  %v2338 = vunpack.c.l.b16 %v335
  %v2339 = vunpack.c.l.b16 %v336
  %v2340 = vunpack.c.h.b16 %v336
  %v2341 = vunpack.c.l.b16 %v337
  %v2342 = vunpack.c.h.b16 %v337
  %v2343 = vunpack.c.l.b16 %v338
  %v2344 = vunpack.c.l.b16 %v339
  %v2345 = vunpack.c.h.b16 %v339
  %v2346 = vunpack.c.l.b16 %v340
  %v2347 = vunpack.c.h.b16 %v340
  %v2348 = vunpack.c.l.b16 %v341
  %v2349 = vunpack.c.l.b16 %v342
  %v2350 = vunpack.c.h.b16 %v342
  %v2351 = vunpack.c.l.b16 %v343
  %v2352 = vunpack.c.h.b16 %v343
  %v2353 = vunpack.c.l.b16 %v344
  %v2354 = vunpack.c.l.b16 %v345
  %v2355 = vunpack.c.h.b16 %v345
  %v2356 = vunpack.c.l.b16 %v346
  %v2357 = vunpack.c.h.b16 %v346
  %v2358 = vunpack.c.l.b16 %v347
  %v2359 = vunpack.c.l.b16 %v348
  %v2360 = vunpack.c.h.b16 %v348
  %v2361 = vunpack.c.l.b16 %v349
  %v2362 = vunpack.c.h.b16 %v349
  %v2363 = vunpack.c.l.b16 %v350
  %v2364 = vunpack.c.l.b16 %v351
  %v2365 = vunpack.c.h.b16 %v351
  %v2366 = vunpack.c.l.b16 %v352
  %v2367 = vunpack.c.h.b16 %v352
  %v2368 = vunpack.c.l.b16 %v353
  %v2369 = vunpack.c.l.b16 %v354
  %v2370 = vunpack.c.h.b16 %v354
  %v2371 = vunpack.c.l.b16 %v355
  %v2372 = vunpack.c.h.b16 %v355
  %v2373 = vunpack.c.l.b16 %v356
  %v2374 = vunpack.c.l.b16 %v357
  %v2375 = vunpack.c.h.b16 %v357
  %v2376 = vunpack.c.l.b16 %v358
  %v2377 = vunpack.c.h.b16 %v358
  %v2378 = vunpack.c.l.b16 %v359
  %v2379 = vunpack.c.l.b16 %v360
  %v2380 = vunpack.c.h.b16 %v360
  %v2381 = vunpack.c.l.b16 %v361
  %v2382 = vunpack.c.h.b16 %v361
  %v2383 = vunpack.c.l.b16 %v362
  %v2384 = vunpack.c.l.b16 %v363
  %v2385 = vunpack.c.h.b16 %v363
  %v2386 = vunpack.c.l.b16 %v364
  %v2387 = vunpack.c.h.b16 %v364
  %v2388 = vunpack.c.l.b16 %v365
  %v2389 = vunpack.c.l.b16 %v366
  %v2390 = vunpack.c.h.b16 %v366
  %v2391 = vunpack.c.l.b16 %v367
  %v2392 = vunpack.c.h.b16 %v367
  %v2393 = vunpack.c.l.b16 %v368
  %v2394 = vunpack.c.l.b16 %v369
  %v2395 = vunpack.c.h.b16 %v369
  %v2396 = vunpack.c.l.b16 %v370
  %v2397 = vunpack.c.h.b16 %v370
  %v2398 = vunpack.c.l.b16 %v371
  %v2399 = vunpack.c.l.b16 %v372
  %v2400 = vunpack.c.h.b16 %v372
  %v2401 = vunpack.c.l.b16 %v373
  %v2402 = vunpack.c.h.b16 %v373
  %v2403 = vunpack.c.l.b16 %v374
  %v2404 = vunpack.c.l.b16 %v375
  %v2405 = vunpack.c.h.b16 %v375
  %v2406 = vunpack.c.l.b16 %v376
  %v2407 = vunpack.c.h.b16 %v376
  %v2408 = vunpack.c.l.b16 %v377
  %v2409 = vunpack.c.l.b16 %v378
  %v2410 = vunpack.c.h.b16 %v378
  %v2411 = vunpack.c.l.b16 %v379
  %v2412 = vunpack.c.h.b16 %v379
  %v2413 = vunpack.c.l.b16 %v380
  %v2414 = vunpack.c.l.b16 %v381
  %v2415 = vunpack.c.h.b16 %v381
  %v2416 = vunpack.c.l.b16 %v382
  %v2417 = vunpack.c.h.b16 %v382
  %v2418 = vunpack.c.l.b16 %v383
  %v2419 = vunpack.c.l.b16 %v384
  %v2420 = vunpack.c.h.b16 %v384
  %v2421 = vunpack.c.l.b16 %v385
  %v2422 = vunpack.c.h.b16 %v385
  %v2423 = vunpack.c.l.b16 %v386
  %v2424 = vunpack.c.l.b16 %v387
  %v2425 = vunpack.c.h.b16 %v387
  %v2426 = vunpack.c.l.b16 %v388
  %v2427 = vunpack.c.h.b16 %v388
  %v2428 = vunpack.c.l.b16 %v389
  %v2429 = vunpack.c.l.b16 %v390
  %v2430 = vunpack.c.h.b16 %v390
  %v2431 = vunpack.c.l.b16 %v391
  %v2432 = vunpack.c.h.b16 %v391
  %v2433 = vunpack.c.l.b16 %v392
  %v2434 = vunpack.c.l.b16 %v393
  %v2435 = vunpack.c.h.b16 %v393
  %v2436 = vunpack.c.l.b16 %v394
  %v2437 = vunpack.c.h.b16 %v394
  %v2438 = vunpack.c.l.b16 %v395
  %v2439 = vunpack.c.l.b16 %v396
  %v2440 = vunpack.c.h.b16 %v396
  %v2441 = vunpack.c.l.b16 %v397
  %v2442 = vunpack.c.h.b16 %v397
  %v2443 = vunpack.c.l.b16 %v398
  %v2444 = vunpack.c.l.b16 %v399
  %v2445 = vunpack.c.h.b16 %v399
  %v2446 = vunpack.c.l.b16 %v400
  %v2447 = vunpack.c.h.b16 %v400
  %v2448 = vunpack.c.l.b16 %v401
  %v2449 = vunpack.c.l.b16 %v402
  %v2450 = vunpack.c.h.b16 %v402
  %v2451 = vunpack.c.l.b16 %v403
  %v2452 = vunpack.c.h.b16 %v403
  %v2453 = vunpack.c.l.b16 %v404
  %v2454 = vunpack.c.l.b16 %v405
  %v2455 = vunpack.c.h.b16 %v405
  %v2456 = vunpack.c.l.b16 %v406
  %v2457 = vunpack.c.h.b16 %v406
  %v2458 = vunpack.c.l.b16 %v407
  %v2459 = vunpack.c.l.b16 %v408
  %v2460 = vunpack.c.h.b16 %v408
  %v2461 = vunpack.c.l.b16 %v409
  %v2462 = vunpack.c.h.b16 %v409
  %v2463 = vunpack.c.l.b16 %v410
  %v2464 = vunpack.c.l.b16 %v411
  %v2465 = vunpack.c.h.b16 %v411
  %v2466 = vunpack.c.l.b16 %v412
  %v2467 = vunpack.c.h.b16 %v412
  %v2468 = vunpack.c.l.b16 %v413
  %v2469 = vunpack.c.l.b16 %v414
  %v2470 = vunpack.c.h.b16 %v414
  %v2471 = vunpack.c.l.b16 %v415
  %v2472 = vunpack.c.h.b16 %v415
  %v2473 = vunpack.c.l.b16 %v416
  %v2474 = vunpack.c.l.b16 %v417
  %v2475 = vunpack.c.h.b16 %v417
  %v2476 = vunpack.c.l.b16 %v418
  %v2477 = vunpack.c.h.b16 %v418
  %v2478 = vunpack.c.l.b16 %v419
  %v2479 = vunpack.c.l.b16 %v420
  %v2480 = vunpack.c.h.b16 %v420
  %v2481 = vunpack.c.l.b16 %v421
  %v2482 = vunpack.c.h.b16 %v421
  %v2483 = vunpack.c.l.b16 %v422
  %v2484 = vunpack.c.l.b16 %v423
  %v2485 = vunpack.c.h.b16 %v423
  %v2486 = vunpack.c.l.b16 %v424
  %v2487 = vunpack.c.h.b16 %v424
  %v2488 = vunpack.c.l.b16 %v425
  %v2489 = vunpack.c.l.b16 %v426
  %v2490 = vunpack.c.h.b16 %v426
  %v2491 = vunpack.c.l.b16 %v427
  %v2492 = vunpack.c.h.b16 %v427
  %v2493 = vunpack.c.l.b16 %v428
  %v2494 = vunpack.c.l.b16 %v429
  %v2495 = vunpack.c.h.b16 %v429
  %v2496 = vunpack.c.l.b16 %v430
  %v2497 = vunpack.c.h.b16 %v430
  %v2498 = vunpack.c.l.b16 %v431
  %v2499 = vunpack.c.l.b16 %v432
  %v2500 = vunpack.c.h.b16 %v432
  %v2501 = vunpack.c.l.b16 %v433
  %v2502 = vunpack.c.h.b16 %v433
  %v2503 = vunpack.c.l.b16 %v434
  %v2504 = vunpack.c.l.b16 %v435
  %v2505 = vunpack.c.h.b16 %v435
  %v2506 = vunpack.c.l.b16 %v436
  %v2507 = vunpack.c.h.b16 %v436
  %v2508 = vunpack.c.l.b16 %v437
  %v2509 = vunpack.c.l.b16 %v438
  %v2510 = vunpack.c.h.b16 %v438
  %v2511 = vunpack.c.l.b16 %v439
  %v2512 = vunpack.c.h.b16 %v439
  %v2513 = vunpack.c.l.b16 %v440
  %v2514 = vunpack.c.l.b16 %v441
  %v2515 = vunpack.c.h.b16 %v441
  %v2516 = vunpack.c.l.b16 %v442
  %v2517 = vunpack.c.h.b16 %v442
  %v2518 = vunpack.c.l.b16 %v443
  %v2519 = vunpack.c.l.b16 %v444
  %v2520 = vunpack.c.h.b16 %v444
  %v2521 = vunpack.c.l.b16 %v445
  %v2522 = vunpack.c.h.b16 %v445
  %v2523 = vunpack.c.l.b16 %v446
  %v2524 = vunpack.c.l.b16 %v447
  %v2525 = vunpack.c.h.b16 %v447
  %v2526 = vunpack.c.l.b16 %v448
  %v2527 = vunpack.c.h.b16 %v448
  %v2528 = vunpack.c.l.b16 %v449
  %v2529 = vunpack.c.l.b16 %v450
  %v2530 = vunpack.c.h.b16 %v450
  %v2531 = vunpack.c.l.b16 %v451
  %v2532 = vunpack.c.h.b16 %v451
  %v2533 = vunpack.c.l.b16 %v452
  %v2534 = vunpack.c.l.b16 %v453
  %v2535 = vunpack.c.h.b16 %v453
  %v2536 = vunpack.c.l.b16 %v454
  %v2537 = vunpack.c.h.b16 %v454
  %v2538 = vunpack.c.l.b16 %v455
  %v2539 = vunpack.c.l.b16 %v456
  %v2540 = vunpack.c.h.b16 %v456
  %v2541 = vunpack.c.l.b16 %v457
  %v2542 = vunpack.c.h.b16 %v457
  %v2543 = vunpack.c.l.b16 %v458
  %v2544 = vunpack.c.l.b16 %v459
  %v2545 = vunpack.c.h.b16 %v459
  %v2546 = vunpack.c.l.b16 %v460
  %v2547 = vunpack.c.h.b16 %v460
  %v2548 = vunpack.c.l.b16 %v461
  %v2549 = vunpack.c.l.b16 %v462
  %v2550 = vunpack.c.h.b16 %v462
  %v2551 = vunpack.c.l.b16 %v463
  %v2552 = vunpack.c.h.b16 %v463
  %v2553 = vunpack.c.l.b16 %v464
  %v2554 = vunpack.c.l.b16 %v465
  %v2555 = vunpack.c.h.b16 %v465
  %v2556 = vunpack.c.l.b16 %v466
  %v2557 = vunpack.c.h.b16 %v466
  %v2558 = vunpack.c.l.b16 %v467
  %v2559 = vunpack.c.l.b16 %v468
  %v2560 = vunpack.c.h.b16 %v468
  %v2561 = vunpack.c.l.b16 %v469
  %v2562 = vunpack.c.h.b16 %v469
  %v2563 = vunpack.c.l.b16 %v470
  %v2564 = vunpack.c.l.b16 %v471
  %v2565 = vunpack.c.h.b16 %v471
  %v2566 = vunpack.c.l.b16 %v472
  %v2567 = vunpack.c.h.b16 %v472
  %v2568 = vunpack.c.l.b16 %v473
  %v2569 = vunpack.c.l.b16 %v474
  %v2570 = vunpack.c.h.b16 %v474
  %v2571 = vunpack.c.l.b16 %v475
  %v2572 = vunpack.c.h.b16 %v475
  %v2573 = vunpack.c.l.b16 %v476
  %v2574 = vunpack.c.l.b16 %v477
  %v2575 = vunpack.c.h.b16 %v477
  %v2576 = vunpack.c.l.b16 %v478
  %v2577 = vunpack.c.h.b16 %v478
  %v2578 = vunpack.c.l.b16 %v479
  %v2579 = vunpack.c.l.b16 %v480
  %v2580 = vunpack.c.h.b16 %v480
  %v2581 = vunpack.c.l.b16 %v481
  %v2582 = vunpack.c.h.b16 %v481
  %v2583 = vunpack.c.l.b16 %v482
  %v2584 = vunpack.c.l.b16 %v483
  %v2585 = vunpack.c.h.b16 %v483
  %v2586 = vunpack.c.l.b16 %v484
  %v2587 = vunpack.c.h.b16 %v484
  %v2588 = vunpack.c.l.b16 %v485
  %v2589 = vunpack.c.l.b16 %v486
  %v2590 = vunpack.c.h.b16 %v486
  %v2591 = vunpack.c.l.b16 %v487
  %v2592 = vunpack.c.h.b16 %v487
  %v2593 = vunpack.c.l.b16 %v488
  %v2594 = vunpack.c.l.b16 %v489
  %v2595 = vunpack.c.h.b16 %v489
  %v2596 = vunpack.c.l.b16 %v490
  %v2597 = vunpack.c.h.b16 %v490
  %v2598 = vunpack.c.l.b16 %v491
  %v2599 = vunpack.c.l.b16 %v492
  %v2600 = vunpack.c.h.b16 %v492
  %v2601 = vunpack.c.l.b16 %v493
  %v2602 = vunpack.c.h.b16 %v493
  %v2603 = vunpack.c.l.b16 %v494
  %v2604 = vunpack.c.l.b16 %v495
  %v2605 = vunpack.c.h.b16 %v495
  %v2606 = vunpack.c.l.b16 %v496
  %v2607 = vunpack.c.h.b16 %v496
  %v2608 = vunpack.c.l.b16 %v497
  %v2609 = vunpack.c.l.b16 %v498
  %v2610 = vunpack.c.h.b16 %v498
  %v2611 = vunpack.c.l.b16 %v499
  %v2612 = vunpack.c.h.b16 %v499
  %v2613 = vunpack.c.l.b16 %v500
  %v2614 = vunpack.c.l.b16 %v501
  %v2615 = vunpack.c.h.b16 %v501
  %v2616 = vunpack.c.l.b16 %v502
  %v2617 = vunpack.c.h.b16 %v502
  %v2618 = vunpack.c.l.b16 %v503
  %v2619 = vunpack.c.l.b16 %v504
  %v2620 = vunpack.c.h.b16 %v504
  %v2621 = vunpack.c.l.b16 %v505
  %v2622 = vunpack.c.h.b16 %v505
  %v2623 = vunpack.c.l.b16 %v506
  %v2624 = vunpack.c.l.b16 %v507
  %v2625 = vunpack.c.h.b16 %v507
  %v2626 = vunpack.c.l.b16 %v508
  %v2627 = vunpack.c.h.b16 %v508
  %v2628 = vunpack.c.l.b16 %v509
  %v2629 = vunpack.c.l.b16 %v510
  %v2630 = vunpack.c.h.b16 %v510
  %v2631 = vunpack.c.l.b16 %v511
  %v2632 = vunpack.c.h.b16 %v511
  %v2633 = vunpack.c.l.b16 %v512
  %v2634 = vunpack.c.l.b16 %v513
  %v2635 = vunpack.c.h.b16 %v513
  %v2636 = vunpack.c.l.b16 %v514
  %v2637 = vunpack.c.h.b16 %v514
  %v2638 = vunpack.c.l.b16 %v515
  %v2639 = vunpack.c.l.b16 %v516
  %v2640 = vunpack.c.h.b16 %v516
  %v2641 = vunpack.c.l.b16 %v517
  %v2642 = vunpack.c.h.b16 %v517
  %v2643 = vunpack.c.l.b16 %v518
  %v2644 = vunpack.c.l.b16 %v519
  %v2645 = vunpack.c.h.b16 %v519
  %v2646 = vunpack.c.l.b16 %v520
  %v2647 = vunpack.c.h.b16 %v520
  %v2648 = vunpack.c.l.b16 %v521
  %v2649 = vunpack.c.l.b16 %v522
  %v2650 = vunpack.c.h.b16 %v522
  %v2651 = vunpack.c.l.b16 %v523
  %v2652 = vunpack.c.h.b16 %v523
  %v2653 = vunpack.c.l.b16 %v524
  %v2654 = vunpack.c.l.b16 %v525
  %v2655 = vunpack.c.h.b16 %v525
  %v2656 = vunpack.c.l.b16 %v526
  %v2657 = vunpack.c.h.b16 %v526
  %v2658 = vunpack.c.l.b16 %v527
  %v2659 = vunpack.c.l.b16 %v528
  %v2660 = vunpack.c.h.b16 %v528
  %v2661 = vunpack.c.l.b16 %v529
  %v2662 = vunpack.c.h.b16 %v529
  %v2663 = vunpack.c.l.b16 %v530
  %v2664 = vunpack.c.l.b16 %v531
  %v2665 = vunpack.c.h.b16 %v531
  %v2666 = vunpack.c.l.b16 %v532
  %v2667 = vunpack.c.h.b16 %v532
  %v2668 = vunpack.c.l.b16 %v533
  %v2669 = vunpack.c.l.b16 %v534
  %v2670 = vunpack.c.h.b16 %v534
  %v2671 = vunpack.c.l.b16 %v535
  %v2672 = vunpack.c.h.b16 %v535
  %v2673 = vunpack.c.l.b16 %v536
  %v2674 = vunpack.c.l.b16 %v537
  %v2675 = vunpack.c.h.b16 %v537
  %v2676 = vunpack.c.l.b16 %v538
  %v2677 = vunpack.c.h.b16 %v538
  %v2678 = vunpack.c.l.b16 %v539
  %v2679 = vunpack.c.l.b16 %v540
  %v2680 = vunpack.c.h.b16 %v540
  %v2681 = vunpack.c.l.b16 %v541
  %v2682 = vunpack.c.h.b16 %v541
  %v2683 = vunpack.c.l.b16 %v542
  %v2684 = vunpack.c.l.b16 %v543
  %v2685 = vunpack.c.h.b16 %v543
  %v2686 = vunpack.c.l.b16 %v544
  %v2687 = vunpack.c.h.b16 %v544
  %v2688 = vunpack.c.l.b16 %v545
  %v2689 = vunpack.c.l.b16 %v546
  %v2690 = vunpack.c.h.b16 %v546
  %v2691 = vunpack.c.l.b16 %v547
  %v2692 = vunpack.c.h.b16 %v547
  %v2693 = vunpack.c.l.b16 %v548
  %v2694 = vunpack.c.l.b16 %v549
  %v2695 = vunpack.c.h.b16 %v549
  %v2696 = vunpack.c.l.b16 %v550
  %v2697 = vunpack.c.h.b16 %v550
  %v2698 = vunpack.c.l.b16 %v551
  %v2699 = vunpack.c.l.b16 %v552
  %v2700 = vunpack.c.h.b16 %v552
  %v2701 = vunpack.c.l.b16 %v553
  %v2702 = vunpack.c.h.b16 %v553
  %v2703 = vunpack.c.l.b16 %v554
  %v2704 = vunpack.c.l.b16 %v555
  %v2705 = vunpack.c.h.b16 %v555
  %v2706 = vunpack.c.l.b16 %v556
  %v2707 = vunpack.c.h.b16 %v556
  %v2708 = vunpack.c.l.b16 %v557
  %v2709 = vunpack.c.l.b16 %v558
  %v2710 = vunpack.c.h.b16 %v558
  %v2711 = vunpack.c.l.b16 %v559
  %v2712 = vunpack.c.h.b16 %v559
  %v2713 = vunpack.c.l.b16 %v560
  %v2714 = vunpack.c.l.b16 %v561
  %v2715 = vunpack.c.h.b16 %v561
  %v2716 = vunpack.c.l.b16 %v562
  %v2717 = vunpack.c.h.b16 %v562
  %v2718 = vunpack.c.l.b16 %v563
  %v2719 = vunpack.c.l.b16 %v564
  %v2720 = vunpack.c.h.b16 %v564
  %v2721 = vunpack.c.l.b16 %v565
  %v2722 = vunpack.c.h.b16 %v565
  %v2723 = vunpack.c.l.b16 %v566
  %v2724 = vunpack.c.l.b16 %v567
  %v2725 = vunpack.c.h.b16 %v567
  %v2726 = vunpack.c.l.b16 %v568
  %v2727 = vunpack.c.h.b16 %v568
  %v2728 = vunpack.c.l.b16 %v569
  %v2729 = vunpack.c.l.b16 %v570
  %v2730 = vunpack.c.h.b16 %v570
  %v2731 = vunpack.c.l.b16 %v571
  %v2732 = vunpack.c.h.b16 %v571
  %v2733 = vunpack.c.l.b16 %v572
  %v2734 = vunpack.c.l.b16 %v573
  %v2735 = vunpack.c.h.b16 %v573
  %v2736 = vunpack.c.l.b16 %v574
  %v2737 = vunpack.c.h.b16 %v574
  %v2738 = vunpack.c.l.b16 %v575
  %v2739 = vunpack.c.l.b16 %v576
  %v2740 = vunpack.c.h.b16 %v576
  %v2741 = vunpack.c.l.b16 %v577
  %v2742 = vunpack.c.h.b16 %v577
  %v2743 = vunpack.c.l.b16 %v578
  %v2744 = vunpack.c.l.b16 %v579
  %v2745 = vunpack.c.h.b16 %v579
  %v2746 = vunpack.c.l.b16 %v580
  %v2747 = vunpack.c.h.b16 %v580
  %v2748 = vunpack.c.l.b16 %v581
  %v2749 = vunpack.c.l.b16 %v582
  %v2750 = vunpack.c.h.b16 %v582
  %v2751 = vunpack.c.l.b16 %v583
  %v2752 = vunpack.c.h.b16 %v583
  %v2753 = vunpack.c.l.b16 %v584
  %v2754 = vunpack.c.l.b16 %v585
  %v2755 = vunpack.c.h.b16 %v585
  %v2756 = vunpack.c.l.b16 %v586
  %v2757 = vunpack.c.h.b16 %v586
  %v2758 = vunpack.c.l.b16 %v587
  %v2759 = vunpack.c.l.b16 %v588
  %v2760 = vunpack.c.h.b16 %v588
  %v2761 = vunpack.c.l.b16 %v589
  %v2762 = vunpack.c.h.b16 %v589
  %v2763 = vunpack.c.l.b16 %v590
  %v2764 = vunpack.c.l.b16 %v591
  %v2765 = vunpack.c.h.b16 %v591
  %v2766 = vunpack.c.l.b16 %v592
  %v2767 = vunpack.c.h.b16 %v592
  %v2768 = vunpack.c.l.b16 %v593
  %v2769 = vunpack.c.l.b16 %v594
  %v2770 = vunpack.c.h.b16 %v594
  %v2771 = vunpack.c.l.b16 %v595
  %v2772 = vunpack.c.h.b16 %v595
  %v2773 = vunpack.c.l.b16 %v596
  %v2774 = vunpack.c.l.b16 %v597
  %v2775 = vunpack.c.h.b16 %v597
  %v2776 = vunpack.c.l.b16 %v598
  %v2777 = vunpack.c.h.b16 %v598
  %v2778 = vunpack.c.l.b16 %v599
  %v2779 = vunpack.c.l.b16 %v600
  %v2780 = vunpack.c.h.b16 %v600
  %v2781 = vunpack.c.l.b16 %v601
  %v2782 = vunpack.c.h.b16 %v601
  %v2783 = vunpack.c.l.b16 %v602
  %v2784 = vunpack.c.l.b16 %v603
  %v2785 = vunpack.c.h.b16 %v603
  %v2786 = vunpack.c.l.b16 %v604
  %v2787 = vunpack.c.h.b16 %v604
  %v2788 = vunpack.c.l.b16 %v605
  %v2789 = vunpack.c.l.b16 %v606
  %v2790 = vunpack.c.h.b16 %v606
  %v2791 = vunpack.c.l.b16 %v607
  %v2792 = vunpack.c.h.b16 %v607
  %v2793 = vunpack.c.l.b16 %v608
  %v2794 = vunpack.c.l.b16 %v609
  %v2795 = vunpack.c.h.b16 %v609
  %v2796 = vunpack.c.l.b16 %v610
  %v2797 = vunpack.c.h.b16 %v610
  %v2798 = vunpack.c.l.b16 %v611
  %v2799 = vunpack.c.l.b16 %v612
  %v2800 = vunpack.c.h.b16 %v612
  %v2801 = vunpack.c.l.b16 %v613
  %v2802 = vunpack.c.h.b16 %v613
  %v2803 = vunpack.c.l.b16 %v614
  %v2804 = vunpack.c.l.b16 %v615
  %v2805 = vunpack.c.h.b16 %v615
  %v2806 = vunpack.c.l.b16 %v616
  %v2807 = vunpack.c.h.b16 %v616
  %v2808 = vunpack.c.l.b16 %v617
  %v2809 = vunpack.c.l.b16 %v618
  %v2810 = vunpack.c.h.b16 %v618
  %v2811 = vunpack.c.l.b16 %v619
  %v2812 = vunpack.c.h.b16 %v619
  %v2813 = vunpack.c.l.b16 %v620
  %v2814 = vunpack.c.l.b16 %v621
  %v2815 = vunpack.c.h.b16 %v621
  %v2816 = vunpack.c.l.b16 %v622
  %v2817 = vunpack.c.h.b16 %v622
  %v2818 = vunpack.c.l.b16 %v623
  %v2819 = vunpack.c.l.b16 %v624
  %v2820 = vunpack.c.h.b16 %v624
  %v2821 = vunpack.c.l.b16 %v625
  %v2822 = vunpack.c.h.b16 %v625
  %v2823 = vunpack.c.l.b16 %v626
  %v2824 = vunpack.c.l.b16 %v627
  %v2825 = vunpack.c.h.b16 %v627
  %v2826 = vunpack.c.l.b16 %v628
  %v2827 = vunpack.c.h.b16 %v628
  %v2828 = vunpack.c.l.b16 %v629
  %v2829 = vunpack.c.l.b16 %v630
  %v2830 = vunpack.c.h.b16 %v630
  %v2831 = vunpack.c.l.b16 %v631
  %v2832 = vunpack.c.h.b16 %v631
  %v2833 = vunpack.c.l.b16 %v632
  %v2834 = vunpack.c.l.b16 %v633
  %v2835 = vunpack.c.h.b16 %v633
  %v2836 = vunpack.c.l.b16 %v634
  %v2837 = vunpack.c.h.b16 %v634
  %v2838 = vunpack.c.l.b16 %v635
  %v2839 = vunpack.c.l.b16 %v636
  %v2840 = vunpack.c.h.b16 %v636
  %v2841 = vunpack.c.l.b16 %v637
  %v2842 = vunpack.c.h.b16 %v637
  %v2843 = vunpack.c.l.b16 %v638
  %v2844 = vunpack.c.l.b16 %v639
  %v2845 = vunpack.c.h.b16 %v639
  %v2846 = vunpack.c.l.b16 %v640
  %v2847 = vunpack.c.h.b16 %v640
  %v2848 = vunpack.c.l.b16 %v641
  %v2849 = vunpack.c.l.b16 %v642
  %v2850 = vunpack.c.h.b16 %v642
  %v2851 = vunpack.c.l.b16 %v643
  %v2852 = vunpack.c.h.b16 %v643
  %v2853 = vunpack.c.l.b16 %v644
  %v2854 = vunpack.c.l.b16 %v645
  %v2855 = vunpack.c.h.b16 %v645
  %v2856 = vunpack.c.l.b16 %v646
  %v2857 = vunpack.c.h.b16 %v646
  %v2858 = vunpack.c.l.b16 %v647
  %v2859 = vunpack.c.l.b16 %v648
  %v2860 = vunpack.c.h.b16 %v648
  %v2861 = vunpack.c.l.b16 %v649
  %v2862 = vunpack.c.h.b16 %v649
  %v2863 = vunpack.c.l.b16 %v650
  %v2864 = vunpack.c.l.b16 %v651
  %v2865 = vunpack.c.h.b16 %v651
  %v2866 = vunpack.c.l.b16 %v652
  %v2867 = vunpack.c.h.b16 %v652
  %v2868 = vunpack.c.l.b16 %v653
  %v2869 = vunpack.c.l.b16 %v654
  %v2870 = vunpack.c.h.b16 %v654
  %v2871 = vunpack.c.l.b16 %v655
  %v2872 = vunpack.c.h.b16 %v655
  %v2873 = vunpack.c.l.b16 %v656
  %v2874 = vunpack.c.l.b16 %v657
  %v2875 = vunpack.c.h.b16 %v657
  %v2876 = vunpack.c.l.b16 %v658
  %v2877 = vunpack.c.h.b16 %v658
  %v2878 = vunpack.c.l.b16 %v659
  %v2879 = vunpack.c.l.b16 %v660
  %v2880 = vunpack.c.h.b16 %v660
  %v2881 = vunpack.c.l.b16 %v661
  %v2882 = vunpack.c.h.b16 %v661
  %v2883 = vunpack.c.l.b16 %v662
  %v2884 = vunpack.c.l.b16 %v663
  %v2885 = vunpack.c.h.b16 %v663
  %v2886 = vunpack.c.l.b16 %v664
  %v2887 = vunpack.c.h.b16 %v664
  %v2888 = vunpack.c.l.b16 %v665
  %v2889 = vunpack.c.l.b16 %v666
  %v2890 = vunpack.c.h.b16 %v666
  %v2891 = vunpack.c.l.b16 %v667
  %v2892 = vunpack.c.h.b16 %v667
  %v2893 = vunpack.c.l.b16 %v668
  %v2894 = vunpack.c.l.b16 %v669
  %v2895 = vunpack.c.h.b16 %v669
  %v2896 = vunpack.c.l.b16 %v670
  %v2897 = vunpack.c.h.b16 %v670
  %v2898 = vunpack.c.l.b16 %v671
  %v2899 = vunpack.c.l.b16 %v672
  %v2900 = vunpack.c.h.b16 %v672
  %v2901 = vunpack.c.l.b16 %v673
  %v2902 = vunpack.c.h.b16 %v673
  %v2903 = vunpack.c.l.b16 %v674
  %v2904 = vunpack.c.l.b16 %v675
  %v2905 = vunpack.c.h.b16 %v675
  %v2906 = vunpack.c.l.b16 %v676
  %v2907 = vunpack.c.h.b16 %v676
  %v2908 = vunpack.c.l.b16 %v677
  %v2909 = vunpack.c.l.b16 %v678
  %v2910 = vunpack.c.h.b16 %v678
  %v2911 = vunpack.c.l.b16 %v679
  %v2912 = vunpack.c.h.b16 %v679
  %v2913 = vunpack.c.l.b16 %v680
  %v2914 = vunpack.c.l.b16 %v681
  %v2915 = vunpack.c.h.b16 %v681
  %v2916 = vunpack.c.l.b16 %v682
  %v2917 = vunpack.c.h.b16 %v682
  %v2918 = vunpack.c.l.b16 %v683
  %v2919 = vunpack.c.l.b16 %v684
  %v2920 = vunpack.c.h.b16 %v684
  %v2921 = vunpack.c.l.b16 %v685
  %v2922 = vunpack.c.h.b16 %v685
  %v2923 = vunpack.c.l.b16 %v686
  %v2924 = vunpack.c.l.b16 %v687
  %v2925 = vunpack.c.h.b16 %v687
  %v2926 = vunpack.c.l.b16 %v688
  %v2927 = vunpack.c.h.b16 %v688
  %v2928 = vunpack.c.l.b16 %v689
  %v2929 = vunpack.c.l.b16 %v690
  %v2930 = vunpack.c.h.b16 %v690
  %v2931 = vunpack.c.l.b16 %v691
  %v2932 = vunpack.c.h.b16 %v691
  %v2933 = vunpack.c.l.b16 %v692
  %v2934 = vunpack.c.l.b16 %v693
  %v2935 = vunpack.c.h.b16 %v693
  %v2936 = vunpack.c.l.b16 %v694
  %v2937 = vunpack.c.h.b16 %v694
  %v2938 = vunpack.c.l.b16 %v695
  %v2939 = vunpack.c.l.b16 %v696
  %v2940 = vunpack.c.h.b16 %v696
  %v2941 = vunpack.c.l.b16 %v697
  %v2942 = vunpack.c.h.b16 %v697
  %v2943 = vunpack.c.l.b16 %v698
  %v2944 = vunpack.c.l.b16 %v699
  %v2945 = vunpack.c.h.b16 %v699
  %v2946 = vunpack.c.l.b16 %v700
  %v2947 = vunpack.c.h.b16 %v700
  %v2948 = vunpack.c.l.b16 %v701
  %v2949 = vunpack.c.l.b16 %v702
  %v2950 = vunpack.c.h.b16 %v702
  %v2951 = vunpack.c.l.b16 %v703
  %v2952 = vunpack.c.h.b16 %v703
  %v2953 = vunpack.c.l.b16 %v704
  %v2954 = vunpack.c.l.b16 %v705
  %v2955 = vunpack.c.h.b16 %v705
  %v2956 = vunpack.c.l.b16 %v706
  %v2957 = vunpack.c.h.b16 %v706
  %v2958 = vunpack.c.l.b16 %v707
  %v2959 = vunpack.c.l.b16 %v708
  %v2960 = vunpack.c.h.b16 %v708
  %v2961 = vunpack.c.l.b16 %v709
  %v2962 = vunpack.c.h.b16 %v709
  %v2963 = vunpack.c.l.b16 %v710
  %v2964 = vunpack.c.l.b16 %v711
  %v2965 = vunpack.c.h.b16 %v711
  %v2966 = vunpack.c.l.b16 %v712
  %v2967 = vunpack.c.h.b16 %v712
  %v2968 = vunpack.c.l.b16 %v713
  %v2969 = vunpack.c.l.b16 %v714
  %v2970 = vunpack.c.h.b16 %v714
  %v2971 = vunpack.c.l.b16 %v715
  %v2972 = vunpack.c.h.b16 %v715
  %v2973 = vunpack.c.l.b16 %v716
  %v2974 = vunpack.c.l.b16 %v717
  %v2975 = vunpack.c.h.b16 %v717
  %v2976 = vunpack.c.l.b16 %v718
  %v2977 = vunpack.c.h.b16 %v718
  %v2978 = vunpack.c.l.b16 %v719
  %v2979 = vunpack.c.l.b16 %v720
  %v2980 = vunpack.c.h.b16 %v720
  %v2981 = vunpack.c.l.b16 %v721
  %v2982 = vunpack.c.h.b16 %v721
  %v2983 = vunpack.c.l.b16 %v722
  %v2984 = vunpack.c.l.b16 %v723
  %v2985 = vunpack.c.h.b16 %v723
  %v2986 = vunpack.c.l.b16 %v724
  %v2987 = vunpack.c.h.b16 %v724
  %v2988 = vunpack.c.l.b16 %v725
  %v2989 = vunpack.c.l.b16 %v726
  %v2990 = vunpack.c.h.b16 %v726
  %v2991 = vunpack.c.l.b16 %v727
  %v2992 = vunpack.c.h.b16 %v727
  %v2993 = vunpack.c.l.b16 %v728
  %v2994 = vunpack.c.l.b16 %v729
  %v2995 = vunpack.c.h.b16 %v729
  %v2996 = vunpack.c.l.b16 %v730
  %v2997 = vunpack.c.h.b16 %v730
  %v2998 = vunpack.c.l.b16 %v731
  %v2999 = vunpack.c.l.b16 %v732
  %v3000 = vunpack.c.h.b16 %v732
  %v3001 = vunpack.c.l.b16 %v733
  %v3002 = vunpack.c.h.b16 %v733
  %v3003 = vunpack.c.l.b16 %v734
  %v3004 = vunpack.c.l.b16 %v735
  %v3005 = vunpack.c.h.b16 %v735
  %v3006 = vunpack.c.l.b16 %v736
  %v3007 = vunpack.c.h.b16 %v736
  %v3008 = vunpack.c.l.b16 %v737
  %v3009 = vunpack.c.l.b16 %v738
  %v3010 = vunpack.c.h.b16 %v738
  %v3011 = vunpack.c.l.b16 %v739
  %v3012 = vunpack.c.h.b16 %v739
  %v3013 = vunpack.c.l.b16 %v740
  %v3014 = vunpack.c.l.b16 %v741
  %v3015 = vunpack.c.h.b16 %v741
  %v3016 = vunpack.c.l.b16 %v742
  %v3017 = vunpack.c.h.b16 %v742
  %v3018 = vunpack.c.l.b16 %v743
  %v3019 = vunpack.c.l.b16 %v744
  %v3020 = vunpack.c.h.b16 %v744
  %v3021 = vunpack.c.l.b16 %v745
  %v3022 = vunpack.c.h.b16 %v745
  %v3023 = vunpack.c.l.b16 %v746
  %v3024 = vunpack.c.l.b16 %v747
  %v3025 = vunpack.c.h.b16 %v747
  %v3026 = vunpack.c.l.b16 %v748
  %v3027 = vunpack.c.h.b16 %v748
  %v3028 = vunpack.c.l.b16 %v749
  %v3029 = vunpack.c.l.b16 %v750
  %v3030 = vunpack.c.h.b16 %v750
  %v3031 = vunpack.c.l.b16 %v751
  %v3032 = vunpack.c.h.b16 %v751
  %v3033 = vunpack.c.l.b16 %v752
  %v3034 = vunpack.c.l.b16 %v753
  %v3035 = vunpack.c.h.b16 %v753
  %v3036 = vunpack.c.l.b16 %v754
  %v3037 = vunpack.c.h.b16 %v754
  %v3038 = vunpack.c.l.b16 %v755
  %v3039 = vunpack.c.l.b16 %v756
  %v3040 = vunpack.c.h.b16 %v756
  %v3041 = vunpack.c.l.b16 %v757
  %v3042 = vunpack.c.h.b16 %v757
  %v3043 = vunpack.c.l.b16 %v758
  %v3044 = vunpack.c.l.b16 %v759
  %v3045 = vunpack.c.h.b16 %v759
  %v3046 = vunpack.c.l.b16 %v760
  %v3047 = vunpack.c.h.b16 %v760
  %v3048 = vunpack.c.l.b16 %v761
  %v3049 = vunpack.c.l.b16 %v762
  %v3050 = vunpack.c.h.b16 %v762
  %v3051 = vunpack.c.l.b16 %v763
  %v3052 = vunpack.c.h.b16 %v763
  %v3053 = vunpack.c.l.b16 %v764
  %v3054 = vunpack.c.l.b16 %v765
  %v3055 = vunpack.c.h.b16 %v765
  %v3056 = vunpack.c.l.b16 %v766
  %v3057 = vunpack.c.h.b16 %v766
  %v3058 = vunpack.c.l.b16 %v767
  %v3059 = vunpack.c.l.b16 %v768
  %v3060 = vunpack.c.h.b16 %v768
  %v3061 = vunpack.c.l.b16 %v769
  %v3062 = vunpack.c.h.b16 %v769
  %v3063 = vunpack.c.l.b16 %v770
  %v3064 = vunpack.c.l.b16 %v771
  %v3065 = vunpack.c.h.b16 %v771
  %v3066 = vunpack.c.l.b16 %v772
  %v3067 = vunpack.c.h.b16 %v772
  %v3068 = vunpack.c.l.b16 %v773
  %v3069 = vunpack.c.l.b16 %v774
  %v3070 = vunpack.c.h.b16 %v774
  %v3071 = vunpack.c.l.b16 %v775
  %v3072 = vunpack.c.h.b16 %v775
  %v3073 = vunpack.c.l.b16 %v776
  %v3074 = vunpack.c.l.b16 %v777
  %v3075 = vunpack.c.h.b16 %v777
  %v3076 = vunpack.c.l.b16 %v778
  %v3077 = vunpack.c.h.b16 %v778
  %v3078 = vunpack.c.l.b16 %v779
  %v3079 = vunpack.c.l.b16 %v780
  %v3080 = vunpack.c.h.b16 %v780
  %v3081 = vunpack.c.l.b16 %v781
  %v3082 = vunpack.c.h.b16 %v781
  %v3083 = vunpack.c.l.b16 %v782
  %v3084 = vunpack.c.l.b16 %v783
  %v3085 = vunpack.c.h.b16 %v783
  %v3086 = vunpack.c.l.b16 %v784
  %v3087 = vunpack.c.h.b16 %v784
  %v3088 = vunpack.c.l.b16 %v785
  %v3089 = vunpack.c.l.b16 %v786
  %v3090 = vunpack.c.h.b16 %v786
  %v3091 = vunpack.c.l.b16 %v787
  %v3092 = vunpack.c.h.b16 %v787
  %v3093 = vunpack.c.l.b16 %v788
  %v3094 = vunpack.c.l.b16 %v789
  %v3095 = vunpack.c.h.b16 %v789
  %v3096 = vunpack.c.l.b16 %v790
  %v3097 = vunpack.c.h.b16 %v790
  %v3098 = vunpack.c.l.b16 %v791
  %v3099 = vunpack.c.l.b16 %v792
  %v3100 = vunpack.c.h.b16 %v792
  %v3101 = vunpack.c.l.b16 %v793
  %v3102 = vunpack.c.h.b16 %v793
  %v3103 = vunpack.c.l.b16 %v794
  %v3104 = vunpack.c.l.b16 %v795
  %v3105 = vunpack.c.h.b16 %v795
  %v3106 = vunpack.c.l.b16 %v796
  %v3107 = vunpack.c.h.b16 %v796
  %v3108 = vunpack.c.l.b16 %v797
  %v3109 = vunpack.c.l.b16 %v798
  %v3110 = vunpack.c.h.b16 %v798
  %v3111 = vunpack.c.l.b16 %v799
  %v3112 = vunpack.c.h.b16 %v799
  %v3113 = vunpack.c.l.b16 %v800
  %v3114 = vunpack.c.l.b16 %v801
  %v3115 = vunpack.c.h.b16 %v801
  %v3116 = vunpack.c.l.b16 %v802
  %v3117 = vunpack.c.h.b16 %v802
  %v3118 = vunpack.c.l.b16 %v803
  %v3119 = vunpack.c.l.b16 %v804
  %v3120 = vunpack.c.h.b16 %v804
  %v3121 = vunpack.c.l.b16 %v805
  %v3122 = vunpack.c.h.b16 %v805
  %v3123 = vunpack.c.l.b16 %v806
  %v3124 = vunpack.c.l.b16 %v807
  %v3125 = vunpack.c.h.b16 %v807
  %v3126 = vunpack.c.l.b16 %v808
  %v3127 = vunpack.c.h.b16 %v808
  %v3128 = vunpack.c.l.b16 %v809
  %v3129 = vunpack.c.l.b16 %v810
  %v3130 = vunpack.c.h.b16 %v810
  %v3131 = vunpack.c.l.b16 %v811
  %v3132 = vunpack.c.h.b16 %v811
  %v3133 = vunpack.c.l.b16 %v812
  %v3134 = vunpack.c.l.b16 %v813
  %v3135 = vunpack.c.h.b16 %v813
  %v3136 = vunpack.c.l.b16 %v814
  %v3137 = vunpack.c.h.b16 %v814
  %v3138 = vunpack.c.l.b16 %v815
  %v3139 = vunpack.c.l.b16 %v816
  %v3140 = vunpack.c.h.b16 %v816
  %v3141 = vunpack.c.l.b16 %v817
  %v3142 = vunpack.c.h.b16 %v817
  %v3143 = vunpack.c.l.b16 %v818
  %v3144 = vunpack.c.l.b16 %v819
  %v3145 = vunpack.c.h.b16 %v819
  %v3146 = vunpack.c.l.b16 %v820
  %v3147 = vunpack.c.h.b16 %v820
  %v3148 = vunpack.c.l.b16 %v821
  %v3149 = vunpack.c.l.b16 %v822
  %v3150 = vunpack.c.h.b16 %v822
  %v3151 = vunpack.c.l.b16 %v823
  %v3152 = vunpack.c.h.b16 %v823
  %v3153 = vunpack.c.l.b16 %v824
  %v3154 = vunpack.c.l.b16 %v825
  %v3155 = vunpack.c.h.b16 %v825
  %v3156 = vunpack.c.l.b16 %v826
  %v3157 = vunpack.c.h.b16 %v826
  %v3158 = vunpack.c.l.b16 %v827
  %v3159 = vunpack.c.l.b16 %v828
  %v3160 = vunpack.c.h.b16 %v828
  %v3161 = vunpack.c.l.b16 %v829
  %v3162 = vunpack.c.h.b16 %v829
  %v3163 = vunpack.c.l.b16 %v830
  %v3164 = vunpack.c.l.b16 %v831
  %v3165 = vunpack.c.h.b16 %v831
  %v3166 = vunpack.c.l.b16 %v832
  %v3167 = vunpack.c.h.b16 %v832
  %v3168 = vunpack.c.l.b16 %v833
  %v3169 = vunpack.c.l.b16 %v834
  %v3170 = vunpack.c.h.b16 %v834
  %v3171 = vunpack.c.l.b16 %v835
  %v3172 = vunpack.c.h.b16 %v835
  %v3173 = vunpack.c.l.b16 %v836
  %v3174 = vunpack.c.l.b16 %v837
  %v3175 = vunpack.c.h.b16 %v837
  %v3176 = vunpack.c.l.b16 %v838
  %v3177 = vunpack.c.h.b16 %v838
  %v3178 = vunpack.c.l.b16 %v839
  %v3179 = vunpack.c.l.b16 %v840
  %v3180 = vunpack.c.h.b16 %v840
  %v3181 = vunpack.c.l.b16 %v841
  %v3182 = vunpack.c.h.b16 %v841
  %v3183 = vunpack.c.l.b16 %v842
  %v3184 = vunpack.c.l.b16 %v843
  %v3185 = vunpack.c.h.b16 %v843
  %v3186 = vunpack.c.l.b16 %v844
  %v3187 = vunpack.c.h.b16 %v844
  %v3188 = vunpack.c.l.b16 %v845
  %v3189 = vunpack.c.l.b16 %v846
  %v3190 = vunpack.c.h.b16 %v846
  %v3191 = vunpack.c.l.b16 %v847
  %v3192 = vunpack.c.h.b16 %v847
  %v3193 = vunpack.c.l.b16 %v848
  %v3194 = vunpack.c.l.b16 %v849
  %v3195 = vunpack.c.h.b16 %v849
  %v3196 = vunpack.c.l.b16 %v850
  %v3197 = vunpack.c.h.b16 %v850
  %v3198 = vunpack.c.l.b16 %v851
  %v3199 = vunpack.c.l.b16 %v852
  %v3200 = vunpack.c.h.b16 %v852
  %v3201 = vunpack.c.l.b16 %v853
  %v3202 = vunpack.c.h.b16 %v853
  %v3203 = vunpack.c.l.b16 %v854
  %v3204 = vunpack.c.l.b16 %v855
  %v3205 = vunpack.c.h.b16 %v855
  %v3206 = vunpack.c.l.b16 %v856
  %v3207 = vunpack.c.h.b16 %v856
  %v3208 = vunpack.c.l.b16 %v857
  %v3209 = vunpack.c.l.b16 %v858
  %v3210 = vunpack.c.h.b16 %v858
  %v3211 = vunpack.c.l.b16 %v859
  %v3212 = vunpack.c.h.b16 %v859
  %v3213 = vunpack.c.l.b16 %v860
  %v3214 = vunpack.c.l.b16 %v861
  %v3215 = vunpack.c.h.b16 %v861
  %v3216 = vunpack.c.l.b16 %v862
  %v3217 = vunpack.c.h.b16 %v862
  %v3218 = vunpack.c.l.b16 %v863
  %v3219 = vunpack.c.l.b16 %v864
  %v3220 = vunpack.c.h.b16 %v864
  %v3221 = vunpack.c.l.b16 %v865
  %v3222 = vunpack.c.h.b16 %v865
  %v3223 = vunpack.c.l.b16 %v866
  %v3224 = vunpack.c.l.b16 %v867
  %v3225 = vunpack.c.h.b16 %v867
  %v3226 = vunpack.c.l.b16 %v868
  %v3227 = vunpack.c.h.b16 %v868
  %v3228 = vunpack.c.l.b16 %v869
  %v3229 = vunpack.c.l.b16 %v870
  %v3230 = vunpack.c.h.b16 %v870
  %v3231 = vunpack.c.l.b16 %v871
  %v3232 = vunpack.c.h.b16 %v871
  %v3233 = vunpack.c.l.b16 %v872
  %v3234 = vunpack.c.l.b16 %v873
  %v3235 = vunpack.c.h.b16 %v873
  %v3236 = vunpack.c.l.b16 %v874
  %v3237 = vunpack.c.h.b16 %v874
  %v3238 = vunpack.c.l.b16 %v875
  %v3239 = vunpack.c.l.b16 %v876
  %v3240 = vunpack.c.h.b16 %v876
  %v3241 = vunpack.c.l.b16 %v877
  %v3242 = vunpack.c.h.b16 %v877
  %v3243 = vunpack.c.l.b16 %v878
  %v3244 = vunpack.c.l.b16 %v879
  %v3245 = vunpack.c.h.b16 %v879
  %v3246 = vunpack.c.l.b16 %v880
  %v3247 = vunpack.c.h.b16 %v880
  %v3248 = vunpack.c.l.b16 %v881
  %v3249 = vunpack.c.l.b16 %v882
  %v3250 = vunpack.c.h.b16 %v882
  %v3251 = vunpack.c.l.b16 %v883
  %v3252 = vunpack.c.h.b16 %v883
  %v3253 = vunpack.c.l.b16 %v884
  %v3254 = vunpack.c.l.b16 %v885
  %v3255 = vunpack.c.h.b16 %v885
  %v3256 = vunpack.c.l.b16 %v886
  %v3257 = vunpack.c.h.b16 %v886
  %v3258 = vunpack.c.l.b16 %v887
  %v3259 = vunpack.c.l.b16 %v888
  %v3260 = vunpack.c.h.b16 %v888
  %v3261 = vunpack.c.l.b16 %v889
  %v3262 = vunpack.c.h.b16 %v889
  %v3263 = vunpack.c.l.b16 %v890
  %v3264 = vunpack.c.l.b16 %v891
  %v3265 = vunpack.c.h.b16 %v891
  %v3266 = vunpack.c.l.b16 %v892
  %v3267 = vunpack.c.h.b16 %v892
  %v3268 = vunpack.c.l.b16 %v893
  %v3269 = vunpack.c.l.b16 %v894
  %v3270 = vunpack.c.h.b16 %v894
  %v3271 = vunpack.c.l.b16 %v895
  %v3272 = vunpack.c.h.b16 %v895
  %v3273 = vunpack.c.l.b16 %v896
  %v3274 = vunpack.c.l.b16 %v897
  %v3275 = vunpack.c.h.b16 %v897
  %v3276 = vunpack.c.l.b16 %v898
  %v3277 = vunpack.c.h.b16 %v898
  %v3278 = vunpack.c.l.b16 %v899
  %v3279 = vpack.c.b16 %v1844, %v1839
  %v3280 = vpack.c.b16 %v1845, %v1840
  %v3281 = vpack.c.b16 %v1846, %v1841
  %v3282 = vpack.c.b16 %v1847, %v1842
  %v3283 = vpack.c.b16 %v1848, %v1843
  %v3284 = vpack.c.b16 %v1854, %v1849
  %v3285 = vpack.c.b16 %v1855, %v1850
  %v3286 = vpack.c.b16 %v1856, %v1851
  %v3287 = vpack.c.b16 %v1857, %v1852
  %v3288 = vpack.c.b16 %v1858, %v1853
  %v3289 = vpack.c.b16 %v1864, %v1859
  %v3290 = vpack.c.b16 %v1865, %v1860
  %v3291 = vpack.c.b16 %v1866, %v1861
  %v3292 = vpack.c.b16 %v1867, %v1862
  %v3293 = vpack.c.b16 %v1868, %v1863
  %v3294 = vpack.c.b16 %v1874, %v1869
  %v3295 = vpack.c.b16 %v1875, %v1870
  %v3296 = vpack.c.b16 %v1876, %v1871
  %v3297 = vpack.c.b16 %v1877, %v1872
  %v3298 = vpack.c.b16 %v1878, %v1873
  %v3299 = vpack.c.b16 %v1884, %v1879
  %v3300 = vpack.c.b16 %v1885, %v1880
  %v3301 = vpack.c.b16 %v1886, %v1881
  %v3302 = vpack.c.b16 %v1887, %v1882
  %v3303 = vpack.c.b16 %v1888, %v1883
  %v3304 = vpack.c.b16 %v1894, %v1889
  %v3305 = vpack.c.b16 %v1895, %v1890
  %v3306 = vpack.c.b16 %v1896, %v1891
  %v3307 = vpack.c.b16 %v1897, %v1892
  %v3308 = vpack.c.b16 %v1898, %v1893
  %v3309 = vpack.c.b16 %v1904, %v1899
  %v3310 = vpack.c.b16 %v1905, %v1900
  %v3311 = vpack.c.b16 %v1906, %v1901
  %v3312 = vpack.c.b16 %v1907, %v1902
  %v3313 = vpack.c.b16 %v1908, %v1903
  %v3314 = vpack.c.b16 %v1914, %v1909
  %v3315 = vpack.c.b16 %v1915, %v1910
  %v3316 = vpack.c.b16 %v1916, %v1911
  %v3317 = vpack.c.b16 %v1917, %v1912
  %v3318 = vpack.c.b16 %v1918, %v1913
  %v3319 = vpack.c.b16 %v1924, %v1919
  %v3320 = vpack.c.b16 %v1925, %v1920
  %v3321 = vpack.c.b16 %v1926, %v1921
  %v3322 = vpack.c.b16 %v1927, %v1922
  %v3323 = vpack.c.b16 %v1928, %v1923
  %v3324 = vpack.c.b16 %v1934, %v1929
  %v3325 = vpack.c.b16 %v1935, %v1930
  %v3326 = vpack.c.b16 %v1936, %v1931
  %v3327 = vpack.c.b16 %v1937, %v1932
  %v3328 = vpack.c.b16 %v1938, %v1933
  %v3329 = vpack.c.b16 %v1944, %v1939
  %v3330 = vpack.c.b16 %v1945, %v1940
  %v3331 = vpack.c.b16 %v1946, %v1941
  %v3332 = vpack.c.b16 %v1947, %v1942
  %v3333 = vpack.c.b16 %v1948, %v1943
  %v3334 = vpack.c.b16 %v1954, %v1949
  %v3335 = vpack.c.b16 %v1955, %v1950
  %v3336 = vpack.c.b16 %v1956, %v1951
  %v3337 = vpack.c.b16 %v1957, %v1952
  %v3338 = vpack.c.b16 %v1958, %v1953
  %v3339 = vpack.c.b16 %v1964, %v1959
  %v3340 = vpack.c.b16 %v1965, %v1960
  %v3341 = vpack.c.b16 %v1966, %v1961
  %v3342 = vpack.c.b16 %v1967, %v1962
  %v3343 = vpack.c.b16 %v1968, %v1963
  %v3344 = vpack.c.b16 %v1974, %v1969
  %v3345 = vpack.c.b16 %v1975, %v1970
  %v3346 = vpack.c.b16 %v1976, %v1971
  %v3347 = vpack.c.b16 %v1977, %v1972
  %v3348 = vpack.c.b16 %v1978, %v1973
  %v3349 = vpack.c.b16 %v1984, %v1979
  %v3350 = vpack.c.b16 %v1985, %v1980
  %v3351 = vpack.c.b16 %v1986, %v1981
  %v3352 = vpack.c.b16 %v1987, %v1982
  %v3353 = vpack.c.b16 %v1988, %v1983
  %v3354 = vpack.c.b16 %v1994, %v1989
  %v3355 = vpack.c.b16 %v1995, %v1990
  %v3356 = vpack.c.b16 %v1996, %v1991
  %v3357 = vpack.c.b16 %v1997, %v1992
  %v3358 = vpack.c.b16 %v1998, %v1993
  %v3359 = vpack.c.b16 %v2004, %v1999
  %v3360 = vpack.c.b16 %v2005, %v2000
  %v3361 = vpack.c.b16 %v2006, %v2001
  %v3362 = vpack.c.b16 %v2007, %v2002
  %v3363 = vpack.c.b16 %v2008, %v2003
  %v3364 = vpack.c.b16 %v2014, %v2009
  %v3365 = vpack.c.b16 %v2015, %v2010
  %v3366 = vpack.c.b16 %v2016, %v2011
  %v3367 = vpack.c.b16 %v2017, %v2012
  %v3368 = vpack.c.b16 %v2018, %v2013
  %v3369 = vpack.c.b16 %v2024, %v2019
  %v3370 = vpack.c.b16 %v2025, %v2020
  %v3371 = vpack.c.b16 %v2026, %v2021
  %v3372 = vpack.c.b16 %v2027, %v2022
  %v3373 = vpack.c.b16 %v2028, %v2023
  %v3374 = vpack.c.b16 %v2034, %v2029
  %v3375 = vpack.c.b16 %v2035, %v2030
  %v3376 = vpack.c.b16 %v2036, %v2031
  %v3377 = vpack.c.b16 %v2037, %v2032
  %v3378 = vpack.c.b16 %v2038, %v2033
  %v3379 = vpack.c.b16 %v2044, %v2039
  %v3380 = vpack.c.b16 %v2045, %v2040
  %v3381 = vpack.c.b16 %v2046, %v2041
  %v3382 = vpack.c.b16 %v2047, %v2042
  %v3383 = vpack.c.b16 %v2048, %v2043
  %v3384 = vpack.c.b16 %v2054, %v2049
  %v3385 = vpack.c.b16 %v2055, %v2050
  %v3386 = vpack.c.b16 %v2056, %v2051
  %v3387 = vpack.c.b16 %v2057, %v2052
  %v3388 = vpack.c.b16 %v2058, %v2053
  %v3389 = vpack.c.b16 %v2064, %v2059
  %v3390 = vpack.c.b16 %v2065, %v2060
  %v3391 = vpack.c.b16 %v2066, %v2061
  %v3392 = vpack.c.b16 %v2067, %v2062
  %v3393 = vpack.c.b16 %v2068, %v2063
  %v3394 = vpack.c.b16 %v2074, %v2069
  %v3395 = vpack.c.b16 %v2075, %v2070
  %v3396 = vpack.c.b16 %v2076, %v2071
  %v3397 = vpack.c.b16 %v2077, %v2072
  %v3398 = vpack.c.b16 %v2078, %v2073
  %v3399 = vpack.c.b16 %v2084, %v2079
  %v3400 = vpack.c.b16 %v2085, %v2080
  %v3401 = vpack.c.b16 %v2086, %v2081
  %v3402 = vpack.c.b16 %v2087, %v2082
  %v3403 = vpack.c.b16 %v2088, %v2083
  %v3404 = vpack.c.b16 %v2094, %v2089
  %v3405 = vpack.c.b16 %v2095, %v2090
  %v3406 = vpack.c.b16 %v2096, %v2091
  %v3407 = vpack.c.b16 %v2097, %v2092
  %v3408 = vpack.c.b16 %v2098, %v2093
  %v3409 = vpack.c.b16 %v2104, %v2099
  %v3410 = vpack.c.b16 %v2105, %v2100
  %v3411 = vpack.c.b16 %v2106, %v2101
  %v3412 = vpack.c.b16 %v2107, %v2102
  %v3413 = vpack.c.b16 %v2108, %v2103
  %v3414 = vpack.c.b16 %v2114, %v2109
  %v3415 = vpack.c.b16 %v2115, %v2110
  %v3416 = vpack.c.b16 %v2116, %v2111
  %v3417 = vpack.c.b16 %v2117, %v2112
  %v3418 = vpack.c.b16 %v2118, %v2113
  %v3419 = vpack.c.b16 %v2124, %v2119
  %v3420 = vpack.c.b16 %v2125, %v2120
  %v3421 = vpack.c.b16 %v2126, %v2121
  %v3422 = vpack.c.b16 %v2127, %v2122
  %v3423 = vpack.c.b16 %v2128, %v2123
  %v3424 = vpack.c.b16 %v2134, %v2129
  %v3425 = vpack.c.b16 %v2135, %v2130
  %v3426 = vpack.c.b16 %v2136, %v2131
  %v3427 = vpack.c.b16 %v2137, %v2132
  %v3428 = vpack.c.b16 %v2138, %v2133
  %v3429 = vpack.c.b16 %v2144, %v2139
  %v3430 = vpack.c.b16 %v2145, %v2140
  %v3431 = vpack.c.b16 %v2146, %v2141
  %v3432 = vpack.c.b16 %v2147, %v2142
  %v3433 = vpack.c.b16 %v2148, %v2143
  %v3434 = vpack.c.b16 %v2154, %v2149
  %v3435 = vpack.c.b16 %v2155, %v2150
  %v3436 = vpack.c.b16 %v2156, %v2151
  %v3437 = vpack.c.b16 %v2157, %v2152
  %v3438 = vpack.c.b16 %v2158, %v2153
  %v3439 = vpack.c.b16 %v2164, %v2159
  %v3440 = vpack.c.b16 %v2165, %v2160
  %v3441 = vpack.c.b16 %v2166, %v2161
  %v3442 = vpack.c.b16 %v2167, %v2162
  %v3443 = vpack.c.b16 %v2168, %v2163
  %v3444 = vpack.c.b16 %v2174, %v2169
  %v3445 = vpack.c.b16 %v2175, %v2170
  %v3446 = vpack.c.b16 %v2176, %v2171
  %v3447 = vpack.c.b16 %v2177, %v2172
  %v3448 = vpack.c.b16 %v2178, %v2173
  %v3449 = vpack.c.b16 %v2184, %v2179
  %v3450 = vpack.c.b16 %v2185, %v2180
  %v3451 = vpack.c.b16 %v2186, %v2181
  %v3452 = vpack.c.b16 %v2187, %v2182
  %v3453 = vpack.c.b16 %v2188, %v2183
  %v3454 = vpack.c.b16 %v2194, %v2189
  %v3455 = vpack.c.b16 %v2195, %v2190
  %v3456 = vpack.c.b16 %v2196, %v2191
  %v3457 = vpack.c.b16 %v2197, %v2192
  %v3458 = vpack.c.b16 %v2198, %v2193
  %v3459 = vpack.c.b16 %v2204, %v2199
  %v3460 = vpack.c.b16 %v2205, %v2200
  %v3461 = vpack.c.b16 %v2206, %v2201
  %v3462 = vpack.c.b16 %v2207, %v2202
  %v3463 = vpack.c.b16 %v2208, %v2203
  %v3464 = vpack.c.b16 %v2214, %v2209
  %v3465 = vpack.c.b16 %v2215, %v2210
  %v3466 = vpack.c.b16 %v2216, %v2211
  %v3467 = vpack.c.b16 %v2217, %v2212
  %v3468 = vpack.c.b16 %v2218, %v2213
  %v3469 = vpack.c.b16 %v2224, %v2219
  %v3470 = vpack.c.b16 %v2225, %v2220
  %v3471 = vpack.c.b16 %v2226, %v2221
  %v3472 = vpack.c.b16 %v2227, %v2222
  %v3473 = vpack.c.b16 %v2228, %v2223
  %v3474 = vpack.c.b16 %v2234, %v2229
  %v3475 = vpack.c.b16 %v2235, %v2230
  %v3476 = vpack.c.b16 %v2236, %v2231
  %v3477 = vpack.c.b16 %v2237, %v2232
  %v3478 = vpack.c.b16 %v2238, %v2233
  %v3479 = vpack.c.b16 %v2244, %v2239
  %v3480 = vpack.c.b16 %v2245, %v2240
  %v3481 = vpack.c.b16 %v2246, %v2241
  %v3482 = vpack.c.b16 %v2247, %v2242
  %v3483 = vpack.c.b16 %v2248, %v2243
  %v3484 = vpack.c.b16 %v2254, %v2249
  %v3485 = vpack.c.b16 %v2255, %v2250
  %v3486 = vpack.c.b16 %v2256, %v2251
  %v3487 = vpack.c.b16 %v2257, %v2252
  %v3488 = vpack.c.b16 %v2258, %v2253
  %v3489 = vpack.c.b16 %v2264, %v2259
  %v3490 = vpack.c.b16 %v2265, %v2260
  %v3491 = vpack.c.b16 %v2266, %v2261
  %v3492 = vpack.c.b16 %v2267, %v2262
  %v3493 = vpack.c.b16 %v2268, %v2263
  %v3494 = vpack.c.b16 %v2274, %v2269
  %v3495 = vpack.c.b16 %v2275, %v2270
  %v3496 = vpack.c.b16 %v2276, %v2271
  %v3497 = vpack.c.b16 %v2277, %v2272
  %v3498 = vpack.c.b16 %v2278, %v2273
  %v3499 = vpack.c.b16 %v2284, %v2279
  %v3500 = vpack.c.b16 %v2285, %v2280
  %v3501 = vpack.c.b16 %v2286, %v2281
  %v3502 = vpack.c.b16 %v2287, %v2282
  %v3503 = vpack.c.b16 %v2288, %v2283
  %v3504 = vpack.c.b16 %v2294, %v2289
  %v3505 = vpack.c.b16 %v2295, %v2290
  %v3506 = vpack.c.b16 %v2296, %v2291
  %v3507 = vpack.c.b16 %v2297, %v2292
  %v3508 = vpack.c.b16 %v2298, %v2293
  %v3509 = vpack.c.b16 %v2304, %v2299
  %v3510 = vpack.c.b16 %v2305, %v2300
  %v3511 = vpack.c.b16 %v2306, %v2301
  %v3512 = vpack.c.b16 %v2307, %v2302
  %v3513 = vpack.c.b16 %v2308, %v2303
  %v3514 = vpack.c.b16 %v2314, %v2309
  %v3515 = vpack.c.b16 %v2315, %v2310
  %v3516 = vpack.c.b16 %v2316, %v2311
  %v3517 = vpack.c.b16 %v2317, %v2312
  %v3518 = vpack.c.b16 %v2318, %v2313
  %v3519 = vpack.c.b16 %v2324, %v2319
  %v3520 = vpack.c.b16 %v2325, %v2320
  %v3521 = vpack.c.b16 %v2326, %v2321
  %v3522 = vpack.c.b16 %v2327, %v2322
  %v3523 = vpack.c.b16 %v2328, %v2323
  %v3524 = vpack.c.b16 %v2334, %v2329
  %v3525 = vpack.c.b16 %v2335, %v2330
  %v3526 = vpack.c.b16 %v2336, %v2331
  %v3527 = vpack.c.b16 %v2337, %v2332
  %v3528 = vpack.c.b16 %v2338, %v2333
  %v3529 = vpack.c.b16 %v2344, %v2339
  %v3530 = vpack.c.b16 %v2345, %v2340
  %v3531 = vpack.c.b16 %v2346, %v2341
  %v3532 = vpack.c.b16 %v2347, %v2342
  %v3533 = vpack.c.b16 %v2348, %v2343
  %v3534 = vpack.c.b16 %v2354, %v2349
  %v3535 = vpack.c.b16 %v2355, %v2350
  %v3536 = vpack.c.b16 %v2356, %v2351
  %v3537 = vpack.c.b16 %v2357, %v2352
  %v3538 = vpack.c.b16 %v2358, %v2353
  %v3539 = vpack.c.b16 %v2364, %v2359
  %v3540 = vpack.c.b16 %v2365, %v2360
  %v3541 = vpack.c.b16 %v2366, %v2361
  %v3542 = vpack.c.b16 %v2367, %v2362
  %v3543 = vpack.c.b16 %v2368, %v2363
  %v3544 = vpack.c.b16 %v2374, %v2369
  %v3545 = vpack.c.b16 %v2375, %v2370
  %v3546 = vpack.c.b16 %v2376, %v2371
  %v3547 = vpack.c.b16 %v2377, %v2372
  %v3548 = vpack.c.b16 %v2378, %v2373
  %v3549 = vpack.c.b16 %v2384, %v2379
  %v3550 = vpack.c.b16 %v2385, %v2380
  %v3551 = vpack.c.b16 %v2386, %v2381
  %v3552 = vpack.c.b16 %v2387, %v2382
  %v3553 = vpack.c.b16 %v2388, %v2383
  %v3554 = vpack.c.b16 %v2394, %v2389
  %v3555 = vpack.c.b16 %v2395, %v2390
  %v3556 = vpack.c.b16 %v2396, %v2391
  %v3557 = vpack.c.b16 %v2397, %v2392
  %v3558 = vpack.c.b16 %v2398, %v2393
  %v3559 = vpack.c.b16 %v2404, %v2399
  %v3560 = vpack.c.b16 %v2405, %v2400
  %v3561 = vpack.c.b16 %v2406, %v2401
  %v3562 = vpack.c.b16 %v2407, %v2402
  %v3563 = vpack.c.b16 %v2408, %v2403
  %v3564 = vpack.c.b16 %v2414, %v2409
  %v3565 = vpack.c.b16 %v2415, %v2410
  %v3566 = vpack.c.b16 %v2416, %v2411
  %v3567 = vpack.c.b16 %v2417, %v2412
  %v3568 = vpack.c.b16 %v2418, %v2413
  %v3569 = vpack.c.b16 %v2424, %v2419
  %v3570 = vpack.c.b16 %v2425, %v2420
  %v3571 = vpack.c.b16 %v2426, %v2421
  %v3572 = vpack.c.b16 %v2427, %v2422
  %v3573 = vpack.c.b16 %v2428, %v2423
  %v3574 = vpack.c.b16 %v2434, %v2429
  %v3575 = vpack.c.b16 %v2435, %v2430
  %v3576 = vpack.c.b16 %v2436, %v2431
  %v3577 = vpack.c.b16 %v2437, %v2432
  %v3578 = vpack.c.b16 %v2438, %v2433
  %v3579 = vpack.c.b16 %v2444, %v2439
  %v3580 = vpack.c.b16 %v2445, %v2440
  %v3581 = vpack.c.b16 %v2446, %v2441
  %v3582 = vpack.c.b16 %v2447, %v2442
  %v3583 = vpack.c.b16 %v2448, %v2443
  %v3584 = vpack.c.b16 %v2454, %v2449
  %v3585 = vpack.c.b16 %v2455, %v2450
  %v3586 = vpack.c.b16 %v2456, %v2451
  %v3587 = vpack.c.b16 %v2457, %v2452
  %v3588 = vpack.c.b16 %v2458, %v2453
  %v3589 = vpack.c.b16 %v2464, %v2459
  %v3590 = vpack.c.b16 %v2465, %v2460
  %v3591 = vpack.c.b16 %v2466, %v2461
  %v3592 = vpack.c.b16 %v2467, %v2462
  %v3593 = vpack.c.b16 %v2468, %v2463
  %v3594 = vpack.c.b16 %v2474, %v2469
  %v3595 = vpack.c.b16 %v2475, %v2470
  %v3596 = vpack.c.b16 %v2476, %v2471
  %v3597 = vpack.c.b16 %v2477, %v2472
  %v3598 = vpack.c.b16 %v2478, %v2473
  %v3599 = vpack.c.b16 %v2484, %v2479
  %v3600 = vpack.c.b16 %v2485, %v2480
  %v3601 = vpack.c.b16 %v2486, %v2481
  %v3602 = vpack.c.b16 %v2487, %v2482
  %v3603 = vpack.c.b16 %v2488, %v2483
  %v3604 = vpack.c.b16 %v2494, %v2489
  %v3605 = vpack.c.b16 %v2495, %v2490
  %v3606 = vpack.c.b16 %v2496, %v2491
  %v3607 = vpack.c.b16 %v2497, %v2492
  %v3608 = vpack.c.b16 %v2498, %v2493
  %v3609 = vpack.c.b16 %v2504, %v2499
  %v3610 = vpack.c.b16 %v2505, %v2500
  %v3611 = vpack.c.b16 %v2506, %v2501
  %v3612 = vpack.c.b16 %v2507, %v2502
  %v3613 = vpack.c.b16 %v2508, %v2503
  %v3614 = vpack.c.b16 %v2514, %v2509
  %v3615 = vpack.c.b16 %v2515, %v2510
  %v3616 = vpack.c.b16 %v2516, %v2511
  %v3617 = vpack.c.b16 %v2517, %v2512
  %v3618 = vpack.c.b16 %v2518, %v2513
  %v3619 = vpack.c.b16 %v2524, %v2519
  %v3620 = vpack.c.b16 %v2525, %v2520
  %v3621 = vpack.c.b16 %v2526, %v2521
  %v3622 = vpack.c.b16 %v2527, %v2522
  %v3623 = vpack.c.b16 %v2528, %v2523
  %v3624 = vpack.c.b16 %v2534, %v2529
  %v3625 = vpack.c.b16 %v2535, %v2530
  %v3626 = vpack.c.b16 %v2536, %v2531
  %v3627 = vpack.c.b16 %v2537, %v2532
  %v3628 = vpack.c.b16 %v2538, %v2533
  %v3629 = vpack.c.b16 %v2544, %v2539
  %v3630 = vpack.c.b16 %v2545, %v2540
  %v3631 = vpack.c.b16 %v2546, %v2541
  %v3632 = vpack.c.b16 %v2547, %v2542
  %v3633 = vpack.c.b16 %v2548, %v2543
  %v3634 = vpack.c.b16 %v2554, %v2549
  %v3635 = vpack.c.b16 %v2555, %v2550
  %v3636 = vpack.c.b16 %v2556, %v2551
  %v3637 = vpack.c.b16 %v2557, %v2552
  %v3638 = vpack.c.b16 %v2558, %v2553
  %v3639 = vpack.c.b16 %v2564, %v2559
  %v3640 = vpack.c.b16 %v2565, %v2560
  %v3641 = vpack.c.b16 %v2566, %v2561
  %v3642 = vpack.c.b16 %v2567, %v2562
  %v3643 = vpack.c.b16 %v2568, %v2563
  %v3644 = vpack.c.b16 %v2574, %v2569
  %v3645 = vpack.c.b16 %v2575, %v2570
  %v3646 = vpack.c.b16 %v2576, %v2571
  %v3647 = vpack.c.b16 %v2577, %v2572
  %v3648 = vpack.c.b16 %v2578, %v2573
  %v3649 = vpack.c.b16 %v2584, %v2579
  %v3650 = vpack.c.b16 %v2585, %v2580
  %v3651 = vpack.c.b16 %v2586, %v2581
  %v3652 = vpack.c.b16 %v2587, %v2582
  %v3653 = vpack.c.b16 %v2588, %v2583
  %v3654 = vpack.c.b16 %v2594, %v2589
  %v3655 = vpack.c.b16 %v2595, %v2590
  %v3656 = vpack.c.b16 %v2596, %v2591
  %v3657 = vpack.c.b16 %v2597, %v2592
  %v3658 = vpack.c.b16 %v2598, %v2593
  %v3659 = vpack.c.b16 %v2604, %v2599
  %v3660 = vpack.c.b16 %v2605, %v2600
  %v3661 = vpack.c.b16 %v2606, %v2601
  %v3662 = vpack.c.b16 %v2607, %v2602
  %v3663 = vpack.c.b16 %v2608, %v2603
  %v3664 = vpack.c.b16 %v2614, %v2609
  %v3665 = vpack.c.b16 %v2615, %v2610
  %v3666 = vpack.c.b16 %v2616, %v2611
  %v3667 = vpack.c.b16 %v2617, %v2612
  %v3668 = vpack.c.b16 %v2618, %v2613
  %v3669 = vpack.c.b16 %v2624, %v2619
  %v3670 = vpack.c.b16 %v2625, %v2620
  %v3671 = vpack.c.b16 %v2626, %v2621
  %v3672 = vpack.c.b16 %v2627, %v2622
  %v3673 = vpack.c.b16 %v2628, %v2623
  %v3674 = vpack.c.b16 %v2634, %v2629
  %v3675 = vpack.c.b16 %v2635, %v2630
  %v3676 = vpack.c.b16 %v2636, %v2631
  %v3677 = vpack.c.b16 %v2637, %v2632
  %v3678 = vpack.c.b16 %v2638, %v2633
  %v3679 = vpack.c.b16 %v2644, %v2639
  %v3680 = vpack.c.b16 %v2645, %v2640
  %v3681 = vpack.c.b16 %v2646, %v2641
  %v3682 = vpack.c.b16 %v2647, %v2642
  %v3683 = vpack.c.b16 %v2648, %v2643
  %v3684 = vpack.c.b16 %v2654, %v2649
  %v3685 = vpack.c.b16 %v2655, %v2650
  %v3686 = vpack.c.b16 %v2656, %v2651
  %v3687 = vpack.c.b16 %v2657, %v2652
  %v3688 = vpack.c.b16 %v2658, %v2653
  %v3689 = vpack.c.b16 %v2664, %v2659
  %v3690 = vpack.c.b16 %v2665, %v2660
  %v3691 = vpack.c.b16 %v2666, %v2661
  %v3692 = vpack.c.b16 %v2667, %v2662
  %v3693 = vpack.c.b16 %v2668, %v2663
  %v3694 = vpack.c.b16 %v2674, %v2669
  %v3695 = vpack.c.b16 %v2675, %v2670
  %v3696 = vpack.c.b16 %v2676, %v2671
  %v3697 = vpack.c.b16 %v2677, %v2672
  %v3698 = vpack.c.b16 %v2678, %v2673
  %v3699 = vpack.c.b16 %v2684, %v2679
  %v3700 = vpack.c.b16 %v2685, %v2680
  %v3701 = vpack.c.b16 %v2686, %v2681
  %v3702 = vpack.c.b16 %v2687, %v2682
  %v3703 = vpack.c.b16 %v2688, %v2683
  %v3704 = vpack.c.b16 %v2694, %v2689
  %v3705 = vpack.c.b16 %v2695, %v2690
  %v3706 = vpack.c.b16 %v2696, %v2691
  %v3707 = vpack.c.b16 %v2697, %v2692
  %v3708 = vpack.c.b16 %v2698, %v2693
  %v3709 = vpack.c.b16 %v2704, %v2699
  %v3710 = vpack.c.b16 %v2705, %v2700
  %v3711 = vpack.c.b16 %v2706, %v2701
  %v3712 = vpack.c.b16 %v2707, %v2702
  %v3713 = vpack.c.b16 %v2708, %v2703
  %v3714 = vpack.c.b16 %v2714, %v2709
  %v3715 = vpack.c.b16 %v2715, %v2710
  %v3716 = vpack.c.b16 %v2716, %v2711
  %v3717 = vpack.c.b16 %v2717, %v2712
  %v3718 = vpack.c.b16 %v2718, %v2713
  %v3719 = vpack.c.b16 %v2724, %v2719
  %v3720 = vpack.c.b16 %v2725, %v2720
  %v3721 = vpack.c.b16 %v2726, %v2721
  %v3722 = vpack.c.b16 %v2727, %v2722
  %v3723 = vpack.c.b16 %v2728, %v2723
  %v3724 = vpack.c.b16 %v2734, %v2729
  %v3725 = vpack.c.b16 %v2735, %v2730
  %v3726 = vpack.c.b16 %v2736, %v2731
  %v3727 = vpack.c.b16 %v2737, %v2732
  %v3728 = vpack.c.b16 %v2738, %v2733
  %v3729 = vpack.c.b16 %v2744, %v2739
  %v3730 = vpack.c.b16 %v2745, %v2740
  %v3731 = vpack.c.b16 %v2746, %v2741
  %v3732 = vpack.c.b16 %v2747, %v2742
  %v3733 = vpack.c.b16 %v2748, %v2743
  %v3734 = vpack.c.b16 %v2754, %v2749
  %v3735 = vpack.c.b16 %v2755, %v2750
  %v3736 = vpack.c.b16 %v2756, %v2751
  %v3737 = vpack.c.b16 %v2757, %v2752
  %v3738 = vpack.c.b16 %v2758, %v2753
  %v3739 = vpack.c.b16 %v2764, %v2759
  %v3740 = vpack.c.b16 %v2765, %v2760
  %v3741 = vpack.c.b16 %v2766, %v2761
  %v3742 = vpack.c.b16 %v2767, %v2762
  %v3743 = vpack.c.b16 %v2768, %v2763
  %v3744 = vpack.c.b16 %v2774, %v2769
  %v3745 = vpack.c.b16 %v2775, %v2770
  %v3746 = vpack.c.b16 %v2776, %v2771
  %v3747 = vpack.c.b16 %v2777, %v2772
  %v3748 = vpack.c.b16 %v2778, %v2773
  %v3749 = vpack.c.b16 %v2784, %v2779
  %v3750 = vpack.c.b16 %v2785, %v2780
  %v3751 = vpack.c.b16 %v2786, %v2781
  %v3752 = vpack.c.b16 %v2787, %v2782
  %v3753 = vpack.c.b16 %v2788, %v2783
  %v3754 = vpack.c.b16 %v2794, %v2789
  %v3755 = vpack.c.b16 %v2795, %v2790
  %v3756 = vpack.c.b16 %v2796, %v2791
  %v3757 = vpack.c.b16 %v2797, %v2792
  %v3758 = vpack.c.b16 %v2798, %v2793
  %v3759 = vpack.c.b16 %v2804, %v2799
  %v3760 = vpack.c.b16 %v2805, %v2800
  %v3761 = vpack.c.b16 %v2806, %v2801
  %v3762 = vpack.c.b16 %v2807, %v2802
  %v3763 = vpack.c.b16 %v2808, %v2803
  %v3764 = vpack.c.b16 %v2814, %v2809
  %v3765 = vpack.c.b16 %v2815, %v2810
  %v3766 = vpack.c.b16 %v2816, %v2811
  %v3767 = vpack.c.b16 %v2817, %v2812
  %v3768 = vpack.c.b16 %v2818, %v2813
  %v3769 = vpack.c.b16 %v2824, %v2819
  %v3770 = vpack.c.b16 %v2825, %v2820
  %v3771 = vpack.c.b16 %v2826, %v2821
  %v3772 = vpack.c.b16 %v2827, %v2822
  %v3773 = vpack.c.b16 %v2828, %v2823
  %v3774 = vpack.c.b16 %v2834, %v2829
  %v3775 = vpack.c.b16 %v2835, %v2830
  %v3776 = vpack.c.b16 %v2836, %v2831
  %v3777 = vpack.c.b16 %v2837, %v2832
  %v3778 = vpack.c.b16 %v2838, %v2833
  %v3779 = vpack.c.b16 %v2844, %v2839
  %v3780 = vpack.c.b16 %v2845, %v2840
  %v3781 = vpack.c.b16 %v2846, %v2841
  %v3782 = vpack.c.b16 %v2847, %v2842
  %v3783 = vpack.c.b16 %v2848, %v2843
  %v3784 = vpack.c.b16 %v2854, %v2849
  %v3785 = vpack.c.b16 %v2855, %v2850
  %v3786 = vpack.c.b16 %v2856, %v2851
  %v3787 = vpack.c.b16 %v2857, %v2852
  %v3788 = vpack.c.b16 %v2858, %v2853
  %v3789 = vpack.c.b16 %v2864, %v2859
  %v3790 = vpack.c.b16 %v2865, %v2860
  %v3791 = vpack.c.b16 %v2866, %v2861
  %v3792 = vpack.c.b16 %v2867, %v2862
  %v3793 = vpack.c.b16 %v2868, %v2863
  %v3794 = vpack.c.b16 %v2874, %v2869
  %v3795 = vpack.c.b16 %v2875, %v2870
  %v3796 = vpack.c.b16 %v2876, %v2871
  %v3797 = vpack.c.b16 %v2877, %v2872
  %v3798 = vpack.c.b16 %v2878, %v2873
  %v3799 = vpack.c.b16 %v2884, %v2879
  %v3800 = vpack.c.b16 %v2885, %v2880
  %v3801 = vpack.c.b16 %v2886, %v2881
  %v3802 = vpack.c.b16 %v2887, %v2882
  %v3803 = vpack.c.b16 %v2888, %v2883
  %v3804 = vpack.c.b16 %v2894, %v2889
  %v3805 = vpack.c.b16 %v2895, %v2890
  %v3806 = vpack.c.b16 %v2896, %v2891
  %v3807 = vpack.c.b16 %v2897, %v2892
  %v3808 = vpack.c.b16 %v2898, %v2893
  %v3809 = vpack.c.b16 %v2904, %v2899
  %v3810 = vpack.c.b16 %v2905, %v2900
  %v3811 = vpack.c.b16 %v2906, %v2901
  %v3812 = vpack.c.b16 %v2907, %v2902
  %v3813 = vpack.c.b16 %v2908, %v2903
  %v3814 = vpack.c.b16 %v2914, %v2909
  %v3815 = vpack.c.b16 %v2915, %v2910
  %v3816 = vpack.c.b16 %v2916, %v2911
  %v3817 = vpack.c.b16 %v2917, %v2912
  %v3818 = vpack.c.b16 %v2918, %v2913
  %v3819 = vpack.c.b16 %v2924, %v2919
  %v3820 = vpack.c.b16 %v2925, %v2920
  %v3821 = vpack.c.b16 %v2926, %v2921
  %v3822 = vpack.c.b16 %v2927, %v2922
  %v3823 = vpack.c.b16 %v2928, %v2923
  %v3824 = vpack.c.b16 %v2934, %v2929
  %v3825 = vpack.c.b16 %v2935, %v2930
  %v3826 = vpack.c.b16 %v2936, %v2931
  %v3827 = vpack.c.b16 %v2937, %v2932
  %v3828 = vpack.c.b16 %v2938, %v2933
  %v3829 = vpack.c.b16 %v2944, %v2939
  %v3830 = vpack.c.b16 %v2945, %v2940
  %v3831 = vpack.c.b16 %v2946, %v2941
  %v3832 = vpack.c.b16 %v2947, %v2942
  %v3833 = vpack.c.b16 %v2948, %v2943
  %v3834 = vpack.c.b16 %v2954, %v2949
  %v3835 = vpack.c.b16 %v2955, %v2950
  %v3836 = vpack.c.b16 %v2956, %v2951
  %v3837 = vpack.c.b16 %v2957, %v2952
  %v3838 = vpack.c.b16 %v2958, %v2953
  %v3839 = vpack.c.b16 %v2964, %v2959
  %v3840 = vpack.c.b16 %v2965, %v2960
  %v3841 = vpack.c.b16 %v2966, %v2961
  %v3842 = vpack.c.b16 %v2967, %v2962
  %v3843 = vpack.c.b16 %v2968, %v2963
  %v3844 = vpack.c.b16 %v2974, %v2969
  %v3845 = vpack.c.b16 %v2975, %v2970
  %v3846 = vpack.c.b16 %v2976, %v2971
  %v3847 = vpack.c.b16 %v2977, %v2972
  %v3848 = vpack.c.b16 %v2978, %v2973
  %v3849 = vpack.c.b16 %v2984, %v2979
  %v3850 = vpack.c.b16 %v2985, %v2980
  %v3851 = vpack.c.b16 %v2986, %v2981
  %v3852 = vpack.c.b16 %v2987, %v2982
  %v3853 = vpack.c.b16 %v2988, %v2983
  %v3854 = vpack.c.b16 %v2994, %v2989
  %v3855 = vpack.c.b16 %v2995, %v2990
  %v3856 = vpack.c.b16 %v2996, %v2991
  %v3857 = vpack.c.b16 %v2997, %v2992
  %v3858 = vpack.c.b16 %v2998, %v2993
  %v3859 = vpack.c.b16 %v3004, %v2999
  %v3860 = vpack.c.b16 %v3005, %v3000
  %v3861 = vpack.c.b16 %v3006, %v3001
  %v3862 = vpack.c.b16 %v3007, %v3002
  %v3863 = vpack.c.b16 %v3008, %v3003
  %v3864 = vpack.c.b16 %v3014, %v3009
  %v3865 = vpack.c.b16 %v3015, %v3010
  %v3866 = vpack.c.b16 %v3016, %v3011
  %v3867 = vpack.c.b16 %v3017, %v3012
  %v3868 = vpack.c.b16 %v3018, %v3013
  %v3869 = vpack.c.b16 %v3024, %v3019
  %v3870 = vpack.c.b16 %v3025, %v3020
  %v3871 = vpack.c.b16 %v3026, %v3021
  %v3872 = vpack.c.b16 %v3027, %v3022
  %v3873 = vpack.c.b16 %v3028, %v3023
  %v3874 = vpack.c.b16 %v3034, %v3029
  %v3875 = vpack.c.b16 %v3035, %v3030
  %v3876 = vpack.c.b16 %v3036, %v3031
  %v3877 = vpack.c.b16 %v3037, %v3032
  %v3878 = vpack.c.b16 %v3038, %v3033
  %v3879 = vpack.c.b16 %v3044, %v3039
  %v3880 = vpack.c.b16 %v3045, %v3040
  %v3881 = vpack.c.b16 %v3046, %v3041
  %v3882 = vpack.c.b16 %v3047, %v3042
  %v3883 = vpack.c.b16 %v3048, %v3043
  %v3884 = vpack.c.b16 %v3054, %v3049
  %v3885 = vpack.c.b16 %v3055, %v3050
  %v3886 = vpack.c.b16 %v3056, %v3051
  %v3887 = vpack.c.b16 %v3057, %v3052
  %v3888 = vpack.c.b16 %v3058, %v3053
  %v3889 = vpack.c.b16 %v3064, %v3059
  %v3890 = vpack.c.b16 %v3065, %v3060
  %v3891 = vpack.c.b16 %v3066, %v3061
  %v3892 = vpack.c.b16 %v3067, %v3062
  %v3893 = vpack.c.b16 %v3068, %v3063
  %v3894 = vpack.c.b16 %v3074, %v3069
  %v3895 = vpack.c.b16 %v3075, %v3070
  %v3896 = vpack.c.b16 %v3076, %v3071
  %v3897 = vpack.c.b16 %v3077, %v3072
  %v3898 = vpack.c.b16 %v3078, %v3073
  %v3899 = vpack.c.b16 %v3084, %v3079
  %v3900 = vpack.c.b16 %v3085, %v3080
  %v3901 = vpack.c.b16 %v3086, %v3081
  %v3902 = vpack.c.b16 %v3087, %v3082
  %v3903 = vpack.c.b16 %v3088, %v3083
  %v3904 = vpack.c.b16 %v3094, %v3089
  %v3905 = vpack.c.b16 %v3095, %v3090
  %v3906 = vpack.c.b16 %v3096, %v3091
  %v3907 = vpack.c.b16 %v3097, %v3092
  %v3908 = vpack.c.b16 %v3098, %v3093
  %v3909 = vpack.c.b16 %v3104, %v3099
  %v3910 = vpack.c.b16 %v3105, %v3100
  %v3911 = vpack.c.b16 %v3106, %v3101
  %v3912 = vpack.c.b16 %v3107, %v3102
  %v3913 = vpack.c.b16 %v3108, %v3103
  %v3914 = vpack.c.b16 %v3114, %v3109
  %v3915 = vpack.c.b16 %v3115, %v3110
  %v3916 = vpack.c.b16 %v3116, %v3111
  %v3917 = vpack.c.b16 %v3117, %v3112
  %v3918 = vpack.c.b16 %v3118, %v3113
  %v3919 = vpack.c.b16 %v3124, %v3119
  %v3920 = vpack.c.b16 %v3125, %v3120
  %v3921 = vpack.c.b16 %v3126, %v3121
  %v3922 = vpack.c.b16 %v3127, %v3122
  %v3923 = vpack.c.b16 %v3128, %v3123
  %v3924 = vpack.c.b16 %v3134, %v3129
  %v3925 = vpack.c.b16 %v3135, %v3130
  %v3926 = vpack.c.b16 %v3136, %v3131
  %v3927 = vpack.c.b16 %v3137, %v3132
  %v3928 = vpack.c.b16 %v3138, %v3133
  %v3929 = vpack.c.b16 %v3144, %v3139
  %v3930 = vpack.c.b16 %v3145, %v3140
  %v3931 = vpack.c.b16 %v3146, %v3141
  %v3932 = vpack.c.b16 %v3147, %v3142
  %v3933 = vpack.c.b16 %v3148, %v3143
  %v3934 = vpack.c.b16 %v3154, %v3149
  %v3935 = vpack.c.b16 %v3155, %v3150
  %v3936 = vpack.c.b16 %v3156, %v3151
  %v3937 = vpack.c.b16 %v3157, %v3152
  %v3938 = vpack.c.b16 %v3158, %v3153
  %v3939 = vpack.c.b16 %v3164, %v3159
  %v3940 = vpack.c.b16 %v3165, %v3160
  %v3941 = vpack.c.b16 %v3166, %v3161
  %v3942 = vpack.c.b16 %v3167, %v3162
  %v3943 = vpack.c.b16 %v3168, %v3163
  %v3944 = vpack.c.b16 %v3174, %v3169
  %v3945 = vpack.c.b16 %v3175, %v3170
  %v3946 = vpack.c.b16 %v3176, %v3171
  %v3947 = vpack.c.b16 %v3177, %v3172
  %v3948 = vpack.c.b16 %v3178, %v3173
  %v3949 = vpack.c.b16 %v3184, %v3179
  %v3950 = vpack.c.b16 %v3185, %v3180
  %v3951 = vpack.c.b16 %v3186, %v3181
  %v3952 = vpack.c.b16 %v3187, %v3182
  %v3953 = vpack.c.b16 %v3188, %v3183
  %v3954 = vpack.c.b16 %v3194, %v3189
  %v3955 = vpack.c.b16 %v3195, %v3190
  %v3956 = vpack.c.b16 %v3196, %v3191
  %v3957 = vpack.c.b16 %v3197, %v3192
  %v3958 = vpack.c.b16 %v3198, %v3193
  %v3959 = vpack.c.b16 %v3204, %v3199
  %v3960 = vpack.c.b16 %v3205, %v3200
  %v3961 = vpack.c.b16 %v3206, %v3201
  %v3962 = vpack.c.b16 %v3207, %v3202
  %v3963 = vpack.c.b16 %v3208, %v3203
  %v3964 = vpack.c.b16 %v3214, %v3209
  %v3965 = vpack.c.b16 %v3215, %v3210
  %v3966 = vpack.c.b16 %v3216, %v3211
  %v3967 = vpack.c.b16 %v3217, %v3212
  %v3968 = vpack.c.b16 %v3218, %v3213
  %v3969 = vpack.c.b16 %v3224, %v3219
  %v3970 = vpack.c.b16 %v3225, %v3220
  %v3971 = vpack.c.b16 %v3226, %v3221
  %v3972 = vpack.c.b16 %v3227, %v3222
  %v3973 = vpack.c.b16 %v3228, %v3223
  %v3974 = vpack.c.b16 %v3234, %v3229
  %v3975 = vpack.c.b16 %v3235, %v3230
  %v3976 = vpack.c.b16 %v3236, %v3231
  %v3977 = vpack.c.b16 %v3237, %v3232
  %v3978 = vpack.c.b16 %v3238, %v3233
  %v3979 = vpack.c.b16 %v3244, %v3239
  %v3980 = vpack.c.b16 %v3245, %v3240
  %v3981 = vpack.c.b16 %v3246, %v3241
  %v3982 = vpack.c.b16 %v3247, %v3242
  %v3983 = vpack.c.b16 %v3248, %v3243
  %v3984 = vpack.c.b16 %v3254, %v3249
  %v3985 = vpack.c.b16 %v3255, %v3250
  %v3986 = vpack.c.b16 %v3256, %v3251
  %v3987 = vpack.c.b16 %v3257, %v3252
  %v3988 = vpack.c.b16 %v3258, %v3253
  %v3989 = vpack.c.b16 %v3264, %v3259
  %v3990 = vpack.c.b16 %v3265, %v3260
  %v3991 = vpack.c.b16 %v3266, %v3261
  %v3992 = vpack.c.b16 %v3267, %v3262
  %v3993 = vpack.c.b16 %v3268, %v3263
  %v3994 = vpack.c.b16 %v3274, %v3269
  %v3995 = vpack.c.b16 %v3275, %v3270
  %v3996 = vpack.c.b16 %v3276, %v3271
  %v3997 = vpack.c.b16 %v3277, %v3272
  %v3998 = vpack.c.b16 %v3278, %v3273
  %4719 = vmatpush.bf16.msra.mxu0 %v3314
  %4720 = vmatpush.bf16.msra.mxu0 %v3309
  %4721 = vmatpush.bf16.msra.mxu0 %v3304
  %4722 = vmatpush.bf16.msra.mxu0 %v3299
  %4723 = vmatpush.bf16.msra.mxu0 %v3294
  %4724 = vmatpush.bf16.msra.mxu0 %v3289
  %4725 = vmatpush.bf16.msra.mxu0 %v3284
  %4726 = vmatpush.bf16.msra.mxu0 %v3279
  %4727 = vmatmul.bf16.gmra.mxu0 %v939
  %v4728 = vpop.f32.mrf.mxu0
  %v4729 = vadd.f32 %v902, %v4728
  %v4730 = vpop.f32.mrf.mxu0
  %4731 = vdwg.mxu0
  %4732 = vmatpush.bf16.msra.mxu0 %v3354
  %4733 = vmatpush.bf16.msra.mxu0 %v3349
  %4734 = vmatpush.bf16.msra.mxu0 %v3344
  %4735 = vmatpush.bf16.msra.mxu0 %v3339
  %4736 = vmatpush.bf16.msra.mxu0 %v3334
  %4737 = vmatpush.bf16.msra.mxu0 %v3329
  %4738 = vmatpush.bf16.msra.mxu0 %v3324
  %4739 = vmatpush.bf16.msra.mxu0 %v3319
  %4740 = vmatmul.bf16.gmra.mxu0 %v940
  %v4741 = vpop.f32.mrf.mxu0
  %v4742 = vadd.f32 %v4729, %v4741
  %v4743 = vpop.f32.mrf.mxu0
  %4744 = vdwg.mxu0
  %4745 = vmatpush.bf16.msra.mxu0 %v3394
  %4746 = vmatpush.bf16.msra.mxu0 %v3389
  %4747 = vmatpush.bf16.msra.mxu0 %v3384
  %4748 = vmatpush.bf16.msra.mxu0 %v3379
  %4749 = vmatpush.bf16.msra.mxu0 %v3374
  %4750 = vmatpush.bf16.msra.mxu0 %v3369
  %4751 = vmatpush.bf16.msra.mxu0 %v3364
  %4752 = vmatpush.bf16.msra.mxu0 %v3359
  %4753 = vmatmul.bf16.gmra.mxu0 %v941
  %v4754 = vpop.f32.mrf.mxu0
  %v4755 = vadd.f32 %v4742, %v4754
  %v4756 = vpop.f32.mrf.mxu0
  %4757 = vdwg.mxu0
  %4758 = vmatpush.bf16.msra.mxu0 %v3434
  %4759 = vmatpush.bf16.msra.mxu0 %v3429
  %4760 = vmatpush.bf16.msra.mxu0 %v3424
  %4761 = vmatpush.bf16.msra.mxu0 %v3419
  %4762 = vmatpush.bf16.msra.mxu0 %v3414
  %4763 = vmatpush.bf16.msra.mxu0 %v3409
  %4764 = vmatpush.bf16.msra.mxu0 %v3404
  %4765 = vmatpush.bf16.msra.mxu0 %v3399
  %4766 = vmatmul.bf16.gmra.mxu0 %v942
  %v4767 = vpop.f32.mrf.mxu0
  %v4768 = vadd.f32 %v4755, %v4767
  %v4769 = vpop.f32.mrf.mxu0
  %4770 = vdwg.mxu0
  %4771 = vmatpush.bf16.msra.mxu0 %v3474
  %4772 = vmatpush.bf16.msra.mxu0 %v3469
  %4773 = vmatpush.bf16.msra.mxu0 %v3464
  %4774 = vmatpush.bf16.msra.mxu0 %v3459
  %4775 = vmatpush.bf16.msra.mxu0 %v3454
  %4776 = vmatpush.bf16.msra.mxu0 %v3449
  %4777 = vmatpush.bf16.msra.mxu0 %v3444
  %4778 = vmatpush.bf16.msra.mxu0 %v3439
  %4779 = vmatmul.bf16.gmra.mxu0 %v943
  %v4780 = vpop.f32.mrf.mxu0
  %v4781 = vadd.f32 %v4768, %v4780
  %v4782 = vpop.f32.mrf.mxu0
  %4783 = vdwg.mxu0
  %4784 = vmatpush.bf16.msra.mxu0 %v3514
  %4785 = vmatpush.bf16.msra.mxu0 %v3509
  %4786 = vmatpush.bf16.msra.mxu0 %v3504
  %4787 = vmatpush.bf16.msra.mxu0 %v3499
  %4788 = vmatpush.bf16.msra.mxu0 %v3494
  %4789 = vmatpush.bf16.msra.mxu0 %v3489
  %4790 = vmatpush.bf16.msra.mxu0 %v3484
  %4791 = vmatpush.bf16.msra.mxu0 %v3479
  %4792 = vmatmul.bf16.gmra.mxu0 %v944
  %v4793 = vpop.f32.mrf.mxu0
  %v4794 = vadd.f32 %v4781, %v4793
  %v4795 = vpop.f32.mrf.mxu0
  %4796 = vdwg.mxu0
  %4797 = vmatpush.bf16.msra.mxu0 %v3554
  %4798 = vmatpush.bf16.msra.mxu0 %v3549
  %4799 = vmatpush.bf16.msra.mxu0 %v3544
  %4800 = vmatpush.bf16.msra.mxu0 %v3539
  %4801 = vmatpush.bf16.msra.mxu0 %v3534
  %4802 = vmatpush.bf16.msra.mxu0 %v3529
  %4803 = vmatpush.bf16.msra.mxu0 %v3524
  %4804 = vmatpush.bf16.msra.mxu0 %v3519
  %4805 = vmatmul.bf16.gmra.mxu0 %v945
  %v4806 = vpop.f32.mrf.mxu0
  %v4807 = vadd.f32 %v4794, %v4806
  %v4808 = vpop.f32.mrf.mxu0
  %4809 = vdwg.mxu0
  %4810 = vmatpush.bf16.msra.mxu0 %v3594
  %4811 = vmatpush.bf16.msra.mxu0 %v3589
  %4812 = vmatpush.bf16.msra.mxu0 %v3584
  %4813 = vmatpush.bf16.msra.mxu0 %v3579
  %4814 = vmatpush.bf16.msra.mxu0 %v3574
  %4815 = vmatpush.bf16.msra.mxu0 %v3569
  %4816 = vmatpush.bf16.msra.mxu0 %v3564
  %4817 = vmatpush.bf16.msra.mxu0 %v3559
  %4818 = vmatmul.bf16.gmra.mxu0 %v946
  %v4819 = vpop.f32.mrf.mxu0
  %v4820 = vadd.f32 %v4807, %v4819
  %v4821 = vpop.f32.mrf.mxu0
  %4822 = vdwg.mxu0
  %4823 = vmatpush.bf16.msra.mxu0 %v3634
  %4824 = vmatpush.bf16.msra.mxu0 %v3629
  %4825 = vmatpush.bf16.msra.mxu0 %v3624
  %4826 = vmatpush.bf16.msra.mxu0 %v3619
  %4827 = vmatpush.bf16.msra.mxu0 %v3614
  %4828 = vmatpush.bf16.msra.mxu0 %v3609
  %4829 = vmatpush.bf16.msra.mxu0 %v3604
  %4830 = vmatpush.bf16.msra.mxu0 %v3599
  %4831 = vmatmul.bf16.gmra.mxu0 %v947
  %v4832 = vpop.f32.mrf.mxu0
  %v4833 = vadd.f32 %v4820, %v4832
  %v4834 = vpop.f32.mrf.mxu0
  %4835 = vdwg.mxu0
  %4836 = vmatpush.bf16.msra.mxu0 %v3674
  %4837 = vmatpush.bf16.msra.mxu0 %v3669
  %4838 = vmatpush.bf16.msra.mxu0 %v3664
  %4839 = vmatpush.bf16.msra.mxu0 %v3659
  %4840 = vmatpush.bf16.msra.mxu0 %v3654
  %4841 = vmatpush.bf16.msra.mxu0 %v3649
  %4842 = vmatpush.bf16.msra.mxu0 %v3644
  %4843 = vmatpush.bf16.msra.mxu0 %v3639
  %4844 = vmatmul.bf16.gmra.mxu0 %v948
  %v4845 = vpop.f32.mrf.mxu0
  %v4846 = vadd.f32 %v4833, %v4845
  %v4847 = vpop.f32.mrf.mxu0
  %4848 = vdwg.mxu0
  %4849 = vmatpush.bf16.msra.mxu0 %v3714
  %4850 = vmatpush.bf16.msra.mxu0 %v3709
  %4851 = vmatpush.bf16.msra.mxu0 %v3704
  %4852 = vmatpush.bf16.msra.mxu0 %v3699
  %4853 = vmatpush.bf16.msra.mxu0 %v3694
  %4854 = vmatpush.bf16.msra.mxu0 %v3689
  %4855 = vmatpush.bf16.msra.mxu0 %v3684
  %4856 = vmatpush.bf16.msra.mxu0 %v3679
  %4857 = vmatmul.bf16.gmra.mxu0 %v949
  %v4858 = vpop.f32.mrf.mxu0
  %v4859 = vadd.f32 %v4846, %v4858
  %v4860 = vpop.f32.mrf.mxu0
  %4861 = vdwg.mxu0
  %4862 = vmatpush.bf16.msra.mxu0 %v3754
  %4863 = vmatpush.bf16.msra.mxu0 %v3749
  %4864 = vmatpush.bf16.msra.mxu0 %v3744
  %4865 = vmatpush.bf16.msra.mxu0 %v3739
  %4866 = vmatpush.bf16.msra.mxu0 %v3734
  %4867 = vmatpush.bf16.msra.mxu0 %v3729
  %4868 = vmatpush.bf16.msra.mxu0 %v3724
  %4869 = vmatpush.bf16.msra.mxu0 %v3719
  %4870 = vmatmul.bf16.gmra.mxu0 %v950
  %v4871 = vpop.f32.mrf.mxu0
  %v4872 = vadd.f32 %v4859, %v4871
  %v4873 = vpop.f32.mrf.mxu0
  %4874 = vdwg.mxu0
  %4875 = vmatpush.bf16.msra.mxu0 %v3794
  %4876 = vmatpush.bf16.msra.mxu0 %v3789
  %4877 = vmatpush.bf16.msra.mxu0 %v3784
  %4878 = vmatpush.bf16.msra.mxu0 %v3779
  %4879 = vmatpush.bf16.msra.mxu0 %v3774
  %4880 = vmatpush.bf16.msra.mxu0 %v3769
  %4881 = vmatpush.bf16.msra.mxu0 %v3764
  %4882 = vmatpush.bf16.msra.mxu0 %v3759
  %4883 = vmatmul.bf16.gmra.mxu0 %v951
  %v4884 = vpop.f32.mrf.mxu0
  %v4885 = vadd.f32 %v4872, %v4884
  %v4886 = vpop.f32.mrf.mxu0
  %4887 = vdwg.mxu0
  %4888 = vmatpush.bf16.msra.mxu0 %v3834
  %4889 = vmatpush.bf16.msra.mxu0 %v3829
  %4890 = vmatpush.bf16.msra.mxu0 %v3824
  %4891 = vmatpush.bf16.msra.mxu0 %v3819
  %4892 = vmatpush.bf16.msra.mxu0 %v3814
  %4893 = vmatpush.bf16.msra.mxu0 %v3809
  %4894 = vmatpush.bf16.msra.mxu0 %v3804
  %4895 = vmatpush.bf16.msra.mxu0 %v3799
  %4896 = vmatmul.bf16.gmra.mxu0 %v952
  %v4897 = vpop.f32.mrf.mxu0
  %v4898 = vadd.f32 %v4885, %v4897
  %v4899 = vpop.f32.mrf.mxu0
  %4900 = vdwg.mxu0
  %4901 = vmatpush.bf16.msra.mxu0 %v3874
  %4902 = vmatpush.bf16.msra.mxu0 %v3869
  %4903 = vmatpush.bf16.msra.mxu0 %v3864
  %4904 = vmatpush.bf16.msra.mxu0 %v3859
  %4905 = vmatpush.bf16.msra.mxu0 %v3854
  %4906 = vmatpush.bf16.msra.mxu0 %v3849
  %4907 = vmatpush.bf16.msra.mxu0 %v3844
  %4908 = vmatpush.bf16.msra.mxu0 %v3839
  %4909 = vmatmul.bf16.gmra.mxu0 %v953
  %v4910 = vpop.f32.mrf.mxu0
  %v4911 = vadd.f32 %v4898, %v4910
  %v4912 = vpop.f32.mrf.mxu0
  %4913 = vdwg.mxu0
  %4914 = vmatpush.bf16.msra.mxu0 %v3914
  %4915 = vmatpush.bf16.msra.mxu0 %v3909
  %4916 = vmatpush.bf16.msra.mxu0 %v3904
  %4917 = vmatpush.bf16.msra.mxu0 %v3899
  %4918 = vmatpush.bf16.msra.mxu0 %v3894
  %4919 = vmatpush.bf16.msra.mxu0 %v3889
  %4920 = vmatpush.bf16.msra.mxu0 %v3884
  %4921 = vmatpush.bf16.msra.mxu0 %v3879
  %4922 = vmatmul.bf16.gmra.mxu0 %v954
  %v4923 = vpop.f32.mrf.mxu0
  %v4924 = vadd.f32 %v4911, %v4923
  %v4925 = vpop.f32.mrf.mxu0
  %4926 = vdwg.mxu0
  %4927 = vmatpush.bf16.msra.mxu0 %v3954
  %4928 = vmatpush.bf16.msra.mxu0 %v3949
  %4929 = vmatpush.bf16.msra.mxu0 %v3944
  %4930 = vmatpush.bf16.msra.mxu0 %v3939
  %4931 = vmatpush.bf16.msra.mxu0 %v3934
  %4932 = vmatpush.bf16.msra.mxu0 %v3929
  %4933 = vmatpush.bf16.msra.mxu0 %v3924
  %4934 = vmatpush.bf16.msra.mxu0 %v3919
  %4935 = vmatmul.bf16.gmra.mxu0 %v955
  %v4936 = vpop.f32.mrf.mxu0
  %v4937 = vadd.f32 %v4924, %v4936
  %v4938 = vpop.f32.mrf.mxu0
  %4939 = vdwg.mxu0
  %4940 = vmatpush.bf16.msra.mxu0 %v3994
  %4941 = vmatpush.bf16.msra.mxu0 %v3989
  %4942 = vmatpush.bf16.msra.mxu0 %v3984
  %4943 = vmatpush.bf16.msra.mxu0 %v3979
  %4944 = vmatpush.bf16.msra.mxu0 %v3974
  %4945 = vmatpush.bf16.msra.mxu0 %v3969
  %4946 = vmatpush.bf16.msra.mxu0 %v3964
  %4947 = vmatpush.bf16.msra.mxu0 %v3959
  %4948 = vmatmul.bf16.gmra.mxu0 %v956
  %v4949 = vpop.f32.mrf.mxu0
  %v4950 = vadd.f32 %v4937, %v4949
  %v4951 = vpop.f32.mrf.mxu0
  %4952 = vdwg.mxu0
  %4953 = vmatpush.bf16.msra.mxu0 %v3315
  %4954 = vmatpush.bf16.msra.mxu0 %v3310
  %4955 = vmatpush.bf16.msra.mxu0 %v3305
  %4956 = vmatpush.bf16.msra.mxu0 %v3300
  %4957 = vmatpush.bf16.msra.mxu0 %v3295
  %4958 = vmatpush.bf16.msra.mxu0 %v3290
  %4959 = vmatpush.bf16.msra.mxu0 %v3285
  %4960 = vmatpush.bf16.msra.mxu0 %v3280
  %4961 = vmatmul.bf16.gmra.mxu0 %v939
  %v4962 = vpop.f32.mrf.mxu0
  %v4963 = vadd.f32 %v903, %v4962
  %v4964 = vpop.f32.mrf.mxu0
  %4965 = vdwg.mxu0
  %4966 = vmatpush.bf16.msra.mxu0 %v3355
  %4967 = vmatpush.bf16.msra.mxu0 %v3350
  %4968 = vmatpush.bf16.msra.mxu0 %v3345
  %4969 = vmatpush.bf16.msra.mxu0 %v3340
  %4970 = vmatpush.bf16.msra.mxu0 %v3335
  %4971 = vmatpush.bf16.msra.mxu0 %v3330
  %4972 = vmatpush.bf16.msra.mxu0 %v3325
  %4973 = vmatpush.bf16.msra.mxu0 %v3320
  %4974 = vmatmul.bf16.gmra.mxu0 %v940
  %v4975 = vpop.f32.mrf.mxu0
  %v4976 = vadd.f32 %v4963, %v4975
  %v4977 = vpop.f32.mrf.mxu0
  %4978 = vdwg.mxu0
  %4979 = vmatpush.bf16.msra.mxu0 %v3395
  %4980 = vmatpush.bf16.msra.mxu0 %v3390
  %4981 = vmatpush.bf16.msra.mxu0 %v3385
  %4982 = vmatpush.bf16.msra.mxu0 %v3380
  %4983 = vmatpush.bf16.msra.mxu0 %v3375
  %4984 = vmatpush.bf16.msra.mxu0 %v3370
  %4985 = vmatpush.bf16.msra.mxu0 %v3365
  %4986 = vmatpush.bf16.msra.mxu0 %v3360
  %4987 = vmatmul.bf16.gmra.mxu0 %v941
  %v4988 = vpop.f32.mrf.mxu0
  %v4989 = vadd.f32 %v4976, %v4988
  %v4990 = vpop.f32.mrf.mxu0
  %4991 = vdwg.mxu0
  %4992 = vmatpush.bf16.msra.mxu0 %v3435
  %4993 = vmatpush.bf16.msra.mxu0 %v3430
  %4994 = vmatpush.bf16.msra.mxu0 %v3425
  %4995 = vmatpush.bf16.msra.mxu0 %v3420
  %4996 = vmatpush.bf16.msra.mxu0 %v3415
  %4997 = vmatpush.bf16.msra.mxu0 %v3410
  %4998 = vmatpush.bf16.msra.mxu0 %v3405
  %4999 = vmatpush.bf16.msra.mxu0 %v3400
  %5000 = vmatmul.bf16.gmra.mxu0 %v942
  %v5001 = vpop.f32.mrf.mxu0
  %v5002 = vadd.f32 %v4989, %v5001
  %v5003 = vpop.f32.mrf.mxu0
  %5004 = vdwg.mxu0
  %5005 = vmatpush.bf16.msra.mxu0 %v3475
  %5006 = vmatpush.bf16.msra.mxu0 %v3470
  %5007 = vmatpush.bf16.msra.mxu0 %v3465
  %5008 = vmatpush.bf16.msra.mxu0 %v3460
  %5009 = vmatpush.bf16.msra.mxu0 %v3455
  %5010 = vmatpush.bf16.msra.mxu0 %v3450
  %5011 = vmatpush.bf16.msra.mxu0 %v3445
  %5012 = vmatpush.bf16.msra.mxu0 %v3440
  %5013 = vmatmul.bf16.gmra.mxu0 %v943
  %v5014 = vpop.f32.mrf.mxu0
  %v5015 = vadd.f32 %v5002, %v5014
  %v5016 = vpop.f32.mrf.mxu0
  %5017 = vdwg.mxu0
  %5018 = vmatpush.bf16.msra.mxu0 %v3515
  %5019 = vmatpush.bf16.msra.mxu0 %v3510
  %5020 = vmatpush.bf16.msra.mxu0 %v3505
  %5021 = vmatpush.bf16.msra.mxu0 %v3500
  %5022 = vmatpush.bf16.msra.mxu0 %v3495
  %5023 = vmatpush.bf16.msra.mxu0 %v3490
  %5024 = vmatpush.bf16.msra.mxu0 %v3485
  %5025 = vmatpush.bf16.msra.mxu0 %v3480
  %5026 = vmatmul.bf16.gmra.mxu0 %v944
  %v5027 = vpop.f32.mrf.mxu0
  %v5028 = vadd.f32 %v5015, %v5027
  %v5029 = vpop.f32.mrf.mxu0
  %5030 = vdwg.mxu0
  %5031 = vmatpush.bf16.msra.mxu0 %v3555
  %5032 = vmatpush.bf16.msra.mxu0 %v3550
  %5033 = vmatpush.bf16.msra.mxu0 %v3545
  %5034 = vmatpush.bf16.msra.mxu0 %v3540
  %5035 = vmatpush.bf16.msra.mxu0 %v3535
  %5036 = vmatpush.bf16.msra.mxu0 %v3530
  %5037 = vmatpush.bf16.msra.mxu0 %v3525
  %5038 = vmatpush.bf16.msra.mxu0 %v3520
  %5039 = vmatmul.bf16.gmra.mxu0 %v945
  %v5040 = vpop.f32.mrf.mxu0
  %v5041 = vadd.f32 %v5028, %v5040
  %v5042 = vpop.f32.mrf.mxu0
  %5043 = vdwg.mxu0
  %5044 = vmatpush.bf16.msra.mxu0 %v3595
  %5045 = vmatpush.bf16.msra.mxu0 %v3590
  %5046 = vmatpush.bf16.msra.mxu0 %v3585
  %5047 = vmatpush.bf16.msra.mxu0 %v3580
  %5048 = vmatpush.bf16.msra.mxu0 %v3575
  %5049 = vmatpush.bf16.msra.mxu0 %v3570
  %5050 = vmatpush.bf16.msra.mxu0 %v3565
  %5051 = vmatpush.bf16.msra.mxu0 %v3560
  %5052 = vmatmul.bf16.gmra.mxu0 %v946
  %v5053 = vpop.f32.mrf.mxu0
  %v5054 = vadd.f32 %v5041, %v5053
  %v5055 = vpop.f32.mrf.mxu0
  %5056 = vdwg.mxu0
  %5057 = vmatpush.bf16.msra.mxu0 %v3635
  %5058 = vmatpush.bf16.msra.mxu0 %v3630
  %5059 = vmatpush.bf16.msra.mxu0 %v3625
  %5060 = vmatpush.bf16.msra.mxu0 %v3620
  %5061 = vmatpush.bf16.msra.mxu0 %v3615
  %5062 = vmatpush.bf16.msra.mxu0 %v3610
  %5063 = vmatpush.bf16.msra.mxu0 %v3605
  %5064 = vmatpush.bf16.msra.mxu0 %v3600
  %5065 = vmatmul.bf16.gmra.mxu0 %v947
  %v5066 = vpop.f32.mrf.mxu0
  %v5067 = vadd.f32 %v5054, %v5066
  %v5068 = vpop.f32.mrf.mxu0
  %5069 = vdwg.mxu0
  %5070 = vmatpush.bf16.msra.mxu0 %v3675
  %5071 = vmatpush.bf16.msra.mxu0 %v3670
  %5072 = vmatpush.bf16.msra.mxu0 %v3665
  %5073 = vmatpush.bf16.msra.mxu0 %v3660
  %5074 = vmatpush.bf16.msra.mxu0 %v3655
  %5075 = vmatpush.bf16.msra.mxu0 %v3650
  %5076 = vmatpush.bf16.msra.mxu0 %v3645
  %5077 = vmatpush.bf16.msra.mxu0 %v3640
  %5078 = vmatmul.bf16.gmra.mxu0 %v948
  %v5079 = vpop.f32.mrf.mxu0
  %v5080 = vadd.f32 %v5067, %v5079
  %v5081 = vpop.f32.mrf.mxu0
  %5082 = vdwg.mxu0
  %5083 = vmatpush.bf16.msra.mxu0 %v3715
  %5084 = vmatpush.bf16.msra.mxu0 %v3710
  %5085 = vmatpush.bf16.msra.mxu0 %v3705
  %5086 = vmatpush.bf16.msra.mxu0 %v3700
  %5087 = vmatpush.bf16.msra.mxu0 %v3695
  %5088 = vmatpush.bf16.msra.mxu0 %v3690
  %5089 = vmatpush.bf16.msra.mxu0 %v3685
  %5090 = vmatpush.bf16.msra.mxu0 %v3680
  %5091 = vmatmul.bf16.gmra.mxu0 %v949
  %v5092 = vpop.f32.mrf.mxu0
  %v5093 = vadd.f32 %v5080, %v5092
  %v5094 = vpop.f32.mrf.mxu0
  %5095 = vdwg.mxu0
  %5096 = vmatpush.bf16.msra.mxu0 %v3755
  %5097 = vmatpush.bf16.msra.mxu0 %v3750
  %5098 = vmatpush.bf16.msra.mxu0 %v3745
  %5099 = vmatpush.bf16.msra.mxu0 %v3740
  %5100 = vmatpush.bf16.msra.mxu0 %v3735
  %5101 = vmatpush.bf16.msra.mxu0 %v3730
  %5102 = vmatpush.bf16.msra.mxu0 %v3725
  %5103 = vmatpush.bf16.msra.mxu0 %v3720
  %5104 = vmatmul.bf16.gmra.mxu0 %v950
  %v5105 = vpop.f32.mrf.mxu0
  %v5106 = vadd.f32 %v5093, %v5105
  %v5107 = vpop.f32.mrf.mxu0
  %5108 = vdwg.mxu0
  %5109 = vmatpush.bf16.msra.mxu0 %v3795
  %5110 = vmatpush.bf16.msra.mxu0 %v3790
  %5111 = vmatpush.bf16.msra.mxu0 %v3785
  %5112 = vmatpush.bf16.msra.mxu0 %v3780
  %5113 = vmatpush.bf16.msra.mxu0 %v3775
  %5114 = vmatpush.bf16.msra.mxu0 %v3770
  %5115 = vmatpush.bf16.msra.mxu0 %v3765
  %5116 = vmatpush.bf16.msra.mxu0 %v3760
  %5117 = vmatmul.bf16.gmra.mxu0 %v951
  %v5118 = vpop.f32.mrf.mxu0
  %v5119 = vadd.f32 %v5106, %v5118
  %v5120 = vpop.f32.mrf.mxu0
  %5121 = vdwg.mxu0
  %5122 = vmatpush.bf16.msra.mxu0 %v3835
  %5123 = vmatpush.bf16.msra.mxu0 %v3830
  %5124 = vmatpush.bf16.msra.mxu0 %v3825
  %5125 = vmatpush.bf16.msra.mxu0 %v3820
  %5126 = vmatpush.bf16.msra.mxu0 %v3815
  %5127 = vmatpush.bf16.msra.mxu0 %v3810
  %5128 = vmatpush.bf16.msra.mxu0 %v3805
  %5129 = vmatpush.bf16.msra.mxu0 %v3800
  %5130 = vmatmul.bf16.gmra.mxu0 %v952
  %v5131 = vpop.f32.mrf.mxu0
  %v5132 = vadd.f32 %v5119, %v5131
  %v5133 = vpop.f32.mrf.mxu0
  %5134 = vdwg.mxu0
  %5135 = vmatpush.bf16.msra.mxu0 %v3875
  %5136 = vmatpush.bf16.msra.mxu0 %v3870
  %5137 = vmatpush.bf16.msra.mxu0 %v3865
  %5138 = vmatpush.bf16.msra.mxu0 %v3860
  %5139 = vmatpush.bf16.msra.mxu0 %v3855
  %5140 = vmatpush.bf16.msra.mxu0 %v3850
  %5141 = vmatpush.bf16.msra.mxu0 %v3845
  %5142 = vmatpush.bf16.msra.mxu0 %v3840
  %5143 = vmatmul.bf16.gmra.mxu0 %v953
  %v5144 = vpop.f32.mrf.mxu0
  %v5145 = vadd.f32 %v5132, %v5144
  %v5146 = vpop.f32.mrf.mxu0
  %5147 = vdwg.mxu0
  %5148 = vmatpush.bf16.msra.mxu0 %v3915
  %5149 = vmatpush.bf16.msra.mxu0 %v3910
  %5150 = vmatpush.bf16.msra.mxu0 %v3905
  %5151 = vmatpush.bf16.msra.mxu0 %v3900
  %5152 = vmatpush.bf16.msra.mxu0 %v3895
  %5153 = vmatpush.bf16.msra.mxu0 %v3890
  %5154 = vmatpush.bf16.msra.mxu0 %v3885
  %5155 = vmatpush.bf16.msra.mxu0 %v3880
  %5156 = vmatmul.bf16.gmra.mxu0 %v954
  %v5157 = vpop.f32.mrf.mxu0
  %v5158 = vadd.f32 %v5145, %v5157
  %v5159 = vpop.f32.mrf.mxu0
  %5160 = vdwg.mxu0
  %5161 = vmatpush.bf16.msra.mxu0 %v3955
  %5162 = vmatpush.bf16.msra.mxu0 %v3950
  %5163 = vmatpush.bf16.msra.mxu0 %v3945
  %5164 = vmatpush.bf16.msra.mxu0 %v3940
  %5165 = vmatpush.bf16.msra.mxu0 %v3935
  %5166 = vmatpush.bf16.msra.mxu0 %v3930
  %5167 = vmatpush.bf16.msra.mxu0 %v3925
  %5168 = vmatpush.bf16.msra.mxu0 %v3920
  %5169 = vmatmul.bf16.gmra.mxu0 %v955
  %v5170 = vpop.f32.mrf.mxu0
  %v5171 = vadd.f32 %v5158, %v5170
  %v5172 = vpop.f32.mrf.mxu0
  %5173 = vdwg.mxu0
  %5174 = vmatpush.bf16.msra.mxu0 %v3995
  %5175 = vmatpush.bf16.msra.mxu0 %v3990
  %5176 = vmatpush.bf16.msra.mxu0 %v3985
  %5177 = vmatpush.bf16.msra.mxu0 %v3980
  %5178 = vmatpush.bf16.msra.mxu0 %v3975
  %5179 = vmatpush.bf16.msra.mxu0 %v3970
  %5180 = vmatpush.bf16.msra.mxu0 %v3965
  %5181 = vmatpush.bf16.msra.mxu0 %v3960
  %5182 = vmatmul.bf16.gmra.mxu0 %v956
  %v5183 = vpop.f32.mrf.mxu0
  %v5184 = vadd.f32 %v5171, %v5183
  %v5185 = vpop.f32.mrf.mxu0
  %5186 = vdwg.mxu0
  %5187 = vmatpush.bf16.msra.mxu0 %v3316
  %5188 = vmatpush.bf16.msra.mxu0 %v3311
  %5189 = vmatpush.bf16.msra.mxu0 %v3306
  %5190 = vmatpush.bf16.msra.mxu0 %v3301
  %5191 = vmatpush.bf16.msra.mxu0 %v3296
  %5192 = vmatpush.bf16.msra.mxu0 %v3291
  %5193 = vmatpush.bf16.msra.mxu0 %v3286
  %5194 = vmatpush.bf16.msra.mxu0 %v3281
  %5195 = vmatmul.bf16.gmra.mxu0 %v939
  %v5196 = vpop.f32.mrf.mxu0
  %v5197 = vadd.f32 %v904, %v5196
  %v5198 = vpop.f32.mrf.mxu0
  %5199 = vdwg.mxu0
  %5200 = vmatpush.bf16.msra.mxu0 %v3356
  %5201 = vmatpush.bf16.msra.mxu0 %v3351
  %5202 = vmatpush.bf16.msra.mxu0 %v3346
  %5203 = vmatpush.bf16.msra.mxu0 %v3341
  %5204 = vmatpush.bf16.msra.mxu0 %v3336
  %5205 = vmatpush.bf16.msra.mxu0 %v3331
  %5206 = vmatpush.bf16.msra.mxu0 %v3326
  %5207 = vmatpush.bf16.msra.mxu0 %v3321
  %5208 = vmatmul.bf16.gmra.mxu0 %v940
  %v5209 = vpop.f32.mrf.mxu0
  %v5210 = vadd.f32 %v5197, %v5209
  %v5211 = vpop.f32.mrf.mxu0
  %5212 = vdwg.mxu0
  %5213 = vmatpush.bf16.msra.mxu0 %v3396
  %5214 = vmatpush.bf16.msra.mxu0 %v3391
  %5215 = vmatpush.bf16.msra.mxu0 %v3386
  %5216 = vmatpush.bf16.msra.mxu0 %v3381
  %5217 = vmatpush.bf16.msra.mxu0 %v3376
  %5218 = vmatpush.bf16.msra.mxu0 %v3371
  %5219 = vmatpush.bf16.msra.mxu0 %v3366
  %5220 = vmatpush.bf16.msra.mxu0 %v3361
  %5221 = vmatmul.bf16.gmra.mxu0 %v941
  %v5222 = vpop.f32.mrf.mxu0
  %v5223 = vadd.f32 %v5210, %v5222
  %v5224 = vpop.f32.mrf.mxu0
  %5225 = vdwg.mxu0
  %5226 = vmatpush.bf16.msra.mxu0 %v3436
  %5227 = vmatpush.bf16.msra.mxu0 %v3431
  %5228 = vmatpush.bf16.msra.mxu0 %v3426
  %5229 = vmatpush.bf16.msra.mxu0 %v3421
  %5230 = vmatpush.bf16.msra.mxu0 %v3416
  %5231 = vmatpush.bf16.msra.mxu0 %v3411
  %5232 = vmatpush.bf16.msra.mxu0 %v3406
  %5233 = vmatpush.bf16.msra.mxu0 %v3401
  %5234 = vmatmul.bf16.gmra.mxu0 %v942
  %v5235 = vpop.f32.mrf.mxu0
  %v5236 = vadd.f32 %v5223, %v5235
  %v5237 = vpop.f32.mrf.mxu0
  %5238 = vdwg.mxu0
  %5239 = vmatpush.bf16.msra.mxu0 %v3476
  %5240 = vmatpush.bf16.msra.mxu0 %v3471
  %5241 = vmatpush.bf16.msra.mxu0 %v3466
  %5242 = vmatpush.bf16.msra.mxu0 %v3461
  %5243 = vmatpush.bf16.msra.mxu0 %v3456
  %5244 = vmatpush.bf16.msra.mxu0 %v3451
  %5245 = vmatpush.bf16.msra.mxu0 %v3446
  %5246 = vmatpush.bf16.msra.mxu0 %v3441
  %5247 = vmatmul.bf16.gmra.mxu0 %v943
  %v5248 = vpop.f32.mrf.mxu0
  %v5249 = vadd.f32 %v5236, %v5248
  %v5250 = vpop.f32.mrf.mxu0
  %5251 = vdwg.mxu0
  %5252 = vmatpush.bf16.msra.mxu0 %v3516
  %5253 = vmatpush.bf16.msra.mxu0 %v3511
  %5254 = vmatpush.bf16.msra.mxu0 %v3506
  %5255 = vmatpush.bf16.msra.mxu0 %v3501
  %5256 = vmatpush.bf16.msra.mxu0 %v3496
  %5257 = vmatpush.bf16.msra.mxu0 %v3491
  %5258 = vmatpush.bf16.msra.mxu0 %v3486
  %5259 = vmatpush.bf16.msra.mxu0 %v3481
  %5260 = vmatmul.bf16.gmra.mxu0 %v944
  %v5261 = vpop.f32.mrf.mxu0
  %v5262 = vadd.f32 %v5249, %v5261
  %v5263 = vpop.f32.mrf.mxu0
  %5264 = vdwg.mxu0
  %5265 = vmatpush.bf16.msra.mxu0 %v3556
  %5266 = vmatpush.bf16.msra.mxu0 %v3551
  %5267 = vmatpush.bf16.msra.mxu0 %v3546
  %5268 = vmatpush.bf16.msra.mxu0 %v3541
  %5269 = vmatpush.bf16.msra.mxu0 %v3536
  %5270 = vmatpush.bf16.msra.mxu0 %v3531
  %5271 = vmatpush.bf16.msra.mxu0 %v3526
  %5272 = vmatpush.bf16.msra.mxu0 %v3521
  %5273 = vmatmul.bf16.gmra.mxu0 %v945
  %v5274 = vpop.f32.mrf.mxu0
  %v5275 = vadd.f32 %v5262, %v5274
  %v5276 = vpop.f32.mrf.mxu0
  %5277 = vdwg.mxu0
  %5278 = vmatpush.bf16.msra.mxu0 %v3596
  %5279 = vmatpush.bf16.msra.mxu0 %v3591
  %5280 = vmatpush.bf16.msra.mxu0 %v3586
  %5281 = vmatpush.bf16.msra.mxu0 %v3581
  %5282 = vmatpush.bf16.msra.mxu0 %v3576
  %5283 = vmatpush.bf16.msra.mxu0 %v3571
  %5284 = vmatpush.bf16.msra.mxu0 %v3566
  %5285 = vmatpush.bf16.msra.mxu0 %v3561
  %5286 = vmatmul.bf16.gmra.mxu0 %v946
  %v5287 = vpop.f32.mrf.mxu0
  %v5288 = vadd.f32 %v5275, %v5287
  %v5289 = vpop.f32.mrf.mxu0
  %5290 = vdwg.mxu0
  %5291 = vmatpush.bf16.msra.mxu0 %v3636
  %5292 = vmatpush.bf16.msra.mxu0 %v3631
  %5293 = vmatpush.bf16.msra.mxu0 %v3626
  %5294 = vmatpush.bf16.msra.mxu0 %v3621
  %5295 = vmatpush.bf16.msra.mxu0 %v3616
  %5296 = vmatpush.bf16.msra.mxu0 %v3611
  %5297 = vmatpush.bf16.msra.mxu0 %v3606
  %5298 = vmatpush.bf16.msra.mxu0 %v3601
  %5299 = vmatmul.bf16.gmra.mxu0 %v947
  %v5300 = vpop.f32.mrf.mxu0
  %v5301 = vadd.f32 %v5288, %v5300
  %v5302 = vpop.f32.mrf.mxu0
  %5303 = vdwg.mxu0
  %5304 = vmatpush.bf16.msra.mxu0 %v3676
  %5305 = vmatpush.bf16.msra.mxu0 %v3671
  %5306 = vmatpush.bf16.msra.mxu0 %v3666
  %5307 = vmatpush.bf16.msra.mxu0 %v3661
  %5308 = vmatpush.bf16.msra.mxu0 %v3656
  %5309 = vmatpush.bf16.msra.mxu0 %v3651
  %5310 = vmatpush.bf16.msra.mxu0 %v3646
  %5311 = vmatpush.bf16.msra.mxu0 %v3641
  %5312 = vmatmul.bf16.gmra.mxu0 %v948
  %v5313 = vpop.f32.mrf.mxu0
  %v5314 = vadd.f32 %v5301, %v5313
  %v5315 = vpop.f32.mrf.mxu0
  %5316 = vdwg.mxu0
  %5317 = vmatpush.bf16.msra.mxu0 %v3716
  %5318 = vmatpush.bf16.msra.mxu0 %v3711
  %5319 = vmatpush.bf16.msra.mxu0 %v3706
  %5320 = vmatpush.bf16.msra.mxu0 %v3701
  %5321 = vmatpush.bf16.msra.mxu0 %v3696
  %5322 = vmatpush.bf16.msra.mxu0 %v3691
  %5323 = vmatpush.bf16.msra.mxu0 %v3686
  %5324 = vmatpush.bf16.msra.mxu0 %v3681
  %5325 = vmatmul.bf16.gmra.mxu0 %v949
  %v5326 = vpop.f32.mrf.mxu0
  %v5327 = vadd.f32 %v5314, %v5326
  %v5328 = vpop.f32.mrf.mxu0
  %5329 = vdwg.mxu0
  %5330 = vmatpush.bf16.msra.mxu0 %v3756
  %5331 = vmatpush.bf16.msra.mxu0 %v3751
  %5332 = vmatpush.bf16.msra.mxu0 %v3746
  %5333 = vmatpush.bf16.msra.mxu0 %v3741
  %5334 = vmatpush.bf16.msra.mxu0 %v3736
  %5335 = vmatpush.bf16.msra.mxu0 %v3731
  %5336 = vmatpush.bf16.msra.mxu0 %v3726
  %5337 = vmatpush.bf16.msra.mxu0 %v3721
  %5338 = vmatmul.bf16.gmra.mxu0 %v950
  %v5339 = vpop.f32.mrf.mxu0
  %v5340 = vadd.f32 %v5327, %v5339
  %v5341 = vpop.f32.mrf.mxu0
  %5342 = vdwg.mxu0
  %5343 = vmatpush.bf16.msra.mxu0 %v3796
  %5344 = vmatpush.bf16.msra.mxu0 %v3791
  %5345 = vmatpush.bf16.msra.mxu0 %v3786
  %5346 = vmatpush.bf16.msra.mxu0 %v3781
  %5347 = vmatpush.bf16.msra.mxu0 %v3776
  %5348 = vmatpush.bf16.msra.mxu0 %v3771
  %5349 = vmatpush.bf16.msra.mxu0 %v3766
  %5350 = vmatpush.bf16.msra.mxu0 %v3761
  %5351 = vmatmul.bf16.gmra.mxu0 %v951
  %v5352 = vpop.f32.mrf.mxu0
  %v5353 = vadd.f32 %v5340, %v5352
  %v5354 = vpop.f32.mrf.mxu0
  %5355 = vdwg.mxu0
  %5356 = vmatpush.bf16.msra.mxu0 %v3836
  %5357 = vmatpush.bf16.msra.mxu0 %v3831
  %5358 = vmatpush.bf16.msra.mxu0 %v3826
  %5359 = vmatpush.bf16.msra.mxu0 %v3821
  %5360 = vmatpush.bf16.msra.mxu0 %v3816
  %5361 = vmatpush.bf16.msra.mxu0 %v3811
  %5362 = vmatpush.bf16.msra.mxu0 %v3806
  %5363 = vmatpush.bf16.msra.mxu0 %v3801
  %5364 = vmatmul.bf16.gmra.mxu0 %v952
  %v5365 = vpop.f32.mrf.mxu0
  %v5366 = vadd.f32 %v5353, %v5365
  %v5367 = vpop.f32.mrf.mxu0
  %5368 = vdwg.mxu0
  %5369 = vmatpush.bf16.msra.mxu0 %v3876
  %5370 = vmatpush.bf16.msra.mxu0 %v3871
  %5371 = vmatpush.bf16.msra.mxu0 %v3866
  %5372 = vmatpush.bf16.msra.mxu0 %v3861
  %5373 = vmatpush.bf16.msra.mxu0 %v3856
  %5374 = vmatpush.bf16.msra.mxu0 %v3851
  %5375 = vmatpush.bf16.msra.mxu0 %v3846
  %5376 = vmatpush.bf16.msra.mxu0 %v3841
  %5377 = vmatmul.bf16.gmra.mxu0 %v953
  %v5378 = vpop.f32.mrf.mxu0
  %v5379 = vadd.f32 %v5366, %v5378
  %v5380 = vpop.f32.mrf.mxu0
  %5381 = vdwg.mxu0
  %5382 = vmatpush.bf16.msra.mxu0 %v3916
  %5383 = vmatpush.bf16.msra.mxu0 %v3911
  %5384 = vmatpush.bf16.msra.mxu0 %v3906
  %5385 = vmatpush.bf16.msra.mxu0 %v3901
  %5386 = vmatpush.bf16.msra.mxu0 %v3896
  %5387 = vmatpush.bf16.msra.mxu0 %v3891
  %5388 = vmatpush.bf16.msra.mxu0 %v3886
  %5389 = vmatpush.bf16.msra.mxu0 %v3881
  %5390 = vmatmul.bf16.gmra.mxu0 %v954
  %v5391 = vpop.f32.mrf.mxu0
  %v5392 = vadd.f32 %v5379, %v5391
  %v5393 = vpop.f32.mrf.mxu0
  %5394 = vdwg.mxu0
  %5395 = vmatpush.bf16.msra.mxu0 %v3956
  %5396 = vmatpush.bf16.msra.mxu0 %v3951
  %5397 = vmatpush.bf16.msra.mxu0 %v3946
  %5398 = vmatpush.bf16.msra.mxu0 %v3941
  %5399 = vmatpush.bf16.msra.mxu0 %v3936
  %5400 = vmatpush.bf16.msra.mxu0 %v3931
  %5401 = vmatpush.bf16.msra.mxu0 %v3926
  %5402 = vmatpush.bf16.msra.mxu0 %v3921
  %5403 = vmatmul.bf16.gmra.mxu0 %v955
  %v5404 = vpop.f32.mrf.mxu0
  %v5405 = vadd.f32 %v5392, %v5404
  %v5406 = vpop.f32.mrf.mxu0
  %5407 = vdwg.mxu0
  %5408 = vmatpush.bf16.msra.mxu0 %v3996
  %5409 = vmatpush.bf16.msra.mxu0 %v3991
  %5410 = vmatpush.bf16.msra.mxu0 %v3986
  %5411 = vmatpush.bf16.msra.mxu0 %v3981
  %5412 = vmatpush.bf16.msra.mxu0 %v3976
  %5413 = vmatpush.bf16.msra.mxu0 %v3971
  %5414 = vmatpush.bf16.msra.mxu0 %v3966
  %5415 = vmatpush.bf16.msra.mxu0 %v3961
  %5416 = vmatmul.bf16.gmra.mxu0 %v956
  %v5417 = vpop.f32.mrf.mxu0
  %v5418 = vadd.f32 %v5405, %v5417
  %v5419 = vpop.f32.mrf.mxu0
  %5420 = vdwg.mxu0
  %5421 = vmatpush.bf16.msra.mxu0 %v3317
  %5422 = vmatpush.bf16.msra.mxu0 %v3312
  %5423 = vmatpush.bf16.msra.mxu0 %v3307
  %5424 = vmatpush.bf16.msra.mxu0 %v3302
  %5425 = vmatpush.bf16.msra.mxu0 %v3297
  %5426 = vmatpush.bf16.msra.mxu0 %v3292
  %5427 = vmatpush.bf16.msra.mxu0 %v3287
  %5428 = vmatpush.bf16.msra.mxu0 %v3282
  %5429 = vmatmul.bf16.gmra.mxu0 %v939
  %v5430 = vpop.f32.mrf.mxu0
  %v5431 = vadd.f32 %v905, %v5430
  %v5432 = vpop.f32.mrf.mxu0
  %5433 = vdwg.mxu0
  %5434 = vmatpush.bf16.msra.mxu0 %v3357
  %5435 = vmatpush.bf16.msra.mxu0 %v3352
  %5436 = vmatpush.bf16.msra.mxu0 %v3347
  %5437 = vmatpush.bf16.msra.mxu0 %v3342
  %5438 = vmatpush.bf16.msra.mxu0 %v3337
  %5439 = vmatpush.bf16.msra.mxu0 %v3332
  %5440 = vmatpush.bf16.msra.mxu0 %v3327
  %5441 = vmatpush.bf16.msra.mxu0 %v3322
  %5442 = vmatmul.bf16.gmra.mxu0 %v940
  %v5443 = vpop.f32.mrf.mxu0
  %v5444 = vadd.f32 %v5431, %v5443
  %v5445 = vpop.f32.mrf.mxu0
  %5446 = vdwg.mxu0
  %5447 = vmatpush.bf16.msra.mxu0 %v3397
  %5448 = vmatpush.bf16.msra.mxu0 %v3392
  %5449 = vmatpush.bf16.msra.mxu0 %v3387
  %5450 = vmatpush.bf16.msra.mxu0 %v3382
  %5451 = vmatpush.bf16.msra.mxu0 %v3377
  %5452 = vmatpush.bf16.msra.mxu0 %v3372
  %5453 = vmatpush.bf16.msra.mxu0 %v3367
  %5454 = vmatpush.bf16.msra.mxu0 %v3362
  %5455 = vmatmul.bf16.gmra.mxu0 %v941
  %v5456 = vpop.f32.mrf.mxu0
  %v5457 = vadd.f32 %v5444, %v5456
  %v5458 = vpop.f32.mrf.mxu0
  %5459 = vdwg.mxu0
  %5460 = vmatpush.bf16.msra.mxu0 %v3437
  %5461 = vmatpush.bf16.msra.mxu0 %v3432
  %5462 = vmatpush.bf16.msra.mxu0 %v3427
  %5463 = vmatpush.bf16.msra.mxu0 %v3422
  %5464 = vmatpush.bf16.msra.mxu0 %v3417
  %5465 = vmatpush.bf16.msra.mxu0 %v3412
  %5466 = vmatpush.bf16.msra.mxu0 %v3407
  %5467 = vmatpush.bf16.msra.mxu0 %v3402
  %5468 = vmatmul.bf16.gmra.mxu0 %v942
  %v5469 = vpop.f32.mrf.mxu0
  %v5470 = vadd.f32 %v5457, %v5469
  %v5471 = vpop.f32.mrf.mxu0
  %5472 = vdwg.mxu0
  %5473 = vmatpush.bf16.msra.mxu0 %v3477
  %5474 = vmatpush.bf16.msra.mxu0 %v3472
  %5475 = vmatpush.bf16.msra.mxu0 %v3467
  %5476 = vmatpush.bf16.msra.mxu0 %v3462
  %5477 = vmatpush.bf16.msra.mxu0 %v3457
  %5478 = vmatpush.bf16.msra.mxu0 %v3452
  %5479 = vmatpush.bf16.msra.mxu0 %v3447
  %5480 = vmatpush.bf16.msra.mxu0 %v3442
  %5481 = vmatmul.bf16.gmra.mxu0 %v943
  %v5482 = vpop.f32.mrf.mxu0
  %v5483 = vadd.f32 %v5470, %v5482
  %v5484 = vpop.f32.mrf.mxu0
  %5485 = vdwg.mxu0
  %5486 = vmatpush.bf16.msra.mxu0 %v3517
  %5487 = vmatpush.bf16.msra.mxu0 %v3512
  %5488 = vmatpush.bf16.msra.mxu0 %v3507
  %5489 = vmatpush.bf16.msra.mxu0 %v3502
  %5490 = vmatpush.bf16.msra.mxu0 %v3497
  %5491 = vmatpush.bf16.msra.mxu0 %v3492
  %5492 = vmatpush.bf16.msra.mxu0 %v3487
  %5493 = vmatpush.bf16.msra.mxu0 %v3482
  %5494 = vmatmul.bf16.gmra.mxu0 %v944
  %v5495 = vpop.f32.mrf.mxu0
  %v5496 = vadd.f32 %v5483, %v5495
  %v5497 = vpop.f32.mrf.mxu0
  %5498 = vdwg.mxu0
  %5499 = vmatpush.bf16.msra.mxu0 %v3557
  %5500 = vmatpush.bf16.msra.mxu0 %v3552
  %5501 = vmatpush.bf16.msra.mxu0 %v3547
  %5502 = vmatpush.bf16.msra.mxu0 %v3542
  %5503 = vmatpush.bf16.msra.mxu0 %v3537
  %5504 = vmatpush.bf16.msra.mxu0 %v3532
  %5505 = vmatpush.bf16.msra.mxu0 %v3527
  %5506 = vmatpush.bf16.msra.mxu0 %v3522
  %5507 = vmatmul.bf16.gmra.mxu0 %v945
  %v5508 = vpop.f32.mrf.mxu0
  %v5509 = vadd.f32 %v5496, %v5508
  %v5510 = vpop.f32.mrf.mxu0
  %5511 = vdwg.mxu0
  %5512 = vmatpush.bf16.msra.mxu0 %v3597
  %5513 = vmatpush.bf16.msra.mxu0 %v3592
  %5514 = vmatpush.bf16.msra.mxu0 %v3587
  %5515 = vmatpush.bf16.msra.mxu0 %v3582
  %5516 = vmatpush.bf16.msra.mxu0 %v3577
  %5517 = vmatpush.bf16.msra.mxu0 %v3572
  %5518 = vmatpush.bf16.msra.mxu0 %v3567
  %5519 = vmatpush.bf16.msra.mxu0 %v3562
  %5520 = vmatmul.bf16.gmra.mxu0 %v946
  %v5521 = vpop.f32.mrf.mxu0
  %v5522 = vadd.f32 %v5509, %v5521
  %v5523 = vpop.f32.mrf.mxu0
  %5524 = vdwg.mxu0
  %5525 = vmatpush.bf16.msra.mxu0 %v3637
  %5526 = vmatpush.bf16.msra.mxu0 %v3632
  %5527 = vmatpush.bf16.msra.mxu0 %v3627
  %5528 = vmatpush.bf16.msra.mxu0 %v3622
  %5529 = vmatpush.bf16.msra.mxu0 %v3617
  %5530 = vmatpush.bf16.msra.mxu0 %v3612
  %5531 = vmatpush.bf16.msra.mxu0 %v3607
  %5532 = vmatpush.bf16.msra.mxu0 %v3602
  %5533 = vmatmul.bf16.gmra.mxu0 %v947
  %v5534 = vpop.f32.mrf.mxu0
  %v5535 = vadd.f32 %v5522, %v5534
  %v5536 = vpop.f32.mrf.mxu0
  %5537 = vdwg.mxu0
  %5538 = vmatpush.bf16.msra.mxu0 %v3677
  %5539 = vmatpush.bf16.msra.mxu0 %v3672
  %5540 = vmatpush.bf16.msra.mxu0 %v3667
  %5541 = vmatpush.bf16.msra.mxu0 %v3662
  %5542 = vmatpush.bf16.msra.mxu0 %v3657
  %5543 = vmatpush.bf16.msra.mxu0 %v3652
  %5544 = vmatpush.bf16.msra.mxu0 %v3647
  %5545 = vmatpush.bf16.msra.mxu0 %v3642
  %5546 = vmatmul.bf16.gmra.mxu0 %v948
  %v5547 = vpop.f32.mrf.mxu0
  %v5548 = vadd.f32 %v5535, %v5547
  %v5549 = vpop.f32.mrf.mxu0
  %5550 = vdwg.mxu0
  %5551 = vmatpush.bf16.msra.mxu0 %v3717
  %5552 = vmatpush.bf16.msra.mxu0 %v3712
  %5553 = vmatpush.bf16.msra.mxu0 %v3707
  %5554 = vmatpush.bf16.msra.mxu0 %v3702
  %5555 = vmatpush.bf16.msra.mxu0 %v3697
  %5556 = vmatpush.bf16.msra.mxu0 %v3692
  %5557 = vmatpush.bf16.msra.mxu0 %v3687
  %5558 = vmatpush.bf16.msra.mxu0 %v3682
  %5559 = vmatmul.bf16.gmra.mxu0 %v949
  %v5560 = vpop.f32.mrf.mxu0
  %v5561 = vadd.f32 %v5548, %v5560
  %v5562 = vpop.f32.mrf.mxu0
  %5563 = vdwg.mxu0
  %5564 = vmatpush.bf16.msra.mxu0 %v3757
  %5565 = vmatpush.bf16.msra.mxu0 %v3752
  %5566 = vmatpush.bf16.msra.mxu0 %v3747
  %5567 = vmatpush.bf16.msra.mxu0 %v3742
  %5568 = vmatpush.bf16.msra.mxu0 %v3737
  %5569 = vmatpush.bf16.msra.mxu0 %v3732
  %5570 = vmatpush.bf16.msra.mxu0 %v3727
  %5571 = vmatpush.bf16.msra.mxu0 %v3722
  %5572 = vmatmul.bf16.gmra.mxu0 %v950
  %v5573 = vpop.f32.mrf.mxu0
  %v5574 = vadd.f32 %v5561, %v5573
  %v5575 = vpop.f32.mrf.mxu0
  %5576 = vdwg.mxu0
  %5577 = vmatpush.bf16.msra.mxu0 %v3797
  %5578 = vmatpush.bf16.msra.mxu0 %v3792
  %5579 = vmatpush.bf16.msra.mxu0 %v3787
  %5580 = vmatpush.bf16.msra.mxu0 %v3782
  %5581 = vmatpush.bf16.msra.mxu0 %v3777
  %5582 = vmatpush.bf16.msra.mxu0 %v3772
  %5583 = vmatpush.bf16.msra.mxu0 %v3767
  %5584 = vmatpush.bf16.msra.mxu0 %v3762
  %5585 = vmatmul.bf16.gmra.mxu0 %v951
  %v5586 = vpop.f32.mrf.mxu0
  %v5587 = vadd.f32 %v5574, %v5586
  %v5588 = vpop.f32.mrf.mxu0
  %5589 = vdwg.mxu0
  %5590 = vmatpush.bf16.msra.mxu0 %v3837
  %5591 = vmatpush.bf16.msra.mxu0 %v3832
  %5592 = vmatpush.bf16.msra.mxu0 %v3827
  %5593 = vmatpush.bf16.msra.mxu0 %v3822
  %5594 = vmatpush.bf16.msra.mxu0 %v3817
  %5595 = vmatpush.bf16.msra.mxu0 %v3812
  %5596 = vmatpush.bf16.msra.mxu0 %v3807
  %5597 = vmatpush.bf16.msra.mxu0 %v3802
  %5598 = vmatmul.bf16.gmra.mxu0 %v952
  %v5599 = vpop.f32.mrf.mxu0
  %v5600 = vadd.f32 %v5587, %v5599
  %v5601 = vpop.f32.mrf.mxu0
  %5602 = vdwg.mxu0
  %5603 = vmatpush.bf16.msra.mxu0 %v3877
  %5604 = vmatpush.bf16.msra.mxu0 %v3872
  %5605 = vmatpush.bf16.msra.mxu0 %v3867
  %5606 = vmatpush.bf16.msra.mxu0 %v3862
  %5607 = vmatpush.bf16.msra.mxu0 %v3857
  %5608 = vmatpush.bf16.msra.mxu0 %v3852
  %5609 = vmatpush.bf16.msra.mxu0 %v3847
  %5610 = vmatpush.bf16.msra.mxu0 %v3842
  %5611 = vmatmul.bf16.gmra.mxu0 %v953
  %v5612 = vpop.f32.mrf.mxu0
  %v5613 = vadd.f32 %v5600, %v5612
  %v5614 = vpop.f32.mrf.mxu0
  %5615 = vdwg.mxu0
  %5616 = vmatpush.bf16.msra.mxu0 %v3917
  %5617 = vmatpush.bf16.msra.mxu0 %v3912
  %5618 = vmatpush.bf16.msra.mxu0 %v3907
  %5619 = vmatpush.bf16.msra.mxu0 %v3902
  %5620 = vmatpush.bf16.msra.mxu0 %v3897
  %5621 = vmatpush.bf16.msra.mxu0 %v3892
  %5622 = vmatpush.bf16.msra.mxu0 %v3887
  %5623 = vmatpush.bf16.msra.mxu0 %v3882
  %5624 = vmatmul.bf16.gmra.mxu0 %v954
  %v5625 = vpop.f32.mrf.mxu0
  %v5626 = vadd.f32 %v5613, %v5625
  %v5627 = vpop.f32.mrf.mxu0
  %5628 = vdwg.mxu0
  %5629 = vmatpush.bf16.msra.mxu0 %v3957
  %5630 = vmatpush.bf16.msra.mxu0 %v3952
  %5631 = vmatpush.bf16.msra.mxu0 %v3947
  %5632 = vmatpush.bf16.msra.mxu0 %v3942
  %5633 = vmatpush.bf16.msra.mxu0 %v3937
  %5634 = vmatpush.bf16.msra.mxu0 %v3932
  %5635 = vmatpush.bf16.msra.mxu0 %v3927
  %5636 = vmatpush.bf16.msra.mxu0 %v3922
  %5637 = vmatmul.bf16.gmra.mxu0 %v955
  %v5638 = vpop.f32.mrf.mxu0
  %v5639 = vadd.f32 %v5626, %v5638
  %v5640 = vpop.f32.mrf.mxu0
  %5641 = vdwg.mxu0
  %5642 = vmatpush.bf16.msra.mxu0 %v3997
  %5643 = vmatpush.bf16.msra.mxu0 %v3992
  %5644 = vmatpush.bf16.msra.mxu0 %v3987
  %5645 = vmatpush.bf16.msra.mxu0 %v3982
  %5646 = vmatpush.bf16.msra.mxu0 %v3977
  %5647 = vmatpush.bf16.msra.mxu0 %v3972
  %5648 = vmatpush.bf16.msra.mxu0 %v3967
  %5649 = vmatpush.bf16.msra.mxu0 %v3962
  %5650 = vmatmul.bf16.gmra.mxu0 %v956
  %v5651 = vpop.f32.mrf.mxu0
  %v5652 = vadd.f32 %v5639, %v5651
  %v5653 = vpop.f32.mrf.mxu0
  %5654 = vdwg.mxu0
  %5655 = vmatpush.bf16.msra.mxu0 %v3318
  %5656 = vmatpush.bf16.msra.mxu0 %v3313
  %5657 = vmatpush.bf16.msra.mxu0 %v3308
  %5658 = vmatpush.bf16.msra.mxu0 %v3303
  %5659 = vmatpush.bf16.msra.mxu0 %v3298
  %5660 = vmatpush.bf16.msra.mxu0 %v3293
  %5661 = vmatpush.bf16.msra.mxu0 %v3288
  %5662 = vmatpush.bf16.msra.mxu0 %v3283
  %5663 = vmatmul.bf16.gmra.mxu0 %v939
  %v5664 = vpop.f32.mrf.mxu0
  %v5665 = vadd.f32 %v906, %v5664
  %v5666 = vpop.f32.mrf.mxu0
  %5667 = vdwg.mxu0
  %5668 = vmatpush.bf16.msra.mxu0 %v3358
  %5669 = vmatpush.bf16.msra.mxu0 %v3353
  %5670 = vmatpush.bf16.msra.mxu0 %v3348
  %5671 = vmatpush.bf16.msra.mxu0 %v3343
  %5672 = vmatpush.bf16.msra.mxu0 %v3338
  %5673 = vmatpush.bf16.msra.mxu0 %v3333
  %5674 = vmatpush.bf16.msra.mxu0 %v3328
  %5675 = vmatpush.bf16.msra.mxu0 %v3323
  %5676 = vmatmul.bf16.gmra.mxu0 %v940
  %v5677 = vpop.f32.mrf.mxu0
  %v5678 = vadd.f32 %v5665, %v5677
  %v5679 = vpop.f32.mrf.mxu0
  %5680 = vdwg.mxu0
  %5681 = vmatpush.bf16.msra.mxu0 %v3398
  %5682 = vmatpush.bf16.msra.mxu0 %v3393
  %5683 = vmatpush.bf16.msra.mxu0 %v3388
  %5684 = vmatpush.bf16.msra.mxu0 %v3383
  %5685 = vmatpush.bf16.msra.mxu0 %v3378
  %5686 = vmatpush.bf16.msra.mxu0 %v3373
  %5687 = vmatpush.bf16.msra.mxu0 %v3368
  %5688 = vmatpush.bf16.msra.mxu0 %v3363
  %5689 = vmatmul.bf16.gmra.mxu0 %v941
  %v5690 = vpop.f32.mrf.mxu0
  %v5691 = vadd.f32 %v5678, %v5690
  %v5692 = vpop.f32.mrf.mxu0
  %5693 = vdwg.mxu0
  %5694 = vmatpush.bf16.msra.mxu0 %v3438
  %5695 = vmatpush.bf16.msra.mxu0 %v3433
  %5696 = vmatpush.bf16.msra.mxu0 %v3428
  %5697 = vmatpush.bf16.msra.mxu0 %v3423
  %5698 = vmatpush.bf16.msra.mxu0 %v3418
  %5699 = vmatpush.bf16.msra.mxu0 %v3413
  %5700 = vmatpush.bf16.msra.mxu0 %v3408
  %5701 = vmatpush.bf16.msra.mxu0 %v3403
  %5702 = vmatmul.bf16.gmra.mxu0 %v942
  %v5703 = vpop.f32.mrf.mxu0
  %v5704 = vadd.f32 %v5691, %v5703
  %v5705 = vpop.f32.mrf.mxu0
  %5706 = vdwg.mxu0
  %5707 = vmatpush.bf16.msra.mxu0 %v3478
  %5708 = vmatpush.bf16.msra.mxu0 %v3473
  %5709 = vmatpush.bf16.msra.mxu0 %v3468
  %5710 = vmatpush.bf16.msra.mxu0 %v3463
  %5711 = vmatpush.bf16.msra.mxu0 %v3458
  %5712 = vmatpush.bf16.msra.mxu0 %v3453
  %5713 = vmatpush.bf16.msra.mxu0 %v3448
  %5714 = vmatpush.bf16.msra.mxu0 %v3443
  %5715 = vmatmul.bf16.gmra.mxu0 %v943
  %v5716 = vpop.f32.mrf.mxu0
  %v5717 = vadd.f32 %v5704, %v5716
  %v5718 = vpop.f32.mrf.mxu0
  %5719 = vdwg.mxu0
  %5720 = vmatpush.bf16.msra.mxu0 %v3518
  %5721 = vmatpush.bf16.msra.mxu0 %v3513
  %5722 = vmatpush.bf16.msra.mxu0 %v3508
  %5723 = vmatpush.bf16.msra.mxu0 %v3503
  %5724 = vmatpush.bf16.msra.mxu0 %v3498
  %5725 = vmatpush.bf16.msra.mxu0 %v3493
  %5726 = vmatpush.bf16.msra.mxu0 %v3488
  %5727 = vmatpush.bf16.msra.mxu0 %v3483
  %5728 = vmatmul.bf16.gmra.mxu0 %v944
  %v5729 = vpop.f32.mrf.mxu0
  %v5730 = vadd.f32 %v5717, %v5729
  %v5731 = vpop.f32.mrf.mxu0
  %5732 = vdwg.mxu0
  %5733 = vmatpush.bf16.msra.mxu0 %v3558
  %5734 = vmatpush.bf16.msra.mxu0 %v3553
  %5735 = vmatpush.bf16.msra.mxu0 %v3548
  %5736 = vmatpush.bf16.msra.mxu0 %v3543
  %5737 = vmatpush.bf16.msra.mxu0 %v3538
  %5738 = vmatpush.bf16.msra.mxu0 %v3533
  %5739 = vmatpush.bf16.msra.mxu0 %v3528
  %5740 = vmatpush.bf16.msra.mxu0 %v3523
  %5741 = vmatmul.bf16.gmra.mxu0 %v945
  %v5742 = vpop.f32.mrf.mxu0
  %v5743 = vadd.f32 %v5730, %v5742
  %v5744 = vpop.f32.mrf.mxu0
  %5745 = vdwg.mxu0
  %5746 = vmatpush.bf16.msra.mxu0 %v3598
  %5747 = vmatpush.bf16.msra.mxu0 %v3593
  %5748 = vmatpush.bf16.msra.mxu0 %v3588
  %5749 = vmatpush.bf16.msra.mxu0 %v3583
  %5750 = vmatpush.bf16.msra.mxu0 %v3578
  %5751 = vmatpush.bf16.msra.mxu0 %v3573
  %5752 = vmatpush.bf16.msra.mxu0 %v3568
  %5753 = vmatpush.bf16.msra.mxu0 %v3563
  %5754 = vmatmul.bf16.gmra.mxu0 %v946
  %v5755 = vpop.f32.mrf.mxu0
  %v5756 = vadd.f32 %v5743, %v5755
  %v5757 = vpop.f32.mrf.mxu0
  %5758 = vdwg.mxu0
  %5759 = vmatpush.bf16.msra.mxu0 %v3638
  %5760 = vmatpush.bf16.msra.mxu0 %v3633
  %5761 = vmatpush.bf16.msra.mxu0 %v3628
  %5762 = vmatpush.bf16.msra.mxu0 %v3623
  %5763 = vmatpush.bf16.msra.mxu0 %v3618
  %5764 = vmatpush.bf16.msra.mxu0 %v3613
  %5765 = vmatpush.bf16.msra.mxu0 %v3608
  %5766 = vmatpush.bf16.msra.mxu0 %v3603
  %5767 = vmatmul.bf16.gmra.mxu0 %v947
  %v5768 = vpop.f32.mrf.mxu0
  %v5769 = vadd.f32 %v5756, %v5768
  %v5770 = vpop.f32.mrf.mxu0
  %5771 = vdwg.mxu0
  %5772 = vmatpush.bf16.msra.mxu0 %v3678
  %5773 = vmatpush.bf16.msra.mxu0 %v3673
  %5774 = vmatpush.bf16.msra.mxu0 %v3668
  %5775 = vmatpush.bf16.msra.mxu0 %v3663
  %5776 = vmatpush.bf16.msra.mxu0 %v3658
  %5777 = vmatpush.bf16.msra.mxu0 %v3653
  %5778 = vmatpush.bf16.msra.mxu0 %v3648
  %5779 = vmatpush.bf16.msra.mxu0 %v3643
  %5780 = vmatmul.bf16.gmra.mxu0 %v948
  %v5781 = vpop.f32.mrf.mxu0
  %v5782 = vadd.f32 %v5769, %v5781
  %v5783 = vpop.f32.mrf.mxu0
  %5784 = vdwg.mxu0
  %5785 = vmatpush.bf16.msra.mxu0 %v3718
  %5786 = vmatpush.bf16.msra.mxu0 %v3713
  %5787 = vmatpush.bf16.msra.mxu0 %v3708
  %5788 = vmatpush.bf16.msra.mxu0 %v3703
  %5789 = vmatpush.bf16.msra.mxu0 %v3698
  %5790 = vmatpush.bf16.msra.mxu0 %v3693
  %5791 = vmatpush.bf16.msra.mxu0 %v3688
  %5792 = vmatpush.bf16.msra.mxu0 %v3683
  %5793 = vmatmul.bf16.gmra.mxu0 %v949
  %v5794 = vpop.f32.mrf.mxu0
  %v5795 = vadd.f32 %v5782, %v5794
  %v5796 = vpop.f32.mrf.mxu0
  %5797 = vdwg.mxu0
  %5798 = vmatpush.bf16.msra.mxu0 %v3758
  %5799 = vmatpush.bf16.msra.mxu0 %v3753
  %5800 = vmatpush.bf16.msra.mxu0 %v3748
  %5801 = vmatpush.bf16.msra.mxu0 %v3743
  %5802 = vmatpush.bf16.msra.mxu0 %v3738
  %5803 = vmatpush.bf16.msra.mxu0 %v3733
  %5804 = vmatpush.bf16.msra.mxu0 %v3728
  %5805 = vmatpush.bf16.msra.mxu0 %v3723
  %5806 = vmatmul.bf16.gmra.mxu0 %v950
  %v5807 = vpop.f32.mrf.mxu0
  %v5808 = vadd.f32 %v5795, %v5807
  %v5809 = vpop.f32.mrf.mxu0
  %5810 = vdwg.mxu0
  %5811 = vmatpush.bf16.msra.mxu0 %v3798
  %5812 = vmatpush.bf16.msra.mxu0 %v3793
  %5813 = vmatpush.bf16.msra.mxu0 %v3788
  %5814 = vmatpush.bf16.msra.mxu0 %v3783
  %5815 = vmatpush.bf16.msra.mxu0 %v3778
  %5816 = vmatpush.bf16.msra.mxu0 %v3773
  %5817 = vmatpush.bf16.msra.mxu0 %v3768
  %5818 = vmatpush.bf16.msra.mxu0 %v3763
  %5819 = vmatmul.bf16.gmra.mxu0 %v951
  %v5820 = vpop.f32.mrf.mxu0
  %v5821 = vadd.f32 %v5808, %v5820
  %v5822 = vpop.f32.mrf.mxu0
  %5823 = vdwg.mxu0
  %5824 = vmatpush.bf16.msra.mxu0 %v3838
  %5825 = vmatpush.bf16.msra.mxu0 %v3833
  %5826 = vmatpush.bf16.msra.mxu0 %v3828
  %5827 = vmatpush.bf16.msra.mxu0 %v3823
  %5828 = vmatpush.bf16.msra.mxu0 %v3818
  %5829 = vmatpush.bf16.msra.mxu0 %v3813
  %5830 = vmatpush.bf16.msra.mxu0 %v3808
  %5831 = vmatpush.bf16.msra.mxu0 %v3803
  %5832 = vmatmul.bf16.gmra.mxu0 %v952
  %v5833 = vpop.f32.mrf.mxu0
  %v5834 = vadd.f32 %v5821, %v5833
  %v5835 = vpop.f32.mrf.mxu0
  %5836 = vdwg.mxu0
  %5837 = vmatpush.bf16.msra.mxu0 %v3878
  %5838 = vmatpush.bf16.msra.mxu0 %v3873
  %5839 = vmatpush.bf16.msra.mxu0 %v3868
  %5840 = vmatpush.bf16.msra.mxu0 %v3863
  %5841 = vmatpush.bf16.msra.mxu0 %v3858
  %5842 = vmatpush.bf16.msra.mxu0 %v3853
  %5843 = vmatpush.bf16.msra.mxu0 %v3848
  %5844 = vmatpush.bf16.msra.mxu0 %v3843
  %5845 = vmatmul.bf16.gmra.mxu0 %v953
  %v5846 = vpop.f32.mrf.mxu0
  %v5847 = vadd.f32 %v5834, %v5846
  %v5848 = vpop.f32.mrf.mxu0
  %5849 = vdwg.mxu0
  %5850 = vmatpush.bf16.msra.mxu0 %v3918
  %5851 = vmatpush.bf16.msra.mxu0 %v3913
  %5852 = vmatpush.bf16.msra.mxu0 %v3908
  %5853 = vmatpush.bf16.msra.mxu0 %v3903
  %5854 = vmatpush.bf16.msra.mxu0 %v3898
  %5855 = vmatpush.bf16.msra.mxu0 %v3893
  %5856 = vmatpush.bf16.msra.mxu0 %v3888
  %5857 = vmatpush.bf16.msra.mxu0 %v3883
  %5858 = vmatmul.bf16.gmra.mxu0 %v954
  %v5859 = vpop.f32.mrf.mxu0
  %v5860 = vadd.f32 %v5847, %v5859
  %v5861 = vpop.f32.mrf.mxu0
  %5862 = vdwg.mxu0
  %5863 = vmatpush.bf16.msra.mxu0 %v3958
  %5864 = vmatpush.bf16.msra.mxu0 %v3953
  %5865 = vmatpush.bf16.msra.mxu0 %v3948
  %5866 = vmatpush.bf16.msra.mxu0 %v3943
  %5867 = vmatpush.bf16.msra.mxu0 %v3938
  %5868 = vmatpush.bf16.msra.mxu0 %v3933
  %5869 = vmatpush.bf16.msra.mxu0 %v3928
  %5870 = vmatpush.bf16.msra.mxu0 %v3923
  %5871 = vmatmul.bf16.gmra.mxu0 %v955
  %v5872 = vpop.f32.mrf.mxu0
  %v5873 = vadd.f32 %v5860, %v5872
  %v5874 = vpop.f32.mrf.mxu0
  %5875 = vdwg.mxu0
  %5876 = vmatpush.bf16.msra.mxu0 %v3998
  %5877 = vmatpush.bf16.msra.mxu0 %v3993
  %5878 = vmatpush.bf16.msra.mxu0 %v3988
  %5879 = vmatpush.bf16.msra.mxu0 %v3983
  %5880 = vmatpush.bf16.msra.mxu0 %v3978
  %5881 = vmatpush.bf16.msra.mxu0 %v3973
  %5882 = vmatpush.bf16.msra.mxu0 %v3968
  %5883 = vmatpush.bf16.msra.mxu0 %v3963
  %5884 = vmatmul.bf16.gmra.mxu0 %v956
  %v5885 = vpop.f32.mrf.mxu0
  %v5886 = vadd.f32 %v5873, %v5885
  %v5887 = vpop.f32.mrf.mxu0
  %5888 = vdwg.mxu0
  %v5889 = vpack.c.bf16 %v4950, %v4950
  %v5890 = vpack.c.bf16 %v5184, %v5184
  %v5891 = vpack.c.bf16 %v5418, %v5418
  %v5892 = vpack.c.bf16 %v5652, %v5652
  %v5893 = vpack.c.bf16 %v5886, %v5886
  %v5894 = vld [vmem:[%s3] sm:$0xf]
  %v5895 = vld [vmem:[%s3 + $0x4] sm:$0xf]
  %v5896 = vld [vmem:[%s3 + $0x8] sm:$0xf]
  %v5897 = vld [vmem:[%s3 + $0xc] sm:$0xf]
  %v5898 = vld [vmem:[%s3 + $0x10] sm:$0xf]
  %v5899 = vld [vmem:[%s3 + $0x14] sm:$0xf]
  %v5900 = vld [vmem:[%s3 + $0x18] sm:$0xf]
  %v5901 = vld [vmem:[%s3 + $0x1c] sm:$0xf]
  %v5902 = vld [vmem:[%s3 + $0x20] sm:$0xf]
  %v5903 = vld [vmem:[%s3 + $0x24] sm:$0xf]
  %v5904 = vld [vmem:[%s3 + $0x28] sm:$0xf]
  %v5905 = vld [vmem:[%s3 + $0x2c] sm:$0xf]
  %v5906 = vld [vmem:[%s3 + $0x30] sm:$0xf]
  %v5907 = vld [vmem:[%s3 + $0x34] sm:$0xf]
  %v5908 = vld [vmem:[%s3 + $0x38] sm:$0xf]
  %v5909 = vld [vmem:[%s3 + $0x3c] sm:$0xf]
  %v5910 = vld [vmem:[%s3 + $0x40] sm:$0xf]
  %v5911 = vld [vmem:[%s3 + $0x44] sm:$0xf]
  %v5912 = vld [vmem:[%s3 + $0x48] sm:$0xf]
  %v5913 = vld [vmem:[%s3 + $0x4c] sm:$0xf]
  %v5914 = vld [vmem:[%s3 + $0x50] sm:$0xf]
  %v5915 = vld [vmem:[%s3 + $0x54] sm:$0xf]
  %v5916 = vld [vmem:[%s3 + $0x58] sm:$0xf]
  %v5917 = vld [vmem:[%s3 + $0x5c] sm:$0xf]
  %v5918 = vld [vmem:[%s3 + $0x60] sm:$0xf]
  %v5919 = vld [vmem:[%s3 + $0x64] sm:$0xf]
  %v5920 = vld [vmem:[%s3 + $0x68] sm:$0xf]
  %v5921 = vld [vmem:[%s3 + $0x6c] sm:$0xf]
  %v5922 = vld [vmem:[%s3 + $0x70] sm:$0xf]
  %v5923 = vld [vmem:[%s3 + $0x74] sm:$0xf]
  %v5924 = vld [vmem:[%s3 + $0x78] sm:$0xf]
  %v5925 = vld [vmem:[%s3 + $0x7c] sm:$0xf]
  %v5926 = vld [vmem:[%s3 + $0x80] sm:$0xf]
  %v5927 = vld [vmem:[%s3 + $0x84] sm:$0xf]
  %v5928 = vld [vmem:[%s3 + $0x88] sm:$0xf]
  %v5929 = vld [vmem:[%s3 + $0x8c] sm:$0xf]
  %v5930 = vld [vmem:[%s3 + $0x90] sm:$0xf]
  %v5931 = vld [vmem:[%s3 + $0x94] sm:$0xf]
  %v5932 = vld [vmem:[%s3 + $0x98] sm:$0xf]
  %v5933 = vld [vmem:[%s3 + $0x9c] sm:$0xf]
  %v5934 = vld [vmem:[%s3 + $0xa0] sm:$0xf]
  %v5935 = vld [vmem:[%s3 + $0xa4] sm:$0xf]
  %v5936 = vld [vmem:[%s3 + $0xa8] sm:$0xf]
  %v5937 = vld [vmem:[%s3 + $0xac] sm:$0xf]
  %v5938 = vld [vmem:[%s3 + $0xb0] sm:$0xf]
  %v5939 = vld [vmem:[%s3 + $0xb4] sm:$0xf]
  %v5940 = vld [vmem:[%s3 + $0xb8] sm:$0xf]
  %v5941 = vld [vmem:[%s3 + $0xbc] sm:$0xf]
  %v5942 = vld [vmem:[%s3 + $0xc0] sm:$0xf]
  %v5943 = vld [vmem:[%s3 + $0xc4] sm:$0xf]
  %v5944 = vld [vmem:[%s3 + $0xc8] sm:$0xf]
  %v5945 = vld [vmem:[%s3 + $0xcc] sm:$0xf]
  %v5946 = vld [vmem:[%s3 + $0xd0] sm:$0xf]
  %v5947 = vld [vmem:[%s3 + $0xd4] sm:$0xf]
  %v5948 = vld [vmem:[%s3 + $0xd8] sm:$0xf]
  %v5949 = vld [vmem:[%s3 + $0xdc] sm:$0xf]
  %v5950 = vld [vmem:[%s3 + $0xe0] sm:$0xf]
  %v5951 = vld [vmem:[%s3 + $0xe4] sm:$0xf]
  %v5952 = vld [vmem:[%s3 + $0xe8] sm:$0xf]
  %v5953 = vld [vmem:[%s3 + $0xec] sm:$0xf]
  %v5954 = vld [vmem:[%s3 + $0xf0] sm:$0xf]
  %v5955 = vld [vmem:[%s3 + $0xf4] sm:$0xf]
  %v5956 = vld [vmem:[%s3 + $0xf8] sm:$0xf]
  %v5957 = vld [vmem:[%s3 + $0xfc] sm:$0xf]
  %v5958 = vld [vmem:[%s3 + $0x100] sm:$0xf]
  %v5959 = vld [vmem:[%s3 + $0x104] sm:$0xf]
  %v5960 = vld [vmem:[%s3 + $0x108] sm:$0xf]
  %v5961 = vld [vmem:[%s3 + $0x10c] sm:$0xf]
  %v5962 = vld [vmem:[%s3 + $0x110] sm:$0xf]
  %v5963 = vld [vmem:[%s3 + $0x114] sm:$0xf]
  %v5964 = vld [vmem:[%s3 + $0x118] sm:$0xf]
  %v5965 = vld [vmem:[%s3 + $0x11c] sm:$0xf]
  %v5966 = vld [vmem:[%s3 + $0x120] sm:$0xf]
  %v5967 = vld [vmem:[%s3 + $0x124] sm:$0xf]
  %v5968 = vld [vmem:[%s3 + $0x128] sm:$0xf]
  %v5969 = vld [vmem:[%s4] sm:$0x1]
  %v5971 = vperm.slane %v5969, 0
  %v6048 = vunpack.c.l.b16 %v5894
  %v6049 = vunpack.c.l.b16 %v5895
  %v6050 = vunpack.c.l.b16 %v5896
  %v6051 = vunpack.c.l.b16 %v5897
  %v6052 = vunpack.c.l.b16 %v5898
  %v6053 = vunpack.c.l.b16 %v5899
  %v6054 = vunpack.c.l.b16 %v5900
  %v6055 = vunpack.c.l.b16 %v5901
  %v6056 = vunpack.c.l.b16 %v5902
  %v6057 = vunpack.c.l.b16 %v5903
  %v6058 = vunpack.c.l.b16 %v5904
  %v6059 = vunpack.c.l.b16 %v5905
  %v6060 = vunpack.c.l.b16 %v5906
  %v6061 = vunpack.c.l.b16 %v5907
  %v6062 = vunpack.c.l.b16 %v5908
  %v6063 = vunpack.c.l.b16 %v5909
  %v6064 = vunpack.c.l.b16 %v5910
  %v6065 = vunpack.c.l.b16 %v5911
  %v6066 = vunpack.c.l.b16 %v5912
  %v6067 = vunpack.c.l.b16 %v5913
  %v6068 = vunpack.c.l.b16 %v5914
  %v6069 = vunpack.c.l.b16 %v5915
  %v6070 = vunpack.c.l.b16 %v5916
  %v6071 = vunpack.c.l.b16 %v5917
  %v6072 = vunpack.c.l.b16 %v5918
  %v6073 = vunpack.c.l.b16 %v5919
  %v6074 = vunpack.c.l.b16 %v5920
  %v6075 = vunpack.c.l.b16 %v5921
  %v6076 = vunpack.c.l.b16 %v5922
  %v6077 = vunpack.c.l.b16 %v5923
  %v6078 = vunpack.c.l.b16 %v5924
  %v6079 = vunpack.c.l.b16 %v5925
  %v6080 = vunpack.c.l.b16 %v5926
  %v6081 = vunpack.c.l.b16 %v5927
  %v6082 = vunpack.c.l.b16 %v5928
  %v6083 = vunpack.c.l.b16 %v5929
  %v6084 = vunpack.c.l.b16 %v5930
  %v6085 = vunpack.c.l.b16 %v5931
  %v6086 = vunpack.c.l.b16 %v5932
  %v6087 = vunpack.c.l.b16 %v5933
  %v6088 = vunpack.c.l.b16 %v5934
  %v6089 = vunpack.c.l.b16 %v5935
  %v6090 = vunpack.c.l.b16 %v5936
  %v6091 = vunpack.c.l.b16 %v5937
  %v6092 = vunpack.c.l.b16 %v5938
  %v6093 = vunpack.c.l.b16 %v5939
  %v6094 = vunpack.c.l.b16 %v5940
  %v6095 = vunpack.c.l.b16 %v5941
  %v6096 = vunpack.c.l.b16 %v5942
  %v6097 = vunpack.c.l.b16 %v5943
  %v6098 = vunpack.c.l.b16 %v5944
  %v6099 = vunpack.c.l.b16 %v5945
  %v6100 = vunpack.c.l.b16 %v5946
  %v6101 = vunpack.c.l.b16 %v5947
  %v6102 = vunpack.c.l.b16 %v5948
  %v6103 = vunpack.c.l.b16 %v5949
  %v6104 = vunpack.c.l.b16 %v5950
  %v6105 = vunpack.c.l.b16 %v5951
  %v6106 = vunpack.c.l.b16 %v5952
  %v6107 = vunpack.c.l.b16 %v5953
  %v6108 = vunpack.c.l.b16 %v5954
  %v6109 = vunpack.c.l.b16 %v5955
  %v6110 = vunpack.c.l.b16 %v5956
  %v6111 = vunpack.c.l.b16 %v5957
  %v6112 = vunpack.c.l.b16 %v5958
  %v6113 = vunpack.c.l.b16 %v5959
  %v6114 = vunpack.c.l.b16 %v5960
  %v6115 = vunpack.c.l.b16 %v5961
  %v6116 = vunpack.c.l.b16 %v5962
  %v6117 = vunpack.c.l.b16 %v5963
  %v6118 = vunpack.c.l.b16 %v5964
  %v6119 = vunpack.c.l.b16 %v5965
  %v6120 = vunpack.c.l.b16 %v5966
  %v6121 = vunpack.c.l.b16 %v5967
  %v6122 = vunpack.c.l.b16 %v5968
  %v6123 = vpack.c.b16 %v6049, %v6048
  %v6124 = vpack.c.b16 %v6051, %v6050
  %v6125 = vpack.c.b16 %v6053, %v6052
  %v6126 = vpack.c.b16 %v6055, %v6054
  %v6127 = vpack.c.b16 %v6057, %v6056
  %v6128 = vpack.c.b16 %v6059, %v6058
  %v6129 = vpack.c.b16 %v6061, %v6060
  %v6130 = vpack.c.b16 %v6063, %v6062
  %v6131 = vpack.c.b16 %v6065, %v6064
  %v6132 = vpack.c.b16 %v6067, %v6066
  %v6133 = vpack.c.b16 %v6069, %v6068
  %v6134 = vpack.c.b16 %v6071, %v6070
  %v6135 = vpack.c.b16 %v6073, %v6072
  %v6136 = vpack.c.b16 %v6075, %v6074
  %v6137 = vpack.c.b16 %v6077, %v6076
  %v6138 = vpack.c.b16 %v6079, %v6078
  %v6139 = vpack.c.b16 %v6081, %v6080
  %v6140 = vpack.c.b16 %v6083, %v6082
  %v6141 = vpack.c.b16 %v6085, %v6084
  %v6142 = vpack.c.b16 %v6087, %v6086
  %v6143 = vpack.c.b16 %v6089, %v6088
  %v6144 = vpack.c.b16 %v6091, %v6090
  %v6145 = vpack.c.b16 %v6093, %v6092
  %v6146 = vpack.c.b16 %v6095, %v6094
  %v6147 = vpack.c.b16 %v6097, %v6096
  %v6148 = vpack.c.b16 %v6099, %v6098
  %v6149 = vpack.c.b16 %v6101, %v6100
  %v6150 = vpack.c.b16 %v6103, %v6102
  %v6151 = vpack.c.b16 %v6105, %v6104
  %v6152 = vpack.c.b16 %v6107, %v6106
  %v6153 = vpack.c.b16 %v6109, %v6108
  %v6154 = vpack.c.b16 %v6111, %v6110
  %v6155 = vpack.c.b16 %v6113, %v6112
  %v6156 = vpack.c.b16 %v6115, %v6114
  %v6157 = vpack.c.b16 %v6117, %v6116
  %v6158 = vpack.c.b16 %v6119, %v6118
  %v6159 = vpack.c.b16 %v6121, %v6120
  %v6160 = vpack.c.b16 %v6122, %v6122
  %vm6198 = vcmask 719872
  %v6200 = vsel %vm6198, %v5893, 0
  %vm6202 = vcmask 1043456
  %v6204 = vsel %vm6202, %v6160, 0
  %6206 = vmatpush.bf16.msra.mxu0 %v6130
  %6207 = vmatpush.bf16.msra.mxu0 %v6129
  %6208 = vmatpush.bf16.msra.mxu0 %v6128
  %6209 = vmatpush.bf16.msra.mxu0 %v6127
  %6210 = vmatpush.bf16.msra.mxu0 %v6126
  %6211 = vmatpush.bf16.msra.mxu0 %v6125
  %6212 = vmatpush.bf16.msra.mxu0 %v6124
  %6213 = vmatpush.bf16.msra.mxu0 %v6123
  %6214 = vmatmul.bf16.gmra.mxu0 %v5889
  %v6215 = vpop.f32.mrf.mxu0
  %v6216 = vadd.f32 %v5971, %v6215
  %v6217 = vpop.f32.mrf.mxu0
  %6218 = vdwg.mxu0
  %6219 = vmatpush.bf16.msra.mxu0 %v6138
  %6220 = vmatpush.bf16.msra.mxu0 %v6137
  %6221 = vmatpush.bf16.msra.mxu0 %v6136
  %6222 = vmatpush.bf16.msra.mxu0 %v6135
  %6223 = vmatpush.bf16.msra.mxu0 %v6134
  %6224 = vmatpush.bf16.msra.mxu0 %v6133
  %6225 = vmatpush.bf16.msra.mxu0 %v6132
  %6226 = vmatpush.bf16.msra.mxu0 %v6131
  %6227 = vmatmul.bf16.gmra.mxu0 %v5890
  %v6228 = vpop.f32.mrf.mxu0
  %v6229 = vadd.f32 %v6216, %v6228
  %v6230 = vpop.f32.mrf.mxu0
  %6231 = vdwg.mxu0
  %6232 = vmatpush.bf16.msra.mxu0 %v6146
  %6233 = vmatpush.bf16.msra.mxu0 %v6145
  %6234 = vmatpush.bf16.msra.mxu0 %v6144
  %6235 = vmatpush.bf16.msra.mxu0 %v6143
  %6236 = vmatpush.bf16.msra.mxu0 %v6142
  %6237 = vmatpush.bf16.msra.mxu0 %v6141
  %6238 = vmatpush.bf16.msra.mxu0 %v6140
  %6239 = vmatpush.bf16.msra.mxu0 %v6139
  %6240 = vmatmul.bf16.gmra.mxu0 %v5891
  %v6241 = vpop.f32.mrf.mxu0
  %v6242 = vadd.f32 %v6229, %v6241
  %v6243 = vpop.f32.mrf.mxu0
  %6244 = vdwg.mxu0
  %6245 = vmatpush.bf16.msra.mxu0 %v6154
  %6246 = vmatpush.bf16.msra.mxu0 %v6153
  %6247 = vmatpush.bf16.msra.mxu0 %v6152
  %6248 = vmatpush.bf16.msra.mxu0 %v6151
  %6249 = vmatpush.bf16.msra.mxu0 %v6150
  %6250 = vmatpush.bf16.msra.mxu0 %v6149
  %6251 = vmatpush.bf16.msra.mxu0 %v6148
  %6252 = vmatpush.bf16.msra.mxu0 %v6147
  %6253 = vmatmul.bf16.gmra.mxu0 %v5892
  %v6254 = vpop.f32.mrf.mxu0
  %v6255 = vadd.f32 %v6242, %v6254
  %v6256 = vpop.f32.mrf.mxu0
  %6257 = vdwg.mxu0
  %6258 = vmatpush.bf16.msra.mxu0 0
  %6259 = vmatpush.bf16.msra.mxu0 0
  %6260 = vmatpush.bf16.msra.mxu0 %v6204
  %6261 = vmatpush.bf16.msra.mxu0 %v6159
  %6262 = vmatpush.bf16.msra.mxu0 %v6158
  %6263 = vmatpush.bf16.msra.mxu0 %v6157
  %6264 = vmatpush.bf16.msra.mxu0 %v6156
  %6265 = vmatpush.bf16.msra.mxu0 %v6155
  %6266 = vmatmul.bf16.gmra.mxu0 %v6200
  %v6267 = vpop.f32.mrf.mxu0
  %v6268 = vadd.f32 %v6255, %v6267
  %v6269 = vpop.f32.mrf.mxu0
  %6270 = vdwg.mxu0
  %v6271 = vpack.c.bf16 %v6268, %v6268
  %v6272 = vld [vmem:[%s5] sm:$0xf]
  %v6273 = vld [vmem:[%s5 + $0x4] sm:$0xf]
  %v6274 = vld [vmem:[%s5 + $0x8] sm:$0xf]
  %v6275 = vld [vmem:[%s5 + $0xc] sm:$0xf]
  %v6276 = vld [vmem:[%s5 + $0x10] sm:$0xf]
  %v6277 = vld [vmem:[%s5 + $0x14] sm:$0xf]
  %v6278 = vld [vmem:[%s5 + $0x18] sm:$0xf]
  %v6279 = vld [vmem:[%s5 + $0x1c] sm:$0xf]
  %v6280 = vld [vmem:[%s5 + $0x20] sm:$0xf]
  %v6281 = vld [vmem:[%s5 + $0x24] sm:$0xf]
  %v6282 = vld [vmem:[%s5 + $0x28] sm:$0xf]
  %v6283 = vld [vmem:[%s5 + $0x2c] sm:$0xf]
  %v6284 = vld [vmem:[%s5 + $0x30] sm:$0xf]
  %v6285 = vld [vmem:[%s5 + $0x34] sm:$0xf]
  %v6286 = vld [vmem:[%s5 + $0x38] sm:$0xf]
  %v6287 = vld [vmem:[%s6] sm:$0x1]
  %v6289 = vperm.slane %v6287, 0
  %v6306 = vunpack.c.l.b16 %v6272
  %v6307 = vunpack.c.l.b16 %v6273
  %v6308 = vunpack.c.l.b16 %v6274
  %v6309 = vunpack.c.l.b16 %v6275
  %v6310 = vunpack.c.l.b16 %v6276
  %v6311 = vunpack.c.l.b16 %v6277
  %v6312 = vunpack.c.l.b16 %v6278
  %v6313 = vunpack.c.l.b16 %v6279
  %v6314 = vunpack.c.l.b16 %v6280
  %v6315 = vunpack.c.l.b16 %v6281
  %v6316 = vunpack.c.l.b16 %v6282
  %v6317 = vunpack.c.l.b16 %v6283
  %v6318 = vunpack.c.l.b16 %v6284
  %v6319 = vunpack.c.l.b16 %v6285
  %v6320 = vunpack.c.l.b16 %v6286
  %v6321 = vpack.c.b16 %v6307, %v6306
  %v6322 = vpack.c.b16 %v6309, %v6308
  %v6323 = vpack.c.b16 %v6311, %v6310
  %v6324 = vpack.c.b16 %v6313, %v6312
  %v6325 = vpack.c.b16 %v6315, %v6314
  %v6326 = vpack.c.b16 %v6317, %v6316
  %v6327 = vpack.c.b16 %v6319, %v6318
  %v6328 = vpack.c.b16 %v6320, %v6320
  %vm6336 = vcmask 982016
  %v6338 = vsel %vm6336, %v6271, 0
  %v6341 = vsel %vm6202, %v6328, 0
  %6343 = vmatpush.bf16.msra.mxu0 %v6341
  %6344 = vmatpush.bf16.msra.mxu0 %v6327
  %6345 = vmatpush.bf16.msra.mxu0 %v6326
  %6346 = vmatpush.bf16.msra.mxu0 %v6325
  %6347 = vmatpush.bf16.msra.mxu0 %v6324
  %6348 = vmatpush.bf16.msra.mxu0 %v6323
  %6349 = vmatpush.bf16.msra.mxu0 %v6322
  %6350 = vmatpush.bf16.msra.mxu0 %v6321
  %6351 = vmatmul.bf16.gmra.mxu0 %v6338
  %v6352 = vpop.f32.mrf.mxu0
  %v6353 = vadd.f32 %v6289, %v6352
  %v6354 = vpop.f32.mrf.mxu0
  %6355 = vdwg.mxu0
  %6356 = vst [vmem:[%s7] sm:$0xff] %v6353
  // Predicated region
  $region30: #{fashion_cnn_forward.5} parent=0 // pred_check
    _
  $region31: #{fashion_cnn_forward.5} parent=0 // pred_check_branch
    %6358 = sbr.rel (0) target = $region33
  $region32: #{fashion_cnn_forward.5} parent=0 // pred_region
    _
  $region33: #{fashion_cnn_forward.5} parent=0 // pred_fallthru
    _
  // Predicated region
  $region34: #{fashion_cnn_forward.5} parent=0 // pred_check
    _
  $region35: #{fashion_cnn_forward.5} parent=0 // pred_check_branch
    %6360 = sbr.rel (0) target = $region37
  $region36: #{fashion_cnn_forward.5} parent=0 // pred_region
    _
  $region37: #{fashion_cnn_forward.5} parent=0 // pred_fallthru
    _

</llo_original>
